<compile_context>
chip_gen: v7x
topology: tpu7x:2x2x1
jax: 0.10.0
libtpu: 0.0.40
codegen_flags: <defaults>
</compile_context>

<pallas_src>
import functools

import jax
import jax.numpy as jnp
import numpy as np
from jax import lax
from jax.experimental import pallas as pl
from jax.experimental.pallas import tpu as pltpu


def _round_up(x, m):
    return ((x + m - 1) // m) * m


def _lm_kernel(x_ref, y_ref, wih_ref, whh_ref, b_ref, wout_ref, bout_ref,
               loss_ref, gx_ref, hall_ref, logit_ref, h_ref, c_ref, s_ref, n_ref,
               *, n_enc_p, batch, t_blk, ce_rows, pad_id):
    """One grid step == one time block of `t_blk` LSTM steps.

    x_ref:    (R, n_emb)   bf16  embedded previous tokens (time-major, flat)
    y_ref:    (R, 1)       i32   next-token targets
    wih_ref:  (n_emb, 4Hp) bf16
    whh_ref:  (Hp, 4Hp)    bf16
    b_ref:    (1, 4Hp)     f32   (b_ih + b_hh, per-gate lane-padded)
    wout_ref: (Hp, Vp)     bf16
    bout_ref: (1, Vp)      f32   (padded vocab columns = -1e9)
    loss_ref: (1, 1)       f32   final masked-mean NLL (written on last step)
    scratch:  gx (R,4Hp) bf16, hall (R,Hp) bf16, logit (R,Vp) f32,
              h (B,Hp) bf16, c (B,Hp) f32, s/n (1,1) f32
    """
    Hp = n_enc_p
    B = batch
    R = t_blk * B

    @pl.when(pl.program_id(0) == 0)
    def _init():
        h_ref[...] = jnp.zeros_like(h_ref)
        c_ref[...] = jnp.zeros_like(c_ref)
        s_ref[...] = jnp.zeros_like(s_ref)
        n_ref[...] = jnp.zeros_like(n_ref)

    # ---- Stage 1: batched input projection for the whole block (one MXU pass),
    #      bias added once; stored bf16 to halve scratch + per-step vld bytes. ----
    gx_ref[...] = (
        jnp.dot(x_ref[...], wih_ref[...], preferred_element_type=jnp.float32)
        + b_ref[...]).astype(jnp.bfloat16)

    # ---- Stage 2: recurrence — h (bf16) / c (f32) carried in vregs; only
    #      h @ W_hh + elementwise gate math per step. ----
    whh = whh_ref[...]                                  # hoisted, bf16

    def step(t, carry):
        h, c = carry                                    # h bf16 (B,Hp), c f32 (B,Hp)
        row = pl.multiple_of(t * B, B)
        gates = gx_ref[pl.ds(row, B), :] + jnp.dot(
            h, whh, preferred_element_type=jnp.float32)
        # PyTorch LSTM gate order: i, f, g, o — each slice lane-aligned (Hp%128==0)
        i_g = jax.nn.sigmoid(gates[:, 0 * Hp:1 * Hp])
        f_g = jax.nn.sigmoid(gates[:, 1 * Hp:2 * Hp])
        g_g = jnp.tanh(gates[:, 2 * Hp:3 * Hp])
        o_g = jax.nn.sigmoid(gates[:, 3 * Hp:4 * Hp])
        c_new = f_g * c + i_g * g_g
        h_new = (o_g * jnp.tanh(c_new)).astype(jnp.bfloat16)
        hall_ref[pl.ds(row, B), :] = h_new
        return (h_new, c_new)

    h_fin, c_fin = lax.fori_loop(0, t_blk, step, (h_ref[...], c_ref[...]),
                                 unroll=True)
    h_ref[...] = h_fin                                   # persist across grid steps
    c_ref[...] = c_fin

    # ---- Stage 3: one big output-projection matmul, then row-chunked masked
    #      cross-entropy so the exp/iota/select live set stays in vregs. ----
    logit_ref[...] = jnp.dot(hall_ref[...], wout_ref[...],
                             preferred_element_type=jnp.float32)   # (R, Vp) f32
    bout = bout_ref[...]
    n_chunks = R // ce_rows

    def ce_step(ci, carry):
        s_acc, n_acc = carry
        r = pl.multiple_of(ci * ce_rows, ce_rows)
        lg = logit_ref[pl.ds(r, ce_rows), :] + bout                # (rows, Vp)
        tgt = y_ref[pl.ds(r, ce_rows), :]                          # (rows, 1)
        m = jnp.max(lg, axis=-1, keepdims=True)
        lse = jnp.log(jnp.sum(jnp.exp(lg - m), axis=-1, keepdims=True)) + m
        onehot = lax.broadcasted_iota(jnp.int32, lg.shape, 1) == tgt
        tgt_logit = jnp.sum(jnp.where(onehot, lg, 0.0), axis=-1, keepdims=True)
        valid = (tgt != pad_id).astype(jnp.float32)
        s_acc = s_acc + jnp.sum((lse - tgt_logit) * valid, axis=0, keepdims=True)
        n_acc = n_acc + jnp.sum(valid, axis=0, keepdims=True)
        return (s_acc, n_acc)

    zero11 = jnp.zeros((1, 1), jnp.float32)
    s_blk, n_blk = lax.fori_loop(0, n_chunks, ce_step, (zero11, zero11))
    s_ref[...] += s_blk
    n_ref[...] += n_blk

    # Final masked mean only on the last grid step.
    @pl.when(pl.program_id(0) == pl.num_programs(0) - 1)
    def _finalize():
        # NOTE: if there are zero non-pad targets this is 0/0 = NaN, matching
        # PyTorch CrossEntropyLoss(ignore_index=...) with all targets ignored.
        loss_ref[...] = s_ref[...] / n_ref[...]


def language_model_loss(out_tokens, params, *, pad_id, t_blk=32):
    """out_tokens: (T, B) int32 time-major token ids. Returns scalar mean loss."""
    emb, w_ih, w_hh, b, w_out, b_out = params
    n_emb = emb.shape[1]
    n_enc = w_hh.shape[0]
    V = w_out.shape[1]

    T, B = out_tokens.shape
    T1 = T - 1
    out_prev = out_tokens[:-1, :]                                  # (T1, B)
    out_next = out_tokens[1:, :]                                   # (T1, B)

    # Pad batch to a multiple of 16 (bf16 sublane tile) with pad tokens; padded
    # rows are fully masked in the loss and never mix with real batch rows.
    Bp = _round_up(max(B, 1), 16)
    if Bp != B:
        out_prev = jnp.pad(out_prev, ((0, 0), (0, Bp - B)), constant_values=pad_id)
        out_next = jnp.pad(out_next, ((0, 0), (0, Bp - B)), constant_values=pad_id)

    # Choose the time block so R = t_blk*Bp fills the MXU, then pad T1 to a
    # multiple of it (padded targets = pad_id -> loss-inert, appended at the end
    # so real hidden states are untouched).
    t_blk = max(1, min(t_blk, T1))
    T1p = _round_up(T1, t_blk)
    if T1p != T1:
        out_prev = jnp.pad(out_prev, ((0, T1p - T1), (0, 0)), constant_values=pad_id)
        out_next = jnp.pad(out_next, ((0, T1p - T1), (0, 0)), constant_values=pad_id)
    R = t_blk * Bp
    ce_rows = 32 if R % 32 == 0 else 16                             # R % 16 == 0 always

    # Lane-align hidden and vocab dims (padding is mathematically inert:
    # padded hidden lanes stay exactly 0, padded vocab logits are -1e9).
    Hp = _round_up(n_enc, 128)
    Vp = _round_up(V, 128)

    def pad_gates(w):                   # (in, 4*n_enc) -> (in, 4*Hp)
        w4 = w.reshape(w.shape[0], 4, n_enc)
        w4 = jnp.pad(w4, ((0, 0), (0, 0), (0, Hp - n_enc)))
        return w4.reshape(w.shape[0], 4 * Hp)

    w_ih_p = pad_gates(w_ih).astype(jnp.bfloat16)
    w_hh_p = jnp.pad(pad_gates(w_hh), ((0, Hp - n_enc), (0, 0))).astype(jnp.bfloat16)
    b_p = pad_gates(b).astype(jnp.float32)
    w_out_p = jnp.pad(w_out, ((0, Hp - n_enc), (0, Vp - V))).astype(jnp.bfloat16)
    b_out_p = jnp.pad(b_out, ((0, 0), (0, Vp - V)),
                      constant_values=-1e9).astype(jnp.float32)

    # Embedding gather + time-major flatten: plain-JAX glue before the kernel.
    x_flat = emb.astype(jnp.bfloat16)[out_prev].reshape(T1p * Bp, n_emb)
    y_flat = out_next.reshape(T1p * Bp, 1).astype(jnp.int32)

    kernel = functools.partial(_lm_kernel, n_enc_p=Hp, batch=Bp,
                               t_blk=t_blk, ce_rows=ce_rows, pad_id=pad_id)

    def resident(shape):                # full-array block, fetched once
        return pl.BlockSpec(shape, lambda t: (0,) * len(shape))

    loss = pl.pallas_call(
        kernel,
        out_shape=jax.ShapeDtypeStruct((1, 1), jnp.float32),
        grid=(T1p // t_blk,),
        in_specs=[
            pl.BlockSpec((R, n_emb), lambda t: (t, 0)),   # x: streamed per block
            pl.BlockSpec((R, 1), lambda t: (t, 0)),       # targets: streamed
            resident((n_emb, 4 * Hp)),                    # W_ih
            resident((Hp, 4 * Hp)),                       # W_hh
            resident((1, 4 * Hp)),                        # b
            resident((Hp, Vp)),                           # W_out
            resident((1, Vp)),                            # b_out
        ],
        out_specs=pl.BlockSpec((1, 1), lambda t: (0, 0)),
        scratch_shapes=[
            pltpu.VMEM((R, 4 * Hp), jnp.bfloat16),        # gx (input-projected gates)
            pltpu.VMEM((R, Hp), jnp.bfloat16),            # h_all for batched proj
            pltpu.VMEM((R, Vp), jnp.float32),             # block logits
            pltpu.VMEM((Bp, Hp), jnp.bfloat16),           # h carry (across blocks)
            pltpu.VMEM((Bp, Hp), jnp.float32),            # c carry (across blocks)
            pltpu.VMEM((1, 1), jnp.float32),              # loss sum
            pltpu.VMEM((1, 1), jnp.float32),              # valid count
        ],
        compiler_params=pltpu.CompilerParams(
            dimension_semantics=("arbitrary",),           # sequential recurrence
            vmem_limit_bytes=32 * 1024 * 1024,
        ),
    )(x_flat, y_flat, w_ih_p, w_hh_p, b_p, w_out_p, b_out_p)
    return loss[0, 0]


def _reference_loss(out_tokens, params, *, pad_id):
    """Pure-JAX (f32) reference of the same forward pass (for verification)."""
    emb, w_ih, w_hh, b, w_out, b_out = params
    n_enc = w_hh.shape[0]
    out_prev = out_tokens[:-1, :]
    out_next = out_tokens[1:, :]
    x = emb[out_prev]                                    # (T1, B, n_emb)
    B = out_prev.shape[1]

    def step(carry, x_t):
        h, c = carry
        gates = x_t @ w_ih + h @ w_hh + b
        i = jax.nn.sigmoid(gates[:, 0 * n_enc:1 * n_enc])
        f = jax.nn.sigmoid(gates[:, 1 * n_enc:2 * n_enc])
        g = jnp.tanh(gates[:, 2 * n_enc:3 * n_enc])
        o = jax.nn.sigmoid(gates[:, 3 * n_enc:4 * n_enc])
        c = f * c + i * g
        h = o * jnp.tanh(c)
        return (h, c), h

    h0 = jnp.zeros((B, n_enc), jnp.float32)
    _, hs = jax.lax.scan(step, (h0, h0), x)
    logits = hs @ w_out + b_out                          # (T1, B, V)
    logits = logits.reshape(-1, logits.shape[-1])
    tgt = out_next.reshape(-1)
    logp = jax.nn.log_softmax(logits, axis=-1)
    nll = -jnp.take_along_axis(logp, tgt[:, None], axis=-1)[:, 0]
    valid = (tgt != pad_id).astype(jnp.float32)
    return jnp.sum(nll * valid) / jnp.sum(valid)


if __name__ == "__main__":
    # Small shapes consistent with the module: time-major tokens (T, B).
    # T1=48 and B=12 deliberately exercise both the batch padding (12 -> 16)
    # and the time padding (48 -> 64 with the default t_blk=32, grid of 2).
    T, B = 49, 12
    V = 250                # vocab size (padded to 256 inside the wrapper)
    n_emb, n_enc = 64, 96  # n_enc padded to 128 inside the wrapper
    pad_id = 0             # vocab.pad()

    key = jax.random.PRNGKey(0)
    k_tok, k_e, k_ih, k_hh, k_b, k_wo, k_bo = jax.random.split(key, 7)

    out_tokens = jax.random.randint(k_tok, (T, B), 0, V, dtype=jnp.int32)
    # sprinkle some pad tokens so ignore_index masking is exercised
    out_tokens = out_tokens.at[-2:, :3].set(pad_id)

    params = (
        0.1 * jax.random.normal(k_e, (V, n_emb), jnp.float32),          # embedding
        0.1 * jax.random.normal(k_ih, (n_emb, 4 * n_enc), jnp.float32), # W_ih^T
        0.1 * jax.random.normal(k_hh, (n_enc, 4 * n_enc), jnp.float32), # W_hh^T
        0.1 * jax.random.normal(k_b, (1, 4 * n_enc), jnp.float32),      # b_ih + b_hh
        0.1 * jax.random.normal(k_wo, (n_enc, V), jnp.float32),         # W_out^T
        0.1 * jax.random.normal(k_bo, (1, V), jnp.float32),             # b_out
    )

    loss_fn = jax.jit(functools.partial(language_model_loss, pad_id=pad_id))
    ref_fn = jax.jit(functools.partial(_reference_loss, pad_id=pad_id))

    loss = jax.block_until_ready(loss_fn(out_tokens, params))
    ref = jax.block_until_ready(ref_fn(out_tokens, params))

    # Kernel uses bf16 weights / activations / gate pre-activations with f32
    # accumulation -> small tolerance against the f32 reference.
    np.testing.assert_allclose(np.asarray(loss), np.asarray(ref), rtol=3e-2, atol=3e-2)
    print("KERNEL_OK")
</pallas_src>

<mosaic_0001>
module attributes {stable_mosaic.version = 11 : i64} {
  func.func @_lm_kernel(%arg0: i32, %arg1: memref<512x64xbf16, #tpu.memory_space<vmem>>, %arg2: memref<512x1xi32, #tpu.memory_space<vmem>>, %arg3: memref<64x512xbf16, #tpu.memory_space<vmem>>, %arg4: memref<128x512xbf16, #tpu.memory_space<vmem>>, %arg5: memref<1x512xf32, #tpu.memory_space<vmem>>, %arg6: memref<128x256xbf16, #tpu.memory_space<vmem>>, %arg7: memref<1x256xf32, #tpu.memory_space<vmem>>, %arg8: memref<1x1xf32, #tpu.memory_space<vmem>>, %arg9: memref<512x512xbf16, #tpu.memory_space<vmem>>, %arg10: memref<512x128xbf16, #tpu.memory_space<vmem>>, %arg11: memref<512x256xf32, #tpu.memory_space<vmem>>, %arg12: memref<16x128xbf16, #tpu.memory_space<vmem>>, %arg13: memref<16x128xf32, #tpu.memory_space<vmem>>, %arg14: memref<1x1xf32, #tpu.memory_space<vmem>>, %arg15: memref<1x1xf32, #tpu.memory_space<vmem>>) attributes {dimension_semantics = [#tpu.dimension_semantics<arbitrary>], iteration_bounds = array<i64: 2>, scalar_prefetch = 0 : i64, scratch_operands = 7 : i64, tpu.core_type = #tpu.core_type<tc>, window_params = [{transform_indices = @transform_0, window_bounds = array<i64: 512, 64>}, {transform_indices = @transform_1, window_bounds = array<i64: 512, 1>}, {pipeline_mode = #tpu.pipeline_mode<synchronous>, transform_indices = @transform_2, window_bounds = array<i64: 64, 512>}, {pipeline_mode = #tpu.pipeline_mode<synchronous>, transform_indices = @transform_3, window_bounds = array<i64: 128, 512>}, {pipeline_mode = #tpu.pipeline_mode<synchronous>, transform_indices = @transform_4, window_bounds = array<i64: 1, 512>}, {pipeline_mode = #tpu.pipeline_mode<synchronous>, transform_indices = @transform_5, window_bounds = array<i64: 128, 256>}, {pipeline_mode = #tpu.pipeline_mode<synchronous>, transform_indices = @transform_6, window_bounds = array<i64: 1, 256>}, {pipeline_mode = #tpu.pipeline_mode<synchronous>, transform_indices = @transform_7, window_bounds = array<i64: 1, 1>}]} {
    %c0_i32 = arith.constant 0 : i32
    %0 = arith.cmpi eq, %arg0, %c0_i32 : i32
    %1 = arith.extui %0 : i1 to i32
    %c0_i32_0 = arith.constant 0 : i32
    %2 = arith.cmpi ne, %1, %c0_i32_0 : i32
    scf.if %2 {
      %cst_267 = arith.constant 0.000000e+00 : bf16
      %1153 = vector.broadcast %cst_267 : bf16 to vector<16x128xbf16>
      %c0_268 = arith.constant 0 : index
      %c0_269 = arith.constant 0 : index
      %1154 = vector.load %arg12[%c0_268, %c0_269] : memref<16x128xbf16, #tpu.memory_space<vmem>>, vector<16x128xbf16>
      tpu.vector_store %arg12[%c0_268, %c0_269], %1153 {strides = array<i32>} : memref<16x128xbf16, #tpu.memory_space<vmem>>, vector<16x128xbf16>,
      %cst_270 = arith.constant 0.000000e+00 : f32
      %1155 = vector.broadcast %cst_270 : f32 to vector<16x128xf32>
      %c0_271 = arith.constant 0 : index
      %c0_272 = arith.constant 0 : index
      %1156 = vector.load %arg13[%c0_271, %c0_272] : memref<16x128xf32, #tpu.memory_space<vmem>>, vector<16x128xf32>
      tpu.vector_store %arg13[%c0_271, %c0_272], %1155 {strides = array<i32>} : memref<16x128xf32, #tpu.memory_space<vmem>>, vector<16x128xf32>,
      %cst_273 = arith.constant 0.000000e+00 : f32
      %1157 = vector.broadcast %cst_273 : f32 to vector<1x1xf32>
      %c0_274 = arith.constant 0 : index
      %c0_275 = arith.constant 0 : index
      %1158 = vector.load %arg14[%c0_274, %c0_275] : memref<1x1xf32, #tpu.memory_space<vmem>>, vector<1x1xf32>
      tpu.vector_store %arg14[%c0_274, %c0_275], %1157 {strides = array<i32>} : memref<1x1xf32, #tpu.memory_space<vmem>>, vector<1x1xf32>,
      %cst_276 = arith.constant 0.000000e+00 : f32
      %1159 = vector.broadcast %cst_276 : f32 to vector<1x1xf32>
      %c0_277 = arith.constant 0 : index
      %c0_278 = arith.constant 0 : index
      %1160 = vector.load %arg15[%c0_277, %c0_278] : memref<1x1xf32, #tpu.memory_space<vmem>>, vector<1x1xf32>
      tpu.vector_store %arg15[%c0_277, %c0_278], %1159 {strides = array<i32>} : memref<1x1xf32, #tpu.memory_space<vmem>>, vector<1x1xf32>,
    } else {
    }
    %c0 = arith.constant 0 : index
    %c0_1 = arith.constant 0 : index
    %3 = vector.load %arg1[%c0, %c0_1] : memref<512x64xbf16, #tpu.memory_space<vmem>>, vector<512x64xbf16>
    %c0_2 = arith.constant 0 : index
    %c0_3 = arith.constant 0 : index
    %4 = vector.load %arg3[%c0_2, %c0_3] : memref<64x512xbf16, #tpu.memory_space<vmem>>, vector<64x512xbf16>
    %cst = arith.constant dense<0.000000e+00> : vector<512x512xf32>
    %5 = tpu.matmul %3, %4, %cst {dimension_numbers = #tpu.dot_dimension_numbers<[1], [0], [0], [1], [0, 0, 1, 1], [], []>} : vector<512x64xbf16>, vector<64x512xbf16>, vector<512x512xf32> -> vector<512x512xf32>
    %c0_4 = arith.constant 0 : index
    %c0_5 = arith.constant 0 : index
    %6 = vector.load %arg5[%c0_4, %c0_5] : memref<1x512xf32, #tpu.memory_space<vmem>>, vector<1x512xf32>
    %7 = vector.broadcast %6 : vector<1x512xf32> to vector<512x512xf32>
    %8 = arith.addf %5, %7 : vector<512x512xf32>
    %9 = arith.truncf %8 : vector<512x512xf32> to vector<512x512xbf16>
    %c0_6 = arith.constant 0 : index
    %c0_7 = arith.constant 0 : index
    %10 = vector.load %arg9[%c0_6, %c0_7] : memref<512x512xbf16, #tpu.memory_space<vmem>>, vector<512x512xbf16>
    tpu.vector_store %arg9[%c0_6, %c0_7], %9 {strides = array<i32>} : memref<512x512xbf16, #tpu.memory_space<vmem>>, vector<512x512xbf16>,
    %c0_8 = arith.constant 0 : index
    %c0_9 = arith.constant 0 : index
    %11 = vector.load %arg4[%c0_8, %c0_9] : memref<128x512xbf16, #tpu.memory_space<vmem>>, vector<128x512xbf16>
    %c0_10 = arith.constant 0 : index
    %c0_11 = arith.constant 0 : index
    %12 = vector.load %arg12[%c0_10, %c0_11] : memref<16x128xbf16, #tpu.memory_space<vmem>>, vector<16x128xbf16>
    %c0_12 = arith.constant 0 : index
    %c0_13 = arith.constant 0 : index
    %13 = vector.load %arg13[%c0_12, %c0_13] : memref<16x128xf32, #tpu.memory_space<vmem>>, vector<16x128xf32>
    %c0_i32_14 = arith.constant 0 : i32
    %c16_i32 = arith.constant 16 : i32
    %14 = arith.muli %c0_i32_14, %c16_i32 : i32
    %15 = tpu.assume_multiple %14, 16 : i32
    %16 = arith.index_cast %15 : i32 to index
    %c0_15 = arith.constant 0 : index
    %17 = vector.load %arg9[%16, %c0_15] : memref<512x512xbf16, #tpu.memory_space<vmem>>, vector<16x512xbf16>
    %cst_16 = arith.constant dense<0.000000e+00> : vector<16x512xf32>
    %18 = tpu.matmul %12, %11, %cst_16 {dimension_numbers = #tpu.dot_dimension_numbers<[1], [0], [0], [1], [0, 0, 1, 1], [], []>} : vector<16x128xbf16>, vector<128x512xbf16>, vector<16x512xf32> -> vector<16x512xf32>
    %19 = arith.extf %17 : vector<16x512xbf16> to vector<16x512xf32>
    %20 = arith.addf %19, %18 : vector<16x512xf32>
    %21 = vector.extract_strided_slice %20 {offsets = [0, 0], sizes = [16, 128], strides = [1, 1]} : vector<16x512xf32> to vector<16x128xf32>
    %22 = arith.negf %21 : vector<16x128xf32>
    %23 = math.exp %22 : vector<16x128xf32>
    %cst_17 = arith.constant 1.000000e+00 : f32
    %24 = vector.broadcast %cst_17 : f32 to vector<16x128xf32>
    %25 = arith.addf %24, %23 : vector<16x128xf32>
    %26 = arith.divf %24, %25 : vector<16x128xf32>
    %27 = vector.extract_strided_slice %20 {offsets = [0, 128], sizes = [16, 128], strides = [1, 1]} : vector<16x512xf32> to vector<16x128xf32>
    %28 = arith.negf %27 : vector<16x128xf32>
    %29 = math.exp %28 : vector<16x128xf32>
    %cst_18 = arith.constant 1.000000e+00 : f32
    %30 = vector.broadcast %cst_18 : f32 to vector<16x128xf32>
    %31 = arith.addf %30, %29 : vector<16x128xf32>
    %32 = arith.divf %30, %31 : vector<16x128xf32>
    %33 = vector.extract_strided_slice %20 {offsets = [0, 256], sizes = [16, 128], strides = [1, 1]} : vector<16x512xf32> to vector<16x128xf32>
    %34 = math.tanh %33 : vector<16x128xf32>
    %35 = vector.extract_strided_slice %20 {offsets = [0, 384], sizes = [16, 128], strides = [1, 1]} : vector<16x512xf32> to vector<16x128xf32>
    %36 = arith.negf %35 : vector<16x128xf32>
    %37 = math.exp %36 : vector<16x128xf32>
    %cst_19 = arith.constant 1.000000e+00 : f32
    %38 = vector.broadcast %cst_19 : f32 to vector<16x128xf32>
    %39 = arith.addf %38, %37 : vector<16x128xf32>
    %40 = arith.divf %38, %39 : vector<16x128xf32>
    %41 = arith.mulf %32, %13 : vector<16x128xf32>
    %42 = arith.mulf %26, %34 : vector<16x128xf32>
    %43 = arith.addf %41, %42 : vector<16x128xf32>
    %44 = math.tanh %43 : vector<16x128xf32>
    %45 = arith.mulf %40, %44 : vector<16x128xf32>
    %46 = arith.truncf %45 : vector<16x128xf32> to vector<16x128xbf16>
    %47 = arith.index_cast %15 : i32 to index
    %c0_20 = arith.constant 0 : index
    %48 = vector.load %arg10[%47, %c0_20] : memref<512x128xbf16, #tpu.memory_space<vmem>>, vector<16x128xbf16>
    tpu.vector_store %arg10[%47, %c0_20], %46 {strides = array<i32>} : memref<512x128xbf16, #tpu.memory_space<vmem>>, vector<16x128xbf16>,
    %c1_i32 = arith.constant 1 : i32
    %c16_i32_21 = arith.constant 16 : i32
    %49 = arith.muli %c1_i32, %c16_i32_21 : i32
    %50 = tpu.assume_multiple %49, 16 : i32
    %51 = arith.index_cast %50 : i32 to index
    %c0_22 = arith.constant 0 : index
    %52 = vector.load %arg9[%51, %c0_22] : memref<512x512xbf16, #tpu.memory_space<vmem>>, vector<16x512xbf16>
    %cst_23 = arith.constant dense<0.000000e+00> : vector<16x512xf32>
    %53 = tpu.matmul %46, %11, %cst_23 {dimension_numbers = #tpu.dot_dimension_numbers<[1], [0], [0], [1], [0, 0, 1, 1], [], []>} : vector<16x128xbf16>, vector<128x512xbf16>, vector<16x512xf32> -> vector<16x512xf32>
    %54 = arith.extf %52 : vector<16x512xbf16> to vector<16x512xf32>
    %55 = arith.addf %54, %53 : vector<16x512xf32>
    %56 = vector.extract_strided_slice %55 {offsets = [0, 0], sizes = [16, 128], strides = [1, 1]} : vector<16x512xf32> to vector<16x128xf32>
    %57 = arith.negf %56 : vector<16x128xf32>
    %58 = math.exp %57 : vector<16x128xf32>
    %cst_24 = arith.constant 1.000000e+00 : f32
    %59 = vector.broadcast %cst_24 : f32 to vector<16x128xf32>
    %60 = arith.addf %59, %58 : vector<16x128xf32>
    %61 = arith.divf %59, %60 : vector<16x128xf32>
    %62 = vector.extract_strided_slice %55 {offsets = [0, 128], sizes = [16, 128], strides = [1, 1]} : vector<16x512xf32> to vector<16x128xf32>
    %63 = arith.negf %62 : vector<16x128xf32>
    %64 = math.exp %63 : vector<16x128xf32>
    %cst_25 = arith.constant 1.000000e+00 : f32
    %65 = vector.broadcast %cst_25 : f32 to vector<16x128xf32>
    %66 = arith.addf %65, %64 : vector<16x128xf32>
    %67 = arith.divf %65, %66 : vector<16x128xf32>
    %68 = vector.extract_strided_slice %55 {offsets = [0, 256], sizes = [16, 128], strides = [1, 1]} : vector<16x512xf32> to vector<16x128xf32>
    %69 = math.tanh %68 : vector<16x128xf32>
    %70 = vector.extract_strided_slice %55 {offsets = [0, 384], sizes = [16, 128], strides = [1, 1]} : vector<16x512xf32> to vector<16x128xf32>
    %71 = arith.negf %70 : vector<16x128xf32>
    %72 = math.exp %71 : vector<16x128xf32>
    %cst_26 = arith.constant 1.000000e+00 : f32
    %73 = vector.broadcast %cst_26 : f32 to vector<16x128xf32>
    %74 = arith.addf %73, %72 : vector<16x128xf32>
    %75 = arith.divf %73, %74 : vector<16x128xf32>
    %76 = arith.mulf %67, %43 : vector<16x128xf32>
    %77 = arith.mulf %61, %69 : vector<16x128xf32>
    %78 = arith.addf %76, %77 : vector<16x128xf32>
    %79 = math.tanh %78 : vector<16x128xf32>
    %80 = arith.mulf %75, %79 : vector<16x128xf32>
    %81 = arith.truncf %80 : vector<16x128xf32> to vector<16x128xbf16>
    %82 = arith.index_cast %50 : i32 to index
    %c0_27 = arith.constant 0 : index
    %83 = vector.load %arg10[%82, %c0_27] : memref<512x128xbf16, #tpu.memory_space<vmem>>, vector<16x128xbf16>
    tpu.vector_store %arg10[%82, %c0_27], %81 {strides = array<i32>} : memref<512x128xbf16, #tpu.memory_space<vmem>>, vector<16x128xbf16>,
    %c2_i32 = arith.constant 2 : i32
    %c16_i32_28 = arith.constant 16 : i32
    %84 = arith.muli %c2_i32, %c16_i32_28 : i32
    %85 = tpu.assume_multiple %84, 16 : i32
    %86 = arith.index_cast %85 : i32 to index
    %c0_29 = arith.constant 0 : index
    %87 = vector.load %arg9[%86, %c0_29] : memref<512x512xbf16, #tpu.memory_space<vmem>>, vector<16x512xbf16>
    %cst_30 = arith.constant dense<0.000000e+00> : vector<16x512xf32>
    %88 = tpu.matmul %81, %11, %cst_30 {dimension_numbers = #tpu.dot_dimension_numbers<[1], [0], [0], [1], [0, 0, 1, 1], [], []>} : vector<16x128xbf16>, vector<128x512xbf16>, vector<16x512xf32> -> vector<16x512xf32>
    %89 = arith.extf %87 : vector<16x512xbf16> to vector<16x512xf32>
    %90 = arith.addf %89, %88 : vector<16x512xf32>
    %91 = vector.extract_strided_slice %90 {offsets = [0, 0], sizes = [16, 128], strides = [1, 1]} : vector<16x512xf32> to vector<16x128xf32>
    %92 = arith.negf %91 : vector<16x128xf32>
    %93 = math.exp %92 : vector<16x128xf32>
    %cst_31 = arith.constant 1.000000e+00 : f32
    %94 = vector.broadcast %cst_31 : f32 to vector<16x128xf32>
    %95 = arith.addf %94, %93 : vector<16x128xf32>
    %96 = arith.divf %94, %95 : vector<16x128xf32>
    %97 = vector.extract_strided_slice %90 {offsets = [0, 128], sizes = [16, 128], strides = [1, 1]} : vector<16x512xf32> to vector<16x128xf32>
    %98 = arith.negf %97 : vector<16x128xf32>
    %99 = math.exp %98 : vector<16x128xf32>
    %cst_32 = arith.constant 1.000000e+00 : f32
    %100 = vector.broadcast %cst_32 : f32 to vector<16x128xf32>
    %101 = arith.addf %100, %99 : vector<16x128xf32>
    %102 = arith.divf %100, %101 : vector<16x128xf32>
    %103 = vector.extract_strided_slice %90 {offsets = [0, 256], sizes = [16, 128], strides = [1, 1]} : vector<16x512xf32> to vector<16x128xf32>
    %104 = math.tanh %103 : vector<16x128xf32>
    %105 = vector.extract_strided_slice %90 {offsets = [0, 384], sizes = [16, 128], strides = [1, 1]} : vector<16x512xf32> to vector<16x128xf32>
    %106 = arith.negf %105 : vector<16x128xf32>
    %107 = math.exp %106 : vector<16x128xf32>
    %cst_33 = arith.constant 1.000000e+00 : f32
    %108 = vector.broadcast %cst_33 : f32 to vector<16x128xf32>
    %109 = arith.addf %108, %107 : vector<16x128xf32>
    %110 = arith.divf %108, %109 : vector<16x128xf32>
    %111 = arith.mulf %102, %78 : vector<16x128xf32>
    %112 = arith.mulf %96, %104 : vector<16x128xf32>
    %113 = arith.addf %111, %112 : vector<16x128xf32>
    %114 = math.tanh %113 : vector<16x128xf32>
    %115 = arith.mulf %110, %114 : vector<16x128xf32>
    %116 = arith.truncf %115 : vector<16x128xf32> to vector<16x128xbf16>
    %117 = arith.index_cast %85 : i32 to index
    %c0_34 = arith.constant 0 : index
    %118 = vector.load %arg10[%117, %c0_34] : memref<512x128xbf16, #tpu.memory_space<vmem>>, vector<16x128xbf16>
    tpu.vector_store %arg10[%117, %c0_34], %116 {strides = array<i32>} : memref<512x128xbf16, #tpu.memory_space<vmem>>, vector<16x128xbf16>,
    %c3_i32 = arith.constant 3 : i32
    %c16_i32_35 = arith.constant 16 : i32
    %119 = arith.muli %c3_i32, %c16_i32_35 : i32
    %120 = tpu.assume_multiple %119, 16 : i32
    %121 = arith.index_cast %120 : i32 to index
    %c0_36 = arith.constant 0 : index
    %122 = vector.load %arg9[%121, %c0_36] : memref<512x512xbf16, #tpu.memory_space<vmem>>, vector<16x512xbf16>
    %cst_37 = arith.constant dense<0.000000e+00> : vector<16x512xf32>
    %123 = tpu.matmul %116, %11, %cst_37 {dimension_numbers = #tpu.dot_dimension_numbers<[1], [0], [0], [1], [0, 0, 1, 1], [], []>} : vector<16x128xbf16>, vector<128x512xbf16>, vector<16x512xf32> -> vector<16x512xf32>
    %124 = arith.extf %122 : vector<16x512xbf16> to vector<16x512xf32>
    %125 = arith.addf %124, %123 : vector<16x512xf32>
    %126 = vector.extract_strided_slice %125 {offsets = [0, 0], sizes = [16, 128], strides = [1, 1]} : vector<16x512xf32> to vector<16x128xf32>
    %127 = arith.negf %126 : vector<16x128xf32>
    %128 = math.exp %127 : vector<16x128xf32>
    %cst_38 = arith.constant 1.000000e+00 : f32
    %129 = vector.broadcast %cst_38 : f32 to vector<16x128xf32>
    %130 = arith.addf %129, %128 : vector<16x128xf32>
    %131 = arith.divf %129, %130 : vector<16x128xf32>
    %132 = vector.extract_strided_slice %125 {offsets = [0, 128], sizes = [16, 128], strides = [1, 1]} : vector<16x512xf32> to vector<16x128xf32>
    %133 = arith.negf %132 : vector<16x128xf32>
    %134 = math.exp %133 : vector<16x128xf32>
    %cst_39 = arith.constant 1.000000e+00 : f32
    %135 = vector.broadcast %cst_39 : f32 to vector<16x128xf32>
    %136 = arith.addf %135, %134 : vector<16x128xf32>
    %137 = arith.divf %135, %136 : vector<16x128xf32>
    %138 = vector.extract_strided_slice %125 {offsets = [0, 256], sizes = [16, 128], strides = [1, 1]} : vector<16x512xf32> to vector<16x128xf32>
    %139 = math.tanh %138 : vector<16x128xf32>
    %140 = vector.extract_strided_slice %125 {offsets = [0, 384], sizes = [16, 128], strides = [1, 1]} : vector<16x512xf32> to vector<16x128xf32>
    %141 = arith.negf %140 : vector<16x128xf32>
    %142 = math.exp %141 : vector<16x128xf32>
    %cst_40 = arith.constant 1.000000e+00 : f32
    %143 = vector.broadcast %cst_40 : f32 to vector<16x128xf32>
    %144 = arith.addf %143, %142 : vector<16x128xf32>
    %145 = arith.divf %143, %144 : vector<16x128xf32>
    %146 = arith.mulf %137, %113 : vector<16x128xf32>
    %147 = arith.mulf %131, %139 : vector<16x128xf32>
    %148 = arith.addf %146, %147 : vector<16x128xf32>
    %149 = math.tanh %148 : vector<16x128xf32>
    %150 = arith.mulf %145, %149 : vector<16x128xf32>
    %151 = arith.truncf %150 : vector<16x128xf32> to vector<16x128xbf16>
    %152 = arith.index_cast %120 : i32 to index
    %c0_41 = arith.constant 0 : index
    %153 = vector.load %arg10[%152, %c0_41] : memref<512x128xbf16, #tpu.memory_space<vmem>>, vector<16x128xbf16>
    tpu.vector_store %arg10[%152, %c0_41], %151 {strides = array<i32>} : memref<512x128xbf16, #tpu.memory_space<vmem>>, vector<16x128xbf16>,
    %c4_i32 = arith.constant 4 : i32
    %c16_i32_42 = arith.constant 16 : i32
    %154 = arith.muli %c4_i32, %c16_i32_42 : i32
    %155 = tpu.assume_multiple %154, 16 : i32
    %156 = arith.index_cast %155 : i32 to index
    %c0_43 = arith.constant 0 : index
    %157 = vector.load %arg9[%156, %c0_43] : memref<512x512xbf16, #tpu.memory_space<vmem>>, vector<16x512xbf16>
    %cst_44 = arith.constant dense<0.000000e+00> : vector<16x512xf32>
    %158 = tpu.matmul %151, %11, %cst_44 {dimension_numbers = #tpu.dot_dimension_numbers<[1], [0], [0], [1], [0, 0, 1, 1], [], []>} : vector<16x128xbf16>, vector<128x512xbf16>, vector<16x512xf32> -> vector<16x512xf32>
    %159 = arith.extf %157 : vector<16x512xbf16> to vector<16x512xf32>
    %160 = arith.addf %159, %158 : vector<16x512xf32>
    %161 = vector.extract_strided_slice %160 {offsets = [0, 0], sizes = [16, 128], strides = [1, 1]} : vector<16x512xf32> to vector<16x128xf32>
    %162 = arith.negf %161 : vector<16x128xf32>
    %163 = math.exp %162 : vector<16x128xf32>
    %cst_45 = arith.constant 1.000000e+00 : f32
    %164 = vector.broadcast %cst_45 : f32 to vector<16x128xf32>
    %165 = arith.addf %164, %163 : vector<16x128xf32>
    %166 = arith.divf %164, %165 : vector<16x128xf32>
    %167 = vector.extract_strided_slice %160 {offsets = [0, 128], sizes = [16, 128], strides = [1, 1]} : vector<16x512xf32> to vector<16x128xf32>
    %168 = arith.negf %167 : vector<16x128xf32>
    %169 = math.exp %168 : vector<16x128xf32>
    %cst_46 = arith.constant 1.000000e+00 : f32
    %170 = vector.broadcast %cst_46 : f32 to vector<16x128xf32>
    %171 = arith.addf %170, %169 : vector<16x128xf32>
    %172 = arith.divf %170, %171 : vector<16x128xf32>
    %173 = vector.extract_strided_slice %160 {offsets = [0, 256], sizes = [16, 128], strides = [1, 1]} : vector<16x512xf32> to vector<16x128xf32>
    %174 = math.tanh %173 : vector<16x128xf32>
    %175 = vector.extract_strided_slice %160 {offsets = [0, 384], sizes = [16, 128], strides = [1, 1]} : vector<16x512xf32> to vector<16x128xf32>
    %176 = arith.negf %175 : vector<16x128xf32>
    %177 = math.exp %176 : vector<16x128xf32>
    %cst_47 = arith.constant 1.000000e+00 : f32
    %178 = vector.broadcast %cst_47 : f32 to vector<16x128xf32>
    %179 = arith.addf %178, %177 : vector<16x128xf32>
    %180 = arith.divf %178, %179 : vector<16x128xf32>
    %181 = arith.mulf %172, %148 : vector<16x128xf32>
    %182 = arith.mulf %166, %174 : vector<16x128xf32>
    %183 = arith.addf %181, %182 : vector<16x128xf32>
    %184 = math.tanh %183 : vector<16x128xf32>
    %185 = arith.mulf %180, %184 : vector<16x128xf32>
    %186 = arith.truncf %185 : vector<16x128xf32> to vector<16x128xbf16>
    %187 = arith.index_cast %155 : i32 to index
    %c0_48 = arith.constant 0 : index
    %188 = vector.load %arg10[%187, %c0_48] : memref<512x128xbf16, #tpu.memory_space<vmem>>, vector<16x128xbf16>
    tpu.vector_store %arg10[%187, %c0_48], %186 {strides = array<i32>} : memref<512x128xbf16, #tpu.memory_space<vmem>>, vector<16x128xbf16>,
    %c5_i32 = arith.constant 5 : i32
    %c16_i32_49 = arith.constant 16 : i32
    %189 = arith.muli %c5_i32, %c16_i32_49 : i32
    %190 = tpu.assume_multiple %189, 16 : i32
    %191 = arith.index_cast %190 : i32 to index
    %c0_50 = arith.constant 0 : index
    %192 = vector.load %arg9[%191, %c0_50] : memref<512x512xbf16, #tpu.memory_space<vmem>>, vector<16x512xbf16>
    %cst_51 = arith.constant dense<0.000000e+00> : vector<16x512xf32>
    %193 = tpu.matmul %186, %11, %cst_51 {dimension_numbers = #tpu.dot_dimension_numbers<[1], [0], [0], [1], [0, 0, 1, 1], [], []>} : vector<16x128xbf16>, vector<128x512xbf16>, vector<16x512xf32> -> vector<16x512xf32>
    %194 = arith.extf %192 : vector<16x512xbf16> to vector<16x512xf32>
    %195 = arith.addf %194, %193 : vector<16x512xf32>
    %196 = vector.extract_strided_slice %195 {offsets = [0, 0], sizes = [16, 128], strides = [1, 1]} : vector<16x512xf32> to vector<16x128xf32>
    %197 = arith.negf %196 : vector<16x128xf32>
    %198 = math.exp %197 : vector<16x128xf32>
    %cst_52 = arith.constant 1.000000e+00 : f32
    %199 = vector.broadcast %cst_52 : f32 to vector<16x128xf32>
    %200 = arith.addf %199, %198 : vector<16x128xf32>
    %201 = arith.divf %199, %200 : vector<16x128xf32>
    %202 = vector.extract_strided_slice %195 {offsets = [0, 128], sizes = [16, 128], strides = [1, 1]} : vector<16x512xf32> to vector<16x128xf32>
    %203 = arith.negf %202 : vector<16x128xf32>
    %204 = math.exp %203 : vector<16x128xf32>
    %cst_53 = arith.constant 1.000000e+00 : f32
    %205 = vector.broadcast %cst_53 : f32 to vector<16x128xf32>
    %206 = arith.addf %205, %204 : vector<16x128xf32>
    %207 = arith.divf %205, %206 : vector<16x128xf32>
    %208 = vector.extract_strided_slice %195 {offsets = [0, 256], sizes = [16, 128], strides = [1, 1]} : vector<16x512xf32> to vector<16x128xf32>
    %209 = math.tanh %208 : vector<16x128xf32>
    %210 = vector.extract_strided_slice %195 {offsets = [0, 384], sizes = [16, 128], strides = [1, 1]} : vector<16x512xf32> to vector<16x128xf32>
    %211 = arith.negf %210 : vector<16x128xf32>
    %212 = math.exp %211 : vector<16x128xf32>
    %cst_54 = arith.constant 1.000000e+00 : f32
    %213 = vector.broadcast %cst_54 : f32 to vector<16x128xf32>
    %214 = arith.addf %213, %212 : vector<16x128xf32>
    %215 = arith.divf %213, %214 : vector<16x128xf32>
    %216 = arith.mulf %207, %183 : vector<16x128xf32>
    %217 = arith.mulf %201, %209 : vector<16x128xf32>
    %218 = arith.addf %216, %217 : vector<16x128xf32>
    %219 = math.tanh %218 : vector<16x128xf32>
    %220 = arith.mulf %215, %219 : vector<16x128xf32>
    %221 = arith.truncf %220 : vector<16x128xf32> to vector<16x128xbf16>
    %222 = arith.index_cast %190 : i32 to index
    %c0_55 = arith.constant 0 : index
    %223 = vector.load %arg10[%222, %c0_55] : memref<512x128xbf16, #tpu.memory_space<vmem>>, vector<16x128xbf16>
    tpu.vector_store %arg10[%222, %c0_55], %221 {strides = array<i32>} : memref<512x128xbf16, #tpu.memory_space<vmem>>, vector<16x128xbf16>,
    %c6_i32 = arith.constant 6 : i32
    %c16_i32_56 = arith.constant 16 : i32
    %224 = arith.muli %c6_i32, %c16_i32_56 : i32
    %225 = tpu.assume_multiple %224, 16 : i32
    %226 = arith.index_cast %225 : i32 to index
    %c0_57 = arith.constant 0 : index
    %227 = vector.load %arg9[%226, %c0_57] : memref<512x512xbf16, #tpu.memory_space<vmem>>, vector<16x512xbf16>
    %cst_58 = arith.constant dense<0.000000e+00> : vector<16x512xf32>
    %228 = tpu.matmul %221, %11, %cst_58 {dimension_numbers = #tpu.dot_dimension_numbers<[1], [0], [0], [1], [0, 0, 1, 1], [], []>} : vector<16x128xbf16>, vector<128x512xbf16>, vector<16x512xf32> -> vector<16x512xf32>
    %229 = arith.extf %227 : vector<16x512xbf16> to vector<16x512xf32>
    %230 = arith.addf %229, %228 : vector<16x512xf32>
    %231 = vector.extract_strided_slice %230 {offsets = [0, 0], sizes = [16, 128], strides = [1, 1]} : vector<16x512xf32> to vector<16x128xf32>
    %232 = arith.negf %231 : vector<16x128xf32>
    %233 = math.exp %232 : vector<16x128xf32>
    %cst_59 = arith.constant 1.000000e+00 : f32
    %234 = vector.broadcast %cst_59 : f32 to vector<16x128xf32>
    %235 = arith.addf %234, %233 : vector<16x128xf32>
    %236 = arith.divf %234, %235 : vector<16x128xf32>
    %237 = vector.extract_strided_slice %230 {offsets = [0, 128], sizes = [16, 128], strides = [1, 1]} : vector<16x512xf32> to vector<16x128xf32>
    %238 = arith.negf %237 : vector<16x128xf32>
    %239 = math.exp %238 : vector<16x128xf32>
    %cst_60 = arith.constant 1.000000e+00 : f32
    %240 = vector.broadcast %cst_60 : f32 to vector<16x128xf32>
    %241 = arith.addf %240, %239 : vector<16x128xf32>
    %242 = arith.divf %240, %241 : vector<16x128xf32>
    %243 = vector.extract_strided_slice %230 {offsets = [0, 256], sizes = [16, 128], strides = [1, 1]} : vector<16x512xf32> to vector<16x128xf32>
    %244 = math.tanh %243 : vector<16x128xf32>
    %245 = vector.extract_strided_slice %230 {offsets = [0, 384], sizes = [16, 128], strides = [1, 1]} : vector<16x512xf32> to vector<16x128xf32>
    %246 = arith.negf %245 : vector<16x128xf32>
    %247 = math.exp %246 : vector<16x128xf32>
    %cst_61 = arith.constant 1.000000e+00 : f32
    %248 = vector.broadcast %cst_61 : f32 to vector<16x128xf32>
    %249 = arith.addf %248, %247 : vector<16x128xf32>
    %250 = arith.divf %248, %249 : vector<16x128xf32>
    %251 = arith.mulf %242, %218 : vector<16x128xf32>
    %252 = arith.mulf %236, %244 : vector<16x128xf32>
    %253 = arith.addf %251, %252 : vector<16x128xf32>
    %254 = math.tanh %253 : vector<16x128xf32>
    %255 = arith.mulf %250, %254 : vector<16x128xf32>
    %256 = arith.truncf %255 : vector<16x128xf32> to vector<16x128xbf16>
    %257 = arith.index_cast %225 : i32 to index
    %c0_62 = arith.constant 0 : index
    %258 = vector.load %arg10[%257, %c0_62] : memref<512x128xbf16, #tpu.memory_space<vmem>>, vector<16x128xbf16>
    tpu.vector_store %arg10[%257, %c0_62], %256 {strides = array<i32>} : memref<512x128xbf16, #tpu.memory_space<vmem>>, vector<16x128xbf16>,
    %c7_i32 = arith.constant 7 : i32
    %c16_i32_63 = arith.constant 16 : i32
    %259 = arith.muli %c7_i32, %c16_i32_63 : i32
    %260 = tpu.assume_multiple %259, 16 : i32
    %261 = arith.index_cast %260 : i32 to index
    %c0_64 = arith.constant 0 : index
    %262 = vector.load %arg9[%261, %c0_64] : memref<512x512xbf16, #tpu.memory_space<vmem>>, vector<16x512xbf16>
    %cst_65 = arith.constant dense<0.000000e+00> : vector<16x512xf32>
    %263 = tpu.matmul %256, %11, %cst_65 {dimension_numbers = #tpu.dot_dimension_numbers<[1], [0], [0], [1], [0, 0, 1, 1], [], []>} : vector<16x128xbf16>, vector<128x512xbf16>, vector<16x512xf32> -> vector<16x512xf32>
    %264 = arith.extf %262 : vector<16x512xbf16> to vector<16x512xf32>
    %265 = arith.addf %264, %263 : vector<16x512xf32>
    %266 = vector.extract_strided_slice %265 {offsets = [0, 0], sizes = [16, 128], strides = [1, 1]} : vector<16x512xf32> to vector<16x128xf32>
    %267 = arith.negf %266 : vector<16x128xf32>
    %268 = math.exp %267 : vector<16x128xf32>
    %cst_66 = arith.constant 1.000000e+00 : f32
    %269 = vector.broadcast %cst_66 : f32 to vector<16x128xf32>
    %270 = arith.addf %269, %268 : vector<16x128xf32>
    %271 = arith.divf %269, %270 : vector<16x128xf32>
    %272 = vector.extract_strided_slice %265 {offsets = [0, 128], sizes = [16, 128], strides = [1, 1]} : vector<16x512xf32> to vector<16x128xf32>
    %273 = arith.negf %272 : vector<16x128xf32>
    %274 = math.exp %273 : vector<16x128xf32>
    %cst_67 = arith.constant 1.000000e+00 : f32
    %275 = vector.broadcast %cst_67 : f32 to vector<16x128xf32>
    %276 = arith.addf %275, %274 : vector<16x128xf32>
    %277 = arith.divf %275, %276 : vector<16x128xf32>
    %278 = vector.extract_strided_slice %265 {offsets = [0, 256], sizes = [16, 128], strides = [1, 1]} : vector<16x512xf32> to vector<16x128xf32>
    %279 = math.tanh %278 : vector<16x128xf32>
    %280 = vector.extract_strided_slice %265 {offsets = [0, 384], sizes = [16, 128], strides = [1, 1]} : vector<16x512xf32> to vector<16x128xf32>
    %281 = arith.negf %280 : vector<16x128xf32>
    %282 = math.exp %281 : vector<16x128xf32>
    %cst_68 = arith.constant 1.000000e+00 : f32
    %283 = vector.broadcast %cst_68 : f32 to vector<16x128xf32>
    %284 = arith.addf %283, %282 : vector<16x128xf32>
    %285 = arith.divf %283, %284 : vector<16x128xf32>
    %286 = arith.mulf %277, %253 : vector<16x128xf32>
    %287 = arith.mulf %271, %279 : vector<16x128xf32>
    %288 = arith.addf %286, %287 : vector<16x128xf32>
    %289 = math.tanh %288 : vector<16x128xf32>
    %290 = arith.mulf %285, %289 : vector<16x128xf32>
    %291 = arith.truncf %290 : vector<16x128xf32> to vector<16x128xbf16>
    %292 = arith.index_cast %260 : i32 to index
    %c0_69 = arith.constant 0 : index
    %293 = vector.load %arg10[%292, %c0_69] : memref<512x128xbf16, #tpu.memory_space<vmem>>, vector<16x128xbf16>
    tpu.vector_store %arg10[%292, %c0_69], %291 {strides = array<i32>} : memref<512x128xbf16, #tpu.memory_space<vmem>>, vector<16x128xbf16>,
    %c8_i32 = arith.constant 8 : i32
    %c16_i32_70 = arith.constant 16 : i32
    %294 = arith.muli %c8_i32, %c16_i32_70 : i32
    %295 = tpu.assume_multiple %294, 16 : i32
    %296 = arith.index_cast %295 : i32 to index
    %c0_71 = arith.constant 0 : index
    %297 = vector.load %arg9[%296, %c0_71] : memref<512x512xbf16, #tpu.memory_space<vmem>>, vector<16x512xbf16>
    %cst_72 = arith.constant dense<0.000000e+00> : vector<16x512xf32>
    %298 = tpu.matmul %291, %11, %cst_72 {dimension_numbers = #tpu.dot_dimension_numbers<[1], [0], [0], [1], [0, 0, 1, 1], [], []>} : vector<16x128xbf16>, vector<128x512xbf16>, vector<16x512xf32> -> vector<16x512xf32>
    %299 = arith.extf %297 : vector<16x512xbf16> to vector<16x512xf32>
    %300 = arith.addf %299, %298 : vector<16x512xf32>
    %301 = vector.extract_strided_slice %300 {offsets = [0, 0], sizes = [16, 128], strides = [1, 1]} : vector<16x512xf32> to vector<16x128xf32>
    %302 = arith.negf %301 : vector<16x128xf32>
    %303 = math.exp %302 : vector<16x128xf32>
    %cst_73 = arith.constant 1.000000e+00 : f32
    %304 = vector.broadcast %cst_73 : f32 to vector<16x128xf32>
    %305 = arith.addf %304, %303 : vector<16x128xf32>
    %306 = arith.divf %304, %305 : vector<16x128xf32>
    %307 = vector.extract_strided_slice %300 {offsets = [0, 128], sizes = [16, 128], strides = [1, 1]} : vector<16x512xf32> to vector<16x128xf32>
    %308 = arith.negf %307 : vector<16x128xf32>
    %309 = math.exp %308 : vector<16x128xf32>
    %cst_74 = arith.constant 1.000000e+00 : f32
    %310 = vector.broadcast %cst_74 : f32 to vector<16x128xf32>
    %311 = arith.addf %310, %309 : vector<16x128xf32>
    %312 = arith.divf %310, %311 : vector<16x128xf32>
    %313 = vector.extract_strided_slice %300 {offsets = [0, 256], sizes = [16, 128], strides = [1, 1]} : vector<16x512xf32> to vector<16x128xf32>
    %314 = math.tanh %313 : vector<16x128xf32>
    %315 = vector.extract_strided_slice %300 {offsets = [0, 384], sizes = [16, 128], strides = [1, 1]} : vector<16x512xf32> to vector<16x128xf32>
    %316 = arith.negf %315 : vector<16x128xf32>
    %317 = math.exp %316 : vector<16x128xf32>
    %cst_75 = arith.constant 1.000000e+00 : f32
    %318 = vector.broadcast %cst_75 : f32 to vector<16x128xf32>
    %319 = arith.addf %318, %317 : vector<16x128xf32>
    %320 = arith.divf %318, %319 : vector<16x128xf32>
    %321 = arith.mulf %312, %288 : vector<16x128xf32>
    %322 = arith.mulf %306, %314 : vector<16x128xf32>
    %323 = arith.addf %321, %322 : vector<16x128xf32>
    %324 = math.tanh %323 : vector<16x128xf32>
    %325 = arith.mulf %320, %324 : vector<16x128xf32>
    %326 = arith.truncf %325 : vector<16x128xf32> to vector<16x128xbf16>
    %327 = arith.index_cast %295 : i32 to index
    %c0_76 = arith.constant 0 : index
    %328 = vector.load %arg10[%327, %c0_76] : memref<512x128xbf16, #tpu.memory_space<vmem>>, vector<16x128xbf16>
    tpu.vector_store %arg10[%327, %c0_76], %326 {strides = array<i32>} : memref<512x128xbf16, #tpu.memory_space<vmem>>, vector<16x128xbf16>,
    %c9_i32 = arith.constant 9 : i32
    %c16_i32_77 = arith.constant 16 : i32
    %329 = arith.muli %c9_i32, %c16_i32_77 : i32
    %330 = tpu.assume_multiple %329, 16 : i32
    %331 = arith.index_cast %330 : i32 to index
    %c0_78 = arith.constant 0 : index
    %332 = vector.load %arg9[%331, %c0_78] : memref<512x512xbf16, #tpu.memory_space<vmem>>, vector<16x512xbf16>
    %cst_79 = arith.constant dense<0.000000e+00> : vector<16x512xf32>
    %333 = tpu.matmul %326, %11, %cst_79 {dimension_numbers = #tpu.dot_dimension_numbers<[1], [0], [0], [1], [0, 0, 1, 1], [], []>} : vector<16x128xbf16>, vector<128x512xbf16>, vector<16x512xf32> -> vector<16x512xf32>
    %334 = arith.extf %332 : vector<16x512xbf16> to vector<16x512xf32>
    %335 = arith.addf %334, %333 : vector<16x512xf32>
    %336 = vector.extract_strided_slice %335 {offsets = [0, 0], sizes = [16, 128], strides = [1, 1]} : vector<16x512xf32> to vector<16x128xf32>
    %337 = arith.negf %336 : vector<16x128xf32>
    %338 = math.exp %337 : vector<16x128xf32>
    %cst_80 = arith.constant 1.000000e+00 : f32
    %339 = vector.broadcast %cst_80 : f32 to vector<16x128xf32>
    %340 = arith.addf %339, %338 : vector<16x128xf32>
    %341 = arith.divf %339, %340 : vector<16x128xf32>
    %342 = vector.extract_strided_slice %335 {offsets = [0, 128], sizes = [16, 128], strides = [1, 1]} : vector<16x512xf32> to vector<16x128xf32>
    %343 = arith.negf %342 : vector<16x128xf32>
    %344 = math.exp %343 : vector<16x128xf32>
    %cst_81 = arith.constant 1.000000e+00 : f32
    %345 = vector.broadcast %cst_81 : f32 to vector<16x128xf32>
    %346 = arith.addf %345, %344 : vector<16x128xf32>
    %347 = arith.divf %345, %346 : vector<16x128xf32>
    %348 = vector.extract_strided_slice %335 {offsets = [0, 256], sizes = [16, 128], strides = [1, 1]} : vector<16x512xf32> to vector<16x128xf32>
    %349 = math.tanh %348 : vector<16x128xf32>
    %350 = vector.extract_strided_slice %335 {offsets = [0, 384], sizes = [16, 128], strides = [1, 1]} : vector<16x512xf32> to vector<16x128xf32>
    %351 = arith.negf %350 : vector<16x128xf32>
    %352 = math.exp %351 : vector<16x128xf32>
    %cst_82 = arith.constant 1.000000e+00 : f32
    %353 = vector.broadcast %cst_82 : f32 to vector<16x128xf32>
    %354 = arith.addf %353, %352 : vector<16x128xf32>
    %355 = arith.divf %353, %354 : vector<16x128xf32>
    %356 = arith.mulf %347, %323 : vector<16x128xf32>
    %357 = arith.mulf %341, %349 : vector<16x128xf32>
    %358 = arith.addf %356, %357 : vector<16x128xf32>
    %359 = math.tanh %358 : vector<16x128xf32>
    %360 = arith.mulf %355, %359 : vector<16x128xf32>
    %361 = arith.truncf %360 : vector<16x128xf32> to vector<16x128xbf16>
    %362 = arith.index_cast %330 : i32 to index
    %c0_83 = arith.constant 0 : index
    %363 = vector.load %arg10[%362, %c0_83] : memref<512x128xbf16, #tpu.memory_space<vmem>>, vector<16x128xbf16>
    tpu.vector_store %arg10[%362, %c0_83], %361 {strides = array<i32>} : memref<512x128xbf16, #tpu.memory_space<vmem>>, vector<16x128xbf16>,
    %c10_i32 = arith.constant 10 : i32
    %c16_i32_84 = arith.constant 16 : i32
    %364 = arith.muli %c10_i32, %c16_i32_84 : i32
    %365 = tpu.assume_multiple %364, 16 : i32
    %366 = arith.index_cast %365 : i32 to index
    %c0_85 = arith.constant 0 : index
    %367 = vector.load %arg9[%366, %c0_85] : memref<512x512xbf16, #tpu.memory_space<vmem>>, vector<16x512xbf16>
    %cst_86 = arith.constant dense<0.000000e+00> : vector<16x512xf32>
    %368 = tpu.matmul %361, %11, %cst_86 {dimension_numbers = #tpu.dot_dimension_numbers<[1], [0], [0], [1], [0, 0, 1, 1], [], []>} : vector<16x128xbf16>, vector<128x512xbf16>, vector<16x512xf32> -> vector<16x512xf32>
    %369 = arith.extf %367 : vector<16x512xbf16> to vector<16x512xf32>
    %370 = arith.addf %369, %368 : vector<16x512xf32>
    %371 = vector.extract_strided_slice %370 {offsets = [0, 0], sizes = [16, 128], strides = [1, 1]} : vector<16x512xf32> to vector<16x128xf32>
    %372 = arith.negf %371 : vector<16x128xf32>
    %373 = math.exp %372 : vector<16x128xf32>
    %cst_87 = arith.constant 1.000000e+00 : f32
    %374 = vector.broadcast %cst_87 : f32 to vector<16x128xf32>
    %375 = arith.addf %374, %373 : vector<16x128xf32>
    %376 = arith.divf %374, %375 : vector<16x128xf32>
    %377 = vector.extract_strided_slice %370 {offsets = [0, 128], sizes = [16, 128], strides = [1, 1]} : vector<16x512xf32> to vector<16x128xf32>
    %378 = arith.negf %377 : vector<16x128xf32>
    %379 = math.exp %378 : vector<16x128xf32>
    %cst_88 = arith.constant 1.000000e+00 : f32
    %380 = vector.broadcast %cst_88 : f32 to vector<16x128xf32>
    %381 = arith.addf %380, %379 : vector<16x128xf32>
    %382 = arith.divf %380, %381 : vector<16x128xf32>
    %383 = vector.extract_strided_slice %370 {offsets = [0, 256], sizes = [16, 128], strides = [1, 1]} : vector<16x512xf32> to vector<16x128xf32>
    %384 = math.tanh %383 : vector<16x128xf32>
    %385 = vector.extract_strided_slice %370 {offsets = [0, 384], sizes = [16, 128], strides = [1, 1]} : vector<16x512xf32> to vector<16x128xf32>
    %386 = arith.negf %385 : vector<16x128xf32>
    %387 = math.exp %386 : vector<16x128xf32>
    %cst_89 = arith.constant 1.000000e+00 : f32
    %388 = vector.broadcast %cst_89 : f32 to vector<16x128xf32>
    %389 = arith.addf %388, %387 : vector<16x128xf32>
    %390 = arith.divf %388, %389 : vector<16x128xf32>
    %391 = arith.mulf %382, %358 : vector<16x128xf32>
    %392 = arith.mulf %376, %384 : vector<16x128xf32>
    %393 = arith.addf %391, %392 : vector<16x128xf32>
    %394 = math.tanh %393 : vector<16x128xf32>
    %395 = arith.mulf %390, %394 : vector<16x128xf32>
    %396 = arith.truncf %395 : vector<16x128xf32> to vector<16x128xbf16>
    %397 = arith.index_cast %365 : i32 to index
    %c0_90 = arith.constant 0 : index
    %398 = vector.load %arg10[%397, %c0_90] : memref<512x128xbf16, #tpu.memory_space<vmem>>, vector<16x128xbf16>
    tpu.vector_store %arg10[%397, %c0_90], %396 {strides = array<i32>} : memref<512x128xbf16, #tpu.memory_space<vmem>>, vector<16x128xbf16>,
    %c11_i32 = arith.constant 11 : i32
    %c16_i32_91 = arith.constant 16 : i32
    %399 = arith.muli %c11_i32, %c16_i32_91 : i32
    %400 = tpu.assume_multiple %399, 16 : i32
    %401 = arith.index_cast %400 : i32 to index
    %c0_92 = arith.constant 0 : index
    %402 = vector.load %arg9[%401, %c0_92] : memref<512x512xbf16, #tpu.memory_space<vmem>>, vector<16x512xbf16>
    %cst_93 = arith.constant dense<0.000000e+00> : vector<16x512xf32>
    %403 = tpu.matmul %396, %11, %cst_93 {dimension_numbers = #tpu.dot_dimension_numbers<[1], [0], [0], [1], [0, 0, 1, 1], [], []>} : vector<16x128xbf16>, vector<128x512xbf16>, vector<16x512xf32> -> vector<16x512xf32>
    %404 = arith.extf %402 : vector<16x512xbf16> to vector<16x512xf32>
    %405 = arith.addf %404, %403 : vector<16x512xf32>
    %406 = vector.extract_strided_slice %405 {offsets = [0, 0], sizes = [16, 128], strides = [1, 1]} : vector<16x512xf32> to vector<16x128xf32>
    %407 = arith.negf %406 : vector<16x128xf32>
    %408 = math.exp %407 : vector<16x128xf32>
    %cst_94 = arith.constant 1.000000e+00 : f32
    %409 = vector.broadcast %cst_94 : f32 to vector<16x128xf32>
    %410 = arith.addf %409, %408 : vector<16x128xf32>
    %411 = arith.divf %409, %410 : vector<16x128xf32>
    %412 = vector.extract_strided_slice %405 {offsets = [0, 128], sizes = [16, 128], strides = [1, 1]} : vector<16x512xf32> to vector<16x128xf32>
    %413 = arith.negf %412 : vector<16x128xf32>
    %414 = math.exp %413 : vector<16x128xf32>
    %cst_95 = arith.constant 1.000000e+00 : f32
    %415 = vector.broadcast %cst_95 : f32 to vector<16x128xf32>
    %416 = arith.addf %415, %414 : vector<16x128xf32>
    %417 = arith.divf %415, %416 : vector<16x128xf32>
    %418 = vector.extract_strided_slice %405 {offsets = [0, 256], sizes = [16, 128], strides = [1, 1]} : vector<16x512xf32> to vector<16x128xf32>
    %419 = math.tanh %418 : vector<16x128xf32>
    %420 = vector.extract_strided_slice %405 {offsets = [0, 384], sizes = [16, 128], strides = [1, 1]} : vector<16x512xf32> to vector<16x128xf32>
    %421 = arith.negf %420 : vector<16x128xf32>
    %422 = math.exp %421 : vector<16x128xf32>
    %cst_96 = arith.constant 1.000000e+00 : f32
    %423 = vector.broadcast %cst_96 : f32 to vector<16x128xf32>
    %424 = arith.addf %423, %422 : vector<16x128xf32>
    %425 = arith.divf %423, %424 : vector<16x128xf32>
    %426 = arith.mulf %417, %393 : vector<16x128xf32>
    %427 = arith.mulf %411, %419 : vector<16x128xf32>
    %428 = arith.addf %426, %427 : vector<16x128xf32>
    %429 = math.tanh %428 : vector<16x128xf32>
    %430 = arith.mulf %425, %429 : vector<16x128xf32>
    %431 = arith.truncf %430 : vector<16x128xf32> to vector<16x128xbf16>
    %432 = arith.index_cast %400 : i32 to index
    %c0_97 = arith.constant 0 : index
    %433 = vector.load %arg10[%432, %c0_97] : memref<512x128xbf16, #tpu.memory_space<vmem>>, vector<16x128xbf16>
    tpu.vector_store %arg10[%432, %c0_97], %431 {strides = array<i32>} : memref<512x128xbf16, #tpu.memory_space<vmem>>, vector<16x128xbf16>,
    %c12_i32 = arith.constant 12 : i32
    %c16_i32_98 = arith.constant 16 : i32
    %434 = arith.muli %c12_i32, %c16_i32_98 : i32
    %435 = tpu.assume_multiple %434, 16 : i32
    %436 = arith.index_cast %435 : i32 to index
    %c0_99 = arith.constant 0 : index
    %437 = vector.load %arg9[%436, %c0_99] : memref<512x512xbf16, #tpu.memory_space<vmem>>, vector<16x512xbf16>
    %cst_100 = arith.constant dense<0.000000e+00> : vector<16x512xf32>
    %438 = tpu.matmul %431, %11, %cst_100 {dimension_numbers = #tpu.dot_dimension_numbers<[1], [0], [0], [1], [0, 0, 1, 1], [], []>} : vector<16x128xbf16>, vector<128x512xbf16>, vector<16x512xf32> -> vector<16x512xf32>
    %439 = arith.extf %437 : vector<16x512xbf16> to vector<16x512xf32>
    %440 = arith.addf %439, %438 : vector<16x512xf32>
    %441 = vector.extract_strided_slice %440 {offsets = [0, 0], sizes = [16, 128], strides = [1, 1]} : vector<16x512xf32> to vector<16x128xf32>
    %442 = arith.negf %441 : vector<16x128xf32>
    %443 = math.exp %442 : vector<16x128xf32>
    %cst_101 = arith.constant 1.000000e+00 : f32
    %444 = vector.broadcast %cst_101 : f32 to vector<16x128xf32>
    %445 = arith.addf %444, %443 : vector<16x128xf32>
    %446 = arith.divf %444, %445 : vector<16x128xf32>
    %447 = vector.extract_strided_slice %440 {offsets = [0, 128], sizes = [16, 128], strides = [1, 1]} : vector<16x512xf32> to vector<16x128xf32>
    %448 = arith.negf %447 : vector<16x128xf32>
    %449 = math.exp %448 : vector<16x128xf32>
    %cst_102 = arith.constant 1.000000e+00 : f32
    %450 = vector.broadcast %cst_102 : f32 to vector<16x128xf32>
    %451 = arith.addf %450, %449 : vector<16x128xf32>
    %452 = arith.divf %450, %451 : vector<16x128xf32>
    %453 = vector.extract_strided_slice %440 {offsets = [0, 256], sizes = [16, 128], strides = [1, 1]} : vector<16x512xf32> to vector<16x128xf32>
    %454 = math.tanh %453 : vector<16x128xf32>
    %455 = vector.extract_strided_slice %440 {offsets = [0, 384], sizes = [16, 128], strides = [1, 1]} : vector<16x512xf32> to vector<16x128xf32>
    %456 = arith.negf %455 : vector<16x128xf32>
    %457 = math.exp %456 : vector<16x128xf32>
    %cst_103 = arith.constant 1.000000e+00 : f32
    %458 = vector.broadcast %cst_103 : f32 to vector<16x128xf32>
    %459 = arith.addf %458, %457 : vector<16x128xf32>
    %460 = arith.divf %458, %459 : vector<16x128xf32>
    %461 = arith.mulf %452, %428 : vector<16x128xf32>
    %462 = arith.mulf %446, %454 : vector<16x128xf32>
    %463 = arith.addf %461, %462 : vector<16x128xf32>
    %464 = math.tanh %463 : vector<16x128xf32>
    %465 = arith.mulf %460, %464 : vector<16x128xf32>
    %466 = arith.truncf %465 : vector<16x128xf32> to vector<16x128xbf16>
    %467 = arith.index_cast %435 : i32 to index
    %c0_104 = arith.constant 0 : index
    %468 = vector.load %arg10[%467, %c0_104] : memref<512x128xbf16, #tpu.memory_space<vmem>>, vector<16x128xbf16>
    tpu.vector_store %arg10[%467, %c0_104], %466 {strides = array<i32>} : memref<512x128xbf16, #tpu.memory_space<vmem>>, vector<16x128xbf16>,
    %c13_i32 = arith.constant 13 : i32
    %c16_i32_105 = arith.constant 16 : i32
    %469 = arith.muli %c13_i32, %c16_i32_105 : i32
    %470 = tpu.assume_multiple %469, 16 : i32
    %471 = arith.index_cast %470 : i32 to index
    %c0_106 = arith.constant 0 : index
    %472 = vector.load %arg9[%471, %c0_106] : memref<512x512xbf16, #tpu.memory_space<vmem>>, vector<16x512xbf16>
    %cst_107 = arith.constant dense<0.000000e+00> : vector<16x512xf32>
    %473 = tpu.matmul %466, %11, %cst_107 {dimension_numbers = #tpu.dot_dimension_numbers<[1], [0], [0], [1], [0, 0, 1, 1], [], []>} : vector<16x128xbf16>, vector<128x512xbf16>, vector<16x512xf32> -> vector<16x512xf32>
    %474 = arith.extf %472 : vector<16x512xbf16> to vector<16x512xf32>
    %475 = arith.addf %474, %473 : vector<16x512xf32>
    %476 = vector.extract_strided_slice %475 {offsets = [0, 0], sizes = [16, 128], strides = [1, 1]} : vector<16x512xf32> to vector<16x128xf32>
    %477 = arith.negf %476 : vector<16x128xf32>
    %478 = math.exp %477 : vector<16x128xf32>
    %cst_108 = arith.constant 1.000000e+00 : f32
    %479 = vector.broadcast %cst_108 : f32 to vector<16x128xf32>
    %480 = arith.addf %479, %478 : vector<16x128xf32>
    %481 = arith.divf %479, %480 : vector<16x128xf32>
    %482 = vector.extract_strided_slice %475 {offsets = [0, 128], sizes = [16, 128], strides = [1, 1]} : vector<16x512xf32> to vector<16x128xf32>
    %483 = arith.negf %482 : vector<16x128xf32>
    %484 = math.exp %483 : vector<16x128xf32>
    %cst_109 = arith.constant 1.000000e+00 : f32
    %485 = vector.broadcast %cst_109 : f32 to vector<16x128xf32>
    %486 = arith.addf %485, %484 : vector<16x128xf32>
    %487 = arith.divf %485, %486 : vector<16x128xf32>
    %488 = vector.extract_strided_slice %475 {offsets = [0, 256], sizes = [16, 128], strides = [1, 1]} : vector<16x512xf32> to vector<16x128xf32>
    %489 = math.tanh %488 : vector<16x128xf32>
    %490 = vector.extract_strided_slice %475 {offsets = [0, 384], sizes = [16, 128], strides = [1, 1]} : vector<16x512xf32> to vector<16x128xf32>
    %491 = arith.negf %490 : vector<16x128xf32>
    %492 = math.exp %491 : vector<16x128xf32>
    %cst_110 = arith.constant 1.000000e+00 : f32
    %493 = vector.broadcast %cst_110 : f32 to vector<16x128xf32>
    %494 = arith.addf %493, %492 : vector<16x128xf32>
    %495 = arith.divf %493, %494 : vector<16x128xf32>
    %496 = arith.mulf %487, %463 : vector<16x128xf32>
    %497 = arith.mulf %481, %489 : vector<16x128xf32>
    %498 = arith.addf %496, %497 : vector<16x128xf32>
    %499 = math.tanh %498 : vector<16x128xf32>
    %500 = arith.mulf %495, %499 : vector<16x128xf32>
    %501 = arith.truncf %500 : vector<16x128xf32> to vector<16x128xbf16>
    %502 = arith.index_cast %470 : i32 to index
    %c0_111 = arith.constant 0 : index
    %503 = vector.load %arg10[%502, %c0_111] : memref<512x128xbf16, #tpu.memory_space<vmem>>, vector<16x128xbf16>
    tpu.vector_store %arg10[%502, %c0_111], %501 {strides = array<i32>} : memref<512x128xbf16, #tpu.memory_space<vmem>>, vector<16x128xbf16>,
    %c14_i32 = arith.constant 14 : i32
    %c16_i32_112 = arith.constant 16 : i32
    %504 = arith.muli %c14_i32, %c16_i32_112 : i32
    %505 = tpu.assume_multiple %504, 16 : i32
    %506 = arith.index_cast %505 : i32 to index
    %c0_113 = arith.constant 0 : index
    %507 = vector.load %arg9[%506, %c0_113] : memref<512x512xbf16, #tpu.memory_space<vmem>>, vector<16x512xbf16>
    %cst_114 = arith.constant dense<0.000000e+00> : vector<16x512xf32>
    %508 = tpu.matmul %501, %11, %cst_114 {dimension_numbers = #tpu.dot_dimension_numbers<[1], [0], [0], [1], [0, 0, 1, 1], [], []>} : vector<16x128xbf16>, vector<128x512xbf16>, vector<16x512xf32> -> vector<16x512xf32>
    %509 = arith.extf %507 : vector<16x512xbf16> to vector<16x512xf32>
    %510 = arith.addf %509, %508 : vector<16x512xf32>
    %511 = vector.extract_strided_slice %510 {offsets = [0, 0], sizes = [16, 128], strides = [1, 1]} : vector<16x512xf32> to vector<16x128xf32>
    %512 = arith.negf %511 : vector<16x128xf32>
    %513 = math.exp %512 : vector<16x128xf32>
    %cst_115 = arith.constant 1.000000e+00 : f32
    %514 = vector.broadcast %cst_115 : f32 to vector<16x128xf32>
    %515 = arith.addf %514, %513 : vector<16x128xf32>
    %516 = arith.divf %514, %515 : vector<16x128xf32>
    %517 = vector.extract_strided_slice %510 {offsets = [0, 128], sizes = [16, 128], strides = [1, 1]} : vector<16x512xf32> to vector<16x128xf32>
    %518 = arith.negf %517 : vector<16x128xf32>
    %519 = math.exp %518 : vector<16x128xf32>
    %cst_116 = arith.constant 1.000000e+00 : f32
    %520 = vector.broadcast %cst_116 : f32 to vector<16x128xf32>
    %521 = arith.addf %520, %519 : vector<16x128xf32>
    %522 = arith.divf %520, %521 : vector<16x128xf32>
    %523 = vector.extract_strided_slice %510 {offsets = [0, 256], sizes = [16, 128], strides = [1, 1]} : vector<16x512xf32> to vector<16x128xf32>
    %524 = math.tanh %523 : vector<16x128xf32>
    %525 = vector.extract_strided_slice %510 {offsets = [0, 384], sizes = [16, 128], strides = [1, 1]} : vector<16x512xf32> to vector<16x128xf32>
    %526 = arith.negf %525 : vector<16x128xf32>
    %527 = math.exp %526 : vector<16x128xf32>
    %cst_117 = arith.constant 1.000000e+00 : f32
    %528 = vector.broadcast %cst_117 : f32 to vector<16x128xf32>
    %529 = arith.addf %528, %527 : vector<16x128xf32>
    %530 = arith.divf %528, %529 : vector<16x128xf32>
    %531 = arith.mulf %522, %498 : vector<16x128xf32>
    %532 = arith.mulf %516, %524 : vector<16x128xf32>
    %533 = arith.addf %531, %532 : vector<16x128xf32>
    %534 = math.tanh %533 : vector<16x128xf32>
    %535 = arith.mulf %530, %534 : vector<16x128xf32>
    %536 = arith.truncf %535 : vector<16x128xf32> to vector<16x128xbf16>
    %537 = arith.index_cast %505 : i32 to index
    %c0_118 = arith.constant 0 : index
    %538 = vector.load %arg10[%537, %c0_118] : memref<512x128xbf16, #tpu.memory_space<vmem>>, vector<16x128xbf16>
    tpu.vector_store %arg10[%537, %c0_118], %536 {strides = array<i32>} : memref<512x128xbf16, #tpu.memory_space<vmem>>, vector<16x128xbf16>,
    %c15_i32 = arith.constant 15 : i32
    %c16_i32_119 = arith.constant 16 : i32
    %539 = arith.muli %c15_i32, %c16_i32_119 : i32
    %540 = tpu.assume_multiple %539, 16 : i32
    %541 = arith.index_cast %540 : i32 to index
    %c0_120 = arith.constant 0 : index
    %542 = vector.load %arg9[%541, %c0_120] : memref<512x512xbf16, #tpu.memory_space<vmem>>, vector<16x512xbf16>
    %cst_121 = arith.constant dense<0.000000e+00> : vector<16x512xf32>
    %543 = tpu.matmul %536, %11, %cst_121 {dimension_numbers = #tpu.dot_dimension_numbers<[1], [0], [0], [1], [0, 0, 1, 1], [], []>} : vector<16x128xbf16>, vector<128x512xbf16>, vector<16x512xf32> -> vector<16x512xf32>
    %544 = arith.extf %542 : vector<16x512xbf16> to vector<16x512xf32>
    %545 = arith.addf %544, %543 : vector<16x512xf32>
    %546 = vector.extract_strided_slice %545 {offsets = [0, 0], sizes = [16, 128], strides = [1, 1]} : vector<16x512xf32> to vector<16x128xf32>
    %547 = arith.negf %546 : vector<16x128xf32>
    %548 = math.exp %547 : vector<16x128xf32>
    %cst_122 = arith.constant 1.000000e+00 : f32
    %549 = vector.broadcast %cst_122 : f32 to vector<16x128xf32>
    %550 = arith.addf %549, %548 : vector<16x128xf32>
    %551 = arith.divf %549, %550 : vector<16x128xf32>
    %552 = vector.extract_strided_slice %545 {offsets = [0, 128], sizes = [16, 128], strides = [1, 1]} : vector<16x512xf32> to vector<16x128xf32>
    %553 = arith.negf %552 : vector<16x128xf32>
    %554 = math.exp %553 : vector<16x128xf32>
    %cst_123 = arith.constant 1.000000e+00 : f32
    %555 = vector.broadcast %cst_123 : f32 to vector<16x128xf32>
    %556 = arith.addf %555, %554 : vector<16x128xf32>
    %557 = arith.divf %555, %556 : vector<16x128xf32>
    %558 = vector.extract_strided_slice %545 {offsets = [0, 256], sizes = [16, 128], strides = [1, 1]} : vector<16x512xf32> to vector<16x128xf32>
    %559 = math.tanh %558 : vector<16x128xf32>
    %560 = vector.extract_strided_slice %545 {offsets = [0, 384], sizes = [16, 128], strides = [1, 1]} : vector<16x512xf32> to vector<16x128xf32>
    %561 = arith.negf %560 : vector<16x128xf32>
    %562 = math.exp %561 : vector<16x128xf32>
    %cst_124 = arith.constant 1.000000e+00 : f32
    %563 = vector.broadcast %cst_124 : f32 to vector<16x128xf32>
    %564 = arith.addf %563, %562 : vector<16x128xf32>
    %565 = arith.divf %563, %564 : vector<16x128xf32>
    %566 = arith.mulf %557, %533 : vector<16x128xf32>
    %567 = arith.mulf %551, %559 : vector<16x128xf32>
    %568 = arith.addf %566, %567 : vector<16x128xf32>
    %569 = math.tanh %568 : vector<16x128xf32>
    %570 = arith.mulf %565, %569 : vector<16x128xf32>
    %571 = arith.truncf %570 : vector<16x128xf32> to vector<16x128xbf16>
    %572 = arith.index_cast %540 : i32 to index
    %c0_125 = arith.constant 0 : index
    %573 = vector.load %arg10[%572, %c0_125] : memref<512x128xbf16, #tpu.memory_space<vmem>>, vector<16x128xbf16>
    tpu.vector_store %arg10[%572, %c0_125], %571 {strides = array<i32>} : memref<512x128xbf16, #tpu.memory_space<vmem>>, vector<16x128xbf16>,
    %c16_i32_126 = arith.constant 16 : i32
    %c16_i32_127 = arith.constant 16 : i32
    %574 = arith.muli %c16_i32_126, %c16_i32_127 : i32
    %575 = tpu.assume_multiple %574, 16 : i32
    %576 = arith.index_cast %575 : i32 to index
    %c0_128 = arith.constant 0 : index
    %577 = vector.load %arg9[%576, %c0_128] : memref<512x512xbf16, #tpu.memory_space<vmem>>, vector<16x512xbf16>
    %cst_129 = arith.constant dense<0.000000e+00> : vector<16x512xf32>
    %578 = tpu.matmul %571, %11, %cst_129 {dimension_numbers = #tpu.dot_dimension_numbers<[1], [0], [0], [1], [0, 0, 1, 1], [], []>} : vector<16x128xbf16>, vector<128x512xbf16>, vector<16x512xf32> -> vector<16x512xf32>
    %579 = arith.extf %577 : vector<16x512xbf16> to vector<16x512xf32>
    %580 = arith.addf %579, %578 : vector<16x512xf32>
    %581 = vector.extract_strided_slice %580 {offsets = [0, 0], sizes = [16, 128], strides = [1, 1]} : vector<16x512xf32> to vector<16x128xf32>
    %582 = arith.negf %581 : vector<16x128xf32>
    %583 = math.exp %582 : vector<16x128xf32>
    %cst_130 = arith.constant 1.000000e+00 : f32
    %584 = vector.broadcast %cst_130 : f32 to vector<16x128xf32>
    %585 = arith.addf %584, %583 : vector<16x128xf32>
    %586 = arith.divf %584, %585 : vector<16x128xf32>
    %587 = vector.extract_strided_slice %580 {offsets = [0, 128], sizes = [16, 128], strides = [1, 1]} : vector<16x512xf32> to vector<16x128xf32>
    %588 = arith.negf %587 : vector<16x128xf32>
    %589 = math.exp %588 : vector<16x128xf32>
    %cst_131 = arith.constant 1.000000e+00 : f32
    %590 = vector.broadcast %cst_131 : f32 to vector<16x128xf32>
    %591 = arith.addf %590, %589 : vector<16x128xf32>
    %592 = arith.divf %590, %591 : vector<16x128xf32>
    %593 = vector.extract_strided_slice %580 {offsets = [0, 256], sizes = [16, 128], strides = [1, 1]} : vector<16x512xf32> to vector<16x128xf32>
    %594 = math.tanh %593 : vector<16x128xf32>
    %595 = vector.extract_strided_slice %580 {offsets = [0, 384], sizes = [16, 128], strides = [1, 1]} : vector<16x512xf32> to vector<16x128xf32>
    %596 = arith.negf %595 : vector<16x128xf32>
    %597 = math.exp %596 : vector<16x128xf32>
    %cst_132 = arith.constant 1.000000e+00 : f32
    %598 = vector.broadcast %cst_132 : f32 to vector<16x128xf32>
    %599 = arith.addf %598, %597 : vector<16x128xf32>
    %600 = arith.divf %598, %599 : vector<16x128xf32>
    %601 = arith.mulf %592, %568 : vector<16x128xf32>
    %602 = arith.mulf %586, %594 : vector<16x128xf32>
    %603 = arith.addf %601, %602 : vector<16x128xf32>
    %604 = math.tanh %603 : vector<16x128xf32>
    %605 = arith.mulf %600, %604 : vector<16x128xf32>
    %606 = arith.truncf %605 : vector<16x128xf32> to vector<16x128xbf16>
    %607 = arith.index_cast %575 : i32 to index
    %c0_133 = arith.constant 0 : index
    %608 = vector.load %arg10[%607, %c0_133] : memref<512x128xbf16, #tpu.memory_space<vmem>>, vector<16x128xbf16>
    tpu.vector_store %arg10[%607, %c0_133], %606 {strides = array<i32>} : memref<512x128xbf16, #tpu.memory_space<vmem>>, vector<16x128xbf16>,
    %c17_i32 = arith.constant 17 : i32
    %c16_i32_134 = arith.constant 16 : i32
    %609 = arith.muli %c17_i32, %c16_i32_134 : i32
    %610 = tpu.assume_multiple %609, 16 : i32
    %611 = arith.index_cast %610 : i32 to index
    %c0_135 = arith.constant 0 : index
    %612 = vector.load %arg9[%611, %c0_135] : memref<512x512xbf16, #tpu.memory_space<vmem>>, vector<16x512xbf16>
    %cst_136 = arith.constant dense<0.000000e+00> : vector<16x512xf32>
    %613 = tpu.matmul %606, %11, %cst_136 {dimension_numbers = #tpu.dot_dimension_numbers<[1], [0], [0], [1], [0, 0, 1, 1], [], []>} : vector<16x128xbf16>, vector<128x512xbf16>, vector<16x512xf32> -> vector<16x512xf32>
    %614 = arith.extf %612 : vector<16x512xbf16> to vector<16x512xf32>
    %615 = arith.addf %614, %613 : vector<16x512xf32>
    %616 = vector.extract_strided_slice %615 {offsets = [0, 0], sizes = [16, 128], strides = [1, 1]} : vector<16x512xf32> to vector<16x128xf32>
    %617 = arith.negf %616 : vector<16x128xf32>
    %618 = math.exp %617 : vector<16x128xf32>
    %cst_137 = arith.constant 1.000000e+00 : f32
    %619 = vector.broadcast %cst_137 : f32 to vector<16x128xf32>
    %620 = arith.addf %619, %618 : vector<16x128xf32>
    %621 = arith.divf %619, %620 : vector<16x128xf32>
    %622 = vector.extract_strided_slice %615 {offsets = [0, 128], sizes = [16, 128], strides = [1, 1]} : vector<16x512xf32> to vector<16x128xf32>
    %623 = arith.negf %622 : vector<16x128xf32>
    %624 = math.exp %623 : vector<16x128xf32>
    %cst_138 = arith.constant 1.000000e+00 : f32
    %625 = vector.broadcast %cst_138 : f32 to vector<16x128xf32>
    %626 = arith.addf %625, %624 : vector<16x128xf32>
    %627 = arith.divf %625, %626 : vector<16x128xf32>
    %628 = vector.extract_strided_slice %615 {offsets = [0, 256], sizes = [16, 128], strides = [1, 1]} : vector<16x512xf32> to vector<16x128xf32>
    %629 = math.tanh %628 : vector<16x128xf32>
    %630 = vector.extract_strided_slice %615 {offsets = [0, 384], sizes = [16, 128], strides = [1, 1]} : vector<16x512xf32> to vector<16x128xf32>
    %631 = arith.negf %630 : vector<16x128xf32>
    %632 = math.exp %631 : vector<16x128xf32>
    %cst_139 = arith.constant 1.000000e+00 : f32
    %633 = vector.broadcast %cst_139 : f32 to vector<16x128xf32>
    %634 = arith.addf %633, %632 : vector<16x128xf32>
    %635 = arith.divf %633, %634 : vector<16x128xf32>
    %636 = arith.mulf %627, %603 : vector<16x128xf32>
    %637 = arith.mulf %621, %629 : vector<16x128xf32>
    %638 = arith.addf %636, %637 : vector<16x128xf32>
    %639 = math.tanh %638 : vector<16x128xf32>
    %640 = arith.mulf %635, %639 : vector<16x128xf32>
    %641 = arith.truncf %640 : vector<16x128xf32> to vector<16x128xbf16>
    %642 = arith.index_cast %610 : i32 to index
    %c0_140 = arith.constant 0 : index
    %643 = vector.load %arg10[%642, %c0_140] : memref<512x128xbf16, #tpu.memory_space<vmem>>, vector<16x128xbf16>
    tpu.vector_store %arg10[%642, %c0_140], %641 {strides = array<i32>} : memref<512x128xbf16, #tpu.memory_space<vmem>>, vector<16x128xbf16>,
    %c18_i32 = arith.constant 18 : i32
    %c16_i32_141 = arith.constant 16 : i32
    %644 = arith.muli %c18_i32, %c16_i32_141 : i32
    %645 = tpu.assume_multiple %644, 16 : i32
    %646 = arith.index_cast %645 : i32 to index
    %c0_142 = arith.constant 0 : index
    %647 = vector.load %arg9[%646, %c0_142] : memref<512x512xbf16, #tpu.memory_space<vmem>>, vector<16x512xbf16>
    %cst_143 = arith.constant dense<0.000000e+00> : vector<16x512xf32>
    %648 = tpu.matmul %641, %11, %cst_143 {dimension_numbers = #tpu.dot_dimension_numbers<[1], [0], [0], [1], [0, 0, 1, 1], [], []>} : vector<16x128xbf16>, vector<128x512xbf16>, vector<16x512xf32> -> vector<16x512xf32>
    %649 = arith.extf %647 : vector<16x512xbf16> to vector<16x512xf32>
    %650 = arith.addf %649, %648 : vector<16x512xf32>
    %651 = vector.extract_strided_slice %650 {offsets = [0, 0], sizes = [16, 128], strides = [1, 1]} : vector<16x512xf32> to vector<16x128xf32>
    %652 = arith.negf %651 : vector<16x128xf32>
    %653 = math.exp %652 : vector<16x128xf32>
    %cst_144 = arith.constant 1.000000e+00 : f32
    %654 = vector.broadcast %cst_144 : f32 to vector<16x128xf32>
    %655 = arith.addf %654, %653 : vector<16x128xf32>
    %656 = arith.divf %654, %655 : vector<16x128xf32>
    %657 = vector.extract_strided_slice %650 {offsets = [0, 128], sizes = [16, 128], strides = [1, 1]} : vector<16x512xf32> to vector<16x128xf32>
    %658 = arith.negf %657 : vector<16x128xf32>
    %659 = math.exp %658 : vector<16x128xf32>
    %cst_145 = arith.constant 1.000000e+00 : f32
    %660 = vector.broadcast %cst_145 : f32 to vector<16x128xf32>
    %661 = arith.addf %660, %659 : vector<16x128xf32>
    %662 = arith.divf %660, %661 : vector<16x128xf32>
    %663 = vector.extract_strided_slice %650 {offsets = [0, 256], sizes = [16, 128], strides = [1, 1]} : vector<16x512xf32> to vector<16x128xf32>
    %664 = math.tanh %663 : vector<16x128xf32>
    %665 = vector.extract_strided_slice %650 {offsets = [0, 384], sizes = [16, 128], strides = [1, 1]} : vector<16x512xf32> to vector<16x128xf32>
    %666 = arith.negf %665 : vector<16x128xf32>
    %667 = math.exp %666 : vector<16x128xf32>
    %cst_146 = arith.constant 1.000000e+00 : f32
    %668 = vector.broadcast %cst_146 : f32 to vector<16x128xf32>
    %669 = arith.addf %668, %667 : vector<16x128xf32>
    %670 = arith.divf %668, %669 : vector<16x128xf32>
    %671 = arith.mulf %662, %638 : vector<16x128xf32>
    %672 = arith.mulf %656, %664 : vector<16x128xf32>
    %673 = arith.addf %671, %672 : vector<16x128xf32>
    %674 = math.tanh %673 : vector<16x128xf32>
    %675 = arith.mulf %670, %674 : vector<16x128xf32>
    %676 = arith.truncf %675 : vector<16x128xf32> to vector<16x128xbf16>
    %677 = arith.index_cast %645 : i32 to index
    %c0_147 = arith.constant 0 : index
    %678 = vector.load %arg10[%677, %c0_147] : memref<512x128xbf16, #tpu.memory_space<vmem>>, vector<16x128xbf16>
    tpu.vector_store %arg10[%677, %c0_147], %676 {strides = array<i32>} : memref<512x128xbf16, #tpu.memory_space<vmem>>, vector<16x128xbf16>,
    %c19_i32 = arith.constant 19 : i32
    %c16_i32_148 = arith.constant 16 : i32
    %679 = arith.muli %c19_i32, %c16_i32_148 : i32
    %680 = tpu.assume_multiple %679, 16 : i32
    %681 = arith.index_cast %680 : i32 to index
    %c0_149 = arith.constant 0 : index
    %682 = vector.load %arg9[%681, %c0_149] : memref<512x512xbf16, #tpu.memory_space<vmem>>, vector<16x512xbf16>
    %cst_150 = arith.constant dense<0.000000e+00> : vector<16x512xf32>
    %683 = tpu.matmul %676, %11, %cst_150 {dimension_numbers = #tpu.dot_dimension_numbers<[1], [0], [0], [1], [0, 0, 1, 1], [], []>} : vector<16x128xbf16>, vector<128x512xbf16>, vector<16x512xf32> -> vector<16x512xf32>
    %684 = arith.extf %682 : vector<16x512xbf16> to vector<16x512xf32>
    %685 = arith.addf %684, %683 : vector<16x512xf32>
    %686 = vector.extract_strided_slice %685 {offsets = [0, 0], sizes = [16, 128], strides = [1, 1]} : vector<16x512xf32> to vector<16x128xf32>
    %687 = arith.negf %686 : vector<16x128xf32>
    %688 = math.exp %687 : vector<16x128xf32>
    %cst_151 = arith.constant 1.000000e+00 : f32
    %689 = vector.broadcast %cst_151 : f32 to vector<16x128xf32>
    %690 = arith.addf %689, %688 : vector<16x128xf32>
    %691 = arith.divf %689, %690 : vector<16x128xf32>
    %692 = vector.extract_strided_slice %685 {offsets = [0, 128], sizes = [16, 128], strides = [1, 1]} : vector<16x512xf32> to vector<16x128xf32>
    %693 = arith.negf %692 : vector<16x128xf32>
    %694 = math.exp %693 : vector<16x128xf32>
    %cst_152 = arith.constant 1.000000e+00 : f32
    %695 = vector.broadcast %cst_152 : f32 to vector<16x128xf32>
    %696 = arith.addf %695, %694 : vector<16x128xf32>
    %697 = arith.divf %695, %696 : vector<16x128xf32>
    %698 = vector.extract_strided_slice %685 {offsets = [0, 256], sizes = [16, 128], strides = [1, 1]} : vector<16x512xf32> to vector<16x128xf32>
    %699 = math.tanh %698 : vector<16x128xf32>
    %700 = vector.extract_strided_slice %685 {offsets = [0, 384], sizes = [16, 128], strides = [1, 1]} : vector<16x512xf32> to vector<16x128xf32>
    %701 = arith.negf %700 : vector<16x128xf32>
    %702 = math.exp %701 : vector<16x128xf32>
    %cst_153 = arith.constant 1.000000e+00 : f32
    %703 = vector.broadcast %cst_153 : f32 to vector<16x128xf32>
    %704 = arith.addf %703, %702 : vector<16x128xf32>
    %705 = arith.divf %703, %704 : vector<16x128xf32>
    %706 = arith.mulf %697, %673 : vector<16x128xf32>
    %707 = arith.mulf %691, %699 : vector<16x128xf32>
    %708 = arith.addf %706, %707 : vector<16x128xf32>
    %709 = math.tanh %708 : vector<16x128xf32>
    %710 = arith.mulf %705, %709 : vector<16x128xf32>
    %711 = arith.truncf %710 : vector<16x128xf32> to vector<16x128xbf16>
    %712 = arith.index_cast %680 : i32 to index
    %c0_154 = arith.constant 0 : index
    %713 = vector.load %arg10[%712, %c0_154] : memref<512x128xbf16, #tpu.memory_space<vmem>>, vector<16x128xbf16>
    tpu.vector_store %arg10[%712, %c0_154], %711 {strides = array<i32>} : memref<512x128xbf16, #tpu.memory_space<vmem>>, vector<16x128xbf16>,
    %c20_i32 = arith.constant 20 : i32
    %c16_i32_155 = arith.constant 16 : i32
    %714 = arith.muli %c20_i32, %c16_i32_155 : i32
    %715 = tpu.assume_multiple %714, 16 : i32
    %716 = arith.index_cast %715 : i32 to index
    %c0_156 = arith.constant 0 : index
    %717 = vector.load %arg9[%716, %c0_156] : memref<512x512xbf16, #tpu.memory_space<vmem>>, vector<16x512xbf16>
    %cst_157 = arith.constant dense<0.000000e+00> : vector<16x512xf32>
    %718 = tpu.matmul %711, %11, %cst_157 {dimension_numbers = #tpu.dot_dimension_numbers<[1], [0], [0], [1], [0, 0, 1, 1], [], []>} : vector<16x128xbf16>, vector<128x512xbf16>, vector<16x512xf32> -> vector<16x512xf32>
    %719 = arith.extf %717 : vector<16x512xbf16> to vector<16x512xf32>
    %720 = arith.addf %719, %718 : vector<16x512xf32>
    %721 = vector.extract_strided_slice %720 {offsets = [0, 0], sizes = [16, 128], strides = [1, 1]} : vector<16x512xf32> to vector<16x128xf32>
    %722 = arith.negf %721 : vector<16x128xf32>
    %723 = math.exp %722 : vector<16x128xf32>
    %cst_158 = arith.constant 1.000000e+00 : f32
    %724 = vector.broadcast %cst_158 : f32 to vector<16x128xf32>
    %725 = arith.addf %724, %723 : vector<16x128xf32>
    %726 = arith.divf %724, %725 : vector<16x128xf32>
    %727 = vector.extract_strided_slice %720 {offsets = [0, 128], sizes = [16, 128], strides = [1, 1]} : vector<16x512xf32> to vector<16x128xf32>
    %728 = arith.negf %727 : vector<16x128xf32>
    %729 = math.exp %728 : vector<16x128xf32>
    %cst_159 = arith.constant 1.000000e+00 : f32
    %730 = vector.broadcast %cst_159 : f32 to vector<16x128xf32>
    %731 = arith.addf %730, %729 : vector<16x128xf32>
    %732 = arith.divf %730, %731 : vector<16x128xf32>
    %733 = vector.extract_strided_slice %720 {offsets = [0, 256], sizes = [16, 128], strides = [1, 1]} : vector<16x512xf32> to vector<16x128xf32>
    %734 = math.tanh %733 : vector<16x128xf32>
    %735 = vector.extract_strided_slice %720 {offsets = [0, 384], sizes = [16, 128], strides = [1, 1]} : vector<16x512xf32> to vector<16x128xf32>
    %736 = arith.negf %735 : vector<16x128xf32>
    %737 = math.exp %736 : vector<16x128xf32>
    %cst_160 = arith.constant 1.000000e+00 : f32
    %738 = vector.broadcast %cst_160 : f32 to vector<16x128xf32>
    %739 = arith.addf %738, %737 : vector<16x128xf32>
    %740 = arith.divf %738, %739 : vector<16x128xf32>
    %741 = arith.mulf %732, %708 : vector<16x128xf32>
    %742 = arith.mulf %726, %734 : vector<16x128xf32>
    %743 = arith.addf %741, %742 : vector<16x128xf32>
    %744 = math.tanh %743 : vector<16x128xf32>
    %745 = arith.mulf %740, %744 : vector<16x128xf32>
    %746 = arith.truncf %745 : vector<16x128xf32> to vector<16x128xbf16>
    %747 = arith.index_cast %715 : i32 to index
    %c0_161 = arith.constant 0 : index
    %748 = vector.load %arg10[%747, %c0_161] : memref<512x128xbf16, #tpu.memory_space<vmem>>, vector<16x128xbf16>
    tpu.vector_store %arg10[%747, %c0_161], %746 {strides = array<i32>} : memref<512x128xbf16, #tpu.memory_space<vmem>>, vector<16x128xbf16>,
    %c21_i32 = arith.constant 21 : i32
    %c16_i32_162 = arith.constant 16 : i32
    %749 = arith.muli %c21_i32, %c16_i32_162 : i32
    %750 = tpu.assume_multiple %749, 16 : i32
    %751 = arith.index_cast %750 : i32 to index
    %c0_163 = arith.constant 0 : index
    %752 = vector.load %arg9[%751, %c0_163] : memref<512x512xbf16, #tpu.memory_space<vmem>>, vector<16x512xbf16>
    %cst_164 = arith.constant dense<0.000000e+00> : vector<16x512xf32>
    %753 = tpu.matmul %746, %11, %cst_164 {dimension_numbers = #tpu.dot_dimension_numbers<[1], [0], [0], [1], [0, 0, 1, 1], [], []>} : vector<16x128xbf16>, vector<128x512xbf16>, vector<16x512xf32> -> vector<16x512xf32>
    %754 = arith.extf %752 : vector<16x512xbf16> to vector<16x512xf32>
    %755 = arith.addf %754, %753 : vector<16x512xf32>
    %756 = vector.extract_strided_slice %755 {offsets = [0, 0], sizes = [16, 128], strides = [1, 1]} : vector<16x512xf32> to vector<16x128xf32>
    %757 = arith.negf %756 : vector<16x128xf32>
    %758 = math.exp %757 : vector<16x128xf32>
    %cst_165 = arith.constant 1.000000e+00 : f32
    %759 = vector.broadcast %cst_165 : f32 to vector<16x128xf32>
    %760 = arith.addf %759, %758 : vector<16x128xf32>
    %761 = arith.divf %759, %760 : vector<16x128xf32>
    %762 = vector.extract_strided_slice %755 {offsets = [0, 128], sizes = [16, 128], strides = [1, 1]} : vector<16x512xf32> to vector<16x128xf32>
    %763 = arith.negf %762 : vector<16x128xf32>
    %764 = math.exp %763 : vector<16x128xf32>
    %cst_166 = arith.constant 1.000000e+00 : f32
    %765 = vector.broadcast %cst_166 : f32 to vector<16x128xf32>
    %766 = arith.addf %765, %764 : vector<16x128xf32>
    %767 = arith.divf %765, %766 : vector<16x128xf32>
    %768 = vector.extract_strided_slice %755 {offsets = [0, 256], sizes = [16, 128], strides = [1, 1]} : vector<16x512xf32> to vector<16x128xf32>
    %769 = math.tanh %768 : vector<16x128xf32>
    %770 = vector.extract_strided_slice %755 {offsets = [0, 384], sizes = [16, 128], strides = [1, 1]} : vector<16x512xf32> to vector<16x128xf32>
    %771 = arith.negf %770 : vector<16x128xf32>
    %772 = math.exp %771 : vector<16x128xf32>
    %cst_167 = arith.constant 1.000000e+00 : f32
    %773 = vector.broadcast %cst_167 : f32 to vector<16x128xf32>
    %774 = arith.addf %773, %772 : vector<16x128xf32>
    %775 = arith.divf %773, %774 : vector<16x128xf32>
    %776 = arith.mulf %767, %743 : vector<16x128xf32>
    %777 = arith.mulf %761, %769 : vector<16x128xf32>
    %778 = arith.addf %776, %777 : vector<16x128xf32>
    %779 = math.tanh %778 : vector<16x128xf32>
    %780 = arith.mulf %775, %779 : vector<16x128xf32>
    %781 = arith.truncf %780 : vector<16x128xf32> to vector<16x128xbf16>
    %782 = arith.index_cast %750 : i32 to index
    %c0_168 = arith.constant 0 : index
    %783 = vector.load %arg10[%782, %c0_168] : memref<512x128xbf16, #tpu.memory_space<vmem>>, vector<16x128xbf16>
    tpu.vector_store %arg10[%782, %c0_168], %781 {strides = array<i32>} : memref<512x128xbf16, #tpu.memory_space<vmem>>, vector<16x128xbf16>,
    %c22_i32 = arith.constant 22 : i32
    %c16_i32_169 = arith.constant 16 : i32
    %784 = arith.muli %c22_i32, %c16_i32_169 : i32
    %785 = tpu.assume_multiple %784, 16 : i32
    %786 = arith.index_cast %785 : i32 to index
    %c0_170 = arith.constant 0 : index
    %787 = vector.load %arg9[%786, %c0_170] : memref<512x512xbf16, #tpu.memory_space<vmem>>, vector<16x512xbf16>
    %cst_171 = arith.constant dense<0.000000e+00> : vector<16x512xf32>
    %788 = tpu.matmul %781, %11, %cst_171 {dimension_numbers = #tpu.dot_dimension_numbers<[1], [0], [0], [1], [0, 0, 1, 1], [], []>} : vector<16x128xbf16>, vector<128x512xbf16>, vector<16x512xf32> -> vector<16x512xf32>
    %789 = arith.extf %787 : vector<16x512xbf16> to vector<16x512xf32>
    %790 = arith.addf %789, %788 : vector<16x512xf32>
    %791 = vector.extract_strided_slice %790 {offsets = [0, 0], sizes = [16, 128], strides = [1, 1]} : vector<16x512xf32> to vector<16x128xf32>
    %792 = arith.negf %791 : vector<16x128xf32>
    %793 = math.exp %792 : vector<16x128xf32>
    %cst_172 = arith.constant 1.000000e+00 : f32
    %794 = vector.broadcast %cst_172 : f32 to vector<16x128xf32>
    %795 = arith.addf %794, %793 : vector<16x128xf32>
    %796 = arith.divf %794, %795 : vector<16x128xf32>
    %797 = vector.extract_strided_slice %790 {offsets = [0, 128], sizes = [16, 128], strides = [1, 1]} : vector<16x512xf32> to vector<16x128xf32>
    %798 = arith.negf %797 : vector<16x128xf32>
    %799 = math.exp %798 : vector<16x128xf32>
    %cst_173 = arith.constant 1.000000e+00 : f32
    %800 = vector.broadcast %cst_173 : f32 to vector<16x128xf32>
    %801 = arith.addf %800, %799 : vector<16x128xf32>
    %802 = arith.divf %800, %801 : vector<16x128xf32>
    %803 = vector.extract_strided_slice %790 {offsets = [0, 256], sizes = [16, 128], strides = [1, 1]} : vector<16x512xf32> to vector<16x128xf32>
    %804 = math.tanh %803 : vector<16x128xf32>
    %805 = vector.extract_strided_slice %790 {offsets = [0, 384], sizes = [16, 128], strides = [1, 1]} : vector<16x512xf32> to vector<16x128xf32>
    %806 = arith.negf %805 : vector<16x128xf32>
    %807 = math.exp %806 : vector<16x128xf32>
    %cst_174 = arith.constant 1.000000e+00 : f32
    %808 = vector.broadcast %cst_174 : f32 to vector<16x128xf32>
    %809 = arith.addf %808, %807 : vector<16x128xf32>
    %810 = arith.divf %808, %809 : vector<16x128xf32>
    %811 = arith.mulf %802, %778 : vector<16x128xf32>
    %812 = arith.mulf %796, %804 : vector<16x128xf32>
    %813 = arith.addf %811, %812 : vector<16x128xf32>
    %814 = math.tanh %813 : vector<16x128xf32>
    %815 = arith.mulf %810, %814 : vector<16x128xf32>
    %816 = arith.truncf %815 : vector<16x128xf32> to vector<16x128xbf16>
    %817 = arith.index_cast %785 : i32 to index
    %c0_175 = arith.constant 0 : index
    %818 = vector.load %arg10[%817, %c0_175] : memref<512x128xbf16, #tpu.memory_space<vmem>>, vector<16x128xbf16>
    tpu.vector_store %arg10[%817, %c0_175], %816 {strides = array<i32>} : memref<512x128xbf16, #tpu.memory_space<vmem>>, vector<16x128xbf16>,
    %c23_i32 = arith.constant 23 : i32
    %c16_i32_176 = arith.constant 16 : i32
    %819 = arith.muli %c23_i32, %c16_i32_176 : i32
    %820 = tpu.assume_multiple %819, 16 : i32
    %821 = arith.index_cast %820 : i32 to index
    %c0_177 = arith.constant 0 : index
    %822 = vector.load %arg9[%821, %c0_177] : memref<512x512xbf16, #tpu.memory_space<vmem>>, vector<16x512xbf16>
    %cst_178 = arith.constant dense<0.000000e+00> : vector<16x512xf32>
    %823 = tpu.matmul %816, %11, %cst_178 {dimension_numbers = #tpu.dot_dimension_numbers<[1], [0], [0], [1], [0, 0, 1, 1], [], []>} : vector<16x128xbf16>, vector<128x512xbf16>, vector<16x512xf32> -> vector<16x512xf32>
    %824 = arith.extf %822 : vector<16x512xbf16> to vector<16x512xf32>
    %825 = arith.addf %824, %823 : vector<16x512xf32>
    %826 = vector.extract_strided_slice %825 {offsets = [0, 0], sizes = [16, 128], strides = [1, 1]} : vector<16x512xf32> to vector<16x128xf32>
    %827 = arith.negf %826 : vector<16x128xf32>
    %828 = math.exp %827 : vector<16x128xf32>
    %cst_179 = arith.constant 1.000000e+00 : f32
    %829 = vector.broadcast %cst_179 : f32 to vector<16x128xf32>
    %830 = arith.addf %829, %828 : vector<16x128xf32>
    %831 = arith.divf %829, %830 : vector<16x128xf32>
    %832 = vector.extract_strided_slice %825 {offsets = [0, 128], sizes = [16, 128], strides = [1, 1]} : vector<16x512xf32> to vector<16x128xf32>
    %833 = arith.negf %832 : vector<16x128xf32>
    %834 = math.exp %833 : vector<16x128xf32>
    %cst_180 = arith.constant 1.000000e+00 : f32
    %835 = vector.broadcast %cst_180 : f32 to vector<16x128xf32>
    %836 = arith.addf %835, %834 : vector<16x128xf32>
    %837 = arith.divf %835, %836 : vector<16x128xf32>
    %838 = vector.extract_strided_slice %825 {offsets = [0, 256], sizes = [16, 128], strides = [1, 1]} : vector<16x512xf32> to vector<16x128xf32>
    %839 = math.tanh %838 : vector<16x128xf32>
    %840 = vector.extract_strided_slice %825 {offsets = [0, 384], sizes = [16, 128], strides = [1, 1]} : vector<16x512xf32> to vector<16x128xf32>
    %841 = arith.negf %840 : vector<16x128xf32>
    %842 = math.exp %841 : vector<16x128xf32>
    %cst_181 = arith.constant 1.000000e+00 : f32
    %843 = vector.broadcast %cst_181 : f32 to vector<16x128xf32>
    %844 = arith.addf %843, %842 : vector<16x128xf32>
    %845 = arith.divf %843, %844 : vector<16x128xf32>
    %846 = arith.mulf %837, %813 : vector<16x128xf32>
    %847 = arith.mulf %831, %839 : vector<16x128xf32>
    %848 = arith.addf %846, %847 : vector<16x128xf32>
    %849 = math.tanh %848 : vector<16x128xf32>
    %850 = arith.mulf %845, %849 : vector<16x128xf32>
    %851 = arith.truncf %850 : vector<16x128xf32> to vector<16x128xbf16>
    %852 = arith.index_cast %820 : i32 to index
    %c0_182 = arith.constant 0 : index
    %853 = vector.load %arg10[%852, %c0_182] : memref<512x128xbf16, #tpu.memory_space<vmem>>, vector<16x128xbf16>
    tpu.vector_store %arg10[%852, %c0_182], %851 {strides = array<i32>} : memref<512x128xbf16, #tpu.memory_space<vmem>>, vector<16x128xbf16>,
    %c24_i32 = arith.constant 24 : i32
    %c16_i32_183 = arith.constant 16 : i32
    %854 = arith.muli %c24_i32, %c16_i32_183 : i32
    %855 = tpu.assume_multiple %854, 16 : i32
    %856 = arith.index_cast %855 : i32 to index
    %c0_184 = arith.constant 0 : index
    %857 = vector.load %arg9[%856, %c0_184] : memref<512x512xbf16, #tpu.memory_space<vmem>>, vector<16x512xbf16>
    %cst_185 = arith.constant dense<0.000000e+00> : vector<16x512xf32>
    %858 = tpu.matmul %851, %11, %cst_185 {dimension_numbers = #tpu.dot_dimension_numbers<[1], [0], [0], [1], [0, 0, 1, 1], [], []>} : vector<16x128xbf16>, vector<128x512xbf16>, vector<16x512xf32> -> vector<16x512xf32>
    %859 = arith.extf %857 : vector<16x512xbf16> to vector<16x512xf32>
    %860 = arith.addf %859, %858 : vector<16x512xf32>
    %861 = vector.extract_strided_slice %860 {offsets = [0, 0], sizes = [16, 128], strides = [1, 1]} : vector<16x512xf32> to vector<16x128xf32>
    %862 = arith.negf %861 : vector<16x128xf32>
    %863 = math.exp %862 : vector<16x128xf32>
    %cst_186 = arith.constant 1.000000e+00 : f32
    %864 = vector.broadcast %cst_186 : f32 to vector<16x128xf32>
    %865 = arith.addf %864, %863 : vector<16x128xf32>
    %866 = arith.divf %864, %865 : vector<16x128xf32>
    %867 = vector.extract_strided_slice %860 {offsets = [0, 128], sizes = [16, 128], strides = [1, 1]} : vector<16x512xf32> to vector<16x128xf32>
    %868 = arith.negf %867 : vector<16x128xf32>
    %869 = math.exp %868 : vector<16x128xf32>
    %cst_187 = arith.constant 1.000000e+00 : f32
    %870 = vector.broadcast %cst_187 : f32 to vector<16x128xf32>
    %871 = arith.addf %870, %869 : vector<16x128xf32>
    %872 = arith.divf %870, %871 : vector<16x128xf32>
    %873 = vector.extract_strided_slice %860 {offsets = [0, 256], sizes = [16, 128], strides = [1, 1]} : vector<16x512xf32> to vector<16x128xf32>
    %874 = math.tanh %873 : vector<16x128xf32>
    %875 = vector.extract_strided_slice %860 {offsets = [0, 384], sizes = [16, 128], strides = [1, 1]} : vector<16x512xf32> to vector<16x128xf32>
    %876 = arith.negf %875 : vector<16x128xf32>
    %877 = math.exp %876 : vector<16x128xf32>
    %cst_188 = arith.constant 1.000000e+00 : f32
    %878 = vector.broadcast %cst_188 : f32 to vector<16x128xf32>
    %879 = arith.addf %878, %877 : vector<16x128xf32>
    %880 = arith.divf %878, %879 : vector<16x128xf32>
    %881 = arith.mulf %872, %848 : vector<16x128xf32>
    %882 = arith.mulf %866, %874 : vector<16x128xf32>
    %883 = arith.addf %881, %882 : vector<16x128xf32>
    %884 = math.tanh %883 : vector<16x128xf32>
    %885 = arith.mulf %880, %884 : vector<16x128xf32>
    %886 = arith.truncf %885 : vector<16x128xf32> to vector<16x128xbf16>
    %887 = arith.index_cast %855 : i32 to index
    %c0_189 = arith.constant 0 : index
    %888 = vector.load %arg10[%887, %c0_189] : memref<512x128xbf16, #tpu.memory_space<vmem>>, vector<16x128xbf16>
    tpu.vector_store %arg10[%887, %c0_189], %886 {strides = array<i32>} : memref<512x128xbf16, #tpu.memory_space<vmem>>, vector<16x128xbf16>,
    %c25_i32 = arith.constant 25 : i32
    %c16_i32_190 = arith.constant 16 : i32
    %889 = arith.muli %c25_i32, %c16_i32_190 : i32
    %890 = tpu.assume_multiple %889, 16 : i32
    %891 = arith.index_cast %890 : i32 to index
    %c0_191 = arith.constant 0 : index
    %892 = vector.load %arg9[%891, %c0_191] : memref<512x512xbf16, #tpu.memory_space<vmem>>, vector<16x512xbf16>
    %cst_192 = arith.constant dense<0.000000e+00> : vector<16x512xf32>
    %893 = tpu.matmul %886, %11, %cst_192 {dimension_numbers = #tpu.dot_dimension_numbers<[1], [0], [0], [1], [0, 0, 1, 1], [], []>} : vector<16x128xbf16>, vector<128x512xbf16>, vector<16x512xf32> -> vector<16x512xf32>
    %894 = arith.extf %892 : vector<16x512xbf16> to vector<16x512xf32>
    %895 = arith.addf %894, %893 : vector<16x512xf32>
    %896 = vector.extract_strided_slice %895 {offsets = [0, 0], sizes = [16, 128], strides = [1, 1]} : vector<16x512xf32> to vector<16x128xf32>
    %897 = arith.negf %896 : vector<16x128xf32>
    %898 = math.exp %897 : vector<16x128xf32>
    %cst_193 = arith.constant 1.000000e+00 : f32
    %899 = vector.broadcast %cst_193 : f32 to vector<16x128xf32>
    %900 = arith.addf %899, %898 : vector<16x128xf32>
    %901 = arith.divf %899, %900 : vector<16x128xf32>
    %902 = vector.extract_strided_slice %895 {offsets = [0, 128], sizes = [16, 128], strides = [1, 1]} : vector<16x512xf32> to vector<16x128xf32>
    %903 = arith.negf %902 : vector<16x128xf32>
    %904 = math.exp %903 : vector<16x128xf32>
    %cst_194 = arith.constant 1.000000e+00 : f32
    %905 = vector.broadcast %cst_194 : f32 to vector<16x128xf32>
    %906 = arith.addf %905, %904 : vector<16x128xf32>
    %907 = arith.divf %905, %906 : vector<16x128xf32>
    %908 = vector.extract_strided_slice %895 {offsets = [0, 256], sizes = [16, 128], strides = [1, 1]} : vector<16x512xf32> to vector<16x128xf32>
    %909 = math.tanh %908 : vector<16x128xf32>
    %910 = vector.extract_strided_slice %895 {offsets = [0, 384], sizes = [16, 128], strides = [1, 1]} : vector<16x512xf32> to vector<16x128xf32>
    %911 = arith.negf %910 : vector<16x128xf32>
    %912 = math.exp %911 : vector<16x128xf32>
    %cst_195 = arith.constant 1.000000e+00 : f32
    %913 = vector.broadcast %cst_195 : f32 to vector<16x128xf32>
    %914 = arith.addf %913, %912 : vector<16x128xf32>
    %915 = arith.divf %913, %914 : vector<16x128xf32>
    %916 = arith.mulf %907, %883 : vector<16x128xf32>
    %917 = arith.mulf %901, %909 : vector<16x128xf32>
    %918 = arith.addf %916, %917 : vector<16x128xf32>
    %919 = math.tanh %918 : vector<16x128xf32>
    %920 = arith.mulf %915, %919 : vector<16x128xf32>
    %921 = arith.truncf %920 : vector<16x128xf32> to vector<16x128xbf16>
    %922 = arith.index_cast %890 : i32 to index
    %c0_196 = arith.constant 0 : index
    %923 = vector.load %arg10[%922, %c0_196] : memref<512x128xbf16, #tpu.memory_space<vmem>>, vector<16x128xbf16>
    tpu.vector_store %arg10[%922, %c0_196], %921 {strides = array<i32>} : memref<512x128xbf16, #tpu.memory_space<vmem>>, vector<16x128xbf16>,
    %c26_i32 = arith.constant 26 : i32
    %c16_i32_197 = arith.constant 16 : i32
    %924 = arith.muli %c26_i32, %c16_i32_197 : i32
    %925 = tpu.assume_multiple %924, 16 : i32
    %926 = arith.index_cast %925 : i32 to index
    %c0_198 = arith.constant 0 : index
    %927 = vector.load %arg9[%926, %c0_198] : memref<512x512xbf16, #tpu.memory_space<vmem>>, vector<16x512xbf16>
    %cst_199 = arith.constant dense<0.000000e+00> : vector<16x512xf32>
    %928 = tpu.matmul %921, %11, %cst_199 {dimension_numbers = #tpu.dot_dimension_numbers<[1], [0], [0], [1], [0, 0, 1, 1], [], []>} : vector<16x128xbf16>, vector<128x512xbf16>, vector<16x512xf32> -> vector<16x512xf32>
    %929 = arith.extf %927 : vector<16x512xbf16> to vector<16x512xf32>
    %930 = arith.addf %929, %928 : vector<16x512xf32>
    %931 = vector.extract_strided_slice %930 {offsets = [0, 0], sizes = [16, 128], strides = [1, 1]} : vector<16x512xf32> to vector<16x128xf32>
    %932 = arith.negf %931 : vector<16x128xf32>
    %933 = math.exp %932 : vector<16x128xf32>
    %cst_200 = arith.constant 1.000000e+00 : f32
    %934 = vector.broadcast %cst_200 : f32 to vector<16x128xf32>
    %935 = arith.addf %934, %933 : vector<16x128xf32>
    %936 = arith.divf %934, %935 : vector<16x128xf32>
    %937 = vector.extract_strided_slice %930 {offsets = [0, 128], sizes = [16, 128], strides = [1, 1]} : vector<16x512xf32> to vector<16x128xf32>
    %938 = arith.negf %937 : vector<16x128xf32>
    %939 = math.exp %938 : vector<16x128xf32>
    %cst_201 = arith.constant 1.000000e+00 : f32
    %940 = vector.broadcast %cst_201 : f32 to vector<16x128xf32>
    %941 = arith.addf %940, %939 : vector<16x128xf32>
    %942 = arith.divf %940, %941 : vector<16x128xf32>
    %943 = vector.extract_strided_slice %930 {offsets = [0, 256], sizes = [16, 128], strides = [1, 1]} : vector<16x512xf32> to vector<16x128xf32>
    %944 = math.tanh %943 : vector<16x128xf32>
    %945 = vector.extract_strided_slice %930 {offsets = [0, 384], sizes = [16, 128], strides = [1, 1]} : vector<16x512xf32> to vector<16x128xf32>
    %946 = arith.negf %945 : vector<16x128xf32>
    %947 = math.exp %946 : vector<16x128xf32>
    %cst_202 = arith.constant 1.000000e+00 : f32
    %948 = vector.broadcast %cst_202 : f32 to vector<16x128xf32>
    %949 = arith.addf %948, %947 : vector<16x128xf32>
    %950 = arith.divf %948, %949 : vector<16x128xf32>
    %951 = arith.mulf %942, %918 : vector<16x128xf32>
    %952 = arith.mulf %936, %944 : vector<16x128xf32>
    %953 = arith.addf %951, %952 : vector<16x128xf32>
    %954 = math.tanh %953 : vector<16x128xf32>
    %955 = arith.mulf %950, %954 : vector<16x128xf32>
    %956 = arith.truncf %955 : vector<16x128xf32> to vector<16x128xbf16>
    %957 = arith.index_cast %925 : i32 to index
    %c0_203 = arith.constant 0 : index
    %958 = vector.load %arg10[%957, %c0_203] : memref<512x128xbf16, #tpu.memory_space<vmem>>, vector<16x128xbf16>
    tpu.vector_store %arg10[%957, %c0_203], %956 {strides = array<i32>} : memref<512x128xbf16, #tpu.memory_space<vmem>>, vector<16x128xbf16>,
    %c27_i32 = arith.constant 27 : i32
    %c16_i32_204 = arith.constant 16 : i32
    %959 = arith.muli %c27_i32, %c16_i32_204 : i32
    %960 = tpu.assume_multiple %959, 16 : i32
    %961 = arith.index_cast %960 : i32 to index
    %c0_205 = arith.constant 0 : index
    %962 = vector.load %arg9[%961, %c0_205] : memref<512x512xbf16, #tpu.memory_space<vmem>>, vector<16x512xbf16>
    %cst_206 = arith.constant dense<0.000000e+00> : vector<16x512xf32>
    %963 = tpu.matmul %956, %11, %cst_206 {dimension_numbers = #tpu.dot_dimension_numbers<[1], [0], [0], [1], [0, 0, 1, 1], [], []>} : vector<16x128xbf16>, vector<128x512xbf16>, vector<16x512xf32> -> vector<16x512xf32>
    %964 = arith.extf %962 : vector<16x512xbf16> to vector<16x512xf32>
    %965 = arith.addf %964, %963 : vector<16x512xf32>
    %966 = vector.extract_strided_slice %965 {offsets = [0, 0], sizes = [16, 128], strides = [1, 1]} : vector<16x512xf32> to vector<16x128xf32>
    %967 = arith.negf %966 : vector<16x128xf32>
    %968 = math.exp %967 : vector<16x128xf32>
    %cst_207 = arith.constant 1.000000e+00 : f32
    %969 = vector.broadcast %cst_207 : f32 to vector<16x128xf32>
    %970 = arith.addf %969, %968 : vector<16x128xf32>
    %971 = arith.divf %969, %970 : vector<16x128xf32>
    %972 = vector.extract_strided_slice %965 {offsets = [0, 128], sizes = [16, 128], strides = [1, 1]} : vector<16x512xf32> to vector<16x128xf32>
    %973 = arith.negf %972 : vector<16x128xf32>
    %974 = math.exp %973 : vector<16x128xf32>
    %cst_208 = arith.constant 1.000000e+00 : f32
    %975 = vector.broadcast %cst_208 : f32 to vector<16x128xf32>
    %976 = arith.addf %975, %974 : vector<16x128xf32>
    %977 = arith.divf %975, %976 : vector<16x128xf32>
    %978 = vector.extract_strided_slice %965 {offsets = [0, 256], sizes = [16, 128], strides = [1, 1]} : vector<16x512xf32> to vector<16x128xf32>
    %979 = math.tanh %978 : vector<16x128xf32>
    %980 = vector.extract_strided_slice %965 {offsets = [0, 384], sizes = [16, 128], strides = [1, 1]} : vector<16x512xf32> to vector<16x128xf32>
    %981 = arith.negf %980 : vector<16x128xf32>
    %982 = math.exp %981 : vector<16x128xf32>
    %cst_209 = arith.constant 1.000000e+00 : f32
    %983 = vector.broadcast %cst_209 : f32 to vector<16x128xf32>
    %984 = arith.addf %983, %982 : vector<16x128xf32>
    %985 = arith.divf %983, %984 : vector<16x128xf32>
    %986 = arith.mulf %977, %953 : vector<16x128xf32>
    %987 = arith.mulf %971, %979 : vector<16x128xf32>
    %988 = arith.addf %986, %987 : vector<16x128xf32>
    %989 = math.tanh %988 : vector<16x128xf32>
    %990 = arith.mulf %985, %989 : vector<16x128xf32>
    %991 = arith.truncf %990 : vector<16x128xf32> to vector<16x128xbf16>
    %992 = arith.index_cast %960 : i32 to index
    %c0_210 = arith.constant 0 : index
    %993 = vector.load %arg10[%992, %c0_210] : memref<512x128xbf16, #tpu.memory_space<vmem>>, vector<16x128xbf16>
    tpu.vector_store %arg10[%992, %c0_210], %991 {strides = array<i32>} : memref<512x128xbf16, #tpu.memory_space<vmem>>, vector<16x128xbf16>,
    %c28_i32 = arith.constant 28 : i32
    %c16_i32_211 = arith.constant 16 : i32
    %994 = arith.muli %c28_i32, %c16_i32_211 : i32
    %995 = tpu.assume_multiple %994, 16 : i32
    %996 = arith.index_cast %995 : i32 to index
    %c0_212 = arith.constant 0 : index
    %997 = vector.load %arg9[%996, %c0_212] : memref<512x512xbf16, #tpu.memory_space<vmem>>, vector<16x512xbf16>
    %cst_213 = arith.constant dense<0.000000e+00> : vector<16x512xf32>
    %998 = tpu.matmul %991, %11, %cst_213 {dimension_numbers = #tpu.dot_dimension_numbers<[1], [0], [0], [1], [0, 0, 1, 1], [], []>} : vector<16x128xbf16>, vector<128x512xbf16>, vector<16x512xf32> -> vector<16x512xf32>
    %999 = arith.extf %997 : vector<16x512xbf16> to vector<16x512xf32>
    %1000 = arith.addf %999, %998 : vector<16x512xf32>
    %1001 = vector.extract_strided_slice %1000 {offsets = [0, 0], sizes = [16, 128], strides = [1, 1]} : vector<16x512xf32> to vector<16x128xf32>
    %1002 = arith.negf %1001 : vector<16x128xf32>
    %1003 = math.exp %1002 : vector<16x128xf32>
    %cst_214 = arith.constant 1.000000e+00 : f32
    %1004 = vector.broadcast %cst_214 : f32 to vector<16x128xf32>
    %1005 = arith.addf %1004, %1003 : vector<16x128xf32>
    %1006 = arith.divf %1004, %1005 : vector<16x128xf32>
    %1007 = vector.extract_strided_slice %1000 {offsets = [0, 128], sizes = [16, 128], strides = [1, 1]} : vector<16x512xf32> to vector<16x128xf32>
    %1008 = arith.negf %1007 : vector<16x128xf32>
    %1009 = math.exp %1008 : vector<16x128xf32>
    %cst_215 = arith.constant 1.000000e+00 : f32
    %1010 = vector.broadcast %cst_215 : f32 to vector<16x128xf32>
    %1011 = arith.addf %1010, %1009 : vector<16x128xf32>
    %1012 = arith.divf %1010, %1011 : vector<16x128xf32>
    %1013 = vector.extract_strided_slice %1000 {offsets = [0, 256], sizes = [16, 128], strides = [1, 1]} : vector<16x512xf32> to vector<16x128xf32>
    %1014 = math.tanh %1013 : vector<16x128xf32>
    %1015 = vector.extract_strided_slice %1000 {offsets = [0, 384], sizes = [16, 128], strides = [1, 1]} : vector<16x512xf32> to vector<16x128xf32>
    %1016 = arith.negf %1015 : vector<16x128xf32>
    %1017 = math.exp %1016 : vector<16x128xf32>
    %cst_216 = arith.constant 1.000000e+00 : f32
    %1018 = vector.broadcast %cst_216 : f32 to vector<16x128xf32>
    %1019 = arith.addf %1018, %1017 : vector<16x128xf32>
    %1020 = arith.divf %1018, %1019 : vector<16x128xf32>
    %1021 = arith.mulf %1012, %988 : vector<16x128xf32>
    %1022 = arith.mulf %1006, %1014 : vector<16x128xf32>
    %1023 = arith.addf %1021, %1022 : vector<16x128xf32>
    %1024 = math.tanh %1023 : vector<16x128xf32>
    %1025 = arith.mulf %1020, %1024 : vector<16x128xf32>
    %1026 = arith.truncf %1025 : vector<16x128xf32> to vector<16x128xbf16>
    %1027 = arith.index_cast %995 : i32 to index
    %c0_217 = arith.constant 0 : index
    %1028 = vector.load %arg10[%1027, %c0_217] : memref<512x128xbf16, #tpu.memory_space<vmem>>, vector<16x128xbf16>
    tpu.vector_store %arg10[%1027, %c0_217], %1026 {strides = array<i32>} : memref<512x128xbf16, #tpu.memory_space<vmem>>, vector<16x128xbf16>,
    %c29_i32 = arith.constant 29 : i32
    %c16_i32_218 = arith.constant 16 : i32
    %1029 = arith.muli %c29_i32, %c16_i32_218 : i32
    %1030 = tpu.assume_multiple %1029, 16 : i32
    %1031 = arith.index_cast %1030 : i32 to index
    %c0_219 = arith.constant 0 : index
    %1032 = vector.load %arg9[%1031, %c0_219] : memref<512x512xbf16, #tpu.memory_space<vmem>>, vector<16x512xbf16>
    %cst_220 = arith.constant dense<0.000000e+00> : vector<16x512xf32>
    %1033 = tpu.matmul %1026, %11, %cst_220 {dimension_numbers = #tpu.dot_dimension_numbers<[1], [0], [0], [1], [0, 0, 1, 1], [], []>} : vector<16x128xbf16>, vector<128x512xbf16>, vector<16x512xf32> -> vector<16x512xf32>
    %1034 = arith.extf %1032 : vector<16x512xbf16> to vector<16x512xf32>
    %1035 = arith.addf %1034, %1033 : vector<16x512xf32>
    %1036 = vector.extract_strided_slice %1035 {offsets = [0, 0], sizes = [16, 128], strides = [1, 1]} : vector<16x512xf32> to vector<16x128xf32>
    %1037 = arith.negf %1036 : vector<16x128xf32>
    %1038 = math.exp %1037 : vector<16x128xf32>
    %cst_221 = arith.constant 1.000000e+00 : f32
    %1039 = vector.broadcast %cst_221 : f32 to vector<16x128xf32>
    %1040 = arith.addf %1039, %1038 : vector<16x128xf32>
    %1041 = arith.divf %1039, %1040 : vector<16x128xf32>
    %1042 = vector.extract_strided_slice %1035 {offsets = [0, 128], sizes = [16, 128], strides = [1, 1]} : vector<16x512xf32> to vector<16x128xf32>
    %1043 = arith.negf %1042 : vector<16x128xf32>
    %1044 = math.exp %1043 : vector<16x128xf32>
    %cst_222 = arith.constant 1.000000e+00 : f32
    %1045 = vector.broadcast %cst_222 : f32 to vector<16x128xf32>
    %1046 = arith.addf %1045, %1044 : vector<16x128xf32>
    %1047 = arith.divf %1045, %1046 : vector<16x128xf32>
    %1048 = vector.extract_strided_slice %1035 {offsets = [0, 256], sizes = [16, 128], strides = [1, 1]} : vector<16x512xf32> to vector<16x128xf32>
    %1049 = math.tanh %1048 : vector<16x128xf32>
    %1050 = vector.extract_strided_slice %1035 {offsets = [0, 384], sizes = [16, 128], strides = [1, 1]} : vector<16x512xf32> to vector<16x128xf32>
    %1051 = arith.negf %1050 : vector<16x128xf32>
    %1052 = math.exp %1051 : vector<16x128xf32>
    %cst_223 = arith.constant 1.000000e+00 : f32
    %1053 = vector.broadcast %cst_223 : f32 to vector<16x128xf32>
    %1054 = arith.addf %1053, %1052 : vector<16x128xf32>
    %1055 = arith.divf %1053, %1054 : vector<16x128xf32>
    %1056 = arith.mulf %1047, %1023 : vector<16x128xf32>
    %1057 = arith.mulf %1041, %1049 : vector<16x128xf32>
    %1058 = arith.addf %1056, %1057 : vector<16x128xf32>
    %1059 = math.tanh %1058 : vector<16x128xf32>
    %1060 = arith.mulf %1055, %1059 : vector<16x128xf32>
    %1061 = arith.truncf %1060 : vector<16x128xf32> to vector<16x128xbf16>
    %1062 = arith.index_cast %1030 : i32 to index
    %c0_224 = arith.constant 0 : index
    %1063 = vector.load %arg10[%1062, %c0_224] : memref<512x128xbf16, #tpu.memory_space<vmem>>, vector<16x128xbf16>
    tpu.vector_store %arg10[%1062, %c0_224], %1061 {strides = array<i32>} : memref<512x128xbf16, #tpu.memory_space<vmem>>, vector<16x128xbf16>,
    %c30_i32 = arith.constant 30 : i32
    %c16_i32_225 = arith.constant 16 : i32
    %1064 = arith.muli %c30_i32, %c16_i32_225 : i32
    %1065 = tpu.assume_multiple %1064, 16 : i32
    %1066 = arith.index_cast %1065 : i32 to index
    %c0_226 = arith.constant 0 : index
    %1067 = vector.load %arg9[%1066, %c0_226] : memref<512x512xbf16, #tpu.memory_space<vmem>>, vector<16x512xbf16>
    %cst_227 = arith.constant dense<0.000000e+00> : vector<16x512xf32>
    %1068 = tpu.matmul %1061, %11, %cst_227 {dimension_numbers = #tpu.dot_dimension_numbers<[1], [0], [0], [1], [0, 0, 1, 1], [], []>} : vector<16x128xbf16>, vector<128x512xbf16>, vector<16x512xf32> -> vector<16x512xf32>
    %1069 = arith.extf %1067 : vector<16x512xbf16> to vector<16x512xf32>
    %1070 = arith.addf %1069, %1068 : vector<16x512xf32>
    %1071 = vector.extract_strided_slice %1070 {offsets = [0, 0], sizes = [16, 128], strides = [1, 1]} : vector<16x512xf32> to vector<16x128xf32>
    %1072 = arith.negf %1071 : vector<16x128xf32>
    %1073 = math.exp %1072 : vector<16x128xf32>
    %cst_228 = arith.constant 1.000000e+00 : f32
    %1074 = vector.broadcast %cst_228 : f32 to vector<16x128xf32>
    %1075 = arith.addf %1074, %1073 : vector<16x128xf32>
    %1076 = arith.divf %1074, %1075 : vector<16x128xf32>
    %1077 = vector.extract_strided_slice %1070 {offsets = [0, 128], sizes = [16, 128], strides = [1, 1]} : vector<16x512xf32> to vector<16x128xf32>
    %1078 = arith.negf %1077 : vector<16x128xf32>
    %1079 = math.exp %1078 : vector<16x128xf32>
    %cst_229 = arith.constant 1.000000e+00 : f32
    %1080 = vector.broadcast %cst_229 : f32 to vector<16x128xf32>
    %1081 = arith.addf %1080, %1079 : vector<16x128xf32>
    %1082 = arith.divf %1080, %1081 : vector<16x128xf32>
    %1083 = vector.extract_strided_slice %1070 {offsets = [0, 256], sizes = [16, 128], strides = [1, 1]} : vector<16x512xf32> to vector<16x128xf32>
    %1084 = math.tanh %1083 : vector<16x128xf32>
    %1085 = vector.extract_strided_slice %1070 {offsets = [0, 384], sizes = [16, 128], strides = [1, 1]} : vector<16x512xf32> to vector<16x128xf32>
    %1086 = arith.negf %1085 : vector<16x128xf32>
    %1087 = math.exp %1086 : vector<16x128xf32>
    %cst_230 = arith.constant 1.000000e+00 : f32
    %1088 = vector.broadcast %cst_230 : f32 to vector<16x128xf32>
    %1089 = arith.addf %1088, %1087 : vector<16x128xf32>
    %1090 = arith.divf %1088, %1089 : vector<16x128xf32>
    %1091 = arith.mulf %1082, %1058 : vector<16x128xf32>
    %1092 = arith.mulf %1076, %1084 : vector<16x128xf32>
    %1093 = arith.addf %1091, %1092 : vector<16x128xf32>
    %1094 = math.tanh %1093 : vector<16x128xf32>
    %1095 = arith.mulf %1090, %1094 : vector<16x128xf32>
    %1096 = arith.truncf %1095 : vector<16x128xf32> to vector<16x128xbf16>
    %1097 = arith.index_cast %1065 : i32 to index
    %c0_231 = arith.constant 0 : index
    %1098 = vector.load %arg10[%1097, %c0_231] : memref<512x128xbf16, #tpu.memory_space<vmem>>, vector<16x128xbf16>
    tpu.vector_store %arg10[%1097, %c0_231], %1096 {strides = array<i32>} : memref<512x128xbf16, #tpu.memory_space<vmem>>, vector<16x128xbf16>,
    %c31_i32 = arith.constant 31 : i32
    %c16_i32_232 = arith.constant 16 : i32
    %1099 = arith.muli %c31_i32, %c16_i32_232 : i32
    %1100 = tpu.assume_multiple %1099, 16 : i32
    %1101 = arith.index_cast %1100 : i32 to index
    %c0_233 = arith.constant 0 : index
    %1102 = vector.load %arg9[%1101, %c0_233] : memref<512x512xbf16, #tpu.memory_space<vmem>>, vector<16x512xbf16>
    %cst_234 = arith.constant dense<0.000000e+00> : vector<16x512xf32>
    %1103 = tpu.matmul %1096, %11, %cst_234 {dimension_numbers = #tpu.dot_dimension_numbers<[1], [0], [0], [1], [0, 0, 1, 1], [], []>} : vector<16x128xbf16>, vector<128x512xbf16>, vector<16x512xf32> -> vector<16x512xf32>
    %1104 = arith.extf %1102 : vector<16x512xbf16> to vector<16x512xf32>
    %1105 = arith.addf %1104, %1103 : vector<16x512xf32>
    %1106 = vector.extract_strided_slice %1105 {offsets = [0, 0], sizes = [16, 128], strides = [1, 1]} : vector<16x512xf32> to vector<16x128xf32>
    %1107 = arith.negf %1106 : vector<16x128xf32>
    %1108 = math.exp %1107 : vector<16x128xf32>
    %cst_235 = arith.constant 1.000000e+00 : f32
    %1109 = vector.broadcast %cst_235 : f32 to vector<16x128xf32>
    %1110 = arith.addf %1109, %1108 : vector<16x128xf32>
    %1111 = arith.divf %1109, %1110 : vector<16x128xf32>
    %1112 = vector.extract_strided_slice %1105 {offsets = [0, 128], sizes = [16, 128], strides = [1, 1]} : vector<16x512xf32> to vector<16x128xf32>
    %1113 = arith.negf %1112 : vector<16x128xf32>
    %1114 = math.exp %1113 : vector<16x128xf32>
    %cst_236 = arith.constant 1.000000e+00 : f32
    %1115 = vector.broadcast %cst_236 : f32 to vector<16x128xf32>
    %1116 = arith.addf %1115, %1114 : vector<16x128xf32>
    %1117 = arith.divf %1115, %1116 : vector<16x128xf32>
    %1118 = vector.extract_strided_slice %1105 {offsets = [0, 256], sizes = [16, 128], strides = [1, 1]} : vector<16x512xf32> to vector<16x128xf32>
    %1119 = math.tanh %1118 : vector<16x128xf32>
    %1120 = vector.extract_strided_slice %1105 {offsets = [0, 384], sizes = [16, 128], strides = [1, 1]} : vector<16x512xf32> to vector<16x128xf32>
    %1121 = arith.negf %1120 : vector<16x128xf32>
    %1122 = math.exp %1121 : vector<16x128xf32>
    %cst_237 = arith.constant 1.000000e+00 : f32
    %1123 = vector.broadcast %cst_237 : f32 to vector<16x128xf32>
    %1124 = arith.addf %1123, %1122 : vector<16x128xf32>
    %1125 = arith.divf %1123, %1124 : vector<16x128xf32>
    %1126 = arith.mulf %1117, %1093 : vector<16x128xf32>
    %1127 = arith.mulf %1111, %1119 : vector<16x128xf32>
    %1128 = arith.addf %1126, %1127 : vector<16x128xf32>
    %1129 = math.tanh %1128 : vector<16x128xf32>
    %1130 = arith.mulf %1125, %1129 : vector<16x128xf32>
    %1131 = arith.truncf %1130 : vector<16x128xf32> to vector<16x128xbf16>
    %1132 = arith.index_cast %1100 : i32 to index
    %c0_238 = arith.constant 0 : index
    %1133 = vector.load %arg10[%1132, %c0_238] : memref<512x128xbf16, #tpu.memory_space<vmem>>, vector<16x128xbf16>
    tpu.vector_store %arg10[%1132, %c0_238], %1131 {strides = array<i32>} : memref<512x128xbf16, #tpu.memory_space<vmem>>, vector<16x128xbf16>,
    %c32_i32 = arith.constant 32 : i32
    %c0_239 = arith.constant 0 : index
    %c0_240 = arith.constant 0 : index
    %1134 = vector.load %arg12[%c0_239, %c0_240] : memref<16x128xbf16, #tpu.memory_space<vmem>>, vector<16x128xbf16>
    tpu.vector_store %arg12[%c0_239, %c0_240], %1131 {strides = array<i32>} : memref<16x128xbf16, #tpu.memory_space<vmem>>, vector<16x128xbf16>,
    %c0_241 = arith.constant 0 : index
    %c0_242 = arith.constant 0 : index
    %1135 = vector.load %arg13[%c0_241, %c0_242] : memref<16x128xf32, #tpu.memory_space<vmem>>, vector<16x128xf32>
    tpu.vector_store %arg13[%c0_241, %c0_242], %1128 {strides = array<i32>} : memref<16x128xf32, #tpu.memory_space<vmem>>, vector<16x128xf32>,
    %c0_243 = arith.constant 0 : index
    %c0_244 = arith.constant 0 : index
    %1136 = vector.load %arg10[%c0_243, %c0_244] : memref<512x128xbf16, #tpu.memory_space<vmem>>, vector<512x128xbf16>
    %c0_245 = arith.constant 0 : index
    %c0_246 = arith.constant 0 : index
    %1137 = vector.load %arg6[%c0_245, %c0_246] : memref<128x256xbf16, #tpu.memory_space<vmem>>, vector<128x256xbf16>
    %cst_247 = arith.constant dense<0.000000e+00> : vector<512x256xf32>
    %1138 = tpu.matmul %1136, %1137, %cst_247 {dimension_numbers = #tpu.dot_dimension_numbers<[1], [0], [0], [1], [0, 0, 1, 1], [], []>} : vector<512x128xbf16>, vector<128x256xbf16>, vector<512x256xf32> -> vector<512x256xf32>
    %c0_248 = arith.constant 0 : index
    %c0_249 = arith.constant 0 : index
    %1139 = vector.load %arg11[%c0_248, %c0_249] : memref<512x256xf32, #tpu.memory_space<vmem>>, vector<512x256xf32>
    tpu.vector_store %arg11[%c0_248, %c0_249], %1138 {strides = array<i32>} : memref<512x256xf32, #tpu.memory_space<vmem>>, vector<512x256xf32>,
    %c0_250 = arith.constant 0 : index
    %c0_251 = arith.constant 0 : index
    %1140 = vector.load %arg7[%c0_250, %c0_251] : memref<1x256xf32, #tpu.memory_space<vmem>>, vector<1x256xf32>
    %cst_252 = arith.constant 0.000000e+00 : f32
    %1141 = vector.broadcast %cst_252 : f32 to vector<1x1xf32>
    %c0_i32_253 = arith.constant 0 : i32
    %c16_i32_254 = arith.constant 16 : i32
    %1142 = arith.addi %c0_i32_253, %c16_i32_254 : i32
    %c1_i32_255 = arith.constant 1 : i32
    %1143:2 = scf.for %arg16 = %c0_i32_253 to %1142 step %c1_i32_255 iter_args(%arg17 = %1141, %arg18 = %1141) -> (vector<1x1xf32>, vector<1x1xf32>)  : i32 {
      %c32_i32_267 = arith.constant 32 : i32
      %1153 = arith.muli %arg16, %c32_i32_267 : i32
      %1154 = tpu.assume_multiple %1153, 32 : i32
      %1155 = arith.index_cast %1154 : i32 to index
      %c0_268 = arith.constant 0 : index
      %1156 = vector.load %arg11[%1155, %c0_268] : memref<512x256xf32, #tpu.memory_space<vmem>>, vector<32x256xf32>
      %1157 = vector.broadcast %1140 : vector<1x256xf32> to vector<32x256xf32>
      %1158 = arith.addf %1156, %1157 : vector<32x256xf32>
      %1159 = arith.index_cast %1154 : i32 to index
      %c0_269 = arith.constant 0 : index
      %1160 = vector.load %arg2[%1159, %c0_269] : memref<512x1xi32, #tpu.memory_space<vmem>>, vector<32x1xi32>
      %cst_270 = arith.constant dense<0xFF800000> : vector<32xf32>
      %1161 = vector.multi_reduction <maximumf>, %1158, %cst_270 [1] : vector<32x256xf32> to vector<32xf32>
      %1162 = vector.shape_cast %1161 : vector<32xf32> to vector<32x1xf32>
      %1163 = vector.broadcast %1162 : vector<32x1xf32> to vector<32x256xf32>
      %1164 = arith.subf %1158, %1163 : vector<32x256xf32>
      %1165 = math.exp %1164 : vector<32x256xf32>
      %cst_271 = arith.constant dense<0.000000e+00> : vector<32xf32>
      %1166 = vector.multi_reduction <add>, %1165, %cst_271 [1] : vector<32x256xf32> to vector<32xf32>
      %1167 = vector.shape_cast %1166 : vector<32xf32> to vector<32x1xf32>
      %1168 = math.log %1167 : vector<32x1xf32>
      %1169 = arith.addf %1168, %1162 : vector<32x1xf32>
      %1170 = tpu.iota {dimensions = array<i32: 1>} : vector<32x256xi32>
      %1171 = vector.broadcast %1160 : vector<32x1xi32> to vector<32x256xi32>
      %1172 = arith.cmpi eq, %1170, %1171 : vector<32x256xi32>
      %cst_272 = arith.constant 0.000000e+00 : f32
      %1173 = vector.broadcast %cst_272 : f32 to vector<32x256xf32>
      %1174 = arith.select %1172, %1158, %1173 : vector<32x256xi1>, vector<32x256xf32>
      %cst_273 = arith.constant dense<0.000000e+00> : vector<32xf32>
      %1175 = vector.multi_reduction <add>, %1174, %cst_273 [1] : vector<32x256xf32> to vector<32xf32>
      %1176 = vector.shape_cast %1175 : vector<32xf32> to vector<32x1xf32>
      %c0_i32_274 = arith.constant 0 : i32
      %1177 = vector.broadcast %c0_i32_274 : i32 to vector<32x1xi32>
      %1178 = arith.cmpi ne, %1160, %1177 : vector<32x1xi32>
      %1179 = arith.extui %1178 : vector<32x1xi1> to vector<32x1xi32>
      %1180 = arith.sitofp %1179 : vector<32x1xi32> to vector<32x1xf32>
      %1181 = arith.subf %1169, %1176 : vector<32x1xf32>
      %1182 = arith.mulf %1181, %1180 : vector<32x1xf32>
      %cst_275 = arith.constant dense<0.000000e+00> : vector<1xf32>
      %1183 = vector.multi_reduction <add>, %1182, %cst_275 [0] : vector<32x1xf32> to vector<1xf32>
      %1184 = vector.shape_cast %1183 : vector<1xf32> to vector<1x1xf32>
      %1185 = arith.addf %arg17, %1184 : vector<1x1xf32>
      %cst_276 = arith.constant dense<0.000000e+00> : vector<1xf32>
      %1186 = vector.multi_reduction <add>, %1180, %cst_276 [0] : vector<32x1xf32> to vector<1xf32>
      %1187 = vector.shape_cast %1186 : vector<1xf32> to vector<1x1xf32>
      %1188 = arith.addf %arg18, %1187 : vector<1x1xf32>
      scf.yield %1185, %1188 : vector<1x1xf32>, vector<1x1xf32>
    }
    %c16_i32_256 = arith.constant 16 : i32
    %c0_257 = arith.constant 0 : index
    %c0_258 = arith.constant 0 : index
    %1144 = vector.load %arg14[%c0_257, %c0_258] : memref<1x1xf32, #tpu.memory_space<vmem>>, vector<1x1xf32>
    %1145 = arith.addf %1144, %1143#0 : vector<1x1xf32>
    %c0_259 = arith.constant 0 : index
    %c0_260 = arith.constant 0 : index
    %1146 = vector.load %arg14[%c0_259, %c0_260] : memref<1x1xf32, #tpu.memory_space<vmem>>, vector<1x1xf32>
    tpu.vector_store %arg14[%c0_259, %c0_260], %1145 {strides = array<i32>} : memref<1x1xf32, #tpu.memory_space<vmem>>, vector<1x1xf32>,
    %c0_261 = arith.constant 0 : index
    %c0_262 = arith.constant 0 : index
    %1147 = vector.load %arg15[%c0_261, %c0_262] : memref<1x1xf32, #tpu.memory_space<vmem>>, vector<1x1xf32>
    %1148 = arith.addf %1147, %1143#1 : vector<1x1xf32>
    %c0_263 = arith.constant 0 : index
    %c0_264 = arith.constant 0 : index
    %1149 = vector.load %arg15[%c0_263, %c0_264] : memref<1x1xf32, #tpu.memory_space<vmem>>, vector<1x1xf32>
    tpu.vector_store %arg15[%c0_263, %c0_264], %1148 {strides = array<i32>} : memref<1x1xf32, #tpu.memory_space<vmem>>, vector<1x1xf32>,
    %c1_i32_265 = arith.constant 1 : i32
    %1150 = arith.cmpi eq, %arg0, %c1_i32_265 : i32
    %1151 = arith.extui %1150 : i1 to i32
    %c0_i32_266 = arith.constant 0 : i32
    %1152 = arith.cmpi ne, %1151, %c0_i32_266 : i32
    scf.if %1152 {
      %c0_267 = arith.constant 0 : index
      %c0_268 = arith.constant 0 : index
      %1153 = vector.load %arg14[%c0_267, %c0_268] : memref<1x1xf32, #tpu.memory_space<vmem>>, vector<1x1xf32>
      %c0_269 = arith.constant 0 : index
      %c0_270 = arith.constant 0 : index
      %1154 = vector.load %arg15[%c0_269, %c0_270] : memref<1x1xf32, #tpu.memory_space<vmem>>, vector<1x1xf32>
      %1155 = arith.divf %1153, %1154 : vector<1x1xf32>
      %c0_271 = arith.constant 0 : index
      %c0_272 = arith.constant 0 : index
      %1156 = vector.load %arg8[%c0_271, %c0_272] : memref<1x1xf32, #tpu.memory_space<vmem>>, vector<1x1xf32>
      tpu.vector_store %arg8[%c0_271, %c0_272], %1155 {strides = array<i32>} : memref<1x1xf32, #tpu.memory_space<vmem>>, vector<1x1xf32>,
    } else {
    }
    return
  }
  func.func @transform_0(%arg0: i32) -> (i32, i32) {
    %c0_i32 = arith.constant 0 : i32
    %c0_i32_0 = arith.constant 0 : i32
    return %arg0, %c0_i32 : i32, i32
  }
  func.func @transform_1(%arg0: i32) -> (i32, i32) {
    %c0_i32 = arith.constant 0 : i32
    %c0_i32_0 = arith.constant 0 : i32
    return %arg0, %c0_i32 : i32, i32
  }
  func.func @transform_2(%arg0: i32) -> (i32, i32) {
    %c0_i32 = arith.constant 0 : i32
    %c0_i32_0 = arith.constant 0 : i32
    %c0_i32_1 = arith.constant 0 : i32
    return %c0_i32, %c0_i32_0 : i32, i32
  }
  func.func @transform_3(%arg0: i32) -> (i32, i32) {
    %c0_i32 = arith.constant 0 : i32
    %c0_i32_0 = arith.constant 0 : i32
    %c0_i32_1 = arith.constant 0 : i32
    return %c0_i32, %c0_i32_0 : i32, i32
  }
  func.func @transform_4(%arg0: i32) -> (i32, i32) {
    %c0_i32 = arith.constant 0 : i32
    %c0_i32_0 = arith.constant 0 : i32
    %c0_i32_1 = arith.constant 0 : i32
    return %c0_i32, %c0_i32_0 : i32, i32
  }
  func.func @transform_5(%arg0: i32) -> (i32, i32) {
    %c0_i32 = arith.constant 0 : i32
    %c0_i32_0 = arith.constant 0 : i32
    %c0_i32_1 = arith.constant 0 : i32
    return %c0_i32, %c0_i32_0 : i32, i32
  }
  func.func @transform_6(%arg0: i32) -> (i32, i32) {
    %c0_i32 = arith.constant 0 : i32
    %c0_i32_0 = arith.constant 0 : i32
    %c0_i32_1 = arith.constant 0 : i32
    return %c0_i32, %c0_i32_0 : i32, i32
  }
  func.func @transform_7(%arg0: i32) -> (i32, i32) {
    %c0_i32 = arith.constant 0 : i32
    %c0_i32_0 = arith.constant 0 : i32
    %c0_i32_1 = arith.constant 0 : i32
    return %c0_i32, %c0_i32_0 : i32, i32
  }
}

</mosaic_0001>

<llo_original>
// kernel: language_model_loss.1
$region0: #{language_model_loss.1}
  #allocation0 [shape = 'u32[]', space=smem, size = 0x4, offset = 0x4, fixed_abs, tag = 'smem constant byte address 0x4 - core index']
  #allocation1 [shape = 'u32[144,128]{1,0:T(1,128)}', space=vmem, size = 0x12000, scoped, tag = 'internal scratch']
  #allocation2 [shape = 'bf16[512,512]{1,0:T(16,128)(2,1)}', space=vmem, size = 0x80000, scoped, tag = 'scratch operand']
  #allocation3 [shape = 'bf16[512,128]{1,0:T(16,128)(2,1)}', space=vmem, size = 0x20000, scoped, tag = 'scratch operand']
  #allocation4 [shape = 'f32[512,256]{1,0:T(8,128)}', space=vmem, size = 0x80000, scoped, tag = 'scratch operand']
  #allocation5 [shape = 'bf16[16,128]{1,0:T(16,128)(2,1)}', space=vmem, size = 0x1000, scoped, tag = 'scratch operand']
  #allocation6 [shape = 'f32[16,128]{1,0:T(8,128)}', space=vmem, size = 0x2000, scoped, tag = 'scratch operand']
  #allocation7 [shape = 'f32[1,1]{1,0:T(1,128)}', space=vmem, size = 0x200, scoped, tag = 'scratch operand']
  #allocation8 [shape = 'f32[1,1]{1,0:T(1,128)}', space=vmem, size = 0x200, scoped, tag = 'scratch operand']
  %s0 = inlined_call_operand.vmem [shape: bf16[1024,64], index: 0, kind: input, shape index: {}]
  %s1 = inlined_call_operand.vmem [shape: s32[1024,1], index: 1, kind: input, shape index: {}]
  %s2 = inlined_call_operand.vmem [shape: bf16[64,512], index: 2, kind: input, shape index: {}]
  %s3 = inlined_call_operand.vmem [shape: bf16[128,512], index: 3, kind: input, shape index: {}]
  %s4 = inlined_call_operand.vmem [shape: f32[1,512], index: 4, kind: input, shape index: {}]
  %s5 = inlined_call_operand.vmem [shape: bf16[128,256], index: 5, kind: input, shape index: {}]
  %s6 = inlined_call_operand.vmem [shape: f32[1,256], index: 6, kind: input, shape index: {}]
  %s7 = inlined_call_operand.hbm [shape: f32[1,1], index: 7, kind: output, shape index: {}]
  %s8 = sld [smem:[#allocation0]]
  $region76: #{language_model_loss.1} parent=0
    _
  %s10 = ssub.s32 1, %s8
  %s11 = scalar_select 0, %s10, %s8
  $region1: #{language_model_loss.1} parent=0
    #allocation9 [shape = 'u8[512]{0}', space=vmem, size = 0x400, scoped, tag = 'output window, operand 0, single buffered']
    #allocation10 [shape = 's32[2]{0}', space=sflag, size = 0x8, scoped, tag = 'scoped memory for language_model_loss.1']
    %12 = vsyncpa [#allocation10], 0
    loop: start=0, step=1, limit=4
    $region2: #{language_model_loss.1} parent=1 // loop_pre_header
      _
    $region3: #{language_model_loss.1} parent=1 // loop_header
      %s14 = sphi 0, %s18
      %p15 = scmp.ge.s32.totalorder %s14, 4
      %s24 = sphi 0, %s26
      %s27 = sphi 0, %s24
      %s28 = sphi 0, %s27
      %s44 = sphi 0, %s28
      %s50 = sphi 0, %s52
      %s53 = sphi 0, %s50
      %s54 = sphi 0, %s53
      %s70 = sphi 0, %s54
      %s74 = sphi 0, %s74
      %s76 = sphi 0, %s74
      %s77 = sphi 0, %s76
      %s91 = sphi 0, %s77
      %s95 = sphi 0, %s95
      %s97 = sphi 0, %s95
      %s98 = sphi 0, %s97
      %s112 = sphi 0, %s98
      %s116 = sphi 0, %s116
      %s118 = sphi 0, %s116
      %s119 = sphi 0, %s118
      %s133 = sphi 0, %s119
      %s137 = sphi 0, %s137
      %s139 = sphi 0, %s137
      %s140 = sphi 0, %s139
      %s154 = sphi 0, %s140
      %s158 = sphi 0, %s158
      %s160 = sphi 0, %s158
      %s161 = sphi 0, %s160
      %s175 = sphi 0, %s161
      %s179 = sphi 0, %s179
      %s181 = sphi 0, %s179
      %s182 = sphi 0, %s181
      %s196 = sphi 0, %s182
    $region4: #{language_model_loss.1} parent=1 // loop_header_branch
      %17 = sbr.rel (%p15) target = $region8
    $region5: #{language_model_loss.1} parent=1 // loop_body
      %s19 = ssub.s32 %s14, 1
      %s20 = ssub.s32 %s14, 2
      %s21 = sadd.s32 %s14, 1
      %s22 = ssub.s32 %s14, %s21
      %p23 = scmp.eq.s32.totalorder %s22, 0
      %s25 = sadd.s32 %s24, 1
      %s26 = scalar_select %p23, %s24, %s25
      %p29 = pneg %p23
      %p30 = scmp.eq.s32.totalorder %s14, 1
      %p31 = por %p29, %p30
      %p32 = scmp.ne.s32.totalorder %s24, %s27
      %p33 = scmp.eq.s32.totalorder %s14, 0
      %p34 = por %p32, %p33
      %p35 = scmp.ne.s32.totalorder %s24, %s27
      %p36 = scmp.eq.s32.totalorder %s19, 1
      %p37 = por %p35, %p36
      %p38 = scmp.ne.s32.totalorder %s27, %s28
      %p39 = scmp.eq.s32.totalorder %s19, 0
      %p40 = por %p38, %p39
      %p41 = scmp.ne.s32.totalorder %s27, %s28
      %p42 = scmp.eq.s32.totalorder %s20, 1
      %p43 = por %p41, %p42
      %p45 = scmp.ne.s32.totalorder %s28, %s44
      %p46 = scmp.eq.s32.totalorder %s20, 0
      %p47 = por %p45, %p46
      %s48 = ssub.s32 %s14, %s21
      %p49 = scmp.eq.s32.totalorder %s48, 0
      %s51 = sadd.s32 %s50, 1
      %s52 = scalar_select %p49, %s50, %s51
      %p55 = pneg %p49
      %p56 = scmp.eq.s32.totalorder %s14, 1
      %p57 = por %p55, %p56
      %p58 = scmp.ne.s32.totalorder %s50, %s53
      %p59 = scmp.eq.s32.totalorder %s14, 0
      %p60 = por %p58, %p59
      %p61 = scmp.ne.s32.totalorder %s50, %s53
      %p62 = scmp.eq.s32.totalorder %s19, 1
      %p63 = por %p61, %p62
      %p64 = scmp.ne.s32.totalorder %s53, %s54
      %p65 = scmp.eq.s32.totalorder %s19, 0
      %p66 = por %p64, %p65
      %p67 = scmp.ne.s32.totalorder %s53, %s54
      %p68 = scmp.eq.s32.totalorder %s20, 1
      %p69 = por %p67, %p68
      %p71 = scmp.ne.s32.totalorder %s54, %s70
      %p72 = scmp.eq.s32.totalorder %s20, 0
      %p73 = por %p71, %p72
      %s75 = sadd.s32 %s74, 1
      %p78 = scmp.eq.s32.totalorder %s14, 1
      %p79 = scmp.ne.s32.totalorder %s74, %s76
      %p80 = scmp.eq.s32.totalorder %s14, 0
      %p81 = por %p79, %p80
      %p82 = scmp.ne.s32.totalorder %s74, %s76
      %p83 = scmp.eq.s32.totalorder %s19, 1
      %p84 = por %p82, %p83
      %p85 = scmp.ne.s32.totalorder %s76, %s77
      %p86 = scmp.eq.s32.totalorder %s19, 0
      %p87 = por %p85, %p86
      %p88 = scmp.ne.s32.totalorder %s76, %s77
      %p89 = scmp.eq.s32.totalorder %s20, 1
      %p90 = por %p88, %p89
      %p92 = scmp.ne.s32.totalorder %s77, %s91
      %p93 = scmp.eq.s32.totalorder %s20, 0
      %p94 = por %p92, %p93
      %s96 = sadd.s32 %s95, 1
      %p99 = scmp.eq.s32.totalorder %s14, 1
      %p100 = scmp.ne.s32.totalorder %s95, %s97
      %p101 = scmp.eq.s32.totalorder %s14, 0
      %p102 = por %p100, %p101
      %p103 = scmp.ne.s32.totalorder %s95, %s97
      %p104 = scmp.eq.s32.totalorder %s19, 1
      %p105 = por %p103, %p104
      %p106 = scmp.ne.s32.totalorder %s97, %s98
      %p107 = scmp.eq.s32.totalorder %s19, 0
      %p108 = por %p106, %p107
      %p109 = scmp.ne.s32.totalorder %s97, %s98
      %p110 = scmp.eq.s32.totalorder %s20, 1
      %p111 = por %p109, %p110
      %p113 = scmp.ne.s32.totalorder %s98, %s112
      %p114 = scmp.eq.s32.totalorder %s20, 0
      %p115 = por %p113, %p114
      %s117 = sadd.s32 %s116, 1
      %p120 = scmp.eq.s32.totalorder %s14, 1
      %p121 = scmp.ne.s32.totalorder %s116, %s118
      %p122 = scmp.eq.s32.totalorder %s14, 0
      %p123 = por %p121, %p122
      %p124 = scmp.ne.s32.totalorder %s116, %s118
      %p125 = scmp.eq.s32.totalorder %s19, 1
      %p126 = por %p124, %p125
      %p127 = scmp.ne.s32.totalorder %s118, %s119
      %p128 = scmp.eq.s32.totalorder %s19, 0
      %p129 = por %p127, %p128
      %p130 = scmp.ne.s32.totalorder %s118, %s119
      %p131 = scmp.eq.s32.totalorder %s20, 1
      %p132 = por %p130, %p131
      %p134 = scmp.ne.s32.totalorder %s119, %s133
      %p135 = scmp.eq.s32.totalorder %s20, 0
      %p136 = por %p134, %p135
      %s138 = sadd.s32 %s137, 1
      %p141 = scmp.eq.s32.totalorder %s14, 1
      %p142 = scmp.ne.s32.totalorder %s137, %s139
      %p143 = scmp.eq.s32.totalorder %s14, 0
      %p144 = por %p142, %p143
      %p145 = scmp.ne.s32.totalorder %s137, %s139
      %p146 = scmp.eq.s32.totalorder %s19, 1
      %p147 = por %p145, %p146
      %p148 = scmp.ne.s32.totalorder %s139, %s140
      %p149 = scmp.eq.s32.totalorder %s19, 0
      %p150 = por %p148, %p149
      %p151 = scmp.ne.s32.totalorder %s139, %s140
      %p152 = scmp.eq.s32.totalorder %s20, 1
      %p153 = por %p151, %p152
      %p155 = scmp.ne.s32.totalorder %s140, %s154
      %p156 = scmp.eq.s32.totalorder %s20, 0
      %p157 = por %p155, %p156
      %s159 = sadd.s32 %s158, 1
      %p162 = scmp.eq.s32.totalorder %s14, 1
      %p163 = scmp.ne.s32.totalorder %s158, %s160
      %p164 = scmp.eq.s32.totalorder %s14, 0
      %p165 = por %p163, %p164
      %p166 = scmp.ne.s32.totalorder %s158, %s160
      %p167 = scmp.eq.s32.totalorder %s19, 1
      %p168 = por %p166, %p167
      %p169 = scmp.ne.s32.totalorder %s160, %s161
      %p170 = scmp.eq.s32.totalorder %s19, 0
      %p171 = por %p169, %p170
      %p172 = scmp.ne.s32.totalorder %s160, %s161
      %p173 = scmp.eq.s32.totalorder %s20, 1
      %p174 = por %p172, %p173
      %p176 = scmp.ne.s32.totalorder %s161, %s175
      %p177 = scmp.eq.s32.totalorder %s20, 0
      %p178 = por %p176, %p177
      %s180 = sadd.s32 %s179, 1
      %p183 = scmp.eq.s32.totalorder %s14, 1
      %p184 = scmp.ne.s32.totalorder %s179, %s181
      %p185 = scmp.eq.s32.totalorder %s14, 0
      %p186 = por %p184, %p185
      %p187 = scmp.ne.s32.totalorder %s179, %s181
      %p188 = scmp.eq.s32.totalorder %s19, 1
      %p189 = por %p187, %p188
      %p190 = scmp.ne.s32.totalorder %s181, %s182
      %p191 = scmp.eq.s32.totalorder %s19, 0
      %p192 = por %p190, %p191
      %p193 = scmp.ne.s32.totalorder %s181, %s182
      %p194 = scmp.eq.s32.totalorder %s20, 1
      %p195 = por %p193, %p194
      %p197 = scmp.ne.s32.totalorder %s182, %s196
      %p198 = scmp.eq.s32.totalorder %s20, 0
      %p199 = por %p197, %p198
      %p200 = scmp.le.s32.totalorder 1, %s14
      %p201 = scmp.lt.s32.totalorder %s14, 3
      %p202 = pnand %p200, %p201
      %p203 = pneg %p202
      // Predicated region
      $region9: #{language_model_loss.1} parent=5 // pred_check
        _
      $region10: #{language_model_loss.1} parent=5 // pred_check_branch
        %205 = sbr.rel (%p202) target = $region12
      $region11: #{language_model_loss.1} parent=5 // pred_region
        %s206 = ssub.s32 %s14, 1
        // Predicated region
        $region13: #{language_model_loss.1} parent=11 // pred_check
          %p207 = pneg %p87
        $region14: #{language_model_loss.1} parent=11 // pred_check_branch
          %209 = sbr.rel (%p207) target = $region16
        $region15: #{language_model_loss.1} parent=11 // pred_region
          _
        $region16: #{language_model_loss.1} parent=11 // pred_fallthru
          _
        // Predicated region
        $region17: #{language_model_loss.1} parent=11 // pred_check
          %p210 = pneg %p108
        $region18: #{language_model_loss.1} parent=11 // pred_check_branch
          %212 = sbr.rel (%p210) target = $region20
        $region19: #{language_model_loss.1} parent=11 // pred_region
          _
        $region20: #{language_model_loss.1} parent=11 // pred_fallthru
          _
        // Predicated region
        $region21: #{language_model_loss.1} parent=11 // pred_check
          %p213 = pneg %p129
        $region22: #{language_model_loss.1} parent=11 // pred_check_branch
          %215 = sbr.rel (%p213) target = $region24
        $region23: #{language_model_loss.1} parent=11 // pred_region
          _
        $region24: #{language_model_loss.1} parent=11 // pred_fallthru
          _
        // Predicated region
        $region25: #{language_model_loss.1} parent=11 // pred_check
          %p216 = pneg %p150
        $region26: #{language_model_loss.1} parent=11 // pred_check_branch
          %218 = sbr.rel (%p216) target = $region28
        $region27: #{language_model_loss.1} parent=11 // pred_region
          _
        $region28: #{language_model_loss.1} parent=11 // pred_fallthru
          _
        // Predicated region
        $region29: #{language_model_loss.1} parent=11 // pred_check
          %p219 = pneg %p171
        $region30: #{language_model_loss.1} parent=11 // pred_check_branch
          %221 = sbr.rel (%p219) target = $region32
        $region31: #{language_model_loss.1} parent=11 // pred_region
          _
        $region32: #{language_model_loss.1} parent=11 // pred_fallthru
          _
      $region12: #{language_model_loss.1} parent=5 // pred_fallthru
        _
      %p222 = scmp.lt.s32.totalorder %s14, 2
      // Predicated region
      $region33: #{language_model_loss.1} parent=5 // pred_check
        %p223 = pneg %p222
      $region34: #{language_model_loss.1} parent=5 // pred_check_branch
        %225 = sbr.rel (%p223) target = $region36
      $region35: #{language_model_loss.1} parent=5 // pred_region
        // Predicated region
        $region37: #{language_model_loss.1} parent=35 // pred_check
          %p226 = pneg %p34
        $region38: #{language_model_loss.1} parent=35 // pred_check_branch
          %228 = sbr.rel (%p226) target = $region40
        $region39: #{language_model_loss.1} parent=35 // pred_region
          %s229 = smul.u32 64, %s14
          %p230 = scmp.lt.s32.totalorder %s229, 127
          %s231 = scalar_select %p230, %s229, 127
          %s232 = smul.addr %s231, 4
          %s233 = scalar_lea.vmem %s0, %s232
          %s234 = smul.u32 64, %s14
        $region40: #{language_model_loss.1} parent=35 // pred_fallthru
          _
        // Predicated region
        $region41: #{language_model_loss.1} parent=35 // pred_check
          %p235 = pneg %p60
        $region42: #{language_model_loss.1} parent=35 // pred_check_branch
          %237 = sbr.rel (%p235) target = $region44
        $region43: #{language_model_loss.1} parent=35 // pred_region
          %s238 = smul.u32 64, %s14
          %p239 = scmp.lt.s32.totalorder %s238, 127
          %s240 = scalar_select %p239, %s238, 127
          %s241 = smul.addr %s240, 8
          %s242 = scalar_lea.vmem %s1, %s241
          %s243 = smul.u32 64, %s14
        $region44: #{language_model_loss.1} parent=35 // pred_fallthru
          _
      $region36: #{language_model_loss.1} parent=5 // pred_fallthru
        _
      %p244 = scmp.le.s32.totalorder 1, %s14
      %p245 = scmp.lt.s32.totalorder %s14, 3
      %p246 = pnand %p244, %p245
      %p247 = pneg %p246
      // Predicated region
      $region45: #{language_model_loss.1} parent=5 // pred_check
        _
      $region46: #{language_model_loss.1} parent=5 // pred_check_branch
        %249 = sbr.rel (%p246) target = $region48
      $region47: #{language_model_loss.1} parent=5 // pred_region
        %s250 = ssub.s32 %s14, 1
        %s251 = smul.u32 64, %s19
        %p252 = scmp.lt.s32.totalorder %s251, 127
        %s253 = scalar_select %p252, %s251, 127
        %s254 = smul.addr %s253, 4
        %s255 = scalar_lea.vmem %s0, %s254
        %p256 = pneg %p40
        %p257 = pneg %p37
        %s258 = smul.u32 64, %s19
        %p259 = scmp.lt.s32.totalorder %s258, 127
        %s260 = scalar_select %p259, %s258, 127
        %s261 = smul.addr %s260, 8
        %s262 = scalar_lea.vmem %s1, %s261
        %p263 = pneg %p66
        %p264 = pneg %p63
        %p265 = pneg %p87
        %p266 = pneg %p84
        %p267 = pneg %p108
        %p268 = pneg %p105
        %p269 = pneg %p129
        %p270 = pneg %p126
        %p271 = pneg %p150
        %p272 = pneg %p147
        %p273 = pneg %p171
        %p274 = pneg %p168
        %p275 = pneg %p192
        %p276 = pneg %p189
        %s277 = smul.u32 64, %s19
        %p278 = scmp.lt.s32.totalorder %s277, 127
        %s279 = scalar_select %p278, %s277, 127
        %s280 = smul.addr %s279, 4
        %s281 = scalar_lea.vmem %s0, %s280
        %s282 = smul.u32 64, %s19
        %s283 = smul.u32 64, %s19
        %p284 = scmp.lt.s32.totalorder %s283, 127
        %s285 = scalar_select %p284, %s283, 127
        %s286 = smul.addr %s285, 8
        %s287 = scalar_lea.vmem %s1, %s286
        %s288 = smul.u32 64, %s19
        %p290 = scmp.eq.s32.totalorder %s19, 0
        // Predicated region
        $region49: #{language_model_loss.1} parent=47 // pred_check
          %p291 = pneg %p290
        $region50: #{language_model_loss.1} parent=47 // pred_check_branch
          %293 = sbr.rel (%p291) target = $region52
        $region51: #{language_model_loss.1} parent=47 // pred_region
          %294 = vst [vmem:[#allocation5] sm:$0xff] 0
          %295 = vst [vmem:[#allocation6] sm:$0xff] 0.0
          %296 = vst [vmem:[#allocation6 + $0x8] sm:$0xff] 0.0
          %vm297 = vcmask 0
          %298 = vst.msk [vmem:[#allocation7] sm:$0x1] %vm297, 0.0
          %299 = vst.msk [vmem:[#allocation8] sm:$0x1] %vm297, 0.0
        $region52: #{language_model_loss.1} parent=47 // pred_fallthru
          _
        %v300 = vld [vmem:[%s281] sm:$0xf]
        %v301 = vld [vmem:[%s281 + $0x4] sm:$0xf]
        %v302 = vld [vmem:[%s281 + $0x8] sm:$0xf]
        %v303 = vld [vmem:[%s281 + $0xc] sm:$0xf]
        %v304 = vld [vmem:[%s281 + $0x10] sm:$0xf]
        %v305 = vld [vmem:[%s281 + $0x14] sm:$0xf]
        %v306 = vld [vmem:[%s281 + $0x18] sm:$0xf]
        %v307 = vld [vmem:[%s281 + $0x1c] sm:$0xf]
        %v308 = vld [vmem:[%s281 + $0x20] sm:$0xf]
        %v309 = vld [vmem:[%s281 + $0x24] sm:$0xf]
        %v310 = vld [vmem:[%s281 + $0x28] sm:$0xf]
        %v311 = vld [vmem:[%s281 + $0x2c] sm:$0xf]
        %v312 = vld [vmem:[%s281 + $0x30] sm:$0xf]
        %v313 = vld [vmem:[%s281 + $0x34] sm:$0xf]
        %v314 = vld [vmem:[%s281 + $0x38] sm:$0xf]
        %v315 = vld [vmem:[%s281 + $0x3c] sm:$0xf]
        %v316 = vld [vmem:[%s281 + $0x40] sm:$0xf]
        %v317 = vld [vmem:[%s281 + $0x44] sm:$0xf]
        %v318 = vld [vmem:[%s281 + $0x48] sm:$0xf]
        %v319 = vld [vmem:[%s281 + $0x4c] sm:$0xf]
        %v320 = vld [vmem:[%s281 + $0x50] sm:$0xf]
        %v321 = vld [vmem:[%s281 + $0x54] sm:$0xf]
        %v322 = vld [vmem:[%s281 + $0x58] sm:$0xf]
        %v323 = vld [vmem:[%s281 + $0x5c] sm:$0xf]
        %v324 = vld [vmem:[%s281 + $0x60] sm:$0xf]
        %v325 = vld [vmem:[%s281 + $0x64] sm:$0xf]
        %v326 = vld [vmem:[%s281 + $0x68] sm:$0xf]
        %v327 = vld [vmem:[%s281 + $0x6c] sm:$0xf]
        %v328 = vld [vmem:[%s281 + $0x70] sm:$0xf]
        %v329 = vld [vmem:[%s281 + $0x74] sm:$0xf]
        %v330 = vld [vmem:[%s281 + $0x78] sm:$0xf]
        %v331 = vld [vmem:[%s281 + $0x7c] sm:$0xf]
        %v332 = vld [vmem:[%s281 + $0x80] sm:$0xf]
        %v333 = vld [vmem:[%s281 + $0x84] sm:$0xf]
        %v334 = vld [vmem:[%s281 + $0x88] sm:$0xf]
        %v335 = vld [vmem:[%s281 + $0x8c] sm:$0xf]
        %v336 = vld [vmem:[%s281 + $0x90] sm:$0xf]
        %v337 = vld [vmem:[%s281 + $0x94] sm:$0xf]
        %v338 = vld [vmem:[%s281 + $0x98] sm:$0xf]
        %v339 = vld [vmem:[%s281 + $0x9c] sm:$0xf]
        %v340 = vld [vmem:[%s281 + $0xa0] sm:$0xf]
        %v341 = vld [vmem:[%s281 + $0xa4] sm:$0xf]
        %v342 = vld [vmem:[%s281 + $0xa8] sm:$0xf]
        %v343 = vld [vmem:[%s281 + $0xac] sm:$0xf]
        %v344 = vld [vmem:[%s281 + $0xb0] sm:$0xf]
        %v345 = vld [vmem:[%s281 + $0xb4] sm:$0xf]
        %v346 = vld [vmem:[%s281 + $0xb8] sm:$0xf]
        %v347 = vld [vmem:[%s281 + $0xbc] sm:$0xf]
        %v348 = vld [vmem:[%s281 + $0xc0] sm:$0xf]
        %v349 = vld [vmem:[%s281 + $0xc4] sm:$0xf]
        %v350 = vld [vmem:[%s281 + $0xc8] sm:$0xf]
        %v351 = vld [vmem:[%s281 + $0xcc] sm:$0xf]
        %v352 = vld [vmem:[%s281 + $0xd0] sm:$0xf]
        %v353 = vld [vmem:[%s281 + $0xd4] sm:$0xf]
        %v354 = vld [vmem:[%s281 + $0xd8] sm:$0xf]
        %v355 = vld [vmem:[%s281 + $0xdc] sm:$0xf]
        %v356 = vld [vmem:[%s281 + $0xe0] sm:$0xf]
        %v357 = vld [vmem:[%s281 + $0xe4] sm:$0xf]
        %v358 = vld [vmem:[%s281 + $0xe8] sm:$0xf]
        %v359 = vld [vmem:[%s281 + $0xec] sm:$0xf]
        %v360 = vld [vmem:[%s281 + $0xf0] sm:$0xf]
        %v361 = vld [vmem:[%s281 + $0xf4] sm:$0xf]
        %v362 = vld [vmem:[%s281 + $0xf8] sm:$0xf]
        %v363 = vld [vmem:[%s281 + $0xfc] sm:$0xf]
        %v364 = vld [vmem:[%s2] sm:$0xff]
        %v365 = vld [vmem:[%s2 + $0x8] sm:$0xff]
        %v366 = vld [vmem:[%s2 + $0x10] sm:$0xff]
        %v367 = vld [vmem:[%s2 + $0x18] sm:$0xff]
        %v368 = vld [vmem:[%s2 + $0x20] sm:$0xff]
        %v369 = vld [vmem:[%s2 + $0x28] sm:$0xff]
        %v370 = vld [vmem:[%s2 + $0x30] sm:$0xff]
        %v371 = vld [vmem:[%s2 + $0x38] sm:$0xff]
        %v372 = vld [vmem:[%s2 + $0x40] sm:$0xff]
        %v373 = vld [vmem:[%s2 + $0x48] sm:$0xff]
        %v374 = vld [vmem:[%s2 + $0x50] sm:$0xff]
        %v375 = vld [vmem:[%s2 + $0x58] sm:$0xff]
        %v376 = vld [vmem:[%s2 + $0x60] sm:$0xff]
        %v377 = vld [vmem:[%s2 + $0x68] sm:$0xff]
        %v378 = vld [vmem:[%s2 + $0x70] sm:$0xff]
        %v379 = vld [vmem:[%s2 + $0x78] sm:$0xff]
        %v380 = vld [vmem:[%s4] sm:$0xf]
        %v382 = vlaneseq
        %v383 = vshrl.u32 %v382, 7
        %v384 = vsub.s32 0, %v383
        %v385 = vrot.slane %v380, %v384
        %v386 = vlaneseq
        %v387 = vshrl.u32 %v386, 7
        %v388 = vsub.s32 1, %v387
        %v389 = vrot.slane %v380, %v388
        %v390 = vlaneseq
        %v391 = vshrl.u32 %v390, 7
        %v392 = vsub.s32 2, %v391
        %v393 = vrot.slane %v380, %v392
        %v394 = vlaneseq
        %v395 = vshrl.u32 %v394, 7
        %v396 = vsub.s32 3, %v395
        %v397 = vrot.slane %v380, %v396
        %v466 = vunpack.c.l.b16 %v300
        %v467 = vunpack.c.l.b16 %v301
        %v468 = vunpack.c.l.b16 %v302
        %v469 = vunpack.c.l.b16 %v303
        %v470 = vunpack.c.l.b16 %v304
        %v471 = vunpack.c.l.b16 %v305
        %v472 = vunpack.c.l.b16 %v306
        %v473 = vunpack.c.l.b16 %v307
        %v474 = vunpack.c.l.b16 %v308
        %v475 = vunpack.c.l.b16 %v309
        %v476 = vunpack.c.l.b16 %v310
        %v477 = vunpack.c.l.b16 %v311
        %v478 = vunpack.c.l.b16 %v312
        %v479 = vunpack.c.l.b16 %v313
        %v480 = vunpack.c.l.b16 %v314
        %v481 = vunpack.c.l.b16 %v315
        %v482 = vunpack.c.l.b16 %v316
        %v483 = vunpack.c.l.b16 %v317
        %v484 = vunpack.c.l.b16 %v318
        %v485 = vunpack.c.l.b16 %v319
        %v486 = vunpack.c.l.b16 %v320
        %v487 = vunpack.c.l.b16 %v321
        %v488 = vunpack.c.l.b16 %v322
        %v489 = vunpack.c.l.b16 %v323
        %v490 = vunpack.c.l.b16 %v324
        %v491 = vunpack.c.l.b16 %v325
        %v492 = vunpack.c.l.b16 %v326
        %v493 = vunpack.c.l.b16 %v327
        %v494 = vunpack.c.l.b16 %v328
        %v495 = vunpack.c.l.b16 %v329
        %v496 = vunpack.c.l.b16 %v330
        %v497 = vunpack.c.l.b16 %v331
        %v498 = vunpack.c.l.b16 %v332
        %v499 = vunpack.c.l.b16 %v333
        %v500 = vunpack.c.l.b16 %v334
        %v501 = vunpack.c.l.b16 %v335
        %v502 = vunpack.c.l.b16 %v336
        %v503 = vunpack.c.l.b16 %v337
        %v504 = vunpack.c.l.b16 %v338
        %v505 = vunpack.c.l.b16 %v339
        %v506 = vunpack.c.l.b16 %v340
        %v507 = vunpack.c.l.b16 %v341
        %v508 = vunpack.c.l.b16 %v342
        %v509 = vunpack.c.l.b16 %v343
        %v510 = vunpack.c.l.b16 %v344
        %v511 = vunpack.c.l.b16 %v345
        %v512 = vunpack.c.l.b16 %v346
        %v513 = vunpack.c.l.b16 %v347
        %v514 = vunpack.c.l.b16 %v348
        %v515 = vunpack.c.l.b16 %v349
        %v516 = vunpack.c.l.b16 %v350
        %v517 = vunpack.c.l.b16 %v351
        %v518 = vunpack.c.l.b16 %v352
        %v519 = vunpack.c.l.b16 %v353
        %v520 = vunpack.c.l.b16 %v354
        %v521 = vunpack.c.l.b16 %v355
        %v522 = vunpack.c.l.b16 %v356
        %v523 = vunpack.c.l.b16 %v357
        %v524 = vunpack.c.l.b16 %v358
        %v525 = vunpack.c.l.b16 %v359
        %v526 = vunpack.c.l.b16 %v360
        %v527 = vunpack.c.l.b16 %v361
        %v528 = vunpack.c.l.b16 %v362
        %v529 = vunpack.c.l.b16 %v363
        %v530 = vpack.c.b16 %v467, %v466
        %v531 = vpack.c.b16 %v469, %v468
        %v532 = vpack.c.b16 %v471, %v470
        %v533 = vpack.c.b16 %v473, %v472
        %v534 = vpack.c.b16 %v475, %v474
        %v535 = vpack.c.b16 %v477, %v476
        %v536 = vpack.c.b16 %v479, %v478
        %v537 = vpack.c.b16 %v481, %v480
        %v538 = vpack.c.b16 %v483, %v482
        %v539 = vpack.c.b16 %v485, %v484
        %v540 = vpack.c.b16 %v487, %v486
        %v541 = vpack.c.b16 %v489, %v488
        %v542 = vpack.c.b16 %v491, %v490
        %v543 = vpack.c.b16 %v493, %v492
        %v544 = vpack.c.b16 %v495, %v494
        %v545 = vpack.c.b16 %v497, %v496
        %v546 = vpack.c.b16 %v499, %v498
        %v547 = vpack.c.b16 %v501, %v500
        %v548 = vpack.c.b16 %v503, %v502
        %v549 = vpack.c.b16 %v505, %v504
        %v550 = vpack.c.b16 %v507, %v506
        %v551 = vpack.c.b16 %v509, %v508
        %v552 = vpack.c.b16 %v511, %v510
        %v553 = vpack.c.b16 %v513, %v512
        %v554 = vpack.c.b16 %v515, %v514
        %v555 = vpack.c.b16 %v517, %v516
        %v556 = vpack.c.b16 %v519, %v518
        %v557 = vpack.c.b16 %v521, %v520
        %v558 = vpack.c.b16 %v523, %v522
        %v559 = vpack.c.b16 %v525, %v524
        %v560 = vpack.c.b16 %v527, %v526
        %v561 = vpack.c.b16 %v529, %v528
        %v578 = vunpack.c.l.b16 %v364
        %v579 = vunpack.c.h.b16 %v364
        %v580 = vunpack.c.l.b16 %v365
        %v581 = vunpack.c.h.b16 %v365
        %v582 = vunpack.c.l.b16 %v366
        %v583 = vunpack.c.h.b16 %v366
        %v584 = vunpack.c.l.b16 %v367
        %v585 = vunpack.c.h.b16 %v367
        %v586 = vunpack.c.l.b16 %v368
        %v587 = vunpack.c.h.b16 %v368
        %v588 = vunpack.c.l.b16 %v369
        %v589 = vunpack.c.h.b16 %v369
        %v590 = vunpack.c.l.b16 %v370
        %v591 = vunpack.c.h.b16 %v370
        %v592 = vunpack.c.l.b16 %v371
        %v593 = vunpack.c.h.b16 %v371
        %v594 = vunpack.c.l.b16 %v372
        %v595 = vunpack.c.h.b16 %v372
        %v596 = vunpack.c.l.b16 %v373
        %v597 = vunpack.c.h.b16 %v373
        %v598 = vunpack.c.l.b16 %v374
        %v599 = vunpack.c.h.b16 %v374
        %v600 = vunpack.c.l.b16 %v375
        %v601 = vunpack.c.h.b16 %v375
        %v602 = vunpack.c.l.b16 %v376
        %v603 = vunpack.c.h.b16 %v376
        %v604 = vunpack.c.l.b16 %v377
        %v605 = vunpack.c.h.b16 %v377
        %v606 = vunpack.c.l.b16 %v378
        %v607 = vunpack.c.h.b16 %v378
        %v608 = vunpack.c.l.b16 %v379
        %v609 = vunpack.c.h.b16 %v379
        %v610 = vpack.c.b16 %v582, %v578
        %v611 = vpack.c.b16 %v583, %v579
        %v612 = vpack.c.b16 %v584, %v580
        %v613 = vpack.c.b16 %v585, %v581
        %v614 = vpack.c.b16 %v590, %v586
        %v615 = vpack.c.b16 %v591, %v587
        %v616 = vpack.c.b16 %v592, %v588
        %v617 = vpack.c.b16 %v593, %v589
        %v618 = vpack.c.b16 %v598, %v594
        %v619 = vpack.c.b16 %v599, %v595
        %v620 = vpack.c.b16 %v600, %v596
        %v621 = vpack.c.b16 %v601, %v597
        %v622 = vpack.c.b16 %v606, %v602
        %v623 = vpack.c.b16 %v607, %v603
        %v624 = vpack.c.b16 %v608, %v604
        %v625 = vpack.c.b16 %v609, %v605
        %vm642 = vcmask 523264
        %v644 = vsel %vm642, %v530, 0
        %v647 = vsel %vm642, %v531, 0
        %v650 = vsel %vm642, %v532, 0
        %v653 = vsel %vm642, %v533, 0
        %v656 = vsel %vm642, %v534, 0
        %v659 = vsel %vm642, %v535, 0
        %v662 = vsel %vm642, %v536, 0
        %v665 = vsel %vm642, %v537, 0
        %v668 = vsel %vm642, %v538, 0
        %v671 = vsel %vm642, %v539, 0
        %v674 = vsel %vm642, %v540, 0
        %v677 = vsel %vm642, %v541, 0
        %v680 = vsel %vm642, %v542, 0
        %v683 = vsel %vm642, %v543, 0
        %v686 = vsel %vm642, %v544, 0
        %v689 = vsel %vm642, %v545, 0
        %v692 = vsel %vm642, %v546, 0
        %v695 = vsel %vm642, %v547, 0
        %v698 = vsel %vm642, %v548, 0
        %v701 = vsel %vm642, %v549, 0
        %v704 = vsel %vm642, %v550, 0
        %v707 = vsel %vm642, %v551, 0
        %v710 = vsel %vm642, %v552, 0
        %v713 = vsel %vm642, %v553, 0
        %v716 = vsel %vm642, %v554, 0
        %v719 = vsel %vm642, %v555, 0
        %v722 = vsel %vm642, %v556, 0
        %v725 = vsel %vm642, %v557, 0
        %v728 = vsel %vm642, %v558, 0
        %v731 = vsel %vm642, %v559, 0
        %v734 = vsel %vm642, %v560, 0
        %v737 = vsel %vm642, %v561, 0
        %739 = vmatprep.subr.bf16.mxu0 %v611
        %740 = vmatpush1.bf16.msra.mxu0 %v610
        %741 = vmatprep.subr.bf16.mxu0 %v615
        %742 = vmatpush1.bf16.msra.mxu0 %v614
        %743 = vmatprep.subr.bf16.mxu0 %v619
        %744 = vmatpush1.bf16.msra.mxu0 %v618
        %745 = vmatprep.subr.bf16.mxu0 %v623
        %746 = vmatpush1.bf16.msra.mxu0 %v622
        %747 = vmatprep.subr.bf16.mxu0 0
        %748 = vmatpush1.bf16.msra.mxu0 0
        %749 = vmatprep.subr.bf16.mxu0 0
        %750 = vmatpush1.bf16.msra.mxu0 0
        %751 = vmatprep.subr.bf16.mxu0 0
        %752 = vmatpush1.bf16.msra.mxu0 0
        %753 = vmatprep.subr.bf16.mxu0 0
        %754 = vmatpush1.bf16.msra.mxu0 0
        %755 = vmatprep.subr.bf16.mxu0 0
        %756 = vmatpush1.bf16.msra.mxu0 0
        %757 = vmatprep.subr.bf16.mxu0 0
        %758 = vmatpush1.bf16.msra.mxu0 0
        %759 = vmatprep.subr.bf16.mxu0 0
        %760 = vmatpush1.bf16.msra.mxu0 0
        %761 = vmatprep.subr.bf16.mxu0 0
        %762 = vmatpush1.bf16.msra.mxu0 0
        %763 = vmatprep.subr.bf16.mxu0 0
        %764 = vmatpush1.bf16.msra.mxu0 0
        %765 = vmatprep.subr.bf16.mxu0 0
        %766 = vmatpush1.bf16.msra.mxu0 0
        %767 = vmatprep.subr.bf16.mxu0 0
        %768 = vmatpush1.bf16.msra.mxu0 0
        %769 = vmatprep.subr.bf16.mxu0 0
        %770 = vmatpush1.bf16.msra.mxu0 0
        %771 = vmatprep.mubr.bf16.mxu0 0
        %772 = vmatmul.mubr.bf16.gmra.mrb[0].mxu0 %v644
        %v773 = vpop.f32.mrb[0].mxu0
        %v774 = vadd.f32 %v385, %v773
        %v775 = vpop.f32.mrb[0].mxu0
        %v776 = vadd.f32 %v389, %v775
        %v777 = vpop.f32.mrb[0].mxu0
        %v778 = vadd.f32 %v385, %v777
        %v779 = vpop.f32.mrb[0].mxu0
        %v780 = vadd.f32 %v389, %v779
        %781 = vmatprep.mubr.bf16.mxu0 0
        %782 = vmatmul.mubr.bf16.gmra.mrb[0].mxu0 %v647
        %v783 = vpop.f32.mrb[0].mxu0
        %v784 = vadd.f32 %v385, %v783
        %v785 = vpop.f32.mrb[0].mxu0
        %v786 = vadd.f32 %v389, %v785
        %v787 = vpop.f32.mrb[0].mxu0
        %v788 = vadd.f32 %v385, %v787
        %v789 = vpop.f32.mrb[0].mxu0
        %v790 = vadd.f32 %v389, %v789
        %791 = vmatprep.mubr.bf16.mxu0 0
        %792 = vmatmul.mubr.bf16.gmra.mrb[0].mxu0 %v650
        %v793 = vpop.f32.mrb[0].mxu0
        %v794 = vadd.f32 %v385, %v793
        %v795 = vpop.f32.mrb[0].mxu0
        %v796 = vadd.f32 %v389, %v795
        %v797 = vpop.f32.mrb[0].mxu0
        %v798 = vadd.f32 %v385, %v797
        %v799 = vpop.f32.mrb[0].mxu0
        %v800 = vadd.f32 %v389, %v799
        %801 = vmatprep.mubr.bf16.mxu0 0
        %802 = vmatmul.mubr.bf16.gmra.mrb[0].mxu0 %v653
        %v803 = vpop.f32.mrb[0].mxu0
        %v804 = vadd.f32 %v385, %v803
        %v805 = vpop.f32.mrb[0].mxu0
        %v806 = vadd.f32 %v389, %v805
        %v807 = vpop.f32.mrb[0].mxu0
        %v808 = vadd.f32 %v385, %v807
        %v809 = vpop.f32.mrb[0].mxu0
        %v810 = vadd.f32 %v389, %v809
        %811 = vmatprep.mubr.bf16.mxu0 0
        %812 = vmatmul.mubr.bf16.gmra.mrb[0].mxu0 %v656
        %v813 = vpop.f32.mrb[0].mxu0
        %v814 = vadd.f32 %v385, %v813
        %v815 = vpop.f32.mrb[0].mxu0
        %v816 = vadd.f32 %v389, %v815
        %v817 = vpop.f32.mrb[0].mxu0
        %v818 = vadd.f32 %v385, %v817
        %v819 = vpop.f32.mrb[0].mxu0
        %v820 = vadd.f32 %v389, %v819
        %821 = vmatprep.mubr.bf16.mxu0 0
        %822 = vmatmul.mubr.bf16.gmra.mrb[0].mxu0 %v659
        %v823 = vpop.f32.mrb[0].mxu0
        %v824 = vadd.f32 %v385, %v823
        %v825 = vpop.f32.mrb[0].mxu0
        %v826 = vadd.f32 %v389, %v825
        %v827 = vpop.f32.mrb[0].mxu0
        %v828 = vadd.f32 %v385, %v827
        %v829 = vpop.f32.mrb[0].mxu0
        %v830 = vadd.f32 %v389, %v829
        %831 = vmatprep.mubr.bf16.mxu0 0
        %832 = vmatmul.mubr.bf16.gmra.mrb[0].mxu0 %v662
        %v833 = vpop.f32.mrb[0].mxu0
        %v834 = vadd.f32 %v385, %v833
        %v835 = vpop.f32.mrb[0].mxu0
        %v836 = vadd.f32 %v389, %v835
        %v837 = vpop.f32.mrb[0].mxu0
        %v838 = vadd.f32 %v385, %v837
        %v839 = vpop.f32.mrb[0].mxu0
        %v840 = vadd.f32 %v389, %v839
        %841 = vmatprep.mubr.bf16.mxu0 0
        %842 = vmatmul.mubr.bf16.gmra.mrb[0].mxu0 %v665
        %v843 = vpop.f32.mrb[0].mxu0
        %v844 = vadd.f32 %v385, %v843
        %v845 = vpop.f32.mrb[0].mxu0
        %v846 = vadd.f32 %v389, %v845
        %v847 = vpop.f32.mrb[0].mxu0
        %v848 = vadd.f32 %v385, %v847
        %v849 = vpop.f32.mrb[0].mxu0
        %v850 = vadd.f32 %v389, %v849
        %851 = vmatprep.mubr.bf16.mxu0 0
        %852 = vmatmul.mubr.bf16.gmra.mrb[0].mxu0 %v668
        %v853 = vpop.f32.mrb[0].mxu0
        %v854 = vadd.f32 %v385, %v853
        %v855 = vpop.f32.mrb[0].mxu0
        %v856 = vadd.f32 %v389, %v855
        %v857 = vpop.f32.mrb[0].mxu0
        %v858 = vadd.f32 %v385, %v857
        %v859 = vpop.f32.mrb[0].mxu0
        %v860 = vadd.f32 %v389, %v859
        %861 = vmatprep.mubr.bf16.mxu0 0
        %862 = vmatmul.mubr.bf16.gmra.mrb[0].mxu0 %v671
        %v863 = vpop.f32.mrb[0].mxu0
        %v864 = vadd.f32 %v385, %v863
        %v865 = vpop.f32.mrb[0].mxu0
        %v866 = vadd.f32 %v389, %v865
        %v867 = vpop.f32.mrb[0].mxu0
        %v868 = vadd.f32 %v385, %v867
        %v869 = vpop.f32.mrb[0].mxu0
        %v870 = vadd.f32 %v389, %v869
        %871 = vmatprep.mubr.bf16.mxu0 0
        %872 = vmatmul.mubr.bf16.gmra.mrb[0].mxu0 %v674
        %v873 = vpop.f32.mrb[0].mxu0
        %v874 = vadd.f32 %v385, %v873
        %v875 = vpop.f32.mrb[0].mxu0
        %v876 = vadd.f32 %v389, %v875
        %v877 = vpop.f32.mrb[0].mxu0
        %v878 = vadd.f32 %v385, %v877
        %v879 = vpop.f32.mrb[0].mxu0
        %v880 = vadd.f32 %v389, %v879
        %881 = vmatprep.mubr.bf16.mxu0 0
        %882 = vmatmul.mubr.bf16.gmra.mrb[0].mxu0 %v677
        %v883 = vpop.f32.mrb[0].mxu0
        %v884 = vadd.f32 %v385, %v883
        %v885 = vpop.f32.mrb[0].mxu0
        %v886 = vadd.f32 %v389, %v885
        %v887 = vpop.f32.mrb[0].mxu0
        %v888 = vadd.f32 %v385, %v887
        %v889 = vpop.f32.mrb[0].mxu0
        %v890 = vadd.f32 %v389, %v889
        %891 = vmatprep.mubr.bf16.mxu0 0
        %892 = vmatmul.mubr.bf16.gmra.mrb[0].mxu0 %v680
        %v893 = vpop.f32.mrb[0].mxu0
        %v894 = vadd.f32 %v385, %v893
        %v895 = vpop.f32.mrb[0].mxu0
        %v896 = vadd.f32 %v389, %v895
        %v897 = vpop.f32.mrb[0].mxu0
        %v898 = vadd.f32 %v385, %v897
        %v899 = vpop.f32.mrb[0].mxu0
        %v900 = vadd.f32 %v389, %v899
        %901 = vmatprep.mubr.bf16.mxu0 0
        %902 = vmatmul.mubr.bf16.gmra.mrb[0].mxu0 %v683
        %v903 = vpop.f32.mrb[0].mxu0
        %v904 = vadd.f32 %v385, %v903
        %v905 = vpop.f32.mrb[0].mxu0
        %v906 = vadd.f32 %v389, %v905
        %v907 = vpop.f32.mrb[0].mxu0
        %v908 = vadd.f32 %v385, %v907
        %v909 = vpop.f32.mrb[0].mxu0
        %v910 = vadd.f32 %v389, %v909
        %911 = vmatprep.mubr.bf16.mxu0 0
        %912 = vmatmul.mubr.bf16.gmra.mrb[0].mxu0 %v686
        %v913 = vpop.f32.mrb[0].mxu0
        %v914 = vadd.f32 %v385, %v913
        %v915 = vpop.f32.mrb[0].mxu0
        %v916 = vadd.f32 %v389, %v915
        %v917 = vpop.f32.mrb[0].mxu0
        %v918 = vadd.f32 %v385, %v917
        %v919 = vpop.f32.mrb[0].mxu0
        %v920 = vadd.f32 %v389, %v919
        %921 = vmatprep.mubr.bf16.mxu0 0
        %922 = vmatmul.mubr.bf16.gmra.mrb[0].mxu0 %v689
        %v923 = vpop.f32.mrb[0].mxu0
        %v924 = vadd.f32 %v385, %v923
        %v925 = vpop.f32.mrb[0].mxu0
        %v926 = vadd.f32 %v389, %v925
        %v927 = vpop.f32.mrb[0].mxu0
        %v928 = vadd.f32 %v385, %v927
        %v929 = vpop.f32.mrb[0].mxu0
        %v930 = vadd.f32 %v389, %v929
        %931 = vmatprep.mubr.bf16.mxu0 0
        %932 = vmatmul.mubr.bf16.gmra.mrb[0].mxu0 %v692
        %v933 = vpop.f32.mrb[0].mxu0
        %v934 = vadd.f32 %v385, %v933
        %v935 = vpop.f32.mrb[0].mxu0
        %v936 = vadd.f32 %v389, %v935
        %v937 = vpop.f32.mrb[0].mxu0
        %v938 = vadd.f32 %v385, %v937
        %v939 = vpop.f32.mrb[0].mxu0
        %v940 = vadd.f32 %v389, %v939
        %941 = vmatprep.mubr.bf16.mxu0 0
        %942 = vmatmul.mubr.bf16.gmra.mrb[0].mxu0 %v695
        %v943 = vpop.f32.mrb[0].mxu0
        %v944 = vadd.f32 %v385, %v943
        %v945 = vpop.f32.mrb[0].mxu0
        %v946 = vadd.f32 %v389, %v945
        %v947 = vpop.f32.mrb[0].mxu0
        %v948 = vadd.f32 %v385, %v947
        %v949 = vpop.f32.mrb[0].mxu0
        %v950 = vadd.f32 %v389, %v949
        %951 = vmatprep.mubr.bf16.mxu0 0
        %952 = vmatmul.mubr.bf16.gmra.mrb[0].mxu0 %v698
        %v953 = vpop.f32.mrb[0].mxu0
        %v954 = vadd.f32 %v385, %v953
        %v955 = vpop.f32.mrb[0].mxu0
        %v956 = vadd.f32 %v389, %v955
        %v957 = vpop.f32.mrb[0].mxu0
        %v958 = vadd.f32 %v385, %v957
        %v959 = vpop.f32.mrb[0].mxu0
        %v960 = vadd.f32 %v389, %v959
        %961 = vmatprep.mubr.bf16.mxu0 0
        %962 = vmatmul.mubr.bf16.gmra.mrb[0].mxu0 %v701
        %v963 = vpop.f32.mrb[0].mxu0
        %v964 = vadd.f32 %v385, %v963
        %v965 = vpop.f32.mrb[0].mxu0
        %v966 = vadd.f32 %v389, %v965
        %v967 = vpop.f32.mrb[0].mxu0
        %v968 = vadd.f32 %v385, %v967
        %v969 = vpop.f32.mrb[0].mxu0
        %v970 = vadd.f32 %v389, %v969
        %971 = vmatprep.mubr.bf16.mxu0 0
        %972 = vmatmul.mubr.bf16.gmra.mrb[0].mxu0 %v704
        %v973 = vpop.f32.mrb[0].mxu0
        %v974 = vadd.f32 %v385, %v973
        %v975 = vpop.f32.mrb[0].mxu0
        %v976 = vadd.f32 %v389, %v975
        %v977 = vpop.f32.mrb[0].mxu0
        %v978 = vadd.f32 %v385, %v977
        %v979 = vpop.f32.mrb[0].mxu0
        %v980 = vadd.f32 %v389, %v979
        %981 = vmatprep.mubr.bf16.mxu0 0
        %982 = vmatmul.mubr.bf16.gmra.mrb[0].mxu0 %v707
        %v983 = vpop.f32.mrb[0].mxu0
        %v984 = vadd.f32 %v385, %v983
        %v985 = vpop.f32.mrb[0].mxu0
        %v986 = vadd.f32 %v389, %v985
        %v987 = vpop.f32.mrb[0].mxu0
        %v988 = vadd.f32 %v385, %v987
        %v989 = vpop.f32.mrb[0].mxu0
        %v990 = vadd.f32 %v389, %v989
        %991 = vmatprep.mubr.bf16.mxu0 0
        %992 = vmatmul.mubr.bf16.gmra.mrb[0].mxu0 %v710
        %v993 = vpop.f32.mrb[0].mxu0
        %v994 = vadd.f32 %v385, %v993
        %v995 = vpop.f32.mrb[0].mxu0
        %v996 = vadd.f32 %v389, %v995
        %v997 = vpop.f32.mrb[0].mxu0
        %v998 = vadd.f32 %v385, %v997
        %v999 = vpop.f32.mrb[0].mxu0
        %v1000 = vadd.f32 %v389, %v999
        %1001 = vmatprep.mubr.bf16.mxu0 0
        %1002 = vmatmul.mubr.bf16.gmra.mrb[0].mxu0 %v713
        %v1003 = vpop.f32.mrb[0].mxu0
        %v1004 = vadd.f32 %v385, %v1003
        %v1005 = vpop.f32.mrb[0].mxu0
        %v1006 = vadd.f32 %v389, %v1005
        %v1007 = vpop.f32.mrb[0].mxu0
        %v1008 = vadd.f32 %v385, %v1007
        %v1009 = vpop.f32.mrb[0].mxu0
        %v1010 = vadd.f32 %v389, %v1009
        %1011 = vmatprep.mubr.bf16.mxu0 0
        %1012 = vmatmul.mubr.bf16.gmra.mrb[0].mxu0 %v716
        %v1013 = vpop.f32.mrb[0].mxu0
        %v1014 = vadd.f32 %v385, %v1013
        %v1015 = vpop.f32.mrb[0].mxu0
        %v1016 = vadd.f32 %v389, %v1015
        %v1017 = vpop.f32.mrb[0].mxu0
        %v1018 = vadd.f32 %v385, %v1017
        %v1019 = vpop.f32.mrb[0].mxu0
        %v1020 = vadd.f32 %v389, %v1019
        %1021 = vmatprep.mubr.bf16.mxu0 0
        %1022 = vmatmul.mubr.bf16.gmra.mrb[0].mxu0 %v719
        %v1023 = vpop.f32.mrb[0].mxu0
        %v1024 = vadd.f32 %v385, %v1023
        %v1025 = vpop.f32.mrb[0].mxu0
        %v1026 = vadd.f32 %v389, %v1025
        %v1027 = vpop.f32.mrb[0].mxu0
        %v1028 = vadd.f32 %v385, %v1027
        %v1029 = vpop.f32.mrb[0].mxu0
        %v1030 = vadd.f32 %v389, %v1029
        %1031 = vmatprep.mubr.bf16.mxu0 0
        %1032 = vmatmul.mubr.bf16.gmra.mrb[0].mxu0 %v722
        %v1033 = vpop.f32.mrb[0].mxu0
        %v1034 = vadd.f32 %v385, %v1033
        %v1035 = vpop.f32.mrb[0].mxu0
        %v1036 = vadd.f32 %v389, %v1035
        %v1037 = vpop.f32.mrb[0].mxu0
        %v1038 = vadd.f32 %v385, %v1037
        %v1039 = vpop.f32.mrb[0].mxu0
        %v1040 = vadd.f32 %v389, %v1039
        %1041 = vmatprep.mubr.bf16.mxu0 0
        %1042 = vmatmul.mubr.bf16.gmra.mrb[0].mxu0 %v725
        %v1043 = vpop.f32.mrb[0].mxu0
        %v1044 = vadd.f32 %v385, %v1043
        %v1045 = vpop.f32.mrb[0].mxu0
        %v1046 = vadd.f32 %v389, %v1045
        %v1047 = vpop.f32.mrb[0].mxu0
        %v1048 = vadd.f32 %v385, %v1047
        %v1049 = vpop.f32.mrb[0].mxu0
        %v1050 = vadd.f32 %v389, %v1049
        %1051 = vmatprep.mubr.bf16.mxu0 0
        %1052 = vmatmul.mubr.bf16.gmra.mrb[0].mxu0 %v728
        %v1053 = vpop.f32.mrb[0].mxu0
        %v1054 = vadd.f32 %v385, %v1053
        %v1055 = vpop.f32.mrb[0].mxu0
        %v1056 = vadd.f32 %v389, %v1055
        %v1057 = vpop.f32.mrb[0].mxu0
        %v1058 = vadd.f32 %v385, %v1057
        %v1059 = vpop.f32.mrb[0].mxu0
        %v1060 = vadd.f32 %v389, %v1059
        %1061 = vmatprep.mubr.bf16.mxu0 0
        %1062 = vmatmul.mubr.bf16.gmra.mrb[0].mxu0 %v731
        %v1063 = vpop.f32.mrb[0].mxu0
        %v1064 = vadd.f32 %v385, %v1063
        %v1065 = vpop.f32.mrb[0].mxu0
        %v1066 = vadd.f32 %v389, %v1065
        %v1067 = vpop.f32.mrb[0].mxu0
        %v1068 = vadd.f32 %v385, %v1067
        %v1069 = vpop.f32.mrb[0].mxu0
        %v1070 = vadd.f32 %v389, %v1069
        %1071 = vmatprep.mubr.bf16.mxu0 0
        %1072 = vmatmul.mubr.bf16.gmra.mrb[0].mxu0 %v734
        %v1073 = vpop.f32.mrb[0].mxu0
        %v1074 = vadd.f32 %v385, %v1073
        %v1075 = vpop.f32.mrb[0].mxu0
        %v1076 = vadd.f32 %v389, %v1075
        %v1077 = vpop.f32.mrb[0].mxu0
        %v1078 = vadd.f32 %v385, %v1077
        %v1079 = vpop.f32.mrb[0].mxu0
        %v1080 = vadd.f32 %v389, %v1079
        %1081 = vmatprep.mubr.bf16.mxu0 0
        %1082 = vmatmul.mubr.bf16.gmra.mrb[0].mxu0 %v737
        %v1083 = vpop.f32.mrb[0].mxu0
        %v1084 = vadd.f32 %v385, %v1083
        %v1085 = vpop.f32.mrb[0].mxu0
        %v1086 = vadd.f32 %v389, %v1085
        %v1087 = vpop.f32.mrb[0].mxu0
        %v1088 = vadd.f32 %v385, %v1087
        %v1089 = vpop.f32.mrb[0].mxu0
        %v1090 = vadd.f32 %v389, %v1089
        %1091 = vdwg.mxu0
        %1092 = vmatprep.subr.bf16.mxu0 %v613
        %1093 = vmatpush1.bf16.msra.mxu0 %v612
        %1094 = vmatprep.subr.bf16.mxu0 %v617
        %1095 = vmatpush1.bf16.msra.mxu0 %v616
        %1096 = vmatprep.subr.bf16.mxu0 %v621
        %1097 = vmatpush1.bf16.msra.mxu0 %v620
        %1098 = vmatprep.subr.bf16.mxu0 %v625
        %1099 = vmatpush1.bf16.msra.mxu0 %v624
        %1100 = vmatprep.subr.bf16.mxu0 0
        %1101 = vmatpush1.bf16.msra.mxu0 0
        %1102 = vmatprep.subr.bf16.mxu0 0
        %1103 = vmatpush1.bf16.msra.mxu0 0
        %1104 = vmatprep.subr.bf16.mxu0 0
        %1105 = vmatpush1.bf16.msra.mxu0 0
        %1106 = vmatprep.subr.bf16.mxu0 0
        %1107 = vmatpush1.bf16.msra.mxu0 0
        %1108 = vmatprep.subr.bf16.mxu0 0
        %1109 = vmatpush1.bf16.msra.mxu0 0
        %1110 = vmatprep.subr.bf16.mxu0 0
        %1111 = vmatpush1.bf16.msra.mxu0 0
        %1112 = vmatprep.subr.bf16.mxu0 0
        %1113 = vmatpush1.bf16.msra.mxu0 0
        %1114 = vmatprep.subr.bf16.mxu0 0
        %1115 = vmatpush1.bf16.msra.mxu0 0
        %1116 = vmatprep.subr.bf16.mxu0 0
        %1117 = vmatpush1.bf16.msra.mxu0 0
        %1118 = vmatprep.subr.bf16.mxu0 0
        %1119 = vmatpush1.bf16.msra.mxu0 0
        %1120 = vmatprep.subr.bf16.mxu0 0
        %1121 = vmatpush1.bf16.msra.mxu0 0
        %1122 = vmatprep.subr.bf16.mxu0 0
        %1123 = vmatpush1.bf16.msra.mxu0 0
        %1124 = vmatprep.mubr.bf16.mxu0 0
        %1125 = vmatmul.mubr.bf16.gmra.mrb[0].mxu0 %v644
        %v1126 = vpop.f32.mrb[0].mxu0
        %v1127 = vadd.f32 %v393, %v1126
        %v1128 = vpop.f32.mrb[0].mxu0
        %v1129 = vadd.f32 %v397, %v1128
        %v1130 = vpop.f32.mrb[0].mxu0
        %v1131 = vadd.f32 %v393, %v1130
        %v1132 = vpop.f32.mrb[0].mxu0
        %v1133 = vadd.f32 %v397, %v1132
        %1134 = vmatprep.mubr.bf16.mxu0 0
        %1135 = vmatmul.mubr.bf16.gmra.mrb[0].mxu0 %v647
        %v1136 = vpop.f32.mrb[0].mxu0
        %v1137 = vadd.f32 %v393, %v1136
        %v1138 = vpop.f32.mrb[0].mxu0
        %v1139 = vadd.f32 %v397, %v1138
        %v1140 = vpop.f32.mrb[0].mxu0
        %v1141 = vadd.f32 %v393, %v1140
        %v1142 = vpop.f32.mrb[0].mxu0
        %v1143 = vadd.f32 %v397, %v1142
        %1144 = vmatprep.mubr.bf16.mxu0 0
        %1145 = vmatmul.mubr.bf16.gmra.mrb[0].mxu0 %v650
        %v1146 = vpop.f32.mrb[0].mxu0
        %v1147 = vadd.f32 %v393, %v1146
        %v1148 = vpop.f32.mrb[0].mxu0
        %v1149 = vadd.f32 %v397, %v1148
        %v1150 = vpop.f32.mrb[0].mxu0
        %v1151 = vadd.f32 %v393, %v1150
        %v1152 = vpop.f32.mrb[0].mxu0
        %v1153 = vadd.f32 %v397, %v1152
        %1154 = vmatprep.mubr.bf16.mxu0 0
        %1155 = vmatmul.mubr.bf16.gmra.mrb[0].mxu0 %v653
        %v1156 = vpop.f32.mrb[0].mxu0
        %v1157 = vadd.f32 %v393, %v1156
        %v1158 = vpop.f32.mrb[0].mxu0
        %v1159 = vadd.f32 %v397, %v1158
        %v1160 = vpop.f32.mrb[0].mxu0
        %v1161 = vadd.f32 %v393, %v1160
        %v1162 = vpop.f32.mrb[0].mxu0
        %v1163 = vadd.f32 %v397, %v1162
        %1164 = vmatprep.mubr.bf16.mxu0 0
        %1165 = vmatmul.mubr.bf16.gmra.mrb[0].mxu0 %v656
        %v1166 = vpop.f32.mrb[0].mxu0
        %v1167 = vadd.f32 %v393, %v1166
        %v1168 = vpop.f32.mrb[0].mxu0
        %v1169 = vadd.f32 %v397, %v1168
        %v1170 = vpop.f32.mrb[0].mxu0
        %v1171 = vadd.f32 %v393, %v1170
        %v1172 = vpop.f32.mrb[0].mxu0
        %v1173 = vadd.f32 %v397, %v1172
        %1174 = vmatprep.mubr.bf16.mxu0 0
        %1175 = vmatmul.mubr.bf16.gmra.mrb[0].mxu0 %v659
        %v1176 = vpop.f32.mrb[0].mxu0
        %v1177 = vadd.f32 %v393, %v1176
        %v1178 = vpop.f32.mrb[0].mxu0
        %v1179 = vadd.f32 %v397, %v1178
        %v1180 = vpop.f32.mrb[0].mxu0
        %v1181 = vadd.f32 %v393, %v1180
        %v1182 = vpop.f32.mrb[0].mxu0
        %v1183 = vadd.f32 %v397, %v1182
        %1184 = vmatprep.mubr.bf16.mxu0 0
        %1185 = vmatmul.mubr.bf16.gmra.mrb[0].mxu0 %v662
        %v1186 = vpop.f32.mrb[0].mxu0
        %v1187 = vadd.f32 %v393, %v1186
        %v1188 = vpop.f32.mrb[0].mxu0
        %v1189 = vadd.f32 %v397, %v1188
        %v1190 = vpop.f32.mrb[0].mxu0
        %v1191 = vadd.f32 %v393, %v1190
        %v1192 = vpop.f32.mrb[0].mxu0
        %v1193 = vadd.f32 %v397, %v1192
        %1194 = vmatprep.mubr.bf16.mxu0 0
        %1195 = vmatmul.mubr.bf16.gmra.mrb[0].mxu0 %v665
        %v1196 = vpop.f32.mrb[0].mxu0
        %v1197 = vadd.f32 %v393, %v1196
        %v1198 = vpop.f32.mrb[0].mxu0
        %v1199 = vadd.f32 %v397, %v1198
        %v1200 = vpop.f32.mrb[0].mxu0
        %v1201 = vadd.f32 %v393, %v1200
        %v1202 = vpop.f32.mrb[0].mxu0
        %v1203 = vadd.f32 %v397, %v1202
        %1204 = vmatprep.mubr.bf16.mxu0 0
        %1205 = vmatmul.mubr.bf16.gmra.mrb[0].mxu0 %v668
        %v1206 = vpop.f32.mrb[0].mxu0
        %v1207 = vadd.f32 %v393, %v1206
        %v1208 = vpop.f32.mrb[0].mxu0
        %v1209 = vadd.f32 %v397, %v1208
        %v1210 = vpop.f32.mrb[0].mxu0
        %v1211 = vadd.f32 %v393, %v1210
        %v1212 = vpop.f32.mrb[0].mxu0
        %v1213 = vadd.f32 %v397, %v1212
        %1214 = vmatprep.mubr.bf16.mxu0 0
        %1215 = vmatmul.mubr.bf16.gmra.mrb[0].mxu0 %v671
        %v1216 = vpop.f32.mrb[0].mxu0
        %v1217 = vadd.f32 %v393, %v1216
        %v1218 = vpop.f32.mrb[0].mxu0
        %v1219 = vadd.f32 %v397, %v1218
        %v1220 = vpop.f32.mrb[0].mxu0
        %v1221 = vadd.f32 %v393, %v1220
        %v1222 = vpop.f32.mrb[0].mxu0
        %v1223 = vadd.f32 %v397, %v1222
        %1224 = vmatprep.mubr.bf16.mxu0 0
        %1225 = vmatmul.mubr.bf16.gmra.mrb[0].mxu0 %v674
        %v1226 = vpop.f32.mrb[0].mxu0
        %v1227 = vadd.f32 %v393, %v1226
        %v1228 = vpop.f32.mrb[0].mxu0
        %v1229 = vadd.f32 %v397, %v1228
        %v1230 = vpop.f32.mrb[0].mxu0
        %v1231 = vadd.f32 %v393, %v1230
        %v1232 = vpop.f32.mrb[0].mxu0
        %v1233 = vadd.f32 %v397, %v1232
        %1234 = vmatprep.mubr.bf16.mxu0 0
        %1235 = vmatmul.mubr.bf16.gmra.mrb[0].mxu0 %v677
        %v1236 = vpop.f32.mrb[0].mxu0
        %v1237 = vadd.f32 %v393, %v1236
        %v1238 = vpop.f32.mrb[0].mxu0
        %v1239 = vadd.f32 %v397, %v1238
        %v1240 = vpop.f32.mrb[0].mxu0
        %v1241 = vadd.f32 %v393, %v1240
        %v1242 = vpop.f32.mrb[0].mxu0
        %v1243 = vadd.f32 %v397, %v1242
        %1244 = vmatprep.mubr.bf16.mxu0 0
        %1245 = vmatmul.mubr.bf16.gmra.mrb[0].mxu0 %v680
        %v1246 = vpop.f32.mrb[0].mxu0
        %v1247 = vadd.f32 %v393, %v1246
        %v1248 = vpop.f32.mrb[0].mxu0
        %v1249 = vadd.f32 %v397, %v1248
        %v1250 = vpop.f32.mrb[0].mxu0
        %v1251 = vadd.f32 %v393, %v1250
        %v1252 = vpop.f32.mrb[0].mxu0
        %v1253 = vadd.f32 %v397, %v1252
        %1254 = vmatprep.mubr.bf16.mxu0 0
        %1255 = vmatmul.mubr.bf16.gmra.mrb[0].mxu0 %v683
        %v1256 = vpop.f32.mrb[0].mxu0
        %v1257 = vadd.f32 %v393, %v1256
        %v1258 = vpop.f32.mrb[0].mxu0
        %v1259 = vadd.f32 %v397, %v1258
        %v1260 = vpop.f32.mrb[0].mxu0
        %v1261 = vadd.f32 %v393, %v1260
        %v1262 = vpop.f32.mrb[0].mxu0
        %v1263 = vadd.f32 %v397, %v1262
        %1264 = vmatprep.mubr.bf16.mxu0 0
        %1265 = vmatmul.mubr.bf16.gmra.mrb[0].mxu0 %v686
        %v1266 = vpop.f32.mrb[0].mxu0
        %v1267 = vadd.f32 %v393, %v1266
        %v1268 = vpop.f32.mrb[0].mxu0
        %v1269 = vadd.f32 %v397, %v1268
        %v1270 = vpop.f32.mrb[0].mxu0
        %v1271 = vadd.f32 %v393, %v1270
        %v1272 = vpop.f32.mrb[0].mxu0
        %v1273 = vadd.f32 %v397, %v1272
        %1274 = vmatprep.mubr.bf16.mxu0 0
        %1275 = vmatmul.mubr.bf16.gmra.mrb[0].mxu0 %v689
        %v1276 = vpop.f32.mrb[0].mxu0
        %v1277 = vadd.f32 %v393, %v1276
        %v1278 = vpop.f32.mrb[0].mxu0
        %v1279 = vadd.f32 %v397, %v1278
        %v1280 = vpop.f32.mrb[0].mxu0
        %v1281 = vadd.f32 %v393, %v1280
        %v1282 = vpop.f32.mrb[0].mxu0
        %v1283 = vadd.f32 %v397, %v1282
        %1284 = vmatprep.mubr.bf16.mxu0 0
        %1285 = vmatmul.mubr.bf16.gmra.mrb[0].mxu0 %v692
        %v1286 = vpop.f32.mrb[0].mxu0
        %v1287 = vadd.f32 %v393, %v1286
        %v1288 = vpop.f32.mrb[0].mxu0
        %v1289 = vadd.f32 %v397, %v1288
        %v1290 = vpop.f32.mrb[0].mxu0
        %v1291 = vadd.f32 %v393, %v1290
        %v1292 = vpop.f32.mrb[0].mxu0
        %v1293 = vadd.f32 %v397, %v1292
        %1294 = vmatprep.mubr.bf16.mxu0 0
        %1295 = vmatmul.mubr.bf16.gmra.mrb[0].mxu0 %v695
        %v1296 = vpop.f32.mrb[0].mxu0
        %v1297 = vadd.f32 %v393, %v1296
        %v1298 = vpop.f32.mrb[0].mxu0
        %v1299 = vadd.f32 %v397, %v1298
        %v1300 = vpop.f32.mrb[0].mxu0
        %v1301 = vadd.f32 %v393, %v1300
        %v1302 = vpop.f32.mrb[0].mxu0
        %v1303 = vadd.f32 %v397, %v1302
        %1304 = vmatprep.mubr.bf16.mxu0 0
        %1305 = vmatmul.mubr.bf16.gmra.mrb[0].mxu0 %v698
        %v1306 = vpop.f32.mrb[0].mxu0
        %v1307 = vadd.f32 %v393, %v1306
        %v1308 = vpop.f32.mrb[0].mxu0
        %v1309 = vadd.f32 %v397, %v1308
        %v1310 = vpop.f32.mrb[0].mxu0
        %v1311 = vadd.f32 %v393, %v1310
        %v1312 = vpop.f32.mrb[0].mxu0
        %v1313 = vadd.f32 %v397, %v1312
        %1314 = vmatprep.mubr.bf16.mxu0 0
        %1315 = vmatmul.mubr.bf16.gmra.mrb[0].mxu0 %v701
        %v1316 = vpop.f32.mrb[0].mxu0
        %v1317 = vadd.f32 %v393, %v1316
        %v1318 = vpop.f32.mrb[0].mxu0
        %v1319 = vadd.f32 %v397, %v1318
        %v1320 = vpop.f32.mrb[0].mxu0
        %v1321 = vadd.f32 %v393, %v1320
        %v1322 = vpop.f32.mrb[0].mxu0
        %v1323 = vadd.f32 %v397, %v1322
        %1324 = vmatprep.mubr.bf16.mxu0 0
        %1325 = vmatmul.mubr.bf16.gmra.mrb[0].mxu0 %v704
        %v1326 = vpop.f32.mrb[0].mxu0
        %v1327 = vadd.f32 %v393, %v1326
        %v1328 = vpop.f32.mrb[0].mxu0
        %v1329 = vadd.f32 %v397, %v1328
        %v1330 = vpop.f32.mrb[0].mxu0
        %v1331 = vadd.f32 %v393, %v1330
        %v1332 = vpop.f32.mrb[0].mxu0
        %v1333 = vadd.f32 %v397, %v1332
        %1334 = vmatprep.mubr.bf16.mxu0 0
        %1335 = vmatmul.mubr.bf16.gmra.mrb[0].mxu0 %v707
        %v1336 = vpop.f32.mrb[0].mxu0
        %v1337 = vadd.f32 %v393, %v1336
        %v1338 = vpop.f32.mrb[0].mxu0
        %v1339 = vadd.f32 %v397, %v1338
        %v1340 = vpop.f32.mrb[0].mxu0
        %v1341 = vadd.f32 %v393, %v1340
        %v1342 = vpop.f32.mrb[0].mxu0
        %v1343 = vadd.f32 %v397, %v1342
        %1344 = vmatprep.mubr.bf16.mxu0 0
        %1345 = vmatmul.mubr.bf16.gmra.mrb[0].mxu0 %v710
        %v1346 = vpop.f32.mrb[0].mxu0
        %v1347 = vadd.f32 %v393, %v1346
        %v1348 = vpop.f32.mrb[0].mxu0
        %v1349 = vadd.f32 %v397, %v1348
        %v1350 = vpop.f32.mrb[0].mxu0
        %v1351 = vadd.f32 %v393, %v1350
        %v1352 = vpop.f32.mrb[0].mxu0
        %v1353 = vadd.f32 %v397, %v1352
        %1354 = vmatprep.mubr.bf16.mxu0 0
        %1355 = vmatmul.mubr.bf16.gmra.mrb[0].mxu0 %v713
        %v1356 = vpop.f32.mrb[0].mxu0
        %v1357 = vadd.f32 %v393, %v1356
        %v1358 = vpop.f32.mrb[0].mxu0
        %v1359 = vadd.f32 %v397, %v1358
        %v1360 = vpop.f32.mrb[0].mxu0
        %v1361 = vadd.f32 %v393, %v1360
        %v1362 = vpop.f32.mrb[0].mxu0
        %v1363 = vadd.f32 %v397, %v1362
        %1364 = vmatprep.mubr.bf16.mxu0 0
        %1365 = vmatmul.mubr.bf16.gmra.mrb[0].mxu0 %v716
        %v1366 = vpop.f32.mrb[0].mxu0
        %v1367 = vadd.f32 %v393, %v1366
        %v1368 = vpop.f32.mrb[0].mxu0
        %v1369 = vadd.f32 %v397, %v1368
        %v1370 = vpop.f32.mrb[0].mxu0
        %v1371 = vadd.f32 %v393, %v1370
        %v1372 = vpop.f32.mrb[0].mxu0
        %v1373 = vadd.f32 %v397, %v1372
        %1374 = vmatprep.mubr.bf16.mxu0 0
        %1375 = vmatmul.mubr.bf16.gmra.mrb[0].mxu0 %v719
        %v1376 = vpop.f32.mrb[0].mxu0
        %v1377 = vadd.f32 %v393, %v1376
        %v1378 = vpop.f32.mrb[0].mxu0
        %v1379 = vadd.f32 %v397, %v1378
        %v1380 = vpop.f32.mrb[0].mxu0
        %v1381 = vadd.f32 %v393, %v1380
        %v1382 = vpop.f32.mrb[0].mxu0
        %v1383 = vadd.f32 %v397, %v1382
        %1384 = vmatprep.mubr.bf16.mxu0 0
        %1385 = vmatmul.mubr.bf16.gmra.mrb[0].mxu0 %v722
        %v1386 = vpop.f32.mrb[0].mxu0
        %v1387 = vadd.f32 %v393, %v1386
        %v1388 = vpop.f32.mrb[0].mxu0
        %v1389 = vadd.f32 %v397, %v1388
        %v1390 = vpop.f32.mrb[0].mxu0
        %v1391 = vadd.f32 %v393, %v1390
        %v1392 = vpop.f32.mrb[0].mxu0
        %v1393 = vadd.f32 %v397, %v1392
        %1394 = vmatprep.mubr.bf16.mxu0 0
        %1395 = vmatmul.mubr.bf16.gmra.mrb[0].mxu0 %v725
        %v1396 = vpop.f32.mrb[0].mxu0
        %v1397 = vadd.f32 %v393, %v1396
        %v1398 = vpop.f32.mrb[0].mxu0
        %v1399 = vadd.f32 %v397, %v1398
        %v1400 = vpop.f32.mrb[0].mxu0
        %v1401 = vadd.f32 %v393, %v1400
        %v1402 = vpop.f32.mrb[0].mxu0
        %v1403 = vadd.f32 %v397, %v1402
        %1404 = vmatprep.mubr.bf16.mxu0 0
        %1405 = vmatmul.mubr.bf16.gmra.mrb[0].mxu0 %v728
        %v1406 = vpop.f32.mrb[0].mxu0
        %v1407 = vadd.f32 %v393, %v1406
        %v1408 = vpop.f32.mrb[0].mxu0
        %v1409 = vadd.f32 %v397, %v1408
        %v1410 = vpop.f32.mrb[0].mxu0
        %v1411 = vadd.f32 %v393, %v1410
        %v1412 = vpop.f32.mrb[0].mxu0
        %v1413 = vadd.f32 %v397, %v1412
        %1414 = vmatprep.mubr.bf16.mxu0 0
        %1415 = vmatmul.mubr.bf16.gmra.mrb[0].mxu0 %v731
        %v1416 = vpop.f32.mrb[0].mxu0
        %v1417 = vadd.f32 %v393, %v1416
        %v1418 = vpop.f32.mrb[0].mxu0
        %v1419 = vadd.f32 %v397, %v1418
        %v1420 = vpop.f32.mrb[0].mxu0
        %v1421 = vadd.f32 %v393, %v1420
        %v1422 = vpop.f32.mrb[0].mxu0
        %v1423 = vadd.f32 %v397, %v1422
        %1424 = vmatprep.mubr.bf16.mxu0 0
        %1425 = vmatmul.mubr.bf16.gmra.mrb[0].mxu0 %v734
        %v1426 = vpop.f32.mrb[0].mxu0
        %v1427 = vadd.f32 %v393, %v1426
        %v1428 = vpop.f32.mrb[0].mxu0
        %v1429 = vadd.f32 %v397, %v1428
        %v1430 = vpop.f32.mrb[0].mxu0
        %v1431 = vadd.f32 %v393, %v1430
        %v1432 = vpop.f32.mrb[0].mxu0
        %v1433 = vadd.f32 %v397, %v1432
        %1434 = vmatprep.mubr.bf16.mxu0 0
        %1435 = vmatmul.mubr.bf16.gmra.mrb[0].mxu0 %v737
        %v1436 = vpop.f32.mrb[0].mxu0
        %v1437 = vadd.f32 %v393, %v1436
        %v1438 = vpop.f32.mrb[0].mxu0
        %v1439 = vadd.f32 %v397, %v1438
        %v1440 = vpop.f32.mrb[0].mxu0
        %v1441 = vadd.f32 %v393, %v1440
        %v1442 = vpop.f32.mrb[0].mxu0
        %v1443 = vadd.f32 %v397, %v1442
        %1444 = vdwg.mxu0
        %v1445 = vpack.c.bf16 %v778, %v774
        %v1446 = vpack.c.bf16 %v780, %v776
        %v1447 = vpack.c.bf16 %v1131, %v1127
        %v1448 = vpack.c.bf16 %v1133, %v1129
        %v1449 = vpack.c.bf16 %v788, %v784
        %v1450 = vpack.c.bf16 %v790, %v786
        %v1451 = vpack.c.bf16 %v1141, %v1137
        %v1452 = vpack.c.bf16 %v1143, %v1139
        %v1453 = vpack.c.bf16 %v798, %v794
        %v1454 = vpack.c.bf16 %v800, %v796
        %v1455 = vpack.c.bf16 %v1151, %v1147
        %v1456 = vpack.c.bf16 %v1153, %v1149
        %v1457 = vpack.c.bf16 %v808, %v804
        %v1458 = vpack.c.bf16 %v810, %v806
        %v1459 = vpack.c.bf16 %v1161, %v1157
        %v1460 = vpack.c.bf16 %v1163, %v1159
        %v1461 = vpack.c.bf16 %v818, %v814
        %v1462 = vpack.c.bf16 %v820, %v816
        %v1463 = vpack.c.bf16 %v1171, %v1167
        %v1464 = vpack.c.bf16 %v1173, %v1169
        %v1465 = vpack.c.bf16 %v828, %v824
        %v1466 = vpack.c.bf16 %v830, %v826
        %v1467 = vpack.c.bf16 %v1181, %v1177
        %v1468 = vpack.c.bf16 %v1183, %v1179
        %v1469 = vpack.c.bf16 %v838, %v834
        %v1470 = vpack.c.bf16 %v840, %v836
        %v1471 = vpack.c.bf16 %v1191, %v1187
        %v1472 = vpack.c.bf16 %v1193, %v1189
        %v1473 = vpack.c.bf16 %v848, %v844
        %v1474 = vpack.c.bf16 %v850, %v846
        %v1475 = vpack.c.bf16 %v1201, %v1197
        %v1476 = vpack.c.bf16 %v1203, %v1199
        %v1477 = vpack.c.bf16 %v858, %v854
        %v1478 = vpack.c.bf16 %v860, %v856
        %v1479 = vpack.c.bf16 %v1211, %v1207
        %v1480 = vpack.c.bf16 %v1213, %v1209
        %v1481 = vpack.c.bf16 %v868, %v864
        %v1482 = vpack.c.bf16 %v870, %v866
        %v1483 = vpack.c.bf16 %v1221, %v1217
        %v1484 = vpack.c.bf16 %v1223, %v1219
        %v1485 = vpack.c.bf16 %v878, %v874
        %v1486 = vpack.c.bf16 %v880, %v876
        %v1487 = vpack.c.bf16 %v1231, %v1227
        %v1488 = vpack.c.bf16 %v1233, %v1229
        %v1489 = vpack.c.bf16 %v888, %v884
        %v1490 = vpack.c.bf16 %v890, %v886
        %v1491 = vpack.c.bf16 %v1241, %v1237
        %v1492 = vpack.c.bf16 %v1243, %v1239
        %v1493 = vpack.c.bf16 %v898, %v894
        %v1494 = vpack.c.bf16 %v900, %v896
        %v1495 = vpack.c.bf16 %v1251, %v1247
        %v1496 = vpack.c.bf16 %v1253, %v1249
        %v1497 = vpack.c.bf16 %v908, %v904
        %v1498 = vpack.c.bf16 %v910, %v906
        %v1499 = vpack.c.bf16 %v1261, %v1257
        %v1500 = vpack.c.bf16 %v1263, %v1259
        %v1501 = vpack.c.bf16 %v918, %v914
        %v1502 = vpack.c.bf16 %v920, %v916
        %v1503 = vpack.c.bf16 %v1271, %v1267
        %v1504 = vpack.c.bf16 %v1273, %v1269
        %v1505 = vpack.c.bf16 %v928, %v924
        %v1506 = vpack.c.bf16 %v930, %v926
        %v1507 = vpack.c.bf16 %v1281, %v1277
        %v1508 = vpack.c.bf16 %v1283, %v1279
        %v1509 = vpack.c.bf16 %v938, %v934
        %v1510 = vpack.c.bf16 %v940, %v936
        %v1511 = vpack.c.bf16 %v1291, %v1287
        %v1512 = vpack.c.bf16 %v1293, %v1289
        %v1513 = vpack.c.bf16 %v948, %v944
        %v1514 = vpack.c.bf16 %v950, %v946
        %v1515 = vpack.c.bf16 %v1301, %v1297
        %v1516 = vpack.c.bf16 %v1303, %v1299
        %v1517 = vpack.c.bf16 %v958, %v954
        %v1518 = vpack.c.bf16 %v960, %v956
        %v1519 = vpack.c.bf16 %v1311, %v1307
        %v1520 = vpack.c.bf16 %v1313, %v1309
        %v1521 = vpack.c.bf16 %v968, %v964
        %v1522 = vpack.c.bf16 %v970, %v966
        %v1523 = vpack.c.bf16 %v1321, %v1317
        %v1524 = vpack.c.bf16 %v1323, %v1319
        %v1525 = vpack.c.bf16 %v978, %v974
        %v1526 = vpack.c.bf16 %v980, %v976
        %v1527 = vpack.c.bf16 %v1331, %v1327
        %v1528 = vpack.c.bf16 %v1333, %v1329
        %v1529 = vpack.c.bf16 %v988, %v984
        %v1530 = vpack.c.bf16 %v990, %v986
        %v1531 = vpack.c.bf16 %v1341, %v1337
        %v1532 = vpack.c.bf16 %v1343, %v1339
        %v1533 = vpack.c.bf16 %v998, %v994
        %v1534 = vpack.c.bf16 %v1000, %v996
        %v1535 = vpack.c.bf16 %v1351, %v1347
        %v1536 = vpack.c.bf16 %v1353, %v1349
        %v1537 = vpack.c.bf16 %v1008, %v1004
        %v1538 = vpack.c.bf16 %v1010, %v1006
        %v1539 = vpack.c.bf16 %v1361, %v1357
        %v1540 = vpack.c.bf16 %v1363, %v1359
        %v1541 = vpack.c.bf16 %v1018, %v1014
        %v1542 = vpack.c.bf16 %v1020, %v1016
        %v1543 = vpack.c.bf16 %v1371, %v1367
        %v1544 = vpack.c.bf16 %v1373, %v1369
        %v1545 = vpack.c.bf16 %v1028, %v1024
        %v1546 = vpack.c.bf16 %v1030, %v1026
        %v1547 = vpack.c.bf16 %v1381, %v1377
        %v1548 = vpack.c.bf16 %v1383, %v1379
        %v1549 = vpack.c.bf16 %v1038, %v1034
        %v1550 = vpack.c.bf16 %v1040, %v1036
        %v1551 = vpack.c.bf16 %v1391, %v1387
        %v1552 = vpack.c.bf16 %v1393, %v1389
        %v1553 = vpack.c.bf16 %v1048, %v1044
        %v1554 = vpack.c.bf16 %v1050, %v1046
        %v1555 = vpack.c.bf16 %v1401, %v1397
        %v1556 = vpack.c.bf16 %v1403, %v1399
        %v1557 = vpack.c.bf16 %v1058, %v1054
        %v1558 = vpack.c.bf16 %v1060, %v1056
        %v1559 = vpack.c.bf16 %v1411, %v1407
        %v1560 = vpack.c.bf16 %v1413, %v1409
        %v1561 = vpack.c.bf16 %v1068, %v1064
        %v1562 = vpack.c.bf16 %v1070, %v1066
        %v1563 = vpack.c.bf16 %v1421, %v1417
        %v1564 = vpack.c.bf16 %v1423, %v1419
        %v1565 = vpack.c.bf16 %v1078, %v1074
        %v1566 = vpack.c.bf16 %v1080, %v1076
        %v1567 = vpack.c.bf16 %v1431, %v1427
        %v1568 = vpack.c.bf16 %v1433, %v1429
        %v1569 = vpack.c.bf16 %v1088, %v1084
        %v1570 = vpack.c.bf16 %v1090, %v1086
        %v1571 = vpack.c.bf16 %v1441, %v1437
        %v1572 = vpack.c.bf16 %v1443, %v1439
        %1573 = vst [vmem:[#allocation2] sm:$0xff] %v1445
        %1574 = vst [vmem:[#allocation2 + $0x8] sm:$0xff] %v1446
        %1575 = vst [vmem:[#allocation2 + $0x10] sm:$0xff] %v1447
        %1576 = vst [vmem:[#allocation2 + $0x18] sm:$0xff] %v1448
        %1577 = vst [vmem:[#allocation2 + $0x20] sm:$0xff] %v1449
        %1578 = vst [vmem:[#allocation2 + $0x28] sm:$0xff] %v1450
        %1579 = vst [vmem:[#allocation2 + $0x30] sm:$0xff] %v1451
        %1580 = vst [vmem:[#allocation2 + $0x38] sm:$0xff] %v1452
        %1581 = vst [vmem:[#allocation2 + $0x40] sm:$0xff] %v1453
        %1582 = vst [vmem:[#allocation2 + $0x48] sm:$0xff] %v1454
        %1583 = vst [vmem:[#allocation2 + $0x50] sm:$0xff] %v1455
        %1584 = vst [vmem:[#allocation2 + $0x58] sm:$0xff] %v1456
        %1585 = vst [vmem:[#allocation2 + $0x60] sm:$0xff] %v1457
        %1586 = vst [vmem:[#allocation2 + $0x68] sm:$0xff] %v1458
        %1587 = vst [vmem:[#allocation2 + $0x70] sm:$0xff] %v1459
        %1588 = vst [vmem:[#allocation2 + $0x78] sm:$0xff] %v1460
        %1589 = vst [vmem:[#allocation2 + $0x80] sm:$0xff] %v1461
        %1590 = vst [vmem:[#allocation2 + $0x88] sm:$0xff] %v1462
        %1591 = vst [vmem:[#allocation2 + $0x90] sm:$0xff] %v1463
        %1592 = vst [vmem:[#allocation2 + $0x98] sm:$0xff] %v1464
        %1593 = vst [vmem:[#allocation2 + $0xa0] sm:$0xff] %v1465
        %1594 = vst [vmem:[#allocation2 + $0xa8] sm:$0xff] %v1466
        %1595 = vst [vmem:[#allocation2 + $0xb0] sm:$0xff] %v1467
        %1596 = vst [vmem:[#allocation2 + $0xb8] sm:$0xff] %v1468
        %1597 = vst [vmem:[#allocation2 + $0xc0] sm:$0xff] %v1469
        %1598 = vst [vmem:[#allocation2 + $0xc8] sm:$0xff] %v1470
        %1599 = vst [vmem:[#allocation2 + $0xd0] sm:$0xff] %v1471
        %1600 = vst [vmem:[#allocation2 + $0xd8] sm:$0xff] %v1472
        %1601 = vst [vmem:[#allocation2 + $0xe0] sm:$0xff] %v1473
        %1602 = vst [vmem:[#allocation2 + $0xe8] sm:$0xff] %v1474
        %1603 = vst [vmem:[#allocation2 + $0xf0] sm:$0xff] %v1475
        %1604 = vst [vmem:[#allocation2 + $0xf8] sm:$0xff] %v1476
        %1605 = vst [vmem:[#allocation2 + $0x100] sm:$0xff] %v1477
        %1606 = vst [vmem:[#allocation2 + $0x108] sm:$0xff] %v1478
        %1607 = vst [vmem:[#allocation2 + $0x110] sm:$0xff] %v1479
        %1608 = vst [vmem:[#allocation2 + $0x118] sm:$0xff] %v1480
        %1609 = vst [vmem:[#allocation2 + $0x120] sm:$0xff] %v1481
        %1610 = vst [vmem:[#allocation2 + $0x128] sm:$0xff] %v1482
        %1611 = vst [vmem:[#allocation2 + $0x130] sm:$0xff] %v1483
        %1612 = vst [vmem:[#allocation2 + $0x138] sm:$0xff] %v1484
        %1613 = vst [vmem:[#allocation2 + $0x140] sm:$0xff] %v1485
        %1614 = vst [vmem:[#allocation2 + $0x148] sm:$0xff] %v1486
        %1615 = vst [vmem:[#allocation2 + $0x150] sm:$0xff] %v1487
        %1616 = vst [vmem:[#allocation2 + $0x158] sm:$0xff] %v1488
        %1617 = vst [vmem:[#allocation2 + $0x160] sm:$0xff] %v1489
        %1618 = vst [vmem:[#allocation2 + $0x168] sm:$0xff] %v1490
        %1619 = vst [vmem:[#allocation2 + $0x170] sm:$0xff] %v1491
        %1620 = vst [vmem:[#allocation2 + $0x178] sm:$0xff] %v1492
        %1621 = vst [vmem:[#allocation2 + $0x180] sm:$0xff] %v1493
        %1622 = vst [vmem:[#allocation2 + $0x188] sm:$0xff] %v1494
        %1623 = vst [vmem:[#allocation2 + $0x190] sm:$0xff] %v1495
        %1624 = vst [vmem:[#allocation2 + $0x198] sm:$0xff] %v1496
        %1625 = vst [vmem:[#allocation2 + $0x1a0] sm:$0xff] %v1497
        %1626 = vst [vmem:[#allocation2 + $0x1a8] sm:$0xff] %v1498
        %1627 = vst [vmem:[#allocation2 + $0x1b0] sm:$0xff] %v1499
        %1628 = vst [vmem:[#allocation2 + $0x1b8] sm:$0xff] %v1500
        %1629 = vst [vmem:[#allocation2 + $0x1c0] sm:$0xff] %v1501
        %1630 = vst [vmem:[#allocation2 + $0x1c8] sm:$0xff] %v1502
        %1631 = vst [vmem:[#allocation2 + $0x1d0] sm:$0xff] %v1503
        %1632 = vst [vmem:[#allocation2 + $0x1d8] sm:$0xff] %v1504
        %1633 = vst [vmem:[#allocation2 + $0x1e0] sm:$0xff] %v1505
        %1634 = vst [vmem:[#allocation2 + $0x1e8] sm:$0xff] %v1506
        %1635 = vst [vmem:[#allocation2 + $0x1f0] sm:$0xff] %v1507
        %1636 = vst [vmem:[#allocation2 + $0x1f8] sm:$0xff] %v1508
        %1637 = vst [vmem:[#allocation2 + $0x200] sm:$0xff] %v1509
        %1638 = vst [vmem:[#allocation2 + $0x208] sm:$0xff] %v1510
        %1639 = vst [vmem:[#allocation2 + $0x210] sm:$0xff] %v1511
        %1640 = vst [vmem:[#allocation2 + $0x218] sm:$0xff] %v1512
        %1641 = vst [vmem:[#allocation2 + $0x220] sm:$0xff] %v1513
        %1642 = vst [vmem:[#allocation2 + $0x228] sm:$0xff] %v1514
        %1643 = vst [vmem:[#allocation2 + $0x230] sm:$0xff] %v1515
        %1644 = vst [vmem:[#allocation2 + $0x238] sm:$0xff] %v1516
        %1645 = vst [vmem:[#allocation2 + $0x240] sm:$0xff] %v1517
        %1646 = vst [vmem:[#allocation2 + $0x248] sm:$0xff] %v1518
        %1647 = vst [vmem:[#allocation2 + $0x250] sm:$0xff] %v1519
        %1648 = vst [vmem:[#allocation2 + $0x258] sm:$0xff] %v1520
        %1649 = vst [vmem:[#allocation2 + $0x260] sm:$0xff] %v1521
        %1650 = vst [vmem:[#allocation2 + $0x268] sm:$0xff] %v1522
        %1651 = vst [vmem:[#allocation2 + $0x270] sm:$0xff] %v1523
        %1652 = vst [vmem:[#allocation2 + $0x278] sm:$0xff] %v1524
        %1653 = vst [vmem:[#allocation2 + $0x280] sm:$0xff] %v1525
        %1654 = vst [vmem:[#allocation2 + $0x288] sm:$0xff] %v1526
        %1655 = vst [vmem:[#allocation2 + $0x290] sm:$0xff] %v1527
        %1656 = vst [vmem:[#allocation2 + $0x298] sm:$0xff] %v1528
        %1657 = vst [vmem:[#allocation2 + $0x2a0] sm:$0xff] %v1529
        %1658 = vst [vmem:[#allocation2 + $0x2a8] sm:$0xff] %v1530
        %1659 = vst [vmem:[#allocation2 + $0x2b0] sm:$0xff] %v1531
        %1660 = vst [vmem:[#allocation2 + $0x2b8] sm:$0xff] %v1532
        %1661 = vst [vmem:[#allocation2 + $0x2c0] sm:$0xff] %v1533
        %1662 = vst [vmem:[#allocation2 + $0x2c8] sm:$0xff] %v1534
        %1663 = vst [vmem:[#allocation2 + $0x2d0] sm:$0xff] %v1535
        %1664 = vst [vmem:[#allocation2 + $0x2d8] sm:$0xff] %v1536
        %1665 = vst [vmem:[#allocation2 + $0x2e0] sm:$0xff] %v1537
        %1666 = vst [vmem:[#allocation2 + $0x2e8] sm:$0xff] %v1538
        %1667 = vst [vmem:[#allocation2 + $0x2f0] sm:$0xff] %v1539
        %1668 = vst [vmem:[#allocation2 + $0x2f8] sm:$0xff] %v1540
        %1669 = vst [vmem:[#allocation2 + $0x300] sm:$0xff] %v1541
        %1670 = vst [vmem:[#allocation2 + $0x308] sm:$0xff] %v1542
        %1671 = vst [vmem:[#allocation2 + $0x310] sm:$0xff] %v1543
        %1672 = vst [vmem:[#allocation2 + $0x318] sm:$0xff] %v1544
        %1673 = vst [vmem:[#allocation2 + $0x320] sm:$0xff] %v1545
        %1674 = vst [vmem:[#allocation2 + $0x328] sm:$0xff] %v1546
        %1675 = vst [vmem:[#allocation2 + $0x330] sm:$0xff] %v1547
        %1676 = vst [vmem:[#allocation2 + $0x338] sm:$0xff] %v1548
        %1677 = vst [vmem:[#allocation2 + $0x340] sm:$0xff] %v1549
        %1678 = vst [vmem:[#allocation2 + $0x348] sm:$0xff] %v1550
        %1679 = vst [vmem:[#allocation2 + $0x350] sm:$0xff] %v1551
        %1680 = vst [vmem:[#allocation2 + $0x358] sm:$0xff] %v1552
        %1681 = vst [vmem:[#allocation2 + $0x360] sm:$0xff] %v1553
        %1682 = vst [vmem:[#allocation2 + $0x368] sm:$0xff] %v1554
        %1683 = vst [vmem:[#allocation2 + $0x370] sm:$0xff] %v1555
        %1684 = vst [vmem:[#allocation2 + $0x378] sm:$0xff] %v1556
        %1685 = vst [vmem:[#allocation2 + $0x380] sm:$0xff] %v1557
        %1686 = vst [vmem:[#allocation2 + $0x388] sm:$0xff] %v1558
        %1687 = vst [vmem:[#allocation2 + $0x390] sm:$0xff] %v1559
        %1688 = vst [vmem:[#allocation2 + $0x398] sm:$0xff] %v1560
        %1689 = vst [vmem:[#allocation2 + $0x3a0] sm:$0xff] %v1561
        %1690 = vst [vmem:[#allocation2 + $0x3a8] sm:$0xff] %v1562
        %1691 = vst [vmem:[#allocation2 + $0x3b0] sm:$0xff] %v1563
        %1692 = vst [vmem:[#allocation2 + $0x3b8] sm:$0xff] %v1564
        %1693 = vst [vmem:[#allocation2 + $0x3c0] sm:$0xff] %v1565
        %1694 = vst [vmem:[#allocation2 + $0x3c8] sm:$0xff] %v1566
        %1695 = vst [vmem:[#allocation2 + $0x3d0] sm:$0xff] %v1567
        %1696 = vst [vmem:[#allocation2 + $0x3d8] sm:$0xff] %v1568
        %1697 = vst [vmem:[#allocation2 + $0x3e0] sm:$0xff] %v1569
        %1698 = vst [vmem:[#allocation2 + $0x3e8] sm:$0xff] %v1570
        %1699 = vst [vmem:[#allocation2 + $0x3f0] sm:$0xff] %v1571
        %1700 = vst [vmem:[#allocation2 + $0x3f8] sm:$0xff] %v1572
        %v1701 = vld [vmem:[%s3] sm:$0xff]
        %v1702 = vld [vmem:[%s3 + $0x8] sm:$0xff]
        %v1703 = vld [vmem:[%s3 + $0x10] sm:$0xff]
        %v1704 = vld [vmem:[%s3 + $0x18] sm:$0xff]
        %v1705 = vld [vmem:[%s3 + $0x20] sm:$0xff]
        %v1706 = vld [vmem:[%s3 + $0x28] sm:$0xff]
        %v1707 = vld [vmem:[%s3 + $0x30] sm:$0xff]
        %v1708 = vld [vmem:[%s3 + $0x38] sm:$0xff]
        %v1709 = vld [vmem:[%s3 + $0x40] sm:$0xff]
        %v1710 = vld [vmem:[%s3 + $0x48] sm:$0xff]
        %v1711 = vld [vmem:[%s3 + $0x50] sm:$0xff]
        %v1712 = vld [vmem:[%s3 + $0x58] sm:$0xff]
        %v1713 = vld [vmem:[%s3 + $0x60] sm:$0xff]
        %v1714 = vld [vmem:[%s3 + $0x68] sm:$0xff]
        %v1715 = vld [vmem:[%s3 + $0x70] sm:$0xff]
        %v1716 = vld [vmem:[%s3 + $0x78] sm:$0xff]
        %v1717 = vld [vmem:[%s3 + $0x80] sm:$0xff]
        %v1718 = vld [vmem:[%s3 + $0x88] sm:$0xff]
        %v1719 = vld [vmem:[%s3 + $0x90] sm:$0xff]
        %v1720 = vld [vmem:[%s3 + $0x98] sm:$0xff]
        %v1721 = vld [vmem:[%s3 + $0xa0] sm:$0xff]
        %v1722 = vld [vmem:[%s3 + $0xa8] sm:$0xff]
        %v1723 = vld [vmem:[%s3 + $0xb0] sm:$0xff]
        %v1724 = vld [vmem:[%s3 + $0xb8] sm:$0xff]
        %v1725 = vld [vmem:[%s3 + $0xc0] sm:$0xff]
        %v1726 = vld [vmem:[%s3 + $0xc8] sm:$0xff]
        %v1727 = vld [vmem:[%s3 + $0xd0] sm:$0xff]
        %v1728 = vld [vmem:[%s3 + $0xd8] sm:$0xff]
        %v1729 = vld [vmem:[%s3 + $0xe0] sm:$0xff]
        %v1730 = vld [vmem:[%s3 + $0xe8] sm:$0xff]
        %v1731 = vld [vmem:[%s3 + $0xf0] sm:$0xff]
        %v1732 = vld [vmem:[%s3 + $0xf8] sm:$0xff]
        %v1733 = vld [vmem:[#allocation5] sm:$0xff]
        %v1734 = vld [vmem:[#allocation6] sm:$0xff]
        %v1735 = vld [vmem:[#allocation6 + $0x8] sm:$0xff]
        %s1736 = smul.u32 0, 4
        %s1737 = smul.addr %s1736, 8
        %s1738 = scalar_lea.vmem [#allocation2], %s1737
        %v1739 = vld [vmem:[%s1738] sm:$0xff]
        %v1740 = vld [vmem:[%s1738 + $0x8] sm:$0xff]
        %v1741 = vld [vmem:[%s1738 + $0x10] sm:$0xff]
        %v1742 = vld [vmem:[%s1738 + $0x18] sm:$0xff]
        %v1775 = vunpack.c.l.b16 %v1701
        %v1776 = vunpack.c.h.b16 %v1701
        %v1777 = vunpack.c.l.b16 %v1702
        %v1778 = vunpack.c.h.b16 %v1702
        %v1779 = vunpack.c.l.b16 %v1703
        %v1780 = vunpack.c.h.b16 %v1703
        %v1781 = vunpack.c.l.b16 %v1704
        %v1782 = vunpack.c.h.b16 %v1704
        %v1783 = vunpack.c.l.b16 %v1705
        %v1784 = vunpack.c.h.b16 %v1705
        %v1785 = vunpack.c.l.b16 %v1706
        %v1786 = vunpack.c.h.b16 %v1706
        %v1787 = vunpack.c.l.b16 %v1707
        %v1788 = vunpack.c.h.b16 %v1707
        %v1789 = vunpack.c.l.b16 %v1708
        %v1790 = vunpack.c.h.b16 %v1708
        %v1791 = vunpack.c.l.b16 %v1709
        %v1792 = vunpack.c.h.b16 %v1709
        %v1793 = vunpack.c.l.b16 %v1710
        %v1794 = vunpack.c.h.b16 %v1710
        %v1795 = vunpack.c.l.b16 %v1711
        %v1796 = vunpack.c.h.b16 %v1711
        %v1797 = vunpack.c.l.b16 %v1712
        %v1798 = vunpack.c.h.b16 %v1712
        %v1799 = vunpack.c.l.b16 %v1713
        %v1800 = vunpack.c.h.b16 %v1713
        %v1801 = vunpack.c.l.b16 %v1714
        %v1802 = vunpack.c.h.b16 %v1714
        %v1803 = vunpack.c.l.b16 %v1715
        %v1804 = vunpack.c.h.b16 %v1715
        %v1805 = vunpack.c.l.b16 %v1716
        %v1806 = vunpack.c.h.b16 %v1716
        %v1807 = vunpack.c.l.b16 %v1717
        %v1808 = vunpack.c.h.b16 %v1717
        %v1809 = vunpack.c.l.b16 %v1718
        %v1810 = vunpack.c.h.b16 %v1718
        %v1811 = vunpack.c.l.b16 %v1719
        %v1812 = vunpack.c.h.b16 %v1719
        %v1813 = vunpack.c.l.b16 %v1720
        %v1814 = vunpack.c.h.b16 %v1720
        %v1815 = vunpack.c.l.b16 %v1721
        %v1816 = vunpack.c.h.b16 %v1721
        %v1817 = vunpack.c.l.b16 %v1722
        %v1818 = vunpack.c.h.b16 %v1722
        %v1819 = vunpack.c.l.b16 %v1723
        %v1820 = vunpack.c.h.b16 %v1723
        %v1821 = vunpack.c.l.b16 %v1724
        %v1822 = vunpack.c.h.b16 %v1724
        %v1823 = vunpack.c.l.b16 %v1725
        %v1824 = vunpack.c.h.b16 %v1725
        %v1825 = vunpack.c.l.b16 %v1726
        %v1826 = vunpack.c.h.b16 %v1726
        %v1827 = vunpack.c.l.b16 %v1727
        %v1828 = vunpack.c.h.b16 %v1727
        %v1829 = vunpack.c.l.b16 %v1728
        %v1830 = vunpack.c.h.b16 %v1728
        %v1831 = vunpack.c.l.b16 %v1729
        %v1832 = vunpack.c.h.b16 %v1729
        %v1833 = vunpack.c.l.b16 %v1730
        %v1834 = vunpack.c.h.b16 %v1730
        %v1835 = vunpack.c.l.b16 %v1731
        %v1836 = vunpack.c.h.b16 %v1731
        %v1837 = vunpack.c.l.b16 %v1732
        %v1838 = vunpack.c.h.b16 %v1732
        %v1839 = vpack.c.b16 %v1779, %v1775
        %v1840 = vpack.c.b16 %v1780, %v1776
        %v1841 = vpack.c.b16 %v1781, %v1777
        %v1842 = vpack.c.b16 %v1782, %v1778
        %v1843 = vpack.c.b16 %v1787, %v1783
        %v1844 = vpack.c.b16 %v1788, %v1784
        %v1845 = vpack.c.b16 %v1789, %v1785
        %v1846 = vpack.c.b16 %v1790, %v1786
        %v1847 = vpack.c.b16 %v1795, %v1791
        %v1848 = vpack.c.b16 %v1796, %v1792
        %v1849 = vpack.c.b16 %v1797, %v1793
        %v1850 = vpack.c.b16 %v1798, %v1794
        %v1851 = vpack.c.b16 %v1803, %v1799
        %v1852 = vpack.c.b16 %v1804, %v1800
        %v1853 = vpack.c.b16 %v1805, %v1801
        %v1854 = vpack.c.b16 %v1806, %v1802
        %v1855 = vpack.c.b16 %v1811, %v1807
        %v1856 = vpack.c.b16 %v1812, %v1808
        %v1857 = vpack.c.b16 %v1813, %v1809
        %v1858 = vpack.c.b16 %v1814, %v1810
        %v1859 = vpack.c.b16 %v1819, %v1815
        %v1860 = vpack.c.b16 %v1820, %v1816
        %v1861 = vpack.c.b16 %v1821, %v1817
        %v1862 = vpack.c.b16 %v1822, %v1818
        %v1863 = vpack.c.b16 %v1827, %v1823
        %v1864 = vpack.c.b16 %v1828, %v1824
        %v1865 = vpack.c.b16 %v1829, %v1825
        %v1866 = vpack.c.b16 %v1830, %v1826
        %v1867 = vpack.c.b16 %v1835, %v1831
        %v1868 = vpack.c.b16 %v1836, %v1832
        %v1869 = vpack.c.b16 %v1837, %v1833
        %v1870 = vpack.c.b16 %v1838, %v1834
        %1903 = vmatprep.subr.bf16.mxu0 %v1840
        %1904 = vmatpush1.bf16.msra.mxu0 %v1839
        %1905 = vmatprep.subr.bf16.mxu0 %v1844
        %1906 = vmatpush1.bf16.msra.mxu0 %v1843
        %1907 = vmatprep.subr.bf16.mxu0 %v1848
        %1908 = vmatpush1.bf16.msra.mxu0 %v1847
        %1909 = vmatprep.subr.bf16.mxu0 %v1852
        %1910 = vmatpush1.bf16.msra.mxu0 %v1851
        %1911 = vmatprep.subr.bf16.mxu0 %v1856
        %1912 = vmatpush1.bf16.msra.mxu0 %v1855
        %1913 = vmatprep.subr.bf16.mxu0 %v1860
        %1914 = vmatpush1.bf16.msra.mxu0 %v1859
        %1915 = vmatprep.subr.bf16.mxu0 %v1864
        %1916 = vmatpush1.bf16.msra.mxu0 %v1863
        %1917 = vmatprep.subr.bf16.mxu0 %v1868
        %1918 = vmatpush1.bf16.msra.mxu0 %v1867
        %1919 = vmatprep.subr.bf16.mxu0 0
        %1920 = vmatpush1.bf16.msra.mxu0 0
        %1921 = vmatprep.subr.bf16.mxu0 0
        %1922 = vmatpush1.bf16.msra.mxu0 0
        %1923 = vmatprep.subr.bf16.mxu0 0
        %1924 = vmatpush1.bf16.msra.mxu0 0
        %1925 = vmatprep.subr.bf16.mxu0 0
        %1926 = vmatpush1.bf16.msra.mxu0 0
        %1927 = vmatprep.subr.bf16.mxu0 0
        %1928 = vmatpush1.bf16.msra.mxu0 0
        %1929 = vmatprep.subr.bf16.mxu0 0
        %1930 = vmatpush1.bf16.msra.mxu0 0
        %1931 = vmatprep.subr.bf16.mxu0 0
        %1932 = vmatpush1.bf16.msra.mxu0 0
        %1933 = vmatprep.subr.bf16.mxu0 0
        %1934 = vmatpush1.bf16.msra.mxu0 0
        %1935 = vmatprep.mubr.bf16.mxu0 0
        %1936 = vmatmul.mubr.bf16.gmra.mrb[0].mxu0 %v1733
        %v1937 = vpop.f32.mrb[0].mxu0
        %v1938 = vadd.f32 0.0, %v1937
        %v1939 = vpop.f32.mrb[0].mxu0
        %v1940 = vadd.f32 0.0, %v1939
        %v1941 = vpop.f32.mrb[0].mxu0
        %v1942 = vadd.f32 0.0, %v1941
        %v1943 = vpop.f32.mrb[0].mxu0
        %v1944 = vadd.f32 0.0, %v1943
        %1945 = vdwg.mxu0
        %1946 = vmatprep.subr.bf16.mxu0 %v1842
        %1947 = vmatpush1.bf16.msra.mxu0 %v1841
        %1948 = vmatprep.subr.bf16.mxu0 %v1846
        %1949 = vmatpush1.bf16.msra.mxu0 %v1845
        %1950 = vmatprep.subr.bf16.mxu0 %v1850
        %1951 = vmatpush1.bf16.msra.mxu0 %v1849
        %1952 = vmatprep.subr.bf16.mxu0 %v1854
        %1953 = vmatpush1.bf16.msra.mxu0 %v1853
        %1954 = vmatprep.subr.bf16.mxu0 %v1858
        %1955 = vmatpush1.bf16.msra.mxu0 %v1857
        %1956 = vmatprep.subr.bf16.mxu0 %v1862
        %1957 = vmatpush1.bf16.msra.mxu0 %v1861
        %1958 = vmatprep.subr.bf16.mxu0 %v1866
        %1959 = vmatpush1.bf16.msra.mxu0 %v1865
        %1960 = vmatprep.subr.bf16.mxu0 %v1870
        %1961 = vmatpush1.bf16.msra.mxu0 %v1869
        %1962 = vmatprep.subr.bf16.mxu0 0
        %1963 = vmatpush1.bf16.msra.mxu0 0
        %1964 = vmatprep.subr.bf16.mxu0 0
        %1965 = vmatpush1.bf16.msra.mxu0 0
        %1966 = vmatprep.subr.bf16.mxu0 0
        %1967 = vmatpush1.bf16.msra.mxu0 0
        %1968 = vmatprep.subr.bf16.mxu0 0
        %1969 = vmatpush1.bf16.msra.mxu0 0
        %1970 = vmatprep.subr.bf16.mxu0 0
        %1971 = vmatpush1.bf16.msra.mxu0 0
        %1972 = vmatprep.subr.bf16.mxu0 0
        %1973 = vmatpush1.bf16.msra.mxu0 0
        %1974 = vmatprep.subr.bf16.mxu0 0
        %1975 = vmatpush1.bf16.msra.mxu0 0
        %1976 = vmatprep.subr.bf16.mxu0 0
        %1977 = vmatpush1.bf16.msra.mxu0 0
        %1978 = vmatprep.mubr.bf16.mxu0 0
        %1979 = vmatmul.mubr.bf16.gmra.mrb[0].mxu0 %v1733
        %v1980 = vpop.f32.mrb[0].mxu0
        %v1981 = vadd.f32 0.0, %v1980
        %v1982 = vpop.f32.mrb[0].mxu0
        %v1983 = vadd.f32 0.0, %v1982
        %v1984 = vpop.f32.mrb[0].mxu0
        %v1985 = vadd.f32 0.0, %v1984
        %v1986 = vpop.f32.mrb[0].mxu0
        %v1987 = vadd.f32 0.0, %v1986
        %1988 = vdwg.mxu0
        %v1989 = vunpack.c.l.bf16 %v1739
        %v1990 = vunpack.c.l.bf16 %v1740
        %v1991 = vunpack.c.l.bf16 %v1741
        %v1992 = vunpack.c.l.bf16 %v1742
        %v1993 = vunpack.c.h.bf16 %v1739
        %v1994 = vunpack.c.h.bf16 %v1740
        %v1995 = vunpack.c.h.bf16 %v1741
        %v1996 = vunpack.c.h.bf16 %v1742
        %v1997 = vadd.f32 %v1989, %v1938
        %v1998 = vadd.f32 %v1990, %v1940
        %v1999 = vadd.f32 %v1991, %v1981
        %v2000 = vadd.f32 %v1992, %v1983
        %v2001 = vadd.f32 %v1993, %v1942
        %v2002 = vadd.f32 %v1994, %v1944
        %v2003 = vadd.f32 %v1995, %v1985
        %v2004 = vadd.f32 %v1996, %v1987
        %v2005 = vxor.u32 %v1997, 2147483648
        %v2006 = vxor.u32 %v2001, 2147483648
        %v2007 = vmul.f32 %v2005, 1.442695
        %v2008 = vpow.pop %v2007
        %v2009 = vmul.f32 %v2006, 1.442695
        %v2010 = vpow.pop %v2009
        %v2011 = vadd.f32 %v2008, 1.0
        %v2012 = vadd.f32 %v2010, 1.0
        %v2013 = vrcp.pop %v2011
        %v2014 = vmul.f32 1.0, %v2013
        %v2015 = vrcp.pop %v2012
        %v2016 = vmul.f32 1.0, %v2015
        %v2017 = vxor.u32 %v1998, 2147483648
        %v2018 = vxor.u32 %v2002, 2147483648
        %v2019 = vmul.f32 %v2017, 1.442695
        %v2020 = vpow.pop %v2019
        %v2021 = vmul.f32 %v2018, 1.442695
        %v2022 = vpow.pop %v2021
        %v2023 = vadd.f32 %v2020, 1.0
        %v2024 = vadd.f32 %v2022, 1.0
        %v2025 = vrcp.pop %v2023
        %v2026 = vmul.f32 1.0, %v2025
        %v2027 = vrcp.pop %v2024
        %v2028 = vmul.f32 1.0, %v2027
        %v2029 = vtanh.pop %v1999
        %v2030 = vtanh.pop %v2003
        %v2031 = vxor.u32 %v2000, 2147483648
        %v2032 = vxor.u32 %v2004, 2147483648
        %v2033 = vmul.f32 %v2031, 1.442695
        %v2034 = vpow.pop %v2033
        %v2035 = vmul.f32 %v2032, 1.442695
        %v2036 = vpow.pop %v2035
        %v2037 = vadd.f32 %v2034, 1.0
        %v2038 = vadd.f32 %v2036, 1.0
        %v2039 = vrcp.pop %v2037
        %v2040 = vmul.f32 1.0, %v2039
        %v2041 = vrcp.pop %v2038
        %v2042 = vmul.f32 1.0, %v2041
        %v2043 = vmul.f32 %v2026, %v1734
        %v2044 = vmul.f32 %v2028, %v1735
        %v2045 = vmul.f32 %v2014, %v2029
        %v2046 = vmul.f32 %v2016, %v2030
        %v2047 = vadd.f32 %v2043, %v2045
        %v2048 = vadd.f32 %v2044, %v2046
        %v2049 = vtanh.pop %v2047
        %v2050 = vtanh.pop %v2048
        %v2051 = vmul.f32 %v2040, %v2049
        %v2052 = vmul.f32 %v2042, %v2050
        %v2053 = vpack.c.bf16 %v2052, %v2051
        %2054 = vst [vmem:[#allocation3] sm:$0xff] %v2053
        %s2055 = smul.u32 1, 4
        %s2056 = smul.addr %s2055, 8
        %s2057 = scalar_lea.vmem [#allocation2], %s2056
        %v2058 = vld [vmem:[%s2057] sm:$0xff]
        %v2059 = vld [vmem:[%s2057 + $0x8] sm:$0xff]
        %v2060 = vld [vmem:[%s2057 + $0x10] sm:$0xff]
        %v2061 = vld [vmem:[%s2057 + $0x18] sm:$0xff]
        %2062 = vmatprep.subr.bf16.mxu0 %v1840
        %2063 = vmatpush1.bf16.msra.mxu0 %v1839
        %2064 = vmatprep.subr.bf16.mxu0 %v1844
        %2065 = vmatpush1.bf16.msra.mxu0 %v1843
        %2066 = vmatprep.subr.bf16.mxu0 %v1848
        %2067 = vmatpush1.bf16.msra.mxu0 %v1847
        %2068 = vmatprep.subr.bf16.mxu0 %v1852
        %2069 = vmatpush1.bf16.msra.mxu0 %v1851
        %2070 = vmatprep.subr.bf16.mxu0 %v1856
        %2071 = vmatpush1.bf16.msra.mxu0 %v1855
        %2072 = vmatprep.subr.bf16.mxu0 %v1860
        %2073 = vmatpush1.bf16.msra.mxu0 %v1859
        %2074 = vmatprep.subr.bf16.mxu0 %v1864
        %2075 = vmatpush1.bf16.msra.mxu0 %v1863
        %2076 = vmatprep.subr.bf16.mxu0 %v1868
        %2077 = vmatpush1.bf16.msra.mxu0 %v1867
        %2078 = vmatprep.subr.bf16.mxu0 0
        %2079 = vmatpush1.bf16.msra.mxu0 0
        %2080 = vmatprep.subr.bf16.mxu0 0
        %2081 = vmatpush1.bf16.msra.mxu0 0
        %2082 = vmatprep.subr.bf16.mxu0 0
        %2083 = vmatpush1.bf16.msra.mxu0 0
        %2084 = vmatprep.subr.bf16.mxu0 0
        %2085 = vmatpush1.bf16.msra.mxu0 0
        %2086 = vmatprep.subr.bf16.mxu0 0
        %2087 = vmatpush1.bf16.msra.mxu0 0
        %2088 = vmatprep.subr.bf16.mxu0 0
        %2089 = vmatpush1.bf16.msra.mxu0 0
        %2090 = vmatprep.subr.bf16.mxu0 0
        %2091 = vmatpush1.bf16.msra.mxu0 0
        %2092 = vmatprep.subr.bf16.mxu0 0
        %2093 = vmatpush1.bf16.msra.mxu0 0
        %2094 = vmatprep.mubr.bf16.mxu0 0
        %2095 = vmatmul.mubr.bf16.gmra.mrb[0].mxu0 %v2053
        %v2096 = vpop.f32.mrb[0].mxu0
        %v2097 = vadd.f32 0.0, %v2096
        %v2098 = vpop.f32.mrb[0].mxu0
        %v2099 = vadd.f32 0.0, %v2098
        %v2100 = vpop.f32.mrb[0].mxu0
        %v2101 = vadd.f32 0.0, %v2100
        %v2102 = vpop.f32.mrb[0].mxu0
        %v2103 = vadd.f32 0.0, %v2102
        %2104 = vdwg.mxu0
        %2105 = vmatprep.subr.bf16.mxu0 %v1842
        %2106 = vmatpush1.bf16.msra.mxu0 %v1841
        %2107 = vmatprep.subr.bf16.mxu0 %v1846
        %2108 = vmatpush1.bf16.msra.mxu0 %v1845
        %2109 = vmatprep.subr.bf16.mxu0 %v1850
        %2110 = vmatpush1.bf16.msra.mxu0 %v1849
        %2111 = vmatprep.subr.bf16.mxu0 %v1854
        %2112 = vmatpush1.bf16.msra.mxu0 %v1853
        %2113 = vmatprep.subr.bf16.mxu0 %v1858
        %2114 = vmatpush1.bf16.msra.mxu0 %v1857
        %2115 = vmatprep.subr.bf16.mxu0 %v1862
        %2116 = vmatpush1.bf16.msra.mxu0 %v1861
        %2117 = vmatprep.subr.bf16.mxu0 %v1866
        %2118 = vmatpush1.bf16.msra.mxu0 %v1865
        %2119 = vmatprep.subr.bf16.mxu0 %v1870
        %2120 = vmatpush1.bf16.msra.mxu0 %v1869
        %2121 = vmatprep.subr.bf16.mxu0 0
        %2122 = vmatpush1.bf16.msra.mxu0 0
        %2123 = vmatprep.subr.bf16.mxu0 0
        %2124 = vmatpush1.bf16.msra.mxu0 0
        %2125 = vmatprep.subr.bf16.mxu0 0
        %2126 = vmatpush1.bf16.msra.mxu0 0
        %2127 = vmatprep.subr.bf16.mxu0 0
        %2128 = vmatpush1.bf16.msra.mxu0 0
        %2129 = vmatprep.subr.bf16.mxu0 0
        %2130 = vmatpush1.bf16.msra.mxu0 0
        %2131 = vmatprep.subr.bf16.mxu0 0
        %2132 = vmatpush1.bf16.msra.mxu0 0
        %2133 = vmatprep.subr.bf16.mxu0 0
        %2134 = vmatpush1.bf16.msra.mxu0 0
        %2135 = vmatprep.subr.bf16.mxu0 0
        %2136 = vmatpush1.bf16.msra.mxu0 0
        %2137 = vmatprep.mubr.bf16.mxu0 0
        %2138 = vmatmul.mubr.bf16.gmra.mrb[0].mxu0 %v2053
        %v2139 = vpop.f32.mrb[0].mxu0
        %v2140 = vadd.f32 0.0, %v2139
        %v2141 = vpop.f32.mrb[0].mxu0
        %v2142 = vadd.f32 0.0, %v2141
        %v2143 = vpop.f32.mrb[0].mxu0
        %v2144 = vadd.f32 0.0, %v2143
        %v2145 = vpop.f32.mrb[0].mxu0
        %v2146 = vadd.f32 0.0, %v2145
        %2147 = vdwg.mxu0
        %v2148 = vunpack.c.l.bf16 %v2058
        %v2149 = vunpack.c.l.bf16 %v2059
        %v2150 = vunpack.c.l.bf16 %v2060
        %v2151 = vunpack.c.l.bf16 %v2061
        %v2152 = vunpack.c.h.bf16 %v2058
        %v2153 = vunpack.c.h.bf16 %v2059
        %v2154 = vunpack.c.h.bf16 %v2060
        %v2155 = vunpack.c.h.bf16 %v2061
        %v2156 = vadd.f32 %v2148, %v2097
        %v2157 = vadd.f32 %v2149, %v2099
        %v2158 = vadd.f32 %v2150, %v2140
        %v2159 = vadd.f32 %v2151, %v2142
        %v2160 = vadd.f32 %v2152, %v2101
        %v2161 = vadd.f32 %v2153, %v2103
        %v2162 = vadd.f32 %v2154, %v2144
        %v2163 = vadd.f32 %v2155, %v2146
        %v2164 = vxor.u32 %v2156, 2147483648
        %v2165 = vxor.u32 %v2160, 2147483648
        %v2166 = vmul.f32 %v2164, 1.442695
        %v2167 = vpow.pop %v2166
        %v2168 = vmul.f32 %v2165, 1.442695
        %v2169 = vpow.pop %v2168
        %v2170 = vadd.f32 %v2167, 1.0
        %v2171 = vadd.f32 %v2169, 1.0
        %v2172 = vrcp.pop %v2170
        %v2173 = vmul.f32 1.0, %v2172
        %v2174 = vrcp.pop %v2171
        %v2175 = vmul.f32 1.0, %v2174
        %v2176 = vxor.u32 %v2157, 2147483648
        %v2177 = vxor.u32 %v2161, 2147483648
        %v2178 = vmul.f32 %v2176, 1.442695
        %v2179 = vpow.pop %v2178
        %v2180 = vmul.f32 %v2177, 1.442695
        %v2181 = vpow.pop %v2180
        %v2182 = vadd.f32 %v2179, 1.0
        %v2183 = vadd.f32 %v2181, 1.0
        %v2184 = vrcp.pop %v2182
        %v2185 = vmul.f32 1.0, %v2184
        %v2186 = vrcp.pop %v2183
        %v2187 = vmul.f32 1.0, %v2186
        %v2188 = vtanh.pop %v2158
        %v2189 = vtanh.pop %v2162
        %v2190 = vxor.u32 %v2159, 2147483648
        %v2191 = vxor.u32 %v2163, 2147483648
        %v2192 = vmul.f32 %v2190, 1.442695
        %v2193 = vpow.pop %v2192
        %v2194 = vmul.f32 %v2191, 1.442695
        %v2195 = vpow.pop %v2194
        %v2196 = vadd.f32 %v2193, 1.0
        %v2197 = vadd.f32 %v2195, 1.0
        %v2198 = vrcp.pop %v2196
        %v2199 = vmul.f32 1.0, %v2198
        %v2200 = vrcp.pop %v2197
        %v2201 = vmul.f32 1.0, %v2200
        %v2202 = vmul.f32 %v2185, %v2047
        %v2203 = vmul.f32 %v2187, %v2048
        %v2204 = vmul.f32 %v2173, %v2188
        %v2205 = vmul.f32 %v2175, %v2189
        %v2206 = vadd.f32 %v2202, %v2204
        %v2207 = vadd.f32 %v2203, %v2205
        %v2208 = vtanh.pop %v2206
        %v2209 = vtanh.pop %v2207
        %v2210 = vmul.f32 %v2199, %v2208
        %v2211 = vmul.f32 %v2201, %v2209
        %v2212 = vpack.c.bf16 %v2211, %v2210
        %s2213 = scalar_lea.vmem [#allocation3], 8
        %2214 = vst [vmem:[%s2213] sm:$0xff] %v2212
        %s2215 = smul.u32 2, 4
        %s2216 = smul.addr %s2215, 8
        %s2217 = scalar_lea.vmem [#allocation2], %s2216
        %v2218 = vld [vmem:[%s2217] sm:$0xff]
        %v2219 = vld [vmem:[%s2217 + $0x8] sm:$0xff]
        %v2220 = vld [vmem:[%s2217 + $0x10] sm:$0xff]
        %v2221 = vld [vmem:[%s2217 + $0x18] sm:$0xff]
        %2222 = vmatprep.subr.bf16.mxu0 %v1840
        %2223 = vmatpush1.bf16.msra.mxu0 %v1839
        %2224 = vmatprep.subr.bf16.mxu0 %v1844
        %2225 = vmatpush1.bf16.msra.mxu0 %v1843
        %2226 = vmatprep.subr.bf16.mxu0 %v1848
        %2227 = vmatpush1.bf16.msra.mxu0 %v1847
        %2228 = vmatprep.subr.bf16.mxu0 %v1852
        %2229 = vmatpush1.bf16.msra.mxu0 %v1851
        %2230 = vmatprep.subr.bf16.mxu0 %v1856
        %2231 = vmatpush1.bf16.msra.mxu0 %v1855
        %2232 = vmatprep.subr.bf16.mxu0 %v1860
        %2233 = vmatpush1.bf16.msra.mxu0 %v1859
        %2234 = vmatprep.subr.bf16.mxu0 %v1864
        %2235 = vmatpush1.bf16.msra.mxu0 %v1863
        %2236 = vmatprep.subr.bf16.mxu0 %v1868
        %2237 = vmatpush1.bf16.msra.mxu0 %v1867
        %2238 = vmatprep.subr.bf16.mxu0 0
        %2239 = vmatpush1.bf16.msra.mxu0 0
        %2240 = vmatprep.subr.bf16.mxu0 0
        %2241 = vmatpush1.bf16.msra.mxu0 0
        %2242 = vmatprep.subr.bf16.mxu0 0
        %2243 = vmatpush1.bf16.msra.mxu0 0
        %2244 = vmatprep.subr.bf16.mxu0 0
        %2245 = vmatpush1.bf16.msra.mxu0 0
        %2246 = vmatprep.subr.bf16.mxu0 0
        %2247 = vmatpush1.bf16.msra.mxu0 0
        %2248 = vmatprep.subr.bf16.mxu0 0
        %2249 = vmatpush1.bf16.msra.mxu0 0
        %2250 = vmatprep.subr.bf16.mxu0 0
        %2251 = vmatpush1.bf16.msra.mxu0 0
        %2252 = vmatprep.subr.bf16.mxu0 0
        %2253 = vmatpush1.bf16.msra.mxu0 0
        %2254 = vmatprep.mubr.bf16.mxu0 0
        %2255 = vmatmul.mubr.bf16.gmra.mrb[0].mxu0 %v2212
        %v2256 = vpop.f32.mrb[0].mxu0
        %v2257 = vadd.f32 0.0, %v2256
        %v2258 = vpop.f32.mrb[0].mxu0
        %v2259 = vadd.f32 0.0, %v2258
        %v2260 = vpop.f32.mrb[0].mxu0
        %v2261 = vadd.f32 0.0, %v2260
        %v2262 = vpop.f32.mrb[0].mxu0
        %v2263 = vadd.f32 0.0, %v2262
        %2264 = vdwg.mxu0
        %2265 = vmatprep.subr.bf16.mxu0 %v1842
        %2266 = vmatpush1.bf16.msra.mxu0 %v1841
        %2267 = vmatprep.subr.bf16.mxu0 %v1846
        %2268 = vmatpush1.bf16.msra.mxu0 %v1845
        %2269 = vmatprep.subr.bf16.mxu0 %v1850
        %2270 = vmatpush1.bf16.msra.mxu0 %v1849
        %2271 = vmatprep.subr.bf16.mxu0 %v1854
        %2272 = vmatpush1.bf16.msra.mxu0 %v1853
        %2273 = vmatprep.subr.bf16.mxu0 %v1858
        %2274 = vmatpush1.bf16.msra.mxu0 %v1857
        %2275 = vmatprep.subr.bf16.mxu0 %v1862
        %2276 = vmatpush1.bf16.msra.mxu0 %v1861
        %2277 = vmatprep.subr.bf16.mxu0 %v1866
        %2278 = vmatpush1.bf16.msra.mxu0 %v1865
        %2279 = vmatprep.subr.bf16.mxu0 %v1870
        %2280 = vmatpush1.bf16.msra.mxu0 %v1869
        %2281 = vmatprep.subr.bf16.mxu0 0
        %2282 = vmatpush1.bf16.msra.mxu0 0
        %2283 = vmatprep.subr.bf16.mxu0 0
        %2284 = vmatpush1.bf16.msra.mxu0 0
        %2285 = vmatprep.subr.bf16.mxu0 0
        %2286 = vmatpush1.bf16.msra.mxu0 0
        %2287 = vmatprep.subr.bf16.mxu0 0
        %2288 = vmatpush1.bf16.msra.mxu0 0
        %2289 = vmatprep.subr.bf16.mxu0 0
        %2290 = vmatpush1.bf16.msra.mxu0 0
        %2291 = vmatprep.subr.bf16.mxu0 0
        %2292 = vmatpush1.bf16.msra.mxu0 0
        %2293 = vmatprep.subr.bf16.mxu0 0
        %2294 = vmatpush1.bf16.msra.mxu0 0
        %2295 = vmatprep.subr.bf16.mxu0 0
        %2296 = vmatpush1.bf16.msra.mxu0 0
        %2297 = vmatprep.mubr.bf16.mxu0 0
        %2298 = vmatmul.mubr.bf16.gmra.mrb[0].mxu0 %v2212
        %v2299 = vpop.f32.mrb[0].mxu0
        %v2300 = vadd.f32 0.0, %v2299
        %v2301 = vpop.f32.mrb[0].mxu0
        %v2302 = vadd.f32 0.0, %v2301
        %v2303 = vpop.f32.mrb[0].mxu0
        %v2304 = vadd.f32 0.0, %v2303
        %v2305 = vpop.f32.mrb[0].mxu0
        %v2306 = vadd.f32 0.0, %v2305
        %2307 = vdwg.mxu0
        %v2308 = vunpack.c.l.bf16 %v2218
        %v2309 = vunpack.c.l.bf16 %v2219
        %v2310 = vunpack.c.l.bf16 %v2220
        %v2311 = vunpack.c.l.bf16 %v2221
        %v2312 = vunpack.c.h.bf16 %v2218
        %v2313 = vunpack.c.h.bf16 %v2219
        %v2314 = vunpack.c.h.bf16 %v2220
        %v2315 = vunpack.c.h.bf16 %v2221
        %v2316 = vadd.f32 %v2308, %v2257
        %v2317 = vadd.f32 %v2309, %v2259
        %v2318 = vadd.f32 %v2310, %v2300
        %v2319 = vadd.f32 %v2311, %v2302
        %v2320 = vadd.f32 %v2312, %v2261
        %v2321 = vadd.f32 %v2313, %v2263
        %v2322 = vadd.f32 %v2314, %v2304
        %v2323 = vadd.f32 %v2315, %v2306
        %v2324 = vxor.u32 %v2316, 2147483648
        %v2325 = vxor.u32 %v2320, 2147483648
        %v2326 = vmul.f32 %v2324, 1.442695
        %v2327 = vpow.pop %v2326
        %v2328 = vmul.f32 %v2325, 1.442695
        %v2329 = vpow.pop %v2328
        %v2330 = vadd.f32 %v2327, 1.0
        %v2331 = vadd.f32 %v2329, 1.0
        %v2332 = vrcp.pop %v2330
        %v2333 = vmul.f32 1.0, %v2332
        %v2334 = vrcp.pop %v2331
        %v2335 = vmul.f32 1.0, %v2334
        %v2336 = vxor.u32 %v2317, 2147483648
        %v2337 = vxor.u32 %v2321, 2147483648
        %v2338 = vmul.f32 %v2336, 1.442695
        %v2339 = vpow.pop %v2338
        %v2340 = vmul.f32 %v2337, 1.442695
        %v2341 = vpow.pop %v2340
        %v2342 = vadd.f32 %v2339, 1.0
        %v2343 = vadd.f32 %v2341, 1.0
        %v2344 = vrcp.pop %v2342
        %v2345 = vmul.f32 1.0, %v2344
        %v2346 = vrcp.pop %v2343
        %v2347 = vmul.f32 1.0, %v2346
        %v2348 = vtanh.pop %v2318
        %v2349 = vtanh.pop %v2322
        %v2350 = vxor.u32 %v2319, 2147483648
        %v2351 = vxor.u32 %v2323, 2147483648
        %v2352 = vmul.f32 %v2350, 1.442695
        %v2353 = vpow.pop %v2352
        %v2354 = vmul.f32 %v2351, 1.442695
        %v2355 = vpow.pop %v2354
        %v2356 = vadd.f32 %v2353, 1.0
        %v2357 = vadd.f32 %v2355, 1.0
        %v2358 = vrcp.pop %v2356
        %v2359 = vmul.f32 1.0, %v2358
        %v2360 = vrcp.pop %v2357
        %v2361 = vmul.f32 1.0, %v2360
        %v2362 = vmul.f32 %v2345, %v2206
        %v2363 = vmul.f32 %v2347, %v2207
        %v2364 = vmul.f32 %v2333, %v2348
        %v2365 = vmul.f32 %v2335, %v2349
        %v2366 = vadd.f32 %v2362, %v2364
        %v2367 = vadd.f32 %v2363, %v2365
        %v2368 = vtanh.pop %v2366
        %v2369 = vtanh.pop %v2367
        %v2370 = vmul.f32 %v2359, %v2368
        %v2371 = vmul.f32 %v2361, %v2369
        %v2372 = vpack.c.bf16 %v2371, %v2370
        %s2373 = scalar_lea.vmem [#allocation3], 16
        %2374 = vst [vmem:[%s2373] sm:$0xff] %v2372
        %s2375 = smul.u32 3, 4
        %s2376 = smul.addr %s2375, 8
        %s2377 = scalar_lea.vmem [#allocation2], %s2376
        %v2378 = vld [vmem:[%s2377] sm:$0xff]
        %v2379 = vld [vmem:[%s2377 + $0x8] sm:$0xff]
        %v2380 = vld [vmem:[%s2377 + $0x10] sm:$0xff]
        %v2381 = vld [vmem:[%s2377 + $0x18] sm:$0xff]
        %2382 = vmatprep.subr.bf16.mxu0 %v1840
        %2383 = vmatpush1.bf16.msra.mxu0 %v1839
        %2384 = vmatprep.subr.bf16.mxu0 %v1844
        %2385 = vmatpush1.bf16.msra.mxu0 %v1843
        %2386 = vmatprep.subr.bf16.mxu0 %v1848
        %2387 = vmatpush1.bf16.msra.mxu0 %v1847
        %2388 = vmatprep.subr.bf16.mxu0 %v1852
        %2389 = vmatpush1.bf16.msra.mxu0 %v1851
        %2390 = vmatprep.subr.bf16.mxu0 %v1856
        %2391 = vmatpush1.bf16.msra.mxu0 %v1855
        %2392 = vmatprep.subr.bf16.mxu0 %v1860
        %2393 = vmatpush1.bf16.msra.mxu0 %v1859
        %2394 = vmatprep.subr.bf16.mxu0 %v1864
        %2395 = vmatpush1.bf16.msra.mxu0 %v1863
        %2396 = vmatprep.subr.bf16.mxu0 %v1868
        %2397 = vmatpush1.bf16.msra.mxu0 %v1867
        %2398 = vmatprep.subr.bf16.mxu0 0
        %2399 = vmatpush1.bf16.msra.mxu0 0
        %2400 = vmatprep.subr.bf16.mxu0 0
        %2401 = vmatpush1.bf16.msra.mxu0 0
        %2402 = vmatprep.subr.bf16.mxu0 0
        %2403 = vmatpush1.bf16.msra.mxu0 0
        %2404 = vmatprep.subr.bf16.mxu0 0
        %2405 = vmatpush1.bf16.msra.mxu0 0
        %2406 = vmatprep.subr.bf16.mxu0 0
        %2407 = vmatpush1.bf16.msra.mxu0 0
        %2408 = vmatprep.subr.bf16.mxu0 0
        %2409 = vmatpush1.bf16.msra.mxu0 0
        %2410 = vmatprep.subr.bf16.mxu0 0
        %2411 = vmatpush1.bf16.msra.mxu0 0
        %2412 = vmatprep.subr.bf16.mxu0 0
        %2413 = vmatpush1.bf16.msra.mxu0 0
        %2414 = vmatprep.mubr.bf16.mxu0 0
        %2415 = vmatmul.mubr.bf16.gmra.mrb[0].mxu0 %v2372
        %v2416 = vpop.f32.mrb[0].mxu0
        %v2417 = vadd.f32 0.0, %v2416
        %v2418 = vpop.f32.mrb[0].mxu0
        %v2419 = vadd.f32 0.0, %v2418
        %v2420 = vpop.f32.mrb[0].mxu0
        %v2421 = vadd.f32 0.0, %v2420
        %v2422 = vpop.f32.mrb[0].mxu0
        %v2423 = vadd.f32 0.0, %v2422
        %2424 = vdwg.mxu0
        %2425 = vmatprep.subr.bf16.mxu0 %v1842
        %2426 = vmatpush1.bf16.msra.mxu0 %v1841
        %2427 = vmatprep.subr.bf16.mxu0 %v1846
        %2428 = vmatpush1.bf16.msra.mxu0 %v1845
        %2429 = vmatprep.subr.bf16.mxu0 %v1850
        %2430 = vmatpush1.bf16.msra.mxu0 %v1849
        %2431 = vmatprep.subr.bf16.mxu0 %v1854
        %2432 = vmatpush1.bf16.msra.mxu0 %v1853
        %2433 = vmatprep.subr.bf16.mxu0 %v1858
        %2434 = vmatpush1.bf16.msra.mxu0 %v1857
        %2435 = vmatprep.subr.bf16.mxu0 %v1862
        %2436 = vmatpush1.bf16.msra.mxu0 %v1861
        %2437 = vmatprep.subr.bf16.mxu0 %v1866
        %2438 = vmatpush1.bf16.msra.mxu0 %v1865
        %2439 = vmatprep.subr.bf16.mxu0 %v1870
        %2440 = vmatpush1.bf16.msra.mxu0 %v1869
        %2441 = vmatprep.subr.bf16.mxu0 0
        %2442 = vmatpush1.bf16.msra.mxu0 0
        %2443 = vmatprep.subr.bf16.mxu0 0
        %2444 = vmatpush1.bf16.msra.mxu0 0
        %2445 = vmatprep.subr.bf16.mxu0 0
        %2446 = vmatpush1.bf16.msra.mxu0 0
        %2447 = vmatprep.subr.bf16.mxu0 0
        %2448 = vmatpush1.bf16.msra.mxu0 0
        %2449 = vmatprep.subr.bf16.mxu0 0
        %2450 = vmatpush1.bf16.msra.mxu0 0
        %2451 = vmatprep.subr.bf16.mxu0 0
        %2452 = vmatpush1.bf16.msra.mxu0 0
        %2453 = vmatprep.subr.bf16.mxu0 0
        %2454 = vmatpush1.bf16.msra.mxu0 0
        %2455 = vmatprep.subr.bf16.mxu0 0
        %2456 = vmatpush1.bf16.msra.mxu0 0
        %2457 = vmatprep.mubr.bf16.mxu0 0
        %2458 = vmatmul.mubr.bf16.gmra.mrb[0].mxu0 %v2372
        %v2459 = vpop.f32.mrb[0].mxu0
        %v2460 = vadd.f32 0.0, %v2459
        %v2461 = vpop.f32.mrb[0].mxu0
        %v2462 = vadd.f32 0.0, %v2461
        %v2463 = vpop.f32.mrb[0].mxu0
        %v2464 = vadd.f32 0.0, %v2463
        %v2465 = vpop.f32.mrb[0].mxu0
        %v2466 = vadd.f32 0.0, %v2465
        %2467 = vdwg.mxu0
        %v2468 = vunpack.c.l.bf16 %v2378
        %v2469 = vunpack.c.l.bf16 %v2379
        %v2470 = vunpack.c.l.bf16 %v2380
        %v2471 = vunpack.c.l.bf16 %v2381
        %v2472 = vunpack.c.h.bf16 %v2378
        %v2473 = vunpack.c.h.bf16 %v2379
        %v2474 = vunpack.c.h.bf16 %v2380
        %v2475 = vunpack.c.h.bf16 %v2381
        %v2476 = vadd.f32 %v2468, %v2417
        %v2477 = vadd.f32 %v2469, %v2419
        %v2478 = vadd.f32 %v2470, %v2460
        %v2479 = vadd.f32 %v2471, %v2462
        %v2480 = vadd.f32 %v2472, %v2421
        %v2481 = vadd.f32 %v2473, %v2423
        %v2482 = vadd.f32 %v2474, %v2464
        %v2483 = vadd.f32 %v2475, %v2466
        %v2484 = vxor.u32 %v2476, 2147483648
        %v2485 = vxor.u32 %v2480, 2147483648
        %v2486 = vmul.f32 %v2484, 1.442695
        %v2487 = vpow.pop %v2486
        %v2488 = vmul.f32 %v2485, 1.442695
        %v2489 = vpow.pop %v2488
        %v2490 = vadd.f32 %v2487, 1.0
        %v2491 = vadd.f32 %v2489, 1.0
        %v2492 = vrcp.pop %v2490
        %v2493 = vmul.f32 1.0, %v2492
        %v2494 = vrcp.pop %v2491
        %v2495 = vmul.f32 1.0, %v2494
        %v2496 = vxor.u32 %v2477, 2147483648
        %v2497 = vxor.u32 %v2481, 2147483648
        %v2498 = vmul.f32 %v2496, 1.442695
        %v2499 = vpow.pop %v2498
        %v2500 = vmul.f32 %v2497, 1.442695
        %v2501 = vpow.pop %v2500
        %v2502 = vadd.f32 %v2499, 1.0
        %v2503 = vadd.f32 %v2501, 1.0
        %v2504 = vrcp.pop %v2502
        %v2505 = vmul.f32 1.0, %v2504
        %v2506 = vrcp.pop %v2503
        %v2507 = vmul.f32 1.0, %v2506
        %v2508 = vtanh.pop %v2478
        %v2509 = vtanh.pop %v2482
        %v2510 = vxor.u32 %v2479, 2147483648
        %v2511 = vxor.u32 %v2483, 2147483648
        %v2512 = vmul.f32 %v2510, 1.442695
        %v2513 = vpow.pop %v2512
        %v2514 = vmul.f32 %v2511, 1.442695
        %v2515 = vpow.pop %v2514
        %v2516 = vadd.f32 %v2513, 1.0
        %v2517 = vadd.f32 %v2515, 1.0
        %v2518 = vrcp.pop %v2516
        %v2519 = vmul.f32 1.0, %v2518
        %v2520 = vrcp.pop %v2517
        %v2521 = vmul.f32 1.0, %v2520
        %v2522 = vmul.f32 %v2505, %v2366
        %v2523 = vmul.f32 %v2507, %v2367
        %v2524 = vmul.f32 %v2493, %v2508
        %v2525 = vmul.f32 %v2495, %v2509
        %v2526 = vadd.f32 %v2522, %v2524
        %v2527 = vadd.f32 %v2523, %v2525
        %v2528 = vtanh.pop %v2526
        %v2529 = vtanh.pop %v2527
        %v2530 = vmul.f32 %v2519, %v2528
        %v2531 = vmul.f32 %v2521, %v2529
        %v2532 = vpack.c.bf16 %v2531, %v2530
        %s2533 = scalar_lea.vmem [#allocation3], 24
        %2534 = vst [vmem:[%s2533] sm:$0xff] %v2532
        %s2535 = smul.u32 4, 4
        %s2536 = smul.addr %s2535, 8
        %s2537 = scalar_lea.vmem [#allocation2], %s2536
        %v2538 = vld [vmem:[%s2537] sm:$0xff]
        %v2539 = vld [vmem:[%s2537 + $0x8] sm:$0xff]
        %v2540 = vld [vmem:[%s2537 + $0x10] sm:$0xff]
        %v2541 = vld [vmem:[%s2537 + $0x18] sm:$0xff]
        %2542 = vmatprep.subr.bf16.mxu0 %v1840
        %2543 = vmatpush1.bf16.msra.mxu0 %v1839
        %2544 = vmatprep.subr.bf16.mxu0 %v1844
        %2545 = vmatpush1.bf16.msra.mxu0 %v1843
        %2546 = vmatprep.subr.bf16.mxu0 %v1848
        %2547 = vmatpush1.bf16.msra.mxu0 %v1847
        %2548 = vmatprep.subr.bf16.mxu0 %v1852
        %2549 = vmatpush1.bf16.msra.mxu0 %v1851
        %2550 = vmatprep.subr.bf16.mxu0 %v1856
        %2551 = vmatpush1.bf16.msra.mxu0 %v1855
        %2552 = vmatprep.subr.bf16.mxu0 %v1860
        %2553 = vmatpush1.bf16.msra.mxu0 %v1859
        %2554 = vmatprep.subr.bf16.mxu0 %v1864
        %2555 = vmatpush1.bf16.msra.mxu0 %v1863
        %2556 = vmatprep.subr.bf16.mxu0 %v1868
        %2557 = vmatpush1.bf16.msra.mxu0 %v1867
        %2558 = vmatprep.subr.bf16.mxu0 0
        %2559 = vmatpush1.bf16.msra.mxu0 0
        %2560 = vmatprep.subr.bf16.mxu0 0
        %2561 = vmatpush1.bf16.msra.mxu0 0
        %2562 = vmatprep.subr.bf16.mxu0 0
        %2563 = vmatpush1.bf16.msra.mxu0 0
        %2564 = vmatprep.subr.bf16.mxu0 0
        %2565 = vmatpush1.bf16.msra.mxu0 0
        %2566 = vmatprep.subr.bf16.mxu0 0
        %2567 = vmatpush1.bf16.msra.mxu0 0
        %2568 = vmatprep.subr.bf16.mxu0 0
        %2569 = vmatpush1.bf16.msra.mxu0 0
        %2570 = vmatprep.subr.bf16.mxu0 0
        %2571 = vmatpush1.bf16.msra.mxu0 0
        %2572 = vmatprep.subr.bf16.mxu0 0
        %2573 = vmatpush1.bf16.msra.mxu0 0
        %2574 = vmatprep.mubr.bf16.mxu0 0
        %2575 = vmatmul.mubr.bf16.gmra.mrb[0].mxu0 %v2532
        %v2576 = vpop.f32.mrb[0].mxu0
        %v2577 = vadd.f32 0.0, %v2576
        %v2578 = vpop.f32.mrb[0].mxu0
        %v2579 = vadd.f32 0.0, %v2578
        %v2580 = vpop.f32.mrb[0].mxu0
        %v2581 = vadd.f32 0.0, %v2580
        %v2582 = vpop.f32.mrb[0].mxu0
        %v2583 = vadd.f32 0.0, %v2582
        %2584 = vdwg.mxu0
        %2585 = vmatprep.subr.bf16.mxu0 %v1842
        %2586 = vmatpush1.bf16.msra.mxu0 %v1841
        %2587 = vmatprep.subr.bf16.mxu0 %v1846
        %2588 = vmatpush1.bf16.msra.mxu0 %v1845
        %2589 = vmatprep.subr.bf16.mxu0 %v1850
        %2590 = vmatpush1.bf16.msra.mxu0 %v1849
        %2591 = vmatprep.subr.bf16.mxu0 %v1854
        %2592 = vmatpush1.bf16.msra.mxu0 %v1853
        %2593 = vmatprep.subr.bf16.mxu0 %v1858
        %2594 = vmatpush1.bf16.msra.mxu0 %v1857
        %2595 = vmatprep.subr.bf16.mxu0 %v1862
        %2596 = vmatpush1.bf16.msra.mxu0 %v1861
        %2597 = vmatprep.subr.bf16.mxu0 %v1866
        %2598 = vmatpush1.bf16.msra.mxu0 %v1865
        %2599 = vmatprep.subr.bf16.mxu0 %v1870
        %2600 = vmatpush1.bf16.msra.mxu0 %v1869
        %2601 = vmatprep.subr.bf16.mxu0 0
        %2602 = vmatpush1.bf16.msra.mxu0 0
        %2603 = vmatprep.subr.bf16.mxu0 0
        %2604 = vmatpush1.bf16.msra.mxu0 0
        %2605 = vmatprep.subr.bf16.mxu0 0
        %2606 = vmatpush1.bf16.msra.mxu0 0
        %2607 = vmatprep.subr.bf16.mxu0 0
        %2608 = vmatpush1.bf16.msra.mxu0 0
        %2609 = vmatprep.subr.bf16.mxu0 0
        %2610 = vmatpush1.bf16.msra.mxu0 0
        %2611 = vmatprep.subr.bf16.mxu0 0
        %2612 = vmatpush1.bf16.msra.mxu0 0
        %2613 = vmatprep.subr.bf16.mxu0 0
        %2614 = vmatpush1.bf16.msra.mxu0 0
        %2615 = vmatprep.subr.bf16.mxu0 0
        %2616 = vmatpush1.bf16.msra.mxu0 0
        %2617 = vmatprep.mubr.bf16.mxu0 0
        %2618 = vmatmul.mubr.bf16.gmra.mrb[0].mxu0 %v2532
        %v2619 = vpop.f32.mrb[0].mxu0
        %v2620 = vadd.f32 0.0, %v2619
        %v2621 = vpop.f32.mrb[0].mxu0
        %v2622 = vadd.f32 0.0, %v2621
        %v2623 = vpop.f32.mrb[0].mxu0
        %v2624 = vadd.f32 0.0, %v2623
        %v2625 = vpop.f32.mrb[0].mxu0
        %v2626 = vadd.f32 0.0, %v2625
        %2627 = vdwg.mxu0
        %v2628 = vunpack.c.l.bf16 %v2538
        %v2629 = vunpack.c.l.bf16 %v2539
        %v2630 = vunpack.c.l.bf16 %v2540
        %v2631 = vunpack.c.l.bf16 %v2541
        %v2632 = vunpack.c.h.bf16 %v2538
        %v2633 = vunpack.c.h.bf16 %v2539
        %v2634 = vunpack.c.h.bf16 %v2540
        %v2635 = vunpack.c.h.bf16 %v2541
        %v2636 = vadd.f32 %v2628, %v2577
        %v2637 = vadd.f32 %v2629, %v2579
        %v2638 = vadd.f32 %v2630, %v2620
        %v2639 = vadd.f32 %v2631, %v2622
        %v2640 = vadd.f32 %v2632, %v2581
        %v2641 = vadd.f32 %v2633, %v2583
        %v2642 = vadd.f32 %v2634, %v2624
        %v2643 = vadd.f32 %v2635, %v2626
        %v2644 = vxor.u32 %v2636, 2147483648
        %v2645 = vxor.u32 %v2640, 2147483648
        %v2646 = vmul.f32 %v2644, 1.442695
        %v2647 = vpow.pop %v2646
        %v2648 = vmul.f32 %v2645, 1.442695
        %v2649 = vpow.pop %v2648
        %v2650 = vadd.f32 %v2647, 1.0
        %v2651 = vadd.f32 %v2649, 1.0
        %v2652 = vrcp.pop %v2650
        %v2653 = vmul.f32 1.0, %v2652
        %v2654 = vrcp.pop %v2651
        %v2655 = vmul.f32 1.0, %v2654
        %v2656 = vxor.u32 %v2637, 2147483648
        %v2657 = vxor.u32 %v2641, 2147483648
        %v2658 = vmul.f32 %v2656, 1.442695
        %v2659 = vpow.pop %v2658
        %v2660 = vmul.f32 %v2657, 1.442695
        %v2661 = vpow.pop %v2660
        %v2662 = vadd.f32 %v2659, 1.0
        %v2663 = vadd.f32 %v2661, 1.0
        %v2664 = vrcp.pop %v2662
        %v2665 = vmul.f32 1.0, %v2664
        %v2666 = vrcp.pop %v2663
        %v2667 = vmul.f32 1.0, %v2666
        %v2668 = vtanh.pop %v2638
        %v2669 = vtanh.pop %v2642
        %v2670 = vxor.u32 %v2639, 2147483648
        %v2671 = vxor.u32 %v2643, 2147483648
        %v2672 = vmul.f32 %v2670, 1.442695
        %v2673 = vpow.pop %v2672
        %v2674 = vmul.f32 %v2671, 1.442695
        %v2675 = vpow.pop %v2674
        %v2676 = vadd.f32 %v2673, 1.0
        %v2677 = vadd.f32 %v2675, 1.0
        %v2678 = vrcp.pop %v2676
        %v2679 = vmul.f32 1.0, %v2678
        %v2680 = vrcp.pop %v2677
        %v2681 = vmul.f32 1.0, %v2680
        %v2682 = vmul.f32 %v2665, %v2526
        %v2683 = vmul.f32 %v2667, %v2527
        %v2684 = vmul.f32 %v2653, %v2668
        %v2685 = vmul.f32 %v2655, %v2669
        %v2686 = vadd.f32 %v2682, %v2684
        %v2687 = vadd.f32 %v2683, %v2685
        %v2688 = vtanh.pop %v2686
        %v2689 = vtanh.pop %v2687
        %v2690 = vmul.f32 %v2679, %v2688
        %v2691 = vmul.f32 %v2681, %v2689
        %v2692 = vpack.c.bf16 %v2691, %v2690
        %s2693 = scalar_lea.vmem [#allocation3], 32
        %2694 = vst [vmem:[%s2693] sm:$0xff] %v2692
        %s2695 = smul.u32 5, 4
        %s2696 = smul.addr %s2695, 8
        %s2697 = scalar_lea.vmem [#allocation2], %s2696
        %v2698 = vld [vmem:[%s2697] sm:$0xff]
        %v2699 = vld [vmem:[%s2697 + $0x8] sm:$0xff]
        %v2700 = vld [vmem:[%s2697 + $0x10] sm:$0xff]
        %v2701 = vld [vmem:[%s2697 + $0x18] sm:$0xff]
        %2702 = vmatprep.subr.bf16.mxu0 %v1840
        %2703 = vmatpush1.bf16.msra.mxu0 %v1839
        %2704 = vmatprep.subr.bf16.mxu0 %v1844
        %2705 = vmatpush1.bf16.msra.mxu0 %v1843
        %2706 = vmatprep.subr.bf16.mxu0 %v1848
        %2707 = vmatpush1.bf16.msra.mxu0 %v1847
        %2708 = vmatprep.subr.bf16.mxu0 %v1852
        %2709 = vmatpush1.bf16.msra.mxu0 %v1851
        %2710 = vmatprep.subr.bf16.mxu0 %v1856
        %2711 = vmatpush1.bf16.msra.mxu0 %v1855
        %2712 = vmatprep.subr.bf16.mxu0 %v1860
        %2713 = vmatpush1.bf16.msra.mxu0 %v1859
        %2714 = vmatprep.subr.bf16.mxu0 %v1864
        %2715 = vmatpush1.bf16.msra.mxu0 %v1863
        %2716 = vmatprep.subr.bf16.mxu0 %v1868
        %2717 = vmatpush1.bf16.msra.mxu0 %v1867
        %2718 = vmatprep.subr.bf16.mxu0 0
        %2719 = vmatpush1.bf16.msra.mxu0 0
        %2720 = vmatprep.subr.bf16.mxu0 0
        %2721 = vmatpush1.bf16.msra.mxu0 0
        %2722 = vmatprep.subr.bf16.mxu0 0
        %2723 = vmatpush1.bf16.msra.mxu0 0
        %2724 = vmatprep.subr.bf16.mxu0 0
        %2725 = vmatpush1.bf16.msra.mxu0 0
        %2726 = vmatprep.subr.bf16.mxu0 0
        %2727 = vmatpush1.bf16.msra.mxu0 0
        %2728 = vmatprep.subr.bf16.mxu0 0
        %2729 = vmatpush1.bf16.msra.mxu0 0
        %2730 = vmatprep.subr.bf16.mxu0 0
        %2731 = vmatpush1.bf16.msra.mxu0 0
        %2732 = vmatprep.subr.bf16.mxu0 0
        %2733 = vmatpush1.bf16.msra.mxu0 0
        %2734 = vmatprep.mubr.bf16.mxu0 0
        %2735 = vmatmul.mubr.bf16.gmra.mrb[0].mxu0 %v2692
        %v2736 = vpop.f32.mrb[0].mxu0
        %v2737 = vadd.f32 0.0, %v2736
        %v2738 = vpop.f32.mrb[0].mxu0
        %v2739 = vadd.f32 0.0, %v2738
        %v2740 = vpop.f32.mrb[0].mxu0
        %v2741 = vadd.f32 0.0, %v2740
        %v2742 = vpop.f32.mrb[0].mxu0
        %v2743 = vadd.f32 0.0, %v2742
        %2744 = vdwg.mxu0
        %2745 = vmatprep.subr.bf16.mxu0 %v1842
        %2746 = vmatpush1.bf16.msra.mxu0 %v1841
        %2747 = vmatprep.subr.bf16.mxu0 %v1846
        %2748 = vmatpush1.bf16.msra.mxu0 %v1845
        %2749 = vmatprep.subr.bf16.mxu0 %v1850
        %2750 = vmatpush1.bf16.msra.mxu0 %v1849
        %2751 = vmatprep.subr.bf16.mxu0 %v1854
        %2752 = vmatpush1.bf16.msra.mxu0 %v1853
        %2753 = vmatprep.subr.bf16.mxu0 %v1858
        %2754 = vmatpush1.bf16.msra.mxu0 %v1857
        %2755 = vmatprep.subr.bf16.mxu0 %v1862
        %2756 = vmatpush1.bf16.msra.mxu0 %v1861
        %2757 = vmatprep.subr.bf16.mxu0 %v1866
        %2758 = vmatpush1.bf16.msra.mxu0 %v1865
        %2759 = vmatprep.subr.bf16.mxu0 %v1870
        %2760 = vmatpush1.bf16.msra.mxu0 %v1869
        %2761 = vmatprep.subr.bf16.mxu0 0
        %2762 = vmatpush1.bf16.msra.mxu0 0
        %2763 = vmatprep.subr.bf16.mxu0 0
        %2764 = vmatpush1.bf16.msra.mxu0 0
        %2765 = vmatprep.subr.bf16.mxu0 0
        %2766 = vmatpush1.bf16.msra.mxu0 0
        %2767 = vmatprep.subr.bf16.mxu0 0
        %2768 = vmatpush1.bf16.msra.mxu0 0
        %2769 = vmatprep.subr.bf16.mxu0 0
        %2770 = vmatpush1.bf16.msra.mxu0 0
        %2771 = vmatprep.subr.bf16.mxu0 0
        %2772 = vmatpush1.bf16.msra.mxu0 0
        %2773 = vmatprep.subr.bf16.mxu0 0
        %2774 = vmatpush1.bf16.msra.mxu0 0
        %2775 = vmatprep.subr.bf16.mxu0 0
        %2776 = vmatpush1.bf16.msra.mxu0 0
        %2777 = vmatprep.mubr.bf16.mxu0 0
        %2778 = vmatmul.mubr.bf16.gmra.mrb[0].mxu0 %v2692
        %v2779 = vpop.f32.mrb[0].mxu0
        %v2780 = vadd.f32 0.0, %v2779
        %v2781 = vpop.f32.mrb[0].mxu0
        %v2782 = vadd.f32 0.0, %v2781
        %v2783 = vpop.f32.mrb[0].mxu0
        %v2784 = vadd.f32 0.0, %v2783
        %v2785 = vpop.f32.mrb[0].mxu0
        %v2786 = vadd.f32 0.0, %v2785
        %2787 = vdwg.mxu0
        %v2788 = vunpack.c.l.bf16 %v2698
        %v2789 = vunpack.c.l.bf16 %v2699
        %v2790 = vunpack.c.l.bf16 %v2700
        %v2791 = vunpack.c.l.bf16 %v2701
        %v2792 = vunpack.c.h.bf16 %v2698
        %v2793 = vunpack.c.h.bf16 %v2699
        %v2794 = vunpack.c.h.bf16 %v2700
        %v2795 = vunpack.c.h.bf16 %v2701
        %v2796 = vadd.f32 %v2788, %v2737
        %v2797 = vadd.f32 %v2789, %v2739
        %v2798 = vadd.f32 %v2790, %v2780
        %v2799 = vadd.f32 %v2791, %v2782
        %v2800 = vadd.f32 %v2792, %v2741
        %v2801 = vadd.f32 %v2793, %v2743
        %v2802 = vadd.f32 %v2794, %v2784
        %v2803 = vadd.f32 %v2795, %v2786
        %v2804 = vxor.u32 %v2796, 2147483648
        %v2805 = vxor.u32 %v2800, 2147483648
        %v2806 = vmul.f32 %v2804, 1.442695
        %v2807 = vpow.pop %v2806
        %v2808 = vmul.f32 %v2805, 1.442695
        %v2809 = vpow.pop %v2808
        %v2810 = vadd.f32 %v2807, 1.0
        %v2811 = vadd.f32 %v2809, 1.0
        %v2812 = vrcp.pop %v2810
        %v2813 = vmul.f32 1.0, %v2812
        %v2814 = vrcp.pop %v2811
        %v2815 = vmul.f32 1.0, %v2814
        %v2816 = vxor.u32 %v2797, 2147483648
        %v2817 = vxor.u32 %v2801, 2147483648
        %v2818 = vmul.f32 %v2816, 1.442695
        %v2819 = vpow.pop %v2818
        %v2820 = vmul.f32 %v2817, 1.442695
        %v2821 = vpow.pop %v2820
        %v2822 = vadd.f32 %v2819, 1.0
        %v2823 = vadd.f32 %v2821, 1.0
        %v2824 = vrcp.pop %v2822
        %v2825 = vmul.f32 1.0, %v2824
        %v2826 = vrcp.pop %v2823
        %v2827 = vmul.f32 1.0, %v2826
        %v2828 = vtanh.pop %v2798
        %v2829 = vtanh.pop %v2802
        %v2830 = vxor.u32 %v2799, 2147483648
        %v2831 = vxor.u32 %v2803, 2147483648
        %v2832 = vmul.f32 %v2830, 1.442695
        %v2833 = vpow.pop %v2832
        %v2834 = vmul.f32 %v2831, 1.442695
        %v2835 = vpow.pop %v2834
        %v2836 = vadd.f32 %v2833, 1.0
        %v2837 = vadd.f32 %v2835, 1.0
        %v2838 = vrcp.pop %v2836
        %v2839 = vmul.f32 1.0, %v2838
        %v2840 = vrcp.pop %v2837
        %v2841 = vmul.f32 1.0, %v2840
        %v2842 = vmul.f32 %v2825, %v2686
        %v2843 = vmul.f32 %v2827, %v2687
        %v2844 = vmul.f32 %v2813, %v2828
        %v2845 = vmul.f32 %v2815, %v2829
        %v2846 = vadd.f32 %v2842, %v2844
        %v2847 = vadd.f32 %v2843, %v2845
        %v2848 = vtanh.pop %v2846
        %v2849 = vtanh.pop %v2847
        %v2850 = vmul.f32 %v2839, %v2848
        %v2851 = vmul.f32 %v2841, %v2849
        %v2852 = vpack.c.bf16 %v2851, %v2850
        %s2853 = scalar_lea.vmem [#allocation3], 40
        %2854 = vst [vmem:[%s2853] sm:$0xff] %v2852
        %s2855 = smul.u32 6, 4
        %s2856 = smul.addr %s2855, 8
        %s2857 = scalar_lea.vmem [#allocation2], %s2856
        %v2858 = vld [vmem:[%s2857] sm:$0xff]
        %v2859 = vld [vmem:[%s2857 + $0x8] sm:$0xff]
        %v2860 = vld [vmem:[%s2857 + $0x10] sm:$0xff]
        %v2861 = vld [vmem:[%s2857 + $0x18] sm:$0xff]
        %2862 = vmatprep.subr.bf16.mxu0 %v1840
        %2863 = vmatpush1.bf16.msra.mxu0 %v1839
        %2864 = vmatprep.subr.bf16.mxu0 %v1844
        %2865 = vmatpush1.bf16.msra.mxu0 %v1843
        %2866 = vmatprep.subr.bf16.mxu0 %v1848
        %2867 = vmatpush1.bf16.msra.mxu0 %v1847
        %2868 = vmatprep.subr.bf16.mxu0 %v1852
        %2869 = vmatpush1.bf16.msra.mxu0 %v1851
        %2870 = vmatprep.subr.bf16.mxu0 %v1856
        %2871 = vmatpush1.bf16.msra.mxu0 %v1855
        %2872 = vmatprep.subr.bf16.mxu0 %v1860
        %2873 = vmatpush1.bf16.msra.mxu0 %v1859
        %2874 = vmatprep.subr.bf16.mxu0 %v1864
        %2875 = vmatpush1.bf16.msra.mxu0 %v1863
        %2876 = vmatprep.subr.bf16.mxu0 %v1868
        %2877 = vmatpush1.bf16.msra.mxu0 %v1867
        %2878 = vmatprep.subr.bf16.mxu0 0
        %2879 = vmatpush1.bf16.msra.mxu0 0
        %2880 = vmatprep.subr.bf16.mxu0 0
        %2881 = vmatpush1.bf16.msra.mxu0 0
        %2882 = vmatprep.subr.bf16.mxu0 0
        %2883 = vmatpush1.bf16.msra.mxu0 0
        %2884 = vmatprep.subr.bf16.mxu0 0
        %2885 = vmatpush1.bf16.msra.mxu0 0
        %2886 = vmatprep.subr.bf16.mxu0 0
        %2887 = vmatpush1.bf16.msra.mxu0 0
        %2888 = vmatprep.subr.bf16.mxu0 0
        %2889 = vmatpush1.bf16.msra.mxu0 0
        %2890 = vmatprep.subr.bf16.mxu0 0
        %2891 = vmatpush1.bf16.msra.mxu0 0
        %2892 = vmatprep.subr.bf16.mxu0 0
        %2893 = vmatpush1.bf16.msra.mxu0 0
        %2894 = vmatprep.mubr.bf16.mxu0 0
        %2895 = vmatmul.mubr.bf16.gmra.mrb[0].mxu0 %v2852
        %v2896 = vpop.f32.mrb[0].mxu0
        %v2897 = vadd.f32 0.0, %v2896
        %v2898 = vpop.f32.mrb[0].mxu0
        %v2899 = vadd.f32 0.0, %v2898
        %v2900 = vpop.f32.mrb[0].mxu0
        %v2901 = vadd.f32 0.0, %v2900
        %v2902 = vpop.f32.mrb[0].mxu0
        %v2903 = vadd.f32 0.0, %v2902
        %2904 = vdwg.mxu0
        %2905 = vmatprep.subr.bf16.mxu0 %v1842
        %2906 = vmatpush1.bf16.msra.mxu0 %v1841
        %2907 = vmatprep.subr.bf16.mxu0 %v1846
        %2908 = vmatpush1.bf16.msra.mxu0 %v1845
        %2909 = vmatprep.subr.bf16.mxu0 %v1850
        %2910 = vmatpush1.bf16.msra.mxu0 %v1849
        %2911 = vmatprep.subr.bf16.mxu0 %v1854
        %2912 = vmatpush1.bf16.msra.mxu0 %v1853
        %2913 = vmatprep.subr.bf16.mxu0 %v1858
        %2914 = vmatpush1.bf16.msra.mxu0 %v1857
        %2915 = vmatprep.subr.bf16.mxu0 %v1862
        %2916 = vmatpush1.bf16.msra.mxu0 %v1861
        %2917 = vmatprep.subr.bf16.mxu0 %v1866
        %2918 = vmatpush1.bf16.msra.mxu0 %v1865
        %2919 = vmatprep.subr.bf16.mxu0 %v1870
        %2920 = vmatpush1.bf16.msra.mxu0 %v1869
        %2921 = vmatprep.subr.bf16.mxu0 0
        %2922 = vmatpush1.bf16.msra.mxu0 0
        %2923 = vmatprep.subr.bf16.mxu0 0
        %2924 = vmatpush1.bf16.msra.mxu0 0
        %2925 = vmatprep.subr.bf16.mxu0 0
        %2926 = vmatpush1.bf16.msra.mxu0 0
        %2927 = vmatprep.subr.bf16.mxu0 0
        %2928 = vmatpush1.bf16.msra.mxu0 0
        %2929 = vmatprep.subr.bf16.mxu0 0
        %2930 = vmatpush1.bf16.msra.mxu0 0
        %2931 = vmatprep.subr.bf16.mxu0 0
        %2932 = vmatpush1.bf16.msra.mxu0 0
        %2933 = vmatprep.subr.bf16.mxu0 0
        %2934 = vmatpush1.bf16.msra.mxu0 0
        %2935 = vmatprep.subr.bf16.mxu0 0
        %2936 = vmatpush1.bf16.msra.mxu0 0
        %2937 = vmatprep.mubr.bf16.mxu0 0
        %2938 = vmatmul.mubr.bf16.gmra.mrb[0].mxu0 %v2852
        %v2939 = vpop.f32.mrb[0].mxu0
        %v2940 = vadd.f32 0.0, %v2939
        %v2941 = vpop.f32.mrb[0].mxu0
        %v2942 = vadd.f32 0.0, %v2941
        %v2943 = vpop.f32.mrb[0].mxu0
        %v2944 = vadd.f32 0.0, %v2943
        %v2945 = vpop.f32.mrb[0].mxu0
        %v2946 = vadd.f32 0.0, %v2945
        %2947 = vdwg.mxu0
        %v2948 = vunpack.c.l.bf16 %v2858
        %v2949 = vunpack.c.l.bf16 %v2859
        %v2950 = vunpack.c.l.bf16 %v2860
        %v2951 = vunpack.c.l.bf16 %v2861
        %v2952 = vunpack.c.h.bf16 %v2858
        %v2953 = vunpack.c.h.bf16 %v2859
        %v2954 = vunpack.c.h.bf16 %v2860
        %v2955 = vunpack.c.h.bf16 %v2861
        %v2956 = vadd.f32 %v2948, %v2897
        %v2957 = vadd.f32 %v2949, %v2899
        %v2958 = vadd.f32 %v2950, %v2940
        %v2959 = vadd.f32 %v2951, %v2942
        %v2960 = vadd.f32 %v2952, %v2901
        %v2961 = vadd.f32 %v2953, %v2903
        %v2962 = vadd.f32 %v2954, %v2944
        %v2963 = vadd.f32 %v2955, %v2946
        %v2964 = vxor.u32 %v2956, 2147483648
        %v2965 = vxor.u32 %v2960, 2147483648
        %v2966 = vmul.f32 %v2964, 1.442695
        %v2967 = vpow.pop %v2966
        %v2968 = vmul.f32 %v2965, 1.442695
        %v2969 = vpow.pop %v2968
        %v2970 = vadd.f32 %v2967, 1.0
        %v2971 = vadd.f32 %v2969, 1.0
        %v2972 = vrcp.pop %v2970
        %v2973 = vmul.f32 1.0, %v2972
        %v2974 = vrcp.pop %v2971
        %v2975 = vmul.f32 1.0, %v2974
        %v2976 = vxor.u32 %v2957, 2147483648
        %v2977 = vxor.u32 %v2961, 2147483648
        %v2978 = vmul.f32 %v2976, 1.442695
        %v2979 = vpow.pop %v2978
        %v2980 = vmul.f32 %v2977, 1.442695
        %v2981 = vpow.pop %v2980
        %v2982 = vadd.f32 %v2979, 1.0
        %v2983 = vadd.f32 %v2981, 1.0
        %v2984 = vrcp.pop %v2982
        %v2985 = vmul.f32 1.0, %v2984
        %v2986 = vrcp.pop %v2983
        %v2987 = vmul.f32 1.0, %v2986
        %v2988 = vtanh.pop %v2958
        %v2989 = vtanh.pop %v2962
        %v2990 = vxor.u32 %v2959, 2147483648
        %v2991 = vxor.u32 %v2963, 2147483648
        %v2992 = vmul.f32 %v2990, 1.442695
        %v2993 = vpow.pop %v2992
        %v2994 = vmul.f32 %v2991, 1.442695
        %v2995 = vpow.pop %v2994
        %v2996 = vadd.f32 %v2993, 1.0
        %v2997 = vadd.f32 %v2995, 1.0
        %v2998 = vrcp.pop %v2996
        %v2999 = vmul.f32 1.0, %v2998
        %v3000 = vrcp.pop %v2997
        %v3001 = vmul.f32 1.0, %v3000
        %v3002 = vmul.f32 %v2985, %v2846
        %v3003 = vmul.f32 %v2987, %v2847
        %v3004 = vmul.f32 %v2973, %v2988
        %v3005 = vmul.f32 %v2975, %v2989
        %v3006 = vadd.f32 %v3002, %v3004
        %v3007 = vadd.f32 %v3003, %v3005
        %v3008 = vtanh.pop %v3006
        %v3009 = vtanh.pop %v3007
        %v3010 = vmul.f32 %v2999, %v3008
        %v3011 = vmul.f32 %v3001, %v3009
        %v3012 = vpack.c.bf16 %v3011, %v3010
        %s3013 = scalar_lea.vmem [#allocation3], 48
        %3014 = vst [vmem:[%s3013] sm:$0xff] %v3012
        %s3015 = smul.u32 7, 4
        %s3016 = smul.addr %s3015, 8
        %s3017 = scalar_lea.vmem [#allocation2], %s3016
        %v3018 = vld [vmem:[%s3017] sm:$0xff]
        %v3019 = vld [vmem:[%s3017 + $0x8] sm:$0xff]
        %v3020 = vld [vmem:[%s3017 + $0x10] sm:$0xff]
        %v3021 = vld [vmem:[%s3017 + $0x18] sm:$0xff]
        %3022 = vmatprep.subr.bf16.mxu0 %v1840
        %3023 = vmatpush1.bf16.msra.mxu0 %v1839
        %3024 = vmatprep.subr.bf16.mxu0 %v1844
        %3025 = vmatpush1.bf16.msra.mxu0 %v1843
        %3026 = vmatprep.subr.bf16.mxu0 %v1848
        %3027 = vmatpush1.bf16.msra.mxu0 %v1847
        %3028 = vmatprep.subr.bf16.mxu0 %v1852
        %3029 = vmatpush1.bf16.msra.mxu0 %v1851
        %3030 = vmatprep.subr.bf16.mxu0 %v1856
        %3031 = vmatpush1.bf16.msra.mxu0 %v1855
        %3032 = vmatprep.subr.bf16.mxu0 %v1860
        %3033 = vmatpush1.bf16.msra.mxu0 %v1859
        %3034 = vmatprep.subr.bf16.mxu0 %v1864
        %3035 = vmatpush1.bf16.msra.mxu0 %v1863
        %3036 = vmatprep.subr.bf16.mxu0 %v1868
        %3037 = vmatpush1.bf16.msra.mxu0 %v1867
        %3038 = vmatprep.subr.bf16.mxu0 0
        %3039 = vmatpush1.bf16.msra.mxu0 0
        %3040 = vmatprep.subr.bf16.mxu0 0
        %3041 = vmatpush1.bf16.msra.mxu0 0
        %3042 = vmatprep.subr.bf16.mxu0 0
        %3043 = vmatpush1.bf16.msra.mxu0 0
        %3044 = vmatprep.subr.bf16.mxu0 0
        %3045 = vmatpush1.bf16.msra.mxu0 0
        %3046 = vmatprep.subr.bf16.mxu0 0
        %3047 = vmatpush1.bf16.msra.mxu0 0
        %3048 = vmatprep.subr.bf16.mxu0 0
        %3049 = vmatpush1.bf16.msra.mxu0 0
        %3050 = vmatprep.subr.bf16.mxu0 0
        %3051 = vmatpush1.bf16.msra.mxu0 0
        %3052 = vmatprep.subr.bf16.mxu0 0
        %3053 = vmatpush1.bf16.msra.mxu0 0
        %3054 = vmatprep.mubr.bf16.mxu0 0
        %3055 = vmatmul.mubr.bf16.gmra.mrb[0].mxu0 %v3012
        %v3056 = vpop.f32.mrb[0].mxu0
        %v3057 = vadd.f32 0.0, %v3056
        %v3058 = vpop.f32.mrb[0].mxu0
        %v3059 = vadd.f32 0.0, %v3058
        %v3060 = vpop.f32.mrb[0].mxu0
        %v3061 = vadd.f32 0.0, %v3060
        %v3062 = vpop.f32.mrb[0].mxu0
        %v3063 = vadd.f32 0.0, %v3062
        %3064 = vdwg.mxu0
        %3065 = vmatprep.subr.bf16.mxu0 %v1842
        %3066 = vmatpush1.bf16.msra.mxu0 %v1841
        %3067 = vmatprep.subr.bf16.mxu0 %v1846
        %3068 = vmatpush1.bf16.msra.mxu0 %v1845
        %3069 = vmatprep.subr.bf16.mxu0 %v1850
        %3070 = vmatpush1.bf16.msra.mxu0 %v1849
        %3071 = vmatprep.subr.bf16.mxu0 %v1854
        %3072 = vmatpush1.bf16.msra.mxu0 %v1853
        %3073 = vmatprep.subr.bf16.mxu0 %v1858
        %3074 = vmatpush1.bf16.msra.mxu0 %v1857
        %3075 = vmatprep.subr.bf16.mxu0 %v1862
        %3076 = vmatpush1.bf16.msra.mxu0 %v1861
        %3077 = vmatprep.subr.bf16.mxu0 %v1866
        %3078 = vmatpush1.bf16.msra.mxu0 %v1865
        %3079 = vmatprep.subr.bf16.mxu0 %v1870
        %3080 = vmatpush1.bf16.msra.mxu0 %v1869
        %3081 = vmatprep.subr.bf16.mxu0 0
        %3082 = vmatpush1.bf16.msra.mxu0 0
        %3083 = vmatprep.subr.bf16.mxu0 0
        %3084 = vmatpush1.bf16.msra.mxu0 0
        %3085 = vmatprep.subr.bf16.mxu0 0
        %3086 = vmatpush1.bf16.msra.mxu0 0
        %3087 = vmatprep.subr.bf16.mxu0 0
        %3088 = vmatpush1.bf16.msra.mxu0 0
        %3089 = vmatprep.subr.bf16.mxu0 0
        %3090 = vmatpush1.bf16.msra.mxu0 0
        %3091 = vmatprep.subr.bf16.mxu0 0
        %3092 = vmatpush1.bf16.msra.mxu0 0
        %3093 = vmatprep.subr.bf16.mxu0 0
        %3094 = vmatpush1.bf16.msra.mxu0 0
        %3095 = vmatprep.subr.bf16.mxu0 0
        %3096 = vmatpush1.bf16.msra.mxu0 0
        %3097 = vmatprep.mubr.bf16.mxu0 0
        %3098 = vmatmul.mubr.bf16.gmra.mrb[0].mxu0 %v3012
        %v3099 = vpop.f32.mrb[0].mxu0
        %v3100 = vadd.f32 0.0, %v3099
        %v3101 = vpop.f32.mrb[0].mxu0
        %v3102 = vadd.f32 0.0, %v3101
        %v3103 = vpop.f32.mrb[0].mxu0
        %v3104 = vadd.f32 0.0, %v3103
        %v3105 = vpop.f32.mrb[0].mxu0
        %v3106 = vadd.f32 0.0, %v3105
        %3107 = vdwg.mxu0
        %v3108 = vunpack.c.l.bf16 %v3018
        %v3109 = vunpack.c.l.bf16 %v3019
        %v3110 = vunpack.c.l.bf16 %v3020
        %v3111 = vunpack.c.l.bf16 %v3021
        %v3112 = vunpack.c.h.bf16 %v3018
        %v3113 = vunpack.c.h.bf16 %v3019
        %v3114 = vunpack.c.h.bf16 %v3020
        %v3115 = vunpack.c.h.bf16 %v3021
        %v3116 = vadd.f32 %v3108, %v3057
        %v3117 = vadd.f32 %v3109, %v3059
        %v3118 = vadd.f32 %v3110, %v3100
        %v3119 = vadd.f32 %v3111, %v3102
        %v3120 = vadd.f32 %v3112, %v3061
        %v3121 = vadd.f32 %v3113, %v3063
        %v3122 = vadd.f32 %v3114, %v3104
        %v3123 = vadd.f32 %v3115, %v3106
        %v3124 = vxor.u32 %v3116, 2147483648
        %v3125 = vxor.u32 %v3120, 2147483648
        %v3126 = vmul.f32 %v3124, 1.442695
        %v3127 = vpow.pop %v3126
        %v3128 = vmul.f32 %v3125, 1.442695
        %v3129 = vpow.pop %v3128
        %v3130 = vadd.f32 %v3127, 1.0
        %v3131 = vadd.f32 %v3129, 1.0
        %v3132 = vrcp.pop %v3130
        %v3133 = vmul.f32 1.0, %v3132
        %v3134 = vrcp.pop %v3131
        %v3135 = vmul.f32 1.0, %v3134
        %v3136 = vxor.u32 %v3117, 2147483648
        %v3137 = vxor.u32 %v3121, 2147483648
        %v3138 = vmul.f32 %v3136, 1.442695
        %v3139 = vpow.pop %v3138
        %v3140 = vmul.f32 %v3137, 1.442695
        %v3141 = vpow.pop %v3140
        %v3142 = vadd.f32 %v3139, 1.0
        %v3143 = vadd.f32 %v3141, 1.0
        %v3144 = vrcp.pop %v3142
        %v3145 = vmul.f32 1.0, %v3144
        %v3146 = vrcp.pop %v3143
        %v3147 = vmul.f32 1.0, %v3146
        %v3148 = vtanh.pop %v3118
        %v3149 = vtanh.pop %v3122
        %v3150 = vxor.u32 %v3119, 2147483648
        %v3151 = vxor.u32 %v3123, 2147483648
        %v3152 = vmul.f32 %v3150, 1.442695
        %v3153 = vpow.pop %v3152
        %v3154 = vmul.f32 %v3151, 1.442695
        %v3155 = vpow.pop %v3154
        %v3156 = vadd.f32 %v3153, 1.0
        %v3157 = vadd.f32 %v3155, 1.0
        %v3158 = vrcp.pop %v3156
        %v3159 = vmul.f32 1.0, %v3158
        %v3160 = vrcp.pop %v3157
        %v3161 = vmul.f32 1.0, %v3160
        %v3162 = vmul.f32 %v3145, %v3006
        %v3163 = vmul.f32 %v3147, %v3007
        %v3164 = vmul.f32 %v3133, %v3148
        %v3165 = vmul.f32 %v3135, %v3149
        %v3166 = vadd.f32 %v3162, %v3164
        %v3167 = vadd.f32 %v3163, %v3165
        %v3168 = vtanh.pop %v3166
        %v3169 = vtanh.pop %v3167
        %v3170 = vmul.f32 %v3159, %v3168
        %v3171 = vmul.f32 %v3161, %v3169
        %v3172 = vpack.c.bf16 %v3171, %v3170
        %s3173 = scalar_lea.vmem [#allocation3], 56
        %3174 = vst [vmem:[%s3173] sm:$0xff] %v3172
        %s3175 = smul.u32 8, 4
        %s3176 = smul.addr %s3175, 8
        %s3177 = scalar_lea.vmem [#allocation2], %s3176
        %v3178 = vld [vmem:[%s3177] sm:$0xff]
        %v3179 = vld [vmem:[%s3177 + $0x8] sm:$0xff]
        %v3180 = vld [vmem:[%s3177 + $0x10] sm:$0xff]
        %v3181 = vld [vmem:[%s3177 + $0x18] sm:$0xff]
        %3182 = vmatprep.subr.bf16.mxu0 %v1840
        %3183 = vmatpush1.bf16.msra.mxu0 %v1839
        %3184 = vmatprep.subr.bf16.mxu0 %v1844
        %3185 = vmatpush1.bf16.msra.mxu0 %v1843
        %3186 = vmatprep.subr.bf16.mxu0 %v1848
        %3187 = vmatpush1.bf16.msra.mxu0 %v1847
        %3188 = vmatprep.subr.bf16.mxu0 %v1852
        %3189 = vmatpush1.bf16.msra.mxu0 %v1851
        %3190 = vmatprep.subr.bf16.mxu0 %v1856
        %3191 = vmatpush1.bf16.msra.mxu0 %v1855
        %3192 = vmatprep.subr.bf16.mxu0 %v1860
        %3193 = vmatpush1.bf16.msra.mxu0 %v1859
        %3194 = vmatprep.subr.bf16.mxu0 %v1864
        %3195 = vmatpush1.bf16.msra.mxu0 %v1863
        %3196 = vmatprep.subr.bf16.mxu0 %v1868
        %3197 = vmatpush1.bf16.msra.mxu0 %v1867
        %3198 = vmatprep.subr.bf16.mxu0 0
        %3199 = vmatpush1.bf16.msra.mxu0 0
        %3200 = vmatprep.subr.bf16.mxu0 0
        %3201 = vmatpush1.bf16.msra.mxu0 0
        %3202 = vmatprep.subr.bf16.mxu0 0
        %3203 = vmatpush1.bf16.msra.mxu0 0
        %3204 = vmatprep.subr.bf16.mxu0 0
        %3205 = vmatpush1.bf16.msra.mxu0 0
        %3206 = vmatprep.subr.bf16.mxu0 0
        %3207 = vmatpush1.bf16.msra.mxu0 0
        %3208 = vmatprep.subr.bf16.mxu0 0
        %3209 = vmatpush1.bf16.msra.mxu0 0
        %3210 = vmatprep.subr.bf16.mxu0 0
        %3211 = vmatpush1.bf16.msra.mxu0 0
        %3212 = vmatprep.subr.bf16.mxu0 0
        %3213 = vmatpush1.bf16.msra.mxu0 0
        %3214 = vmatprep.mubr.bf16.mxu0 0
        %3215 = vmatmul.mubr.bf16.gmra.mrb[0].mxu0 %v3172
        %v3216 = vpop.f32.mrb[0].mxu0
        %v3217 = vadd.f32 0.0, %v3216
        %v3218 = vpop.f32.mrb[0].mxu0
        %v3219 = vadd.f32 0.0, %v3218
        %v3220 = vpop.f32.mrb[0].mxu0
        %v3221 = vadd.f32 0.0, %v3220
        %v3222 = vpop.f32.mrb[0].mxu0
        %v3223 = vadd.f32 0.0, %v3222
        %3224 = vdwg.mxu0
        %3225 = vmatprep.subr.bf16.mxu0 %v1842
        %3226 = vmatpush1.bf16.msra.mxu0 %v1841
        %3227 = vmatprep.subr.bf16.mxu0 %v1846
        %3228 = vmatpush1.bf16.msra.mxu0 %v1845
        %3229 = vmatprep.subr.bf16.mxu0 %v1850
        %3230 = vmatpush1.bf16.msra.mxu0 %v1849
        %3231 = vmatprep.subr.bf16.mxu0 %v1854
        %3232 = vmatpush1.bf16.msra.mxu0 %v1853
        %3233 = vmatprep.subr.bf16.mxu0 %v1858
        %3234 = vmatpush1.bf16.msra.mxu0 %v1857
        %3235 = vmatprep.subr.bf16.mxu0 %v1862
        %3236 = vmatpush1.bf16.msra.mxu0 %v1861
        %3237 = vmatprep.subr.bf16.mxu0 %v1866
        %3238 = vmatpush1.bf16.msra.mxu0 %v1865
        %3239 = vmatprep.subr.bf16.mxu0 %v1870
        %3240 = vmatpush1.bf16.msra.mxu0 %v1869
        %3241 = vmatprep.subr.bf16.mxu0 0
        %3242 = vmatpush1.bf16.msra.mxu0 0
        %3243 = vmatprep.subr.bf16.mxu0 0
        %3244 = vmatpush1.bf16.msra.mxu0 0
        %3245 = vmatprep.subr.bf16.mxu0 0
        %3246 = vmatpush1.bf16.msra.mxu0 0
        %3247 = vmatprep.subr.bf16.mxu0 0
        %3248 = vmatpush1.bf16.msra.mxu0 0
        %3249 = vmatprep.subr.bf16.mxu0 0
        %3250 = vmatpush1.bf16.msra.mxu0 0
        %3251 = vmatprep.subr.bf16.mxu0 0
        %3252 = vmatpush1.bf16.msra.mxu0 0
        %3253 = vmatprep.subr.bf16.mxu0 0
        %3254 = vmatpush1.bf16.msra.mxu0 0
        %3255 = vmatprep.subr.bf16.mxu0 0
        %3256 = vmatpush1.bf16.msra.mxu0 0
        %3257 = vmatprep.mubr.bf16.mxu0 0
        %3258 = vmatmul.mubr.bf16.gmra.mrb[0].mxu0 %v3172
        %v3259 = vpop.f32.mrb[0].mxu0
        %v3260 = vadd.f32 0.0, %v3259
        %v3261 = vpop.f32.mrb[0].mxu0
        %v3262 = vadd.f32 0.0, %v3261
        %v3263 = vpop.f32.mrb[0].mxu0
        %v3264 = vadd.f32 0.0, %v3263
        %v3265 = vpop.f32.mrb[0].mxu0
        %v3266 = vadd.f32 0.0, %v3265
        %3267 = vdwg.mxu0
        %v3268 = vunpack.c.l.bf16 %v3178
        %v3269 = vunpack.c.l.bf16 %v3179
        %v3270 = vunpack.c.l.bf16 %v3180
        %v3271 = vunpack.c.l.bf16 %v3181
        %v3272 = vunpack.c.h.bf16 %v3178
        %v3273 = vunpack.c.h.bf16 %v3179
        %v3274 = vunpack.c.h.bf16 %v3180
        %v3275 = vunpack.c.h.bf16 %v3181
        %v3276 = vadd.f32 %v3268, %v3217
        %v3277 = vadd.f32 %v3269, %v3219
        %v3278 = vadd.f32 %v3270, %v3260
        %v3279 = vadd.f32 %v3271, %v3262
        %v3280 = vadd.f32 %v3272, %v3221
        %v3281 = vadd.f32 %v3273, %v3223
        %v3282 = vadd.f32 %v3274, %v3264
        %v3283 = vadd.f32 %v3275, %v3266
        %v3284 = vxor.u32 %v3276, 2147483648
        %v3285 = vxor.u32 %v3280, 2147483648
        %v3286 = vmul.f32 %v3284, 1.442695
        %v3287 = vpow.pop %v3286
        %v3288 = vmul.f32 %v3285, 1.442695
        %v3289 = vpow.pop %v3288
        %v3290 = vadd.f32 %v3287, 1.0
        %v3291 = vadd.f32 %v3289, 1.0
        %v3292 = vrcp.pop %v3290
        %v3293 = vmul.f32 1.0, %v3292
        %v3294 = vrcp.pop %v3291
        %v3295 = vmul.f32 1.0, %v3294
        %v3296 = vxor.u32 %v3277, 2147483648
        %v3297 = vxor.u32 %v3281, 2147483648
        %v3298 = vmul.f32 %v3296, 1.442695
        %v3299 = vpow.pop %v3298
        %v3300 = vmul.f32 %v3297, 1.442695
        %v3301 = vpow.pop %v3300
        %v3302 = vadd.f32 %v3299, 1.0
        %v3303 = vadd.f32 %v3301, 1.0
        %v3304 = vrcp.pop %v3302
        %v3305 = vmul.f32 1.0, %v3304
        %v3306 = vrcp.pop %v3303
        %v3307 = vmul.f32 1.0, %v3306
        %v3308 = vtanh.pop %v3278
        %v3309 = vtanh.pop %v3282
        %v3310 = vxor.u32 %v3279, 2147483648
        %v3311 = vxor.u32 %v3283, 2147483648
        %v3312 = vmul.f32 %v3310, 1.442695
        %v3313 = vpow.pop %v3312
        %v3314 = vmul.f32 %v3311, 1.442695
        %v3315 = vpow.pop %v3314
        %v3316 = vadd.f32 %v3313, 1.0
        %v3317 = vadd.f32 %v3315, 1.0
        %v3318 = vrcp.pop %v3316
        %v3319 = vmul.f32 1.0, %v3318
        %v3320 = vrcp.pop %v3317
        %v3321 = vmul.f32 1.0, %v3320
        %v3322 = vmul.f32 %v3305, %v3166
        %v3323 = vmul.f32 %v3307, %v3167
        %v3324 = vmul.f32 %v3293, %v3308
        %v3325 = vmul.f32 %v3295, %v3309
        %v3326 = vadd.f32 %v3322, %v3324
        %v3327 = vadd.f32 %v3323, %v3325
        %v3328 = vtanh.pop %v3326
        %v3329 = vtanh.pop %v3327
        %v3330 = vmul.f32 %v3319, %v3328
        %v3331 = vmul.f32 %v3321, %v3329
        %v3332 = vpack.c.bf16 %v3331, %v3330
        %s3333 = scalar_lea.vmem [#allocation3], 64
        %3334 = vst [vmem:[%s3333] sm:$0xff] %v3332
        %s3335 = smul.u32 9, 4
        %s3336 = smul.addr %s3335, 8
        %s3337 = scalar_lea.vmem [#allocation2], %s3336
        %v3338 = vld [vmem:[%s3337] sm:$0xff]
        %v3339 = vld [vmem:[%s3337 + $0x8] sm:$0xff]
        %v3340 = vld [vmem:[%s3337 + $0x10] sm:$0xff]
        %v3341 = vld [vmem:[%s3337 + $0x18] sm:$0xff]
        %3342 = vmatprep.subr.bf16.mxu0 %v1840
        %3343 = vmatpush1.bf16.msra.mxu0 %v1839
        %3344 = vmatprep.subr.bf16.mxu0 %v1844
        %3345 = vmatpush1.bf16.msra.mxu0 %v1843
        %3346 = vmatprep.subr.bf16.mxu0 %v1848
        %3347 = vmatpush1.bf16.msra.mxu0 %v1847
        %3348 = vmatprep.subr.bf16.mxu0 %v1852
        %3349 = vmatpush1.bf16.msra.mxu0 %v1851
        %3350 = vmatprep.subr.bf16.mxu0 %v1856
        %3351 = vmatpush1.bf16.msra.mxu0 %v1855
        %3352 = vmatprep.subr.bf16.mxu0 %v1860
        %3353 = vmatpush1.bf16.msra.mxu0 %v1859
        %3354 = vmatprep.subr.bf16.mxu0 %v1864
        %3355 = vmatpush1.bf16.msra.mxu0 %v1863
        %3356 = vmatprep.subr.bf16.mxu0 %v1868
        %3357 = vmatpush1.bf16.msra.mxu0 %v1867
        %3358 = vmatprep.subr.bf16.mxu0 0
        %3359 = vmatpush1.bf16.msra.mxu0 0
        %3360 = vmatprep.subr.bf16.mxu0 0
        %3361 = vmatpush1.bf16.msra.mxu0 0
        %3362 = vmatprep.subr.bf16.mxu0 0
        %3363 = vmatpush1.bf16.msra.mxu0 0
        %3364 = vmatprep.subr.bf16.mxu0 0
        %3365 = vmatpush1.bf16.msra.mxu0 0
        %3366 = vmatprep.subr.bf16.mxu0 0
        %3367 = vmatpush1.bf16.msra.mxu0 0
        %3368 = vmatprep.subr.bf16.mxu0 0
        %3369 = vmatpush1.bf16.msra.mxu0 0
        %3370 = vmatprep.subr.bf16.mxu0 0
        %3371 = vmatpush1.bf16.msra.mxu0 0
        %3372 = vmatprep.subr.bf16.mxu0 0
        %3373 = vmatpush1.bf16.msra.mxu0 0
        %3374 = vmatprep.mubr.bf16.mxu0 0
        %3375 = vmatmul.mubr.bf16.gmra.mrb[0].mxu0 %v3332
        %v3376 = vpop.f32.mrb[0].mxu0
        %v3377 = vadd.f32 0.0, %v3376
        %v3378 = vpop.f32.mrb[0].mxu0
        %v3379 = vadd.f32 0.0, %v3378
        %v3380 = vpop.f32.mrb[0].mxu0
        %v3381 = vadd.f32 0.0, %v3380
        %v3382 = vpop.f32.mrb[0].mxu0
        %v3383 = vadd.f32 0.0, %v3382
        %3384 = vdwg.mxu0
        %3385 = vmatprep.subr.bf16.mxu0 %v1842
        %3386 = vmatpush1.bf16.msra.mxu0 %v1841
        %3387 = vmatprep.subr.bf16.mxu0 %v1846
        %3388 = vmatpush1.bf16.msra.mxu0 %v1845
        %3389 = vmatprep.subr.bf16.mxu0 %v1850
        %3390 = vmatpush1.bf16.msra.mxu0 %v1849
        %3391 = vmatprep.subr.bf16.mxu0 %v1854
        %3392 = vmatpush1.bf16.msra.mxu0 %v1853
        %3393 = vmatprep.subr.bf16.mxu0 %v1858
        %3394 = vmatpush1.bf16.msra.mxu0 %v1857
        %3395 = vmatprep.subr.bf16.mxu0 %v1862
        %3396 = vmatpush1.bf16.msra.mxu0 %v1861
        %3397 = vmatprep.subr.bf16.mxu0 %v1866
        %3398 = vmatpush1.bf16.msra.mxu0 %v1865
        %3399 = vmatprep.subr.bf16.mxu0 %v1870
        %3400 = vmatpush1.bf16.msra.mxu0 %v1869
        %3401 = vmatprep.subr.bf16.mxu0 0
        %3402 = vmatpush1.bf16.msra.mxu0 0
        %3403 = vmatprep.subr.bf16.mxu0 0
        %3404 = vmatpush1.bf16.msra.mxu0 0
        %3405 = vmatprep.subr.bf16.mxu0 0
        %3406 = vmatpush1.bf16.msra.mxu0 0
        %3407 = vmatprep.subr.bf16.mxu0 0
        %3408 = vmatpush1.bf16.msra.mxu0 0
        %3409 = vmatprep.subr.bf16.mxu0 0
        %3410 = vmatpush1.bf16.msra.mxu0 0
        %3411 = vmatprep.subr.bf16.mxu0 0
        %3412 = vmatpush1.bf16.msra.mxu0 0
        %3413 = vmatprep.subr.bf16.mxu0 0
        %3414 = vmatpush1.bf16.msra.mxu0 0
        %3415 = vmatprep.subr.bf16.mxu0 0
        %3416 = vmatpush1.bf16.msra.mxu0 0
        %3417 = vmatprep.mubr.bf16.mxu0 0
        %3418 = vmatmul.mubr.bf16.gmra.mrb[0].mxu0 %v3332
        %v3419 = vpop.f32.mrb[0].mxu0
        %v3420 = vadd.f32 0.0, %v3419
        %v3421 = vpop.f32.mrb[0].mxu0
        %v3422 = vadd.f32 0.0, %v3421
        %v3423 = vpop.f32.mrb[0].mxu0
        %v3424 = vadd.f32 0.0, %v3423
        %v3425 = vpop.f32.mrb[0].mxu0
        %v3426 = vadd.f32 0.0, %v3425
        %3427 = vdwg.mxu0
        %v3428 = vunpack.c.l.bf16 %v3338
        %v3429 = vunpack.c.l.bf16 %v3339
        %v3430 = vunpack.c.l.bf16 %v3340
        %v3431 = vunpack.c.l.bf16 %v3341
        %v3432 = vunpack.c.h.bf16 %v3338
        %v3433 = vunpack.c.h.bf16 %v3339
        %v3434 = vunpack.c.h.bf16 %v3340
        %v3435 = vunpack.c.h.bf16 %v3341
        %v3436 = vadd.f32 %v3428, %v3377
        %v3437 = vadd.f32 %v3429, %v3379
        %v3438 = vadd.f32 %v3430, %v3420
        %v3439 = vadd.f32 %v3431, %v3422
        %v3440 = vadd.f32 %v3432, %v3381
        %v3441 = vadd.f32 %v3433, %v3383
        %v3442 = vadd.f32 %v3434, %v3424
        %v3443 = vadd.f32 %v3435, %v3426
        %v3444 = vxor.u32 %v3436, 2147483648
        %v3445 = vxor.u32 %v3440, 2147483648
        %v3446 = vmul.f32 %v3444, 1.442695
        %v3447 = vpow.pop %v3446
        %v3448 = vmul.f32 %v3445, 1.442695
        %v3449 = vpow.pop %v3448
        %v3450 = vadd.f32 %v3447, 1.0
        %v3451 = vadd.f32 %v3449, 1.0
        %v3452 = vrcp.pop %v3450
        %v3453 = vmul.f32 1.0, %v3452
        %v3454 = vrcp.pop %v3451
        %v3455 = vmul.f32 1.0, %v3454
        %v3456 = vxor.u32 %v3437, 2147483648
        %v3457 = vxor.u32 %v3441, 2147483648
        %v3458 = vmul.f32 %v3456, 1.442695
        %v3459 = vpow.pop %v3458
        %v3460 = vmul.f32 %v3457, 1.442695
        %v3461 = vpow.pop %v3460
        %v3462 = vadd.f32 %v3459, 1.0
        %v3463 = vadd.f32 %v3461, 1.0
        %v3464 = vrcp.pop %v3462
        %v3465 = vmul.f32 1.0, %v3464
        %v3466 = vrcp.pop %v3463
        %v3467 = vmul.f32 1.0, %v3466
        %v3468 = vtanh.pop %v3438
        %v3469 = vtanh.pop %v3442
        %v3470 = vxor.u32 %v3439, 2147483648
        %v3471 = vxor.u32 %v3443, 2147483648
        %v3472 = vmul.f32 %v3470, 1.442695
        %v3473 = vpow.pop %v3472
        %v3474 = vmul.f32 %v3471, 1.442695
        %v3475 = vpow.pop %v3474
        %v3476 = vadd.f32 %v3473, 1.0
        %v3477 = vadd.f32 %v3475, 1.0
        %v3478 = vrcp.pop %v3476
        %v3479 = vmul.f32 1.0, %v3478
        %v3480 = vrcp.pop %v3477
        %v3481 = vmul.f32 1.0, %v3480
        %v3482 = vmul.f32 %v3465, %v3326
        %v3483 = vmul.f32 %v3467, %v3327
        %v3484 = vmul.f32 %v3453, %v3468
        %v3485 = vmul.f32 %v3455, %v3469
        %v3486 = vadd.f32 %v3482, %v3484
        %v3487 = vadd.f32 %v3483, %v3485
        %v3488 = vtanh.pop %v3486
        %v3489 = vtanh.pop %v3487
        %v3490 = vmul.f32 %v3479, %v3488
        %v3491 = vmul.f32 %v3481, %v3489
        %v3492 = vpack.c.bf16 %v3491, %v3490
        %s3493 = scalar_lea.vmem [#allocation3], 72
        %3494 = vst [vmem:[%s3493] sm:$0xff] %v3492
        %s3495 = smul.u32 10, 4
        %s3496 = smul.addr %s3495, 8
        %s3497 = scalar_lea.vmem [#allocation2], %s3496
        %v3498 = vld [vmem:[%s3497] sm:$0xff]
        %v3499 = vld [vmem:[%s3497 + $0x8] sm:$0xff]
        %v3500 = vld [vmem:[%s3497 + $0x10] sm:$0xff]
        %v3501 = vld [vmem:[%s3497 + $0x18] sm:$0xff]
        %3502 = vmatprep.subr.bf16.mxu0 %v1840
        %3503 = vmatpush1.bf16.msra.mxu0 %v1839
        %3504 = vmatprep.subr.bf16.mxu0 %v1844
        %3505 = vmatpush1.bf16.msra.mxu0 %v1843
        %3506 = vmatprep.subr.bf16.mxu0 %v1848
        %3507 = vmatpush1.bf16.msra.mxu0 %v1847
        %3508 = vmatprep.subr.bf16.mxu0 %v1852
        %3509 = vmatpush1.bf16.msra.mxu0 %v1851
        %3510 = vmatprep.subr.bf16.mxu0 %v1856
        %3511 = vmatpush1.bf16.msra.mxu0 %v1855
        %3512 = vmatprep.subr.bf16.mxu0 %v1860
        %3513 = vmatpush1.bf16.msra.mxu0 %v1859
        %3514 = vmatprep.subr.bf16.mxu0 %v1864
        %3515 = vmatpush1.bf16.msra.mxu0 %v1863
        %3516 = vmatprep.subr.bf16.mxu0 %v1868
        %3517 = vmatpush1.bf16.msra.mxu0 %v1867
        %3518 = vmatprep.subr.bf16.mxu0 0
        %3519 = vmatpush1.bf16.msra.mxu0 0
        %3520 = vmatprep.subr.bf16.mxu0 0
        %3521 = vmatpush1.bf16.msra.mxu0 0
        %3522 = vmatprep.subr.bf16.mxu0 0
        %3523 = vmatpush1.bf16.msra.mxu0 0
        %3524 = vmatprep.subr.bf16.mxu0 0
        %3525 = vmatpush1.bf16.msra.mxu0 0
        %3526 = vmatprep.subr.bf16.mxu0 0
        %3527 = vmatpush1.bf16.msra.mxu0 0
        %3528 = vmatprep.subr.bf16.mxu0 0
        %3529 = vmatpush1.bf16.msra.mxu0 0
        %3530 = vmatprep.subr.bf16.mxu0 0
        %3531 = vmatpush1.bf16.msra.mxu0 0
        %3532 = vmatprep.subr.bf16.mxu0 0
        %3533 = vmatpush1.bf16.msra.mxu0 0
        %3534 = vmatprep.mubr.bf16.mxu0 0
        %3535 = vmatmul.mubr.bf16.gmra.mrb[0].mxu0 %v3492
        %v3536 = vpop.f32.mrb[0].mxu0
        %v3537 = vadd.f32 0.0, %v3536
        %v3538 = vpop.f32.mrb[0].mxu0
        %v3539 = vadd.f32 0.0, %v3538
        %v3540 = vpop.f32.mrb[0].mxu0
        %v3541 = vadd.f32 0.0, %v3540
        %v3542 = vpop.f32.mrb[0].mxu0
        %v3543 = vadd.f32 0.0, %v3542
        %3544 = vdwg.mxu0
        %3545 = vmatprep.subr.bf16.mxu0 %v1842
        %3546 = vmatpush1.bf16.msra.mxu0 %v1841
        %3547 = vmatprep.subr.bf16.mxu0 %v1846
        %3548 = vmatpush1.bf16.msra.mxu0 %v1845
        %3549 = vmatprep.subr.bf16.mxu0 %v1850
        %3550 = vmatpush1.bf16.msra.mxu0 %v1849
        %3551 = vmatprep.subr.bf16.mxu0 %v1854
        %3552 = vmatpush1.bf16.msra.mxu0 %v1853
        %3553 = vmatprep.subr.bf16.mxu0 %v1858
        %3554 = vmatpush1.bf16.msra.mxu0 %v1857
        %3555 = vmatprep.subr.bf16.mxu0 %v1862
        %3556 = vmatpush1.bf16.msra.mxu0 %v1861
        %3557 = vmatprep.subr.bf16.mxu0 %v1866
        %3558 = vmatpush1.bf16.msra.mxu0 %v1865
        %3559 = vmatprep.subr.bf16.mxu0 %v1870
        %3560 = vmatpush1.bf16.msra.mxu0 %v1869
        %3561 = vmatprep.subr.bf16.mxu0 0
        %3562 = vmatpush1.bf16.msra.mxu0 0
        %3563 = vmatprep.subr.bf16.mxu0 0
        %3564 = vmatpush1.bf16.msra.mxu0 0
        %3565 = vmatprep.subr.bf16.mxu0 0
        %3566 = vmatpush1.bf16.msra.mxu0 0
        %3567 = vmatprep.subr.bf16.mxu0 0
        %3568 = vmatpush1.bf16.msra.mxu0 0
        %3569 = vmatprep.subr.bf16.mxu0 0
        %3570 = vmatpush1.bf16.msra.mxu0 0
        %3571 = vmatprep.subr.bf16.mxu0 0
        %3572 = vmatpush1.bf16.msra.mxu0 0
        %3573 = vmatprep.subr.bf16.mxu0 0
        %3574 = vmatpush1.bf16.msra.mxu0 0
        %3575 = vmatprep.subr.bf16.mxu0 0
        %3576 = vmatpush1.bf16.msra.mxu0 0
        %3577 = vmatprep.mubr.bf16.mxu0 0
        %3578 = vmatmul.mubr.bf16.gmra.mrb[0].mxu0 %v3492
        %v3579 = vpop.f32.mrb[0].mxu0
        %v3580 = vadd.f32 0.0, %v3579
        %v3581 = vpop.f32.mrb[0].mxu0
        %v3582 = vadd.f32 0.0, %v3581
        %v3583 = vpop.f32.mrb[0].mxu0
        %v3584 = vadd.f32 0.0, %v3583
        %v3585 = vpop.f32.mrb[0].mxu0
        %v3586 = vadd.f32 0.0, %v3585
        %3587 = vdwg.mxu0
        %v3588 = vunpack.c.l.bf16 %v3498
        %v3589 = vunpack.c.l.bf16 %v3499
        %v3590 = vunpack.c.l.bf16 %v3500
        %v3591 = vunpack.c.l.bf16 %v3501
        %v3592 = vunpack.c.h.bf16 %v3498
        %v3593 = vunpack.c.h.bf16 %v3499
        %v3594 = vunpack.c.h.bf16 %v3500
        %v3595 = vunpack.c.h.bf16 %v3501
        %v3596 = vadd.f32 %v3588, %v3537
        %v3597 = vadd.f32 %v3589, %v3539
        %v3598 = vadd.f32 %v3590, %v3580
        %v3599 = vadd.f32 %v3591, %v3582
        %v3600 = vadd.f32 %v3592, %v3541
        %v3601 = vadd.f32 %v3593, %v3543
        %v3602 = vadd.f32 %v3594, %v3584
        %v3603 = vadd.f32 %v3595, %v3586
        %v3604 = vxor.u32 %v3596, 2147483648
        %v3605 = vxor.u32 %v3600, 2147483648
        %v3606 = vmul.f32 %v3604, 1.442695
        %v3607 = vpow.pop %v3606
        %v3608 = vmul.f32 %v3605, 1.442695
        %v3609 = vpow.pop %v3608
        %v3610 = vadd.f32 %v3607, 1.0
        %v3611 = vadd.f32 %v3609, 1.0
        %v3612 = vrcp.pop %v3610
        %v3613 = vmul.f32 1.0, %v3612
        %v3614 = vrcp.pop %v3611
        %v3615 = vmul.f32 1.0, %v3614
        %v3616 = vxor.u32 %v3597, 2147483648
        %v3617 = vxor.u32 %v3601, 2147483648
        %v3618 = vmul.f32 %v3616, 1.442695
        %v3619 = vpow.pop %v3618
        %v3620 = vmul.f32 %v3617, 1.442695
        %v3621 = vpow.pop %v3620
        %v3622 = vadd.f32 %v3619, 1.0
        %v3623 = vadd.f32 %v3621, 1.0
        %v3624 = vrcp.pop %v3622
        %v3625 = vmul.f32 1.0, %v3624
        %v3626 = vrcp.pop %v3623
        %v3627 = vmul.f32 1.0, %v3626
        %v3628 = vtanh.pop %v3598
        %v3629 = vtanh.pop %v3602
        %v3630 = vxor.u32 %v3599, 2147483648
        %v3631 = vxor.u32 %v3603, 2147483648
        %v3632 = vmul.f32 %v3630, 1.442695
        %v3633 = vpow.pop %v3632
        %v3634 = vmul.f32 %v3631, 1.442695
        %v3635 = vpow.pop %v3634
        %v3636 = vadd.f32 %v3633, 1.0
        %v3637 = vadd.f32 %v3635, 1.0
        %v3638 = vrcp.pop %v3636
        %v3639 = vmul.f32 1.0, %v3638
        %v3640 = vrcp.pop %v3637
        %v3641 = vmul.f32 1.0, %v3640
        %v3642 = vmul.f32 %v3625, %v3486
        %v3643 = vmul.f32 %v3627, %v3487
        %v3644 = vmul.f32 %v3613, %v3628
        %v3645 = vmul.f32 %v3615, %v3629
        %v3646 = vadd.f32 %v3642, %v3644
        %v3647 = vadd.f32 %v3643, %v3645
        %v3648 = vtanh.pop %v3646
        %v3649 = vtanh.pop %v3647
        %v3650 = vmul.f32 %v3639, %v3648
        %v3651 = vmul.f32 %v3641, %v3649
        %v3652 = vpack.c.bf16 %v3651, %v3650
        %s3653 = scalar_lea.vmem [#allocation3], 80
        %3654 = vst [vmem:[%s3653] sm:$0xff] %v3652
        %s3655 = smul.u32 11, 4
        %s3656 = smul.addr %s3655, 8
        %s3657 = scalar_lea.vmem [#allocation2], %s3656
        %v3658 = vld [vmem:[%s3657] sm:$0xff]
        %v3659 = vld [vmem:[%s3657 + $0x8] sm:$0xff]
        %v3660 = vld [vmem:[%s3657 + $0x10] sm:$0xff]
        %v3661 = vld [vmem:[%s3657 + $0x18] sm:$0xff]
        %3662 = vmatprep.subr.bf16.mxu0 %v1840
        %3663 = vmatpush1.bf16.msra.mxu0 %v1839
        %3664 = vmatprep.subr.bf16.mxu0 %v1844
        %3665 = vmatpush1.bf16.msra.mxu0 %v1843
        %3666 = vmatprep.subr.bf16.mxu0 %v1848
        %3667 = vmatpush1.bf16.msra.mxu0 %v1847
        %3668 = vmatprep.subr.bf16.mxu0 %v1852
        %3669 = vmatpush1.bf16.msra.mxu0 %v1851
        %3670 = vmatprep.subr.bf16.mxu0 %v1856
        %3671 = vmatpush1.bf16.msra.mxu0 %v1855
        %3672 = vmatprep.subr.bf16.mxu0 %v1860
        %3673 = vmatpush1.bf16.msra.mxu0 %v1859
        %3674 = vmatprep.subr.bf16.mxu0 %v1864
        %3675 = vmatpush1.bf16.msra.mxu0 %v1863
        %3676 = vmatprep.subr.bf16.mxu0 %v1868
        %3677 = vmatpush1.bf16.msra.mxu0 %v1867
        %3678 = vmatprep.subr.bf16.mxu0 0
        %3679 = vmatpush1.bf16.msra.mxu0 0
        %3680 = vmatprep.subr.bf16.mxu0 0
        %3681 = vmatpush1.bf16.msra.mxu0 0
        %3682 = vmatprep.subr.bf16.mxu0 0
        %3683 = vmatpush1.bf16.msra.mxu0 0
        %3684 = vmatprep.subr.bf16.mxu0 0
        %3685 = vmatpush1.bf16.msra.mxu0 0
        %3686 = vmatprep.subr.bf16.mxu0 0
        %3687 = vmatpush1.bf16.msra.mxu0 0
        %3688 = vmatprep.subr.bf16.mxu0 0
        %3689 = vmatpush1.bf16.msra.mxu0 0
        %3690 = vmatprep.subr.bf16.mxu0 0
        %3691 = vmatpush1.bf16.msra.mxu0 0
        %3692 = vmatprep.subr.bf16.mxu0 0
        %3693 = vmatpush1.bf16.msra.mxu0 0
        %3694 = vmatprep.mubr.bf16.mxu0 0
        %3695 = vmatmul.mubr.bf16.gmra.mrb[0].mxu0 %v3652
        %v3696 = vpop.f32.mrb[0].mxu0
        %v3697 = vadd.f32 0.0, %v3696
        %v3698 = vpop.f32.mrb[0].mxu0
        %v3699 = vadd.f32 0.0, %v3698
        %v3700 = vpop.f32.mrb[0].mxu0
        %v3701 = vadd.f32 0.0, %v3700
        %v3702 = vpop.f32.mrb[0].mxu0
        %v3703 = vadd.f32 0.0, %v3702
        %3704 = vdwg.mxu0
        %3705 = vmatprep.subr.bf16.mxu0 %v1842
        %3706 = vmatpush1.bf16.msra.mxu0 %v1841
        %3707 = vmatprep.subr.bf16.mxu0 %v1846
        %3708 = vmatpush1.bf16.msra.mxu0 %v1845
        %3709 = vmatprep.subr.bf16.mxu0 %v1850
        %3710 = vmatpush1.bf16.msra.mxu0 %v1849
        %3711 = vmatprep.subr.bf16.mxu0 %v1854
        %3712 = vmatpush1.bf16.msra.mxu0 %v1853
        %3713 = vmatprep.subr.bf16.mxu0 %v1858
        %3714 = vmatpush1.bf16.msra.mxu0 %v1857
        %3715 = vmatprep.subr.bf16.mxu0 %v1862
        %3716 = vmatpush1.bf16.msra.mxu0 %v1861
        %3717 = vmatprep.subr.bf16.mxu0 %v1866
        %3718 = vmatpush1.bf16.msra.mxu0 %v1865
        %3719 = vmatprep.subr.bf16.mxu0 %v1870
        %3720 = vmatpush1.bf16.msra.mxu0 %v1869
        %3721 = vmatprep.subr.bf16.mxu0 0
        %3722 = vmatpush1.bf16.msra.mxu0 0
        %3723 = vmatprep.subr.bf16.mxu0 0
        %3724 = vmatpush1.bf16.msra.mxu0 0
        %3725 = vmatprep.subr.bf16.mxu0 0
        %3726 = vmatpush1.bf16.msra.mxu0 0
        %3727 = vmatprep.subr.bf16.mxu0 0
        %3728 = vmatpush1.bf16.msra.mxu0 0
        %3729 = vmatprep.subr.bf16.mxu0 0
        %3730 = vmatpush1.bf16.msra.mxu0 0
        %3731 = vmatprep.subr.bf16.mxu0 0
        %3732 = vmatpush1.bf16.msra.mxu0 0
        %3733 = vmatprep.subr.bf16.mxu0 0
        %3734 = vmatpush1.bf16.msra.mxu0 0
        %3735 = vmatprep.subr.bf16.mxu0 0
        %3736 = vmatpush1.bf16.msra.mxu0 0
        %3737 = vmatprep.mubr.bf16.mxu0 0
        %3738 = vmatmul.mubr.bf16.gmra.mrb[0].mxu0 %v3652
        %v3739 = vpop.f32.mrb[0].mxu0
        %v3740 = vadd.f32 0.0, %v3739
        %v3741 = vpop.f32.mrb[0].mxu0
        %v3742 = vadd.f32 0.0, %v3741
        %v3743 = vpop.f32.mrb[0].mxu0
        %v3744 = vadd.f32 0.0, %v3743
        %v3745 = vpop.f32.mrb[0].mxu0
        %v3746 = vadd.f32 0.0, %v3745
        %3747 = vdwg.mxu0
        %v3748 = vunpack.c.l.bf16 %v3658
        %v3749 = vunpack.c.l.bf16 %v3659
        %v3750 = vunpack.c.l.bf16 %v3660
        %v3751 = vunpack.c.l.bf16 %v3661
        %v3752 = vunpack.c.h.bf16 %v3658
        %v3753 = vunpack.c.h.bf16 %v3659
        %v3754 = vunpack.c.h.bf16 %v3660
        %v3755 = vunpack.c.h.bf16 %v3661
        %v3756 = vadd.f32 %v3748, %v3697
        %v3757 = vadd.f32 %v3749, %v3699
        %v3758 = vadd.f32 %v3750, %v3740
        %v3759 = vadd.f32 %v3751, %v3742
        %v3760 = vadd.f32 %v3752, %v3701
        %v3761 = vadd.f32 %v3753, %v3703
        %v3762 = vadd.f32 %v3754, %v3744
        %v3763 = vadd.f32 %v3755, %v3746
        %v3764 = vxor.u32 %v3756, 2147483648
        %v3765 = vxor.u32 %v3760, 2147483648
        %v3766 = vmul.f32 %v3764, 1.442695
        %v3767 = vpow.pop %v3766
        %v3768 = vmul.f32 %v3765, 1.442695
        %v3769 = vpow.pop %v3768
        %v3770 = vadd.f32 %v3767, 1.0
        %v3771 = vadd.f32 %v3769, 1.0
        %v3772 = vrcp.pop %v3770
        %v3773 = vmul.f32 1.0, %v3772
        %v3774 = vrcp.pop %v3771
        %v3775 = vmul.f32 1.0, %v3774
        %v3776 = vxor.u32 %v3757, 2147483648
        %v3777 = vxor.u32 %v3761, 2147483648
        %v3778 = vmul.f32 %v3776, 1.442695
        %v3779 = vpow.pop %v3778
        %v3780 = vmul.f32 %v3777, 1.442695
        %v3781 = vpow.pop %v3780
        %v3782 = vadd.f32 %v3779, 1.0
        %v3783 = vadd.f32 %v3781, 1.0
        %v3784 = vrcp.pop %v3782
        %v3785 = vmul.f32 1.0, %v3784
        %v3786 = vrcp.pop %v3783
        %v3787 = vmul.f32 1.0, %v3786
        %v3788 = vtanh.pop %v3758
        %v3789 = vtanh.pop %v3762
        %v3790 = vxor.u32 %v3759, 2147483648
        %v3791 = vxor.u32 %v3763, 2147483648
        %v3792 = vmul.f32 %v3790, 1.442695
        %v3793 = vpow.pop %v3792
        %v3794 = vmul.f32 %v3791, 1.442695
        %v3795 = vpow.pop %v3794
        %v3796 = vadd.f32 %v3793, 1.0
        %v3797 = vadd.f32 %v3795, 1.0
        %v3798 = vrcp.pop %v3796
        %v3799 = vmul.f32 1.0, %v3798
        %v3800 = vrcp.pop %v3797
        %v3801 = vmul.f32 1.0, %v3800
        %v3802 = vmul.f32 %v3785, %v3646
        %v3803 = vmul.f32 %v3787, %v3647
        %v3804 = vmul.f32 %v3773, %v3788
        %v3805 = vmul.f32 %v3775, %v3789
        %v3806 = vadd.f32 %v3802, %v3804
        %v3807 = vadd.f32 %v3803, %v3805
        %v3808 = vtanh.pop %v3806
        %v3809 = vtanh.pop %v3807
        %v3810 = vmul.f32 %v3799, %v3808
        %v3811 = vmul.f32 %v3801, %v3809
        %v3812 = vpack.c.bf16 %v3811, %v3810
        %s3813 = scalar_lea.vmem [#allocation3], 88
        %3814 = vst [vmem:[%s3813] sm:$0xff] %v3812
        %s3815 = smul.u32 12, 4
        %s3816 = smul.addr %s3815, 8
        %s3817 = scalar_lea.vmem [#allocation2], %s3816
        %v3818 = vld [vmem:[%s3817] sm:$0xff]
        %v3819 = vld [vmem:[%s3817 + $0x8] sm:$0xff]
        %v3820 = vld [vmem:[%s3817 + $0x10] sm:$0xff]
        %v3821 = vld [vmem:[%s3817 + $0x18] sm:$0xff]
        %3822 = vmatprep.subr.bf16.mxu0 %v1840
        %3823 = vmatpush1.bf16.msra.mxu0 %v1839
        %3824 = vmatprep.subr.bf16.mxu0 %v1844
        %3825 = vmatpush1.bf16.msra.mxu0 %v1843
        %3826 = vmatprep.subr.bf16.mxu0 %v1848
        %3827 = vmatpush1.bf16.msra.mxu0 %v1847
        %3828 = vmatprep.subr.bf16.mxu0 %v1852
        %3829 = vmatpush1.bf16.msra.mxu0 %v1851
        %3830 = vmatprep.subr.bf16.mxu0 %v1856
        %3831 = vmatpush1.bf16.msra.mxu0 %v1855
        %3832 = vmatprep.subr.bf16.mxu0 %v1860
        %3833 = vmatpush1.bf16.msra.mxu0 %v1859
        %3834 = vmatprep.subr.bf16.mxu0 %v1864
        %3835 = vmatpush1.bf16.msra.mxu0 %v1863
        %3836 = vmatprep.subr.bf16.mxu0 %v1868
        %3837 = vmatpush1.bf16.msra.mxu0 %v1867
        %3838 = vmatprep.subr.bf16.mxu0 0
        %3839 = vmatpush1.bf16.msra.mxu0 0
        %3840 = vmatprep.subr.bf16.mxu0 0
        %3841 = vmatpush1.bf16.msra.mxu0 0
        %3842 = vmatprep.subr.bf16.mxu0 0
        %3843 = vmatpush1.bf16.msra.mxu0 0
        %3844 = vmatprep.subr.bf16.mxu0 0
        %3845 = vmatpush1.bf16.msra.mxu0 0
        %3846 = vmatprep.subr.bf16.mxu0 0
        %3847 = vmatpush1.bf16.msra.mxu0 0
        %3848 = vmatprep.subr.bf16.mxu0 0
        %3849 = vmatpush1.bf16.msra.mxu0 0
        %3850 = vmatprep.subr.bf16.mxu0 0
        %3851 = vmatpush1.bf16.msra.mxu0 0
        %3852 = vmatprep.subr.bf16.mxu0 0
        %3853 = vmatpush1.bf16.msra.mxu0 0
        %3854 = vmatprep.mubr.bf16.mxu0 0
        %3855 = vmatmul.mubr.bf16.gmra.mrb[0].mxu0 %v3812
        %v3856 = vpop.f32.mrb[0].mxu0
        %v3857 = vadd.f32 0.0, %v3856
        %v3858 = vpop.f32.mrb[0].mxu0
        %v3859 = vadd.f32 0.0, %v3858
        %v3860 = vpop.f32.mrb[0].mxu0
        %v3861 = vadd.f32 0.0, %v3860
        %v3862 = vpop.f32.mrb[0].mxu0
        %v3863 = vadd.f32 0.0, %v3862
        %3864 = vdwg.mxu0
        %3865 = vmatprep.subr.bf16.mxu0 %v1842
        %3866 = vmatpush1.bf16.msra.mxu0 %v1841
        %3867 = vmatprep.subr.bf16.mxu0 %v1846
        %3868 = vmatpush1.bf16.msra.mxu0 %v1845
        %3869 = vmatprep.subr.bf16.mxu0 %v1850
        %3870 = vmatpush1.bf16.msra.mxu0 %v1849
        %3871 = vmatprep.subr.bf16.mxu0 %v1854
        %3872 = vmatpush1.bf16.msra.mxu0 %v1853
        %3873 = vmatprep.subr.bf16.mxu0 %v1858
        %3874 = vmatpush1.bf16.msra.mxu0 %v1857
        %3875 = vmatprep.subr.bf16.mxu0 %v1862
        %3876 = vmatpush1.bf16.msra.mxu0 %v1861
        %3877 = vmatprep.subr.bf16.mxu0 %v1866
        %3878 = vmatpush1.bf16.msra.mxu0 %v1865
        %3879 = vmatprep.subr.bf16.mxu0 %v1870
        %3880 = vmatpush1.bf16.msra.mxu0 %v1869
        %3881 = vmatprep.subr.bf16.mxu0 0
        %3882 = vmatpush1.bf16.msra.mxu0 0
        %3883 = vmatprep.subr.bf16.mxu0 0
        %3884 = vmatpush1.bf16.msra.mxu0 0
        %3885 = vmatprep.subr.bf16.mxu0 0
        %3886 = vmatpush1.bf16.msra.mxu0 0
        %3887 = vmatprep.subr.bf16.mxu0 0
        %3888 = vmatpush1.bf16.msra.mxu0 0
        %3889 = vmatprep.subr.bf16.mxu0 0
        %3890 = vmatpush1.bf16.msra.mxu0 0
        %3891 = vmatprep.subr.bf16.mxu0 0
        %3892 = vmatpush1.bf16.msra.mxu0 0
        %3893 = vmatprep.subr.bf16.mxu0 0
        %3894 = vmatpush1.bf16.msra.mxu0 0
        %3895 = vmatprep.subr.bf16.mxu0 0
        %3896 = vmatpush1.bf16.msra.mxu0 0
        %3897 = vmatprep.mubr.bf16.mxu0 0
        %3898 = vmatmul.mubr.bf16.gmra.mrb[0].mxu0 %v3812
        %v3899 = vpop.f32.mrb[0].mxu0
        %v3900 = vadd.f32 0.0, %v3899
        %v3901 = vpop.f32.mrb[0].mxu0
        %v3902 = vadd.f32 0.0, %v3901
        %v3903 = vpop.f32.mrb[0].mxu0
        %v3904 = vadd.f32 0.0, %v3903
        %v3905 = vpop.f32.mrb[0].mxu0
        %v3906 = vadd.f32 0.0, %v3905
        %3907 = vdwg.mxu0
        %v3908 = vunpack.c.l.bf16 %v3818
        %v3909 = vunpack.c.l.bf16 %v3819
        %v3910 = vunpack.c.l.bf16 %v3820
        %v3911 = vunpack.c.l.bf16 %v3821
        %v3912 = vunpack.c.h.bf16 %v3818
        %v3913 = vunpack.c.h.bf16 %v3819
        %v3914 = vunpack.c.h.bf16 %v3820
        %v3915 = vunpack.c.h.bf16 %v3821
        %v3916 = vadd.f32 %v3908, %v3857
        %v3917 = vadd.f32 %v3909, %v3859
        %v3918 = vadd.f32 %v3910, %v3900
        %v3919 = vadd.f32 %v3911, %v3902
        %v3920 = vadd.f32 %v3912, %v3861
        %v3921 = vadd.f32 %v3913, %v3863
        %v3922 = vadd.f32 %v3914, %v3904
        %v3923 = vadd.f32 %v3915, %v3906
        %v3924 = vxor.u32 %v3916, 2147483648
        %v3925 = vxor.u32 %v3920, 2147483648
        %v3926 = vmul.f32 %v3924, 1.442695
        %v3927 = vpow.pop %v3926
        %v3928 = vmul.f32 %v3925, 1.442695
        %v3929 = vpow.pop %v3928
        %v3930 = vadd.f32 %v3927, 1.0
        %v3931 = vadd.f32 %v3929, 1.0
        %v3932 = vrcp.pop %v3930
        %v3933 = vmul.f32 1.0, %v3932
        %v3934 = vrcp.pop %v3931
        %v3935 = vmul.f32 1.0, %v3934
        %v3936 = vxor.u32 %v3917, 2147483648
        %v3937 = vxor.u32 %v3921, 2147483648
        %v3938 = vmul.f32 %v3936, 1.442695
        %v3939 = vpow.pop %v3938
        %v3940 = vmul.f32 %v3937, 1.442695
        %v3941 = vpow.pop %v3940
        %v3942 = vadd.f32 %v3939, 1.0
        %v3943 = vadd.f32 %v3941, 1.0
        %v3944 = vrcp.pop %v3942
        %v3945 = vmul.f32 1.0, %v3944
        %v3946 = vrcp.pop %v3943
        %v3947 = vmul.f32 1.0, %v3946
        %v3948 = vtanh.pop %v3918
        %v3949 = vtanh.pop %v3922
        %v3950 = vxor.u32 %v3919, 2147483648
        %v3951 = vxor.u32 %v3923, 2147483648
        %v3952 = vmul.f32 %v3950, 1.442695
        %v3953 = vpow.pop %v3952
        %v3954 = vmul.f32 %v3951, 1.442695
        %v3955 = vpow.pop %v3954
        %v3956 = vadd.f32 %v3953, 1.0
        %v3957 = vadd.f32 %v3955, 1.0
        %v3958 = vrcp.pop %v3956
        %v3959 = vmul.f32 1.0, %v3958
        %v3960 = vrcp.pop %v3957
        %v3961 = vmul.f32 1.0, %v3960
        %v3962 = vmul.f32 %v3945, %v3806
        %v3963 = vmul.f32 %v3947, %v3807
        %v3964 = vmul.f32 %v3933, %v3948
        %v3965 = vmul.f32 %v3935, %v3949
        %v3966 = vadd.f32 %v3962, %v3964
        %v3967 = vadd.f32 %v3963, %v3965
        %v3968 = vtanh.pop %v3966
        %v3969 = vtanh.pop %v3967
        %v3970 = vmul.f32 %v3959, %v3968
        %v3971 = vmul.f32 %v3961, %v3969
        %v3972 = vpack.c.bf16 %v3971, %v3970
        %s3973 = scalar_lea.vmem [#allocation3], 96
        %3974 = vst [vmem:[%s3973] sm:$0xff] %v3972
        %s3975 = smul.u32 13, 4
        %s3976 = smul.addr %s3975, 8
        %s3977 = scalar_lea.vmem [#allocation2], %s3976
        %v3978 = vld [vmem:[%s3977] sm:$0xff]
        %v3979 = vld [vmem:[%s3977 + $0x8] sm:$0xff]
        %v3980 = vld [vmem:[%s3977 + $0x10] sm:$0xff]
        %v3981 = vld [vmem:[%s3977 + $0x18] sm:$0xff]
        %3982 = vmatprep.subr.bf16.mxu0 %v1840
        %3983 = vmatpush1.bf16.msra.mxu0 %v1839
        %3984 = vmatprep.subr.bf16.mxu0 %v1844
        %3985 = vmatpush1.bf16.msra.mxu0 %v1843
        %3986 = vmatprep.subr.bf16.mxu0 %v1848
        %3987 = vmatpush1.bf16.msra.mxu0 %v1847
        %3988 = vmatprep.subr.bf16.mxu0 %v1852
        %3989 = vmatpush1.bf16.msra.mxu0 %v1851
        %3990 = vmatprep.subr.bf16.mxu0 %v1856
        %3991 = vmatpush1.bf16.msra.mxu0 %v1855
        %3992 = vmatprep.subr.bf16.mxu0 %v1860
        %3993 = vmatpush1.bf16.msra.mxu0 %v1859
        %3994 = vmatprep.subr.bf16.mxu0 %v1864
        %3995 = vmatpush1.bf16.msra.mxu0 %v1863
        %3996 = vmatprep.subr.bf16.mxu0 %v1868
        %3997 = vmatpush1.bf16.msra.mxu0 %v1867
        %3998 = vmatprep.subr.bf16.mxu0 0
        %3999 = vmatpush1.bf16.msra.mxu0 0
        %4000 = vmatprep.subr.bf16.mxu0 0
        %4001 = vmatpush1.bf16.msra.mxu0 0
        %4002 = vmatprep.subr.bf16.mxu0 0
        %4003 = vmatpush1.bf16.msra.mxu0 0
        %4004 = vmatprep.subr.bf16.mxu0 0
        %4005 = vmatpush1.bf16.msra.mxu0 0
        %4006 = vmatprep.subr.bf16.mxu0 0
        %4007 = vmatpush1.bf16.msra.mxu0 0
        %4008 = vmatprep.subr.bf16.mxu0 0
        %4009 = vmatpush1.bf16.msra.mxu0 0
        %4010 = vmatprep.subr.bf16.mxu0 0
        %4011 = vmatpush1.bf16.msra.mxu0 0
        %4012 = vmatprep.subr.bf16.mxu0 0
        %4013 = vmatpush1.bf16.msra.mxu0 0
        %4014 = vmatprep.mubr.bf16.mxu0 0
        %4015 = vmatmul.mubr.bf16.gmra.mrb[0].mxu0 %v3972
        %v4016 = vpop.f32.mrb[0].mxu0
        %v4017 = vadd.f32 0.0, %v4016
        %v4018 = vpop.f32.mrb[0].mxu0
        %v4019 = vadd.f32 0.0, %v4018
        %v4020 = vpop.f32.mrb[0].mxu0
        %v4021 = vadd.f32 0.0, %v4020
        %v4022 = vpop.f32.mrb[0].mxu0
        %v4023 = vadd.f32 0.0, %v4022
        %4024 = vdwg.mxu0
        %4025 = vmatprep.subr.bf16.mxu0 %v1842
        %4026 = vmatpush1.bf16.msra.mxu0 %v1841
        %4027 = vmatprep.subr.bf16.mxu0 %v1846
        %4028 = vmatpush1.bf16.msra.mxu0 %v1845
        %4029 = vmatprep.subr.bf16.mxu0 %v1850
        %4030 = vmatpush1.bf16.msra.mxu0 %v1849
        %4031 = vmatprep.subr.bf16.mxu0 %v1854
        %4032 = vmatpush1.bf16.msra.mxu0 %v1853
        %4033 = vmatprep.subr.bf16.mxu0 %v1858
        %4034 = vmatpush1.bf16.msra.mxu0 %v1857
        %4035 = vmatprep.subr.bf16.mxu0 %v1862
        %4036 = vmatpush1.bf16.msra.mxu0 %v1861
        %4037 = vmatprep.subr.bf16.mxu0 %v1866
        %4038 = vmatpush1.bf16.msra.mxu0 %v1865
        %4039 = vmatprep.subr.bf16.mxu0 %v1870
        %4040 = vmatpush1.bf16.msra.mxu0 %v1869
        %4041 = vmatprep.subr.bf16.mxu0 0
        %4042 = vmatpush1.bf16.msra.mxu0 0
        %4043 = vmatprep.subr.bf16.mxu0 0
        %4044 = vmatpush1.bf16.msra.mxu0 0
        %4045 = vmatprep.subr.bf16.mxu0 0
        %4046 = vmatpush1.bf16.msra.mxu0 0
        %4047 = vmatprep.subr.bf16.mxu0 0
        %4048 = vmatpush1.bf16.msra.mxu0 0
        %4049 = vmatprep.subr.bf16.mxu0 0
        %4050 = vmatpush1.bf16.msra.mxu0 0
        %4051 = vmatprep.subr.bf16.mxu0 0
        %4052 = vmatpush1.bf16.msra.mxu0 0
        %4053 = vmatprep.subr.bf16.mxu0 0
        %4054 = vmatpush1.bf16.msra.mxu0 0
        %4055 = vmatprep.subr.bf16.mxu0 0
        %4056 = vmatpush1.bf16.msra.mxu0 0
        %4057 = vmatprep.mubr.bf16.mxu0 0
        %4058 = vmatmul.mubr.bf16.gmra.mrb[0].mxu0 %v3972
        %v4059 = vpop.f32.mrb[0].mxu0
        %v4060 = vadd.f32 0.0, %v4059
        %v4061 = vpop.f32.mrb[0].mxu0
        %v4062 = vadd.f32 0.0, %v4061
        %v4063 = vpop.f32.mrb[0].mxu0
        %v4064 = vadd.f32 0.0, %v4063
        %v4065 = vpop.f32.mrb[0].mxu0
        %v4066 = vadd.f32 0.0, %v4065
        %4067 = vdwg.mxu0
        %v4068 = vunpack.c.l.bf16 %v3978
        %v4069 = vunpack.c.l.bf16 %v3979
        %v4070 = vunpack.c.l.bf16 %v3980
        %v4071 = vunpack.c.l.bf16 %v3981
        %v4072 = vunpack.c.h.bf16 %v3978
        %v4073 = vunpack.c.h.bf16 %v3979
        %v4074 = vunpack.c.h.bf16 %v3980
        %v4075 = vunpack.c.h.bf16 %v3981
        %v4076 = vadd.f32 %v4068, %v4017
        %v4077 = vadd.f32 %v4069, %v4019
        %v4078 = vadd.f32 %v4070, %v4060
        %v4079 = vadd.f32 %v4071, %v4062
        %v4080 = vadd.f32 %v4072, %v4021
        %v4081 = vadd.f32 %v4073, %v4023
        %v4082 = vadd.f32 %v4074, %v4064
        %v4083 = vadd.f32 %v4075, %v4066
        %v4084 = vxor.u32 %v4076, 2147483648
        %v4085 = vxor.u32 %v4080, 2147483648
        %v4086 = vmul.f32 %v4084, 1.442695
        %v4087 = vpow.pop %v4086
        %v4088 = vmul.f32 %v4085, 1.442695
        %v4089 = vpow.pop %v4088
        %v4090 = vadd.f32 %v4087, 1.0
        %v4091 = vadd.f32 %v4089, 1.0
        %v4092 = vrcp.pop %v4090
        %v4093 = vmul.f32 1.0, %v4092
        %v4094 = vrcp.pop %v4091
        %v4095 = vmul.f32 1.0, %v4094
        %v4096 = vxor.u32 %v4077, 2147483648
        %v4097 = vxor.u32 %v4081, 2147483648
        %v4098 = vmul.f32 %v4096, 1.442695
        %v4099 = vpow.pop %v4098
        %v4100 = vmul.f32 %v4097, 1.442695
        %v4101 = vpow.pop %v4100
        %v4102 = vadd.f32 %v4099, 1.0
        %v4103 = vadd.f32 %v4101, 1.0
        %v4104 = vrcp.pop %v4102
        %v4105 = vmul.f32 1.0, %v4104
        %v4106 = vrcp.pop %v4103
        %v4107 = vmul.f32 1.0, %v4106
        %v4108 = vtanh.pop %v4078
        %v4109 = vtanh.pop %v4082
        %v4110 = vxor.u32 %v4079, 2147483648
        %v4111 = vxor.u32 %v4083, 2147483648
        %v4112 = vmul.f32 %v4110, 1.442695
        %v4113 = vpow.pop %v4112
        %v4114 = vmul.f32 %v4111, 1.442695
        %v4115 = vpow.pop %v4114
        %v4116 = vadd.f32 %v4113, 1.0
        %v4117 = vadd.f32 %v4115, 1.0
        %v4118 = vrcp.pop %v4116
        %v4119 = vmul.f32 1.0, %v4118
        %v4120 = vrcp.pop %v4117
        %v4121 = vmul.f32 1.0, %v4120
        %v4122 = vmul.f32 %v4105, %v3966
        %v4123 = vmul.f32 %v4107, %v3967
        %v4124 = vmul.f32 %v4093, %v4108
        %v4125 = vmul.f32 %v4095, %v4109
        %v4126 = vadd.f32 %v4122, %v4124
        %v4127 = vadd.f32 %v4123, %v4125
        %v4128 = vtanh.pop %v4126
        %v4129 = vtanh.pop %v4127
        %v4130 = vmul.f32 %v4119, %v4128
        %v4131 = vmul.f32 %v4121, %v4129
        %v4132 = vpack.c.bf16 %v4131, %v4130
        %s4133 = scalar_lea.vmem [#allocation3], 104
        %4134 = vst [vmem:[%s4133] sm:$0xff] %v4132
        %s4135 = smul.u32 14, 4
        %s4136 = smul.addr %s4135, 8
        %s4137 = scalar_lea.vmem [#allocation2], %s4136
        %v4138 = vld [vmem:[%s4137] sm:$0xff]
        %v4139 = vld [vmem:[%s4137 + $0x8] sm:$0xff]
        %v4140 = vld [vmem:[%s4137 + $0x10] sm:$0xff]
        %v4141 = vld [vmem:[%s4137 + $0x18] sm:$0xff]
        %4142 = vmatprep.subr.bf16.mxu0 %v1840
        %4143 = vmatpush1.bf16.msra.mxu0 %v1839
        %4144 = vmatprep.subr.bf16.mxu0 %v1844
        %4145 = vmatpush1.bf16.msra.mxu0 %v1843
        %4146 = vmatprep.subr.bf16.mxu0 %v1848
        %4147 = vmatpush1.bf16.msra.mxu0 %v1847
        %4148 = vmatprep.subr.bf16.mxu0 %v1852
        %4149 = vmatpush1.bf16.msra.mxu0 %v1851
        %4150 = vmatprep.subr.bf16.mxu0 %v1856
        %4151 = vmatpush1.bf16.msra.mxu0 %v1855
        %4152 = vmatprep.subr.bf16.mxu0 %v1860
        %4153 = vmatpush1.bf16.msra.mxu0 %v1859
        %4154 = vmatprep.subr.bf16.mxu0 %v1864
        %4155 = vmatpush1.bf16.msra.mxu0 %v1863
        %4156 = vmatprep.subr.bf16.mxu0 %v1868
        %4157 = vmatpush1.bf16.msra.mxu0 %v1867
        %4158 = vmatprep.subr.bf16.mxu0 0
        %4159 = vmatpush1.bf16.msra.mxu0 0
        %4160 = vmatprep.subr.bf16.mxu0 0
        %4161 = vmatpush1.bf16.msra.mxu0 0
        %4162 = vmatprep.subr.bf16.mxu0 0
        %4163 = vmatpush1.bf16.msra.mxu0 0
        %4164 = vmatprep.subr.bf16.mxu0 0
        %4165 = vmatpush1.bf16.msra.mxu0 0
        %4166 = vmatprep.subr.bf16.mxu0 0
        %4167 = vmatpush1.bf16.msra.mxu0 0
        %4168 = vmatprep.subr.bf16.mxu0 0
        %4169 = vmatpush1.bf16.msra.mxu0 0
        %4170 = vmatprep.subr.bf16.mxu0 0
        %4171 = vmatpush1.bf16.msra.mxu0 0
        %4172 = vmatprep.subr.bf16.mxu0 0
        %4173 = vmatpush1.bf16.msra.mxu0 0
        %4174 = vmatprep.mubr.bf16.mxu0 0
        %4175 = vmatmul.mubr.bf16.gmra.mrb[0].mxu0 %v4132
        %v4176 = vpop.f32.mrb[0].mxu0
        %v4177 = vadd.f32 0.0, %v4176
        %v4178 = vpop.f32.mrb[0].mxu0
        %v4179 = vadd.f32 0.0, %v4178
        %v4180 = vpop.f32.mrb[0].mxu0
        %v4181 = vadd.f32 0.0, %v4180
        %v4182 = vpop.f32.mrb[0].mxu0
        %v4183 = vadd.f32 0.0, %v4182
        %4184 = vdwg.mxu0
        %4185 = vmatprep.subr.bf16.mxu0 %v1842
        %4186 = vmatpush1.bf16.msra.mxu0 %v1841
        %4187 = vmatprep.subr.bf16.mxu0 %v1846
        %4188 = vmatpush1.bf16.msra.mxu0 %v1845
        %4189 = vmatprep.subr.bf16.mxu0 %v1850
        %4190 = vmatpush1.bf16.msra.mxu0 %v1849
        %4191 = vmatprep.subr.bf16.mxu0 %v1854
        %4192 = vmatpush1.bf16.msra.mxu0 %v1853
        %4193 = vmatprep.subr.bf16.mxu0 %v1858
        %4194 = vmatpush1.bf16.msra.mxu0 %v1857
        %4195 = vmatprep.subr.bf16.mxu0 %v1862
        %4196 = vmatpush1.bf16.msra.mxu0 %v1861
        %4197 = vmatprep.subr.bf16.mxu0 %v1866
        %4198 = vmatpush1.bf16.msra.mxu0 %v1865
        %4199 = vmatprep.subr.bf16.mxu0 %v1870
        %4200 = vmatpush1.bf16.msra.mxu0 %v1869
        %4201 = vmatprep.subr.bf16.mxu0 0
        %4202 = vmatpush1.bf16.msra.mxu0 0
        %4203 = vmatprep.subr.bf16.mxu0 0
        %4204 = vmatpush1.bf16.msra.mxu0 0
        %4205 = vmatprep.subr.bf16.mxu0 0
        %4206 = vmatpush1.bf16.msra.mxu0 0
        %4207 = vmatprep.subr.bf16.mxu0 0
        %4208 = vmatpush1.bf16.msra.mxu0 0
        %4209 = vmatprep.subr.bf16.mxu0 0
        %4210 = vmatpush1.bf16.msra.mxu0 0
        %4211 = vmatprep.subr.bf16.mxu0 0
        %4212 = vmatpush1.bf16.msra.mxu0 0
        %4213 = vmatprep.subr.bf16.mxu0 0
        %4214 = vmatpush1.bf16.msra.mxu0 0
        %4215 = vmatprep.subr.bf16.mxu0 0
        %4216 = vmatpush1.bf16.msra.mxu0 0
        %4217 = vmatprep.mubr.bf16.mxu0 0
        %4218 = vmatmul.mubr.bf16.gmra.mrb[0].mxu0 %v4132
        %v4219 = vpop.f32.mrb[0].mxu0
        %v4220 = vadd.f32 0.0, %v4219
        %v4221 = vpop.f32.mrb[0].mxu0
        %v4222 = vadd.f32 0.0, %v4221
        %v4223 = vpop.f32.mrb[0].mxu0
        %v4224 = vadd.f32 0.0, %v4223
        %v4225 = vpop.f32.mrb[0].mxu0
        %v4226 = vadd.f32 0.0, %v4225
        %4227 = vdwg.mxu0
        %v4228 = vunpack.c.l.bf16 %v4138
        %v4229 = vunpack.c.l.bf16 %v4139
        %v4230 = vunpack.c.l.bf16 %v4140
        %v4231 = vunpack.c.l.bf16 %v4141
        %v4232 = vunpack.c.h.bf16 %v4138
        %v4233 = vunpack.c.h.bf16 %v4139
        %v4234 = vunpack.c.h.bf16 %v4140
        %v4235 = vunpack.c.h.bf16 %v4141
        %v4236 = vadd.f32 %v4228, %v4177
        %v4237 = vadd.f32 %v4229, %v4179
        %v4238 = vadd.f32 %v4230, %v4220
        %v4239 = vadd.f32 %v4231, %v4222
        %v4240 = vadd.f32 %v4232, %v4181
        %v4241 = vadd.f32 %v4233, %v4183
        %v4242 = vadd.f32 %v4234, %v4224
        %v4243 = vadd.f32 %v4235, %v4226
        %v4244 = vxor.u32 %v4236, 2147483648
        %v4245 = vxor.u32 %v4240, 2147483648
        %v4246 = vmul.f32 %v4244, 1.442695
        %v4247 = vpow.pop %v4246
        %v4248 = vmul.f32 %v4245, 1.442695
        %v4249 = vpow.pop %v4248
        %v4250 = vadd.f32 %v4247, 1.0
        %v4251 = vadd.f32 %v4249, 1.0
        %v4252 = vrcp.pop %v4250
        %v4253 = vmul.f32 1.0, %v4252
        %v4254 = vrcp.pop %v4251
        %v4255 = vmul.f32 1.0, %v4254
        %v4256 = vxor.u32 %v4237, 2147483648
        %v4257 = vxor.u32 %v4241, 2147483648
        %v4258 = vmul.f32 %v4256, 1.442695
        %v4259 = vpow.pop %v4258
        %v4260 = vmul.f32 %v4257, 1.442695
        %v4261 = vpow.pop %v4260
        %v4262 = vadd.f32 %v4259, 1.0
        %v4263 = vadd.f32 %v4261, 1.0
        %v4264 = vrcp.pop %v4262
        %v4265 = vmul.f32 1.0, %v4264
        %v4266 = vrcp.pop %v4263
        %v4267 = vmul.f32 1.0, %v4266
        %v4268 = vtanh.pop %v4238
        %v4269 = vtanh.pop %v4242
        %v4270 = vxor.u32 %v4239, 2147483648
        %v4271 = vxor.u32 %v4243, 2147483648
        %v4272 = vmul.f32 %v4270, 1.442695
        %v4273 = vpow.pop %v4272
        %v4274 = vmul.f32 %v4271, 1.442695
        %v4275 = vpow.pop %v4274
        %v4276 = vadd.f32 %v4273, 1.0
        %v4277 = vadd.f32 %v4275, 1.0
        %v4278 = vrcp.pop %v4276
        %v4279 = vmul.f32 1.0, %v4278
        %v4280 = vrcp.pop %v4277
        %v4281 = vmul.f32 1.0, %v4280
        %v4282 = vmul.f32 %v4265, %v4126
        %v4283 = vmul.f32 %v4267, %v4127
        %v4284 = vmul.f32 %v4253, %v4268
        %v4285 = vmul.f32 %v4255, %v4269
        %v4286 = vadd.f32 %v4282, %v4284
        %v4287 = vadd.f32 %v4283, %v4285
        %v4288 = vtanh.pop %v4286
        %v4289 = vtanh.pop %v4287
        %v4290 = vmul.f32 %v4279, %v4288
        %v4291 = vmul.f32 %v4281, %v4289
        %v4292 = vpack.c.bf16 %v4291, %v4290
        %s4293 = scalar_lea.vmem [#allocation3], 112
        %4294 = vst [vmem:[%s4293] sm:$0xff] %v4292
        %s4295 = smul.u32 15, 4
        %s4296 = smul.addr %s4295, 8
        %s4297 = scalar_lea.vmem [#allocation2], %s4296
        %v4298 = vld [vmem:[%s4297] sm:$0xff]
        %v4299 = vld [vmem:[%s4297 + $0x8] sm:$0xff]
        %v4300 = vld [vmem:[%s4297 + $0x10] sm:$0xff]
        %v4301 = vld [vmem:[%s4297 + $0x18] sm:$0xff]
        %4302 = vmatprep.subr.bf16.mxu0 %v1840
        %4303 = vmatpush1.bf16.msra.mxu0 %v1839
        %4304 = vmatprep.subr.bf16.mxu0 %v1844
        %4305 = vmatpush1.bf16.msra.mxu0 %v1843
        %4306 = vmatprep.subr.bf16.mxu0 %v1848
        %4307 = vmatpush1.bf16.msra.mxu0 %v1847
        %4308 = vmatprep.subr.bf16.mxu0 %v1852
        %4309 = vmatpush1.bf16.msra.mxu0 %v1851
        %4310 = vmatprep.subr.bf16.mxu0 %v1856
        %4311 = vmatpush1.bf16.msra.mxu0 %v1855
        %4312 = vmatprep.subr.bf16.mxu0 %v1860
        %4313 = vmatpush1.bf16.msra.mxu0 %v1859
        %4314 = vmatprep.subr.bf16.mxu0 %v1864
        %4315 = vmatpush1.bf16.msra.mxu0 %v1863
        %4316 = vmatprep.subr.bf16.mxu0 %v1868
        %4317 = vmatpush1.bf16.msra.mxu0 %v1867
        %4318 = vmatprep.subr.bf16.mxu0 0
        %4319 = vmatpush1.bf16.msra.mxu0 0
        %4320 = vmatprep.subr.bf16.mxu0 0
        %4321 = vmatpush1.bf16.msra.mxu0 0
        %4322 = vmatprep.subr.bf16.mxu0 0
        %4323 = vmatpush1.bf16.msra.mxu0 0
        %4324 = vmatprep.subr.bf16.mxu0 0
        %4325 = vmatpush1.bf16.msra.mxu0 0
        %4326 = vmatprep.subr.bf16.mxu0 0
        %4327 = vmatpush1.bf16.msra.mxu0 0
        %4328 = vmatprep.subr.bf16.mxu0 0
        %4329 = vmatpush1.bf16.msra.mxu0 0
        %4330 = vmatprep.subr.bf16.mxu0 0
        %4331 = vmatpush1.bf16.msra.mxu0 0
        %4332 = vmatprep.subr.bf16.mxu0 0
        %4333 = vmatpush1.bf16.msra.mxu0 0
        %4334 = vmatprep.mubr.bf16.mxu0 0
        %4335 = vmatmul.mubr.bf16.gmra.mrb[0].mxu0 %v4292
        %v4336 = vpop.f32.mrb[0].mxu0
        %v4337 = vadd.f32 0.0, %v4336
        %v4338 = vpop.f32.mrb[0].mxu0
        %v4339 = vadd.f32 0.0, %v4338
        %v4340 = vpop.f32.mrb[0].mxu0
        %v4341 = vadd.f32 0.0, %v4340
        %v4342 = vpop.f32.mrb[0].mxu0
        %v4343 = vadd.f32 0.0, %v4342
        %4344 = vdwg.mxu0
        %4345 = vmatprep.subr.bf16.mxu0 %v1842
        %4346 = vmatpush1.bf16.msra.mxu0 %v1841
        %4347 = vmatprep.subr.bf16.mxu0 %v1846
        %4348 = vmatpush1.bf16.msra.mxu0 %v1845
        %4349 = vmatprep.subr.bf16.mxu0 %v1850
        %4350 = vmatpush1.bf16.msra.mxu0 %v1849
        %4351 = vmatprep.subr.bf16.mxu0 %v1854
        %4352 = vmatpush1.bf16.msra.mxu0 %v1853
        %4353 = vmatprep.subr.bf16.mxu0 %v1858
        %4354 = vmatpush1.bf16.msra.mxu0 %v1857
        %4355 = vmatprep.subr.bf16.mxu0 %v1862
        %4356 = vmatpush1.bf16.msra.mxu0 %v1861
        %4357 = vmatprep.subr.bf16.mxu0 %v1866
        %4358 = vmatpush1.bf16.msra.mxu0 %v1865
        %4359 = vmatprep.subr.bf16.mxu0 %v1870
        %4360 = vmatpush1.bf16.msra.mxu0 %v1869
        %4361 = vmatprep.subr.bf16.mxu0 0
        %4362 = vmatpush1.bf16.msra.mxu0 0
        %4363 = vmatprep.subr.bf16.mxu0 0
        %4364 = vmatpush1.bf16.msra.mxu0 0
        %4365 = vmatprep.subr.bf16.mxu0 0
        %4366 = vmatpush1.bf16.msra.mxu0 0
        %4367 = vmatprep.subr.bf16.mxu0 0
        %4368 = vmatpush1.bf16.msra.mxu0 0
        %4369 = vmatprep.subr.bf16.mxu0 0
        %4370 = vmatpush1.bf16.msra.mxu0 0
        %4371 = vmatprep.subr.bf16.mxu0 0
        %4372 = vmatpush1.bf16.msra.mxu0 0
        %4373 = vmatprep.subr.bf16.mxu0 0
        %4374 = vmatpush1.bf16.msra.mxu0 0
        %4375 = vmatprep.subr.bf16.mxu0 0
        %4376 = vmatpush1.bf16.msra.mxu0 0
        %4377 = vmatprep.mubr.bf16.mxu0 0
        %4378 = vmatmul.mubr.bf16.gmra.mrb[0].mxu0 %v4292
        %v4379 = vpop.f32.mrb[0].mxu0
        %v4380 = vadd.f32 0.0, %v4379
        %v4381 = vpop.f32.mrb[0].mxu0
        %v4382 = vadd.f32 0.0, %v4381
        %v4383 = vpop.f32.mrb[0].mxu0
        %v4384 = vadd.f32 0.0, %v4383
        %v4385 = vpop.f32.mrb[0].mxu0
        %v4386 = vadd.f32 0.0, %v4385
        %4387 = vdwg.mxu0
        %v4388 = vunpack.c.l.bf16 %v4298
        %v4389 = vunpack.c.l.bf16 %v4299
        %v4390 = vunpack.c.l.bf16 %v4300
        %v4391 = vunpack.c.l.bf16 %v4301
        %v4392 = vunpack.c.h.bf16 %v4298
        %v4393 = vunpack.c.h.bf16 %v4299
        %v4394 = vunpack.c.h.bf16 %v4300
        %v4395 = vunpack.c.h.bf16 %v4301
        %v4396 = vadd.f32 %v4388, %v4337
        %v4397 = vadd.f32 %v4389, %v4339
        %v4398 = vadd.f32 %v4390, %v4380
        %v4399 = vadd.f32 %v4391, %v4382
        %v4400 = vadd.f32 %v4392, %v4341
        %v4401 = vadd.f32 %v4393, %v4343
        %v4402 = vadd.f32 %v4394, %v4384
        %v4403 = vadd.f32 %v4395, %v4386
        %v4404 = vxor.u32 %v4396, 2147483648
        %v4405 = vxor.u32 %v4400, 2147483648
        %v4406 = vmul.f32 %v4404, 1.442695
        %v4407 = vpow.pop %v4406
        %v4408 = vmul.f32 %v4405, 1.442695
        %v4409 = vpow.pop %v4408
        %v4410 = vadd.f32 %v4407, 1.0
        %v4411 = vadd.f32 %v4409, 1.0
        %v4412 = vrcp.pop %v4410
        %v4413 = vmul.f32 1.0, %v4412
        %v4414 = vrcp.pop %v4411
        %v4415 = vmul.f32 1.0, %v4414
        %v4416 = vxor.u32 %v4397, 2147483648
        %v4417 = vxor.u32 %v4401, 2147483648
        %v4418 = vmul.f32 %v4416, 1.442695
        %v4419 = vpow.pop %v4418
        %v4420 = vmul.f32 %v4417, 1.442695
        %v4421 = vpow.pop %v4420
        %v4422 = vadd.f32 %v4419, 1.0
        %v4423 = vadd.f32 %v4421, 1.0
        %v4424 = vrcp.pop %v4422
        %v4425 = vmul.f32 1.0, %v4424
        %v4426 = vrcp.pop %v4423
        %v4427 = vmul.f32 1.0, %v4426
        %v4428 = vtanh.pop %v4398
        %v4429 = vtanh.pop %v4402
        %v4430 = vxor.u32 %v4399, 2147483648
        %v4431 = vxor.u32 %v4403, 2147483648
        %v4432 = vmul.f32 %v4430, 1.442695
        %v4433 = vpow.pop %v4432
        %v4434 = vmul.f32 %v4431, 1.442695
        %v4435 = vpow.pop %v4434
        %v4436 = vadd.f32 %v4433, 1.0
        %v4437 = vadd.f32 %v4435, 1.0
        %v4438 = vrcp.pop %v4436
        %v4439 = vmul.f32 1.0, %v4438
        %v4440 = vrcp.pop %v4437
        %v4441 = vmul.f32 1.0, %v4440
        %v4442 = vmul.f32 %v4425, %v4286
        %v4443 = vmul.f32 %v4427, %v4287
        %v4444 = vmul.f32 %v4413, %v4428
        %v4445 = vmul.f32 %v4415, %v4429
        %v4446 = vadd.f32 %v4442, %v4444
        %v4447 = vadd.f32 %v4443, %v4445
        %v4448 = vtanh.pop %v4446
        %v4449 = vtanh.pop %v4447
        %v4450 = vmul.f32 %v4439, %v4448
        %v4451 = vmul.f32 %v4441, %v4449
        %v4452 = vpack.c.bf16 %v4451, %v4450
        %s4453 = scalar_lea.vmem [#allocation3], 120
        %4454 = vst [vmem:[%s4453] sm:$0xff] %v4452
        %s4455 = smul.u32 16, 4
        %s4456 = smul.addr %s4455, 8
        %s4457 = scalar_lea.vmem [#allocation2], %s4456
        %v4458 = vld [vmem:[%s4457] sm:$0xff]
        %v4459 = vld [vmem:[%s4457 + $0x8] sm:$0xff]
        %v4460 = vld [vmem:[%s4457 + $0x10] sm:$0xff]
        %v4461 = vld [vmem:[%s4457 + $0x18] sm:$0xff]
        %4462 = vmatprep.subr.bf16.mxu0 %v1840
        %4463 = vmatpush1.bf16.msra.mxu0 %v1839
        %4464 = vmatprep.subr.bf16.mxu0 %v1844
        %4465 = vmatpush1.bf16.msra.mxu0 %v1843
        %4466 = vmatprep.subr.bf16.mxu0 %v1848
        %4467 = vmatpush1.bf16.msra.mxu0 %v1847
        %4468 = vmatprep.subr.bf16.mxu0 %v1852
        %4469 = vmatpush1.bf16.msra.mxu0 %v1851
        %4470 = vmatprep.subr.bf16.mxu0 %v1856
        %4471 = vmatpush1.bf16.msra.mxu0 %v1855
        %4472 = vmatprep.subr.bf16.mxu0 %v1860
        %4473 = vmatpush1.bf16.msra.mxu0 %v1859
        %4474 = vmatprep.subr.bf16.mxu0 %v1864
        %4475 = vmatpush1.bf16.msra.mxu0 %v1863
        %4476 = vmatprep.subr.bf16.mxu0 %v1868
        %4477 = vmatpush1.bf16.msra.mxu0 %v1867
        %4478 = vmatprep.subr.bf16.mxu0 0
        %4479 = vmatpush1.bf16.msra.mxu0 0
        %4480 = vmatprep.subr.bf16.mxu0 0
        %4481 = vmatpush1.bf16.msra.mxu0 0
        %4482 = vmatprep.subr.bf16.mxu0 0
        %4483 = vmatpush1.bf16.msra.mxu0 0
        %4484 = vmatprep.subr.bf16.mxu0 0
        %4485 = vmatpush1.bf16.msra.mxu0 0
        %4486 = vmatprep.subr.bf16.mxu0 0
        %4487 = vmatpush1.bf16.msra.mxu0 0
        %4488 = vmatprep.subr.bf16.mxu0 0
        %4489 = vmatpush1.bf16.msra.mxu0 0
        %4490 = vmatprep.subr.bf16.mxu0 0
        %4491 = vmatpush1.bf16.msra.mxu0 0
        %4492 = vmatprep.subr.bf16.mxu0 0
        %4493 = vmatpush1.bf16.msra.mxu0 0
        %4494 = vmatprep.mubr.bf16.mxu0 0
        %4495 = vmatmul.mubr.bf16.gmra.mrb[0].mxu0 %v4452
        %v4496 = vpop.f32.mrb[0].mxu0
        %v4497 = vadd.f32 0.0, %v4496
        %v4498 = vpop.f32.mrb[0].mxu0
        %v4499 = vadd.f32 0.0, %v4498
        %v4500 = vpop.f32.mrb[0].mxu0
        %v4501 = vadd.f32 0.0, %v4500
        %v4502 = vpop.f32.mrb[0].mxu0
        %v4503 = vadd.f32 0.0, %v4502
        %4504 = vdwg.mxu0
        %4505 = vmatprep.subr.bf16.mxu0 %v1842
        %4506 = vmatpush1.bf16.msra.mxu0 %v1841
        %4507 = vmatprep.subr.bf16.mxu0 %v1846
        %4508 = vmatpush1.bf16.msra.mxu0 %v1845
        %4509 = vmatprep.subr.bf16.mxu0 %v1850
        %4510 = vmatpush1.bf16.msra.mxu0 %v1849
        %4511 = vmatprep.subr.bf16.mxu0 %v1854
        %4512 = vmatpush1.bf16.msra.mxu0 %v1853
        %4513 = vmatprep.subr.bf16.mxu0 %v1858
        %4514 = vmatpush1.bf16.msra.mxu0 %v1857
        %4515 = vmatprep.subr.bf16.mxu0 %v1862
        %4516 = vmatpush1.bf16.msra.mxu0 %v1861
        %4517 = vmatprep.subr.bf16.mxu0 %v1866
        %4518 = vmatpush1.bf16.msra.mxu0 %v1865
        %4519 = vmatprep.subr.bf16.mxu0 %v1870
        %4520 = vmatpush1.bf16.msra.mxu0 %v1869
        %4521 = vmatprep.subr.bf16.mxu0 0
        %4522 = vmatpush1.bf16.msra.mxu0 0
        %4523 = vmatprep.subr.bf16.mxu0 0
        %4524 = vmatpush1.bf16.msra.mxu0 0
        %4525 = vmatprep.subr.bf16.mxu0 0
        %4526 = vmatpush1.bf16.msra.mxu0 0
        %4527 = vmatprep.subr.bf16.mxu0 0
        %4528 = vmatpush1.bf16.msra.mxu0 0
        %4529 = vmatprep.subr.bf16.mxu0 0
        %4530 = vmatpush1.bf16.msra.mxu0 0
        %4531 = vmatprep.subr.bf16.mxu0 0
        %4532 = vmatpush1.bf16.msra.mxu0 0
        %4533 = vmatprep.subr.bf16.mxu0 0
        %4534 = vmatpush1.bf16.msra.mxu0 0
        %4535 = vmatprep.subr.bf16.mxu0 0
        %4536 = vmatpush1.bf16.msra.mxu0 0
        %4537 = vmatprep.mubr.bf16.mxu0 0
        %4538 = vmatmul.mubr.bf16.gmra.mrb[0].mxu0 %v4452
        %v4539 = vpop.f32.mrb[0].mxu0
        %v4540 = vadd.f32 0.0, %v4539
        %v4541 = vpop.f32.mrb[0].mxu0
        %v4542 = vadd.f32 0.0, %v4541
        %v4543 = vpop.f32.mrb[0].mxu0
        %v4544 = vadd.f32 0.0, %v4543
        %v4545 = vpop.f32.mrb[0].mxu0
        %v4546 = vadd.f32 0.0, %v4545
        %4547 = vdwg.mxu0
        %v4548 = vunpack.c.l.bf16 %v4458
        %v4549 = vunpack.c.l.bf16 %v4459
        %v4550 = vunpack.c.l.bf16 %v4460
        %v4551 = vunpack.c.l.bf16 %v4461
        %v4552 = vunpack.c.h.bf16 %v4458
        %v4553 = vunpack.c.h.bf16 %v4459
        %v4554 = vunpack.c.h.bf16 %v4460
        %v4555 = vunpack.c.h.bf16 %v4461
        %v4556 = vadd.f32 %v4548, %v4497
        %v4557 = vadd.f32 %v4549, %v4499
        %v4558 = vadd.f32 %v4550, %v4540
        %v4559 = vadd.f32 %v4551, %v4542
        %v4560 = vadd.f32 %v4552, %v4501
        %v4561 = vadd.f32 %v4553, %v4503
        %v4562 = vadd.f32 %v4554, %v4544
        %v4563 = vadd.f32 %v4555, %v4546
        %v4564 = vxor.u32 %v4556, 2147483648
        %v4565 = vxor.u32 %v4560, 2147483648
        %v4566 = vmul.f32 %v4564, 1.442695
        %v4567 = vpow.pop %v4566
        %v4568 = vmul.f32 %v4565, 1.442695
        %v4569 = vpow.pop %v4568
        %v4570 = vadd.f32 %v4567, 1.0
        %v4571 = vadd.f32 %v4569, 1.0
        %v4572 = vrcp.pop %v4570
        %v4573 = vmul.f32 1.0, %v4572
        %v4574 = vrcp.pop %v4571
        %v4575 = vmul.f32 1.0, %v4574
        %v4576 = vxor.u32 %v4557, 2147483648
        %v4577 = vxor.u32 %v4561, 2147483648
        %v4578 = vmul.f32 %v4576, 1.442695
        %v4579 = vpow.pop %v4578
        %v4580 = vmul.f32 %v4577, 1.442695
        %v4581 = vpow.pop %v4580
        %v4582 = vadd.f32 %v4579, 1.0
        %v4583 = vadd.f32 %v4581, 1.0
        %v4584 = vrcp.pop %v4582
        %v4585 = vmul.f32 1.0, %v4584
        %v4586 = vrcp.pop %v4583
        %v4587 = vmul.f32 1.0, %v4586
        %v4588 = vtanh.pop %v4558
        %v4589 = vtanh.pop %v4562
        %v4590 = vxor.u32 %v4559, 2147483648
        %v4591 = vxor.u32 %v4563, 2147483648
        %v4592 = vmul.f32 %v4590, 1.442695
        %v4593 = vpow.pop %v4592
        %v4594 = vmul.f32 %v4591, 1.442695
        %v4595 = vpow.pop %v4594
        %v4596 = vadd.f32 %v4593, 1.0
        %v4597 = vadd.f32 %v4595, 1.0
        %v4598 = vrcp.pop %v4596
        %v4599 = vmul.f32 1.0, %v4598
        %v4600 = vrcp.pop %v4597
        %v4601 = vmul.f32 1.0, %v4600
        %v4602 = vmul.f32 %v4585, %v4446
        %v4603 = vmul.f32 %v4587, %v4447
        %v4604 = vmul.f32 %v4573, %v4588
        %v4605 = vmul.f32 %v4575, %v4589
        %v4606 = vadd.f32 %v4602, %v4604
        %v4607 = vadd.f32 %v4603, %v4605
        %v4608 = vtanh.pop %v4606
        %v4609 = vtanh.pop %v4607
        %v4610 = vmul.f32 %v4599, %v4608
        %v4611 = vmul.f32 %v4601, %v4609
        %v4612 = vpack.c.bf16 %v4611, %v4610
        %s4613 = scalar_lea.vmem [#allocation3], 128
        %4614 = vst [vmem:[%s4613] sm:$0xff] %v4612
        %s4615 = smul.u32 17, 4
        %s4616 = smul.addr %s4615, 8
        %s4617 = scalar_lea.vmem [#allocation2], %s4616
        %v4618 = vld [vmem:[%s4617] sm:$0xff]
        %v4619 = vld [vmem:[%s4617 + $0x8] sm:$0xff]
        %v4620 = vld [vmem:[%s4617 + $0x10] sm:$0xff]
        %v4621 = vld [vmem:[%s4617 + $0x18] sm:$0xff]
        %4622 = vmatprep.subr.bf16.mxu0 %v1840
        %4623 = vmatpush1.bf16.msra.mxu0 %v1839
        %4624 = vmatprep.subr.bf16.mxu0 %v1844
        %4625 = vmatpush1.bf16.msra.mxu0 %v1843
        %4626 = vmatprep.subr.bf16.mxu0 %v1848
        %4627 = vmatpush1.bf16.msra.mxu0 %v1847
        %4628 = vmatprep.subr.bf16.mxu0 %v1852
        %4629 = vmatpush1.bf16.msra.mxu0 %v1851
        %4630 = vmatprep.subr.bf16.mxu0 %v1856
        %4631 = vmatpush1.bf16.msra.mxu0 %v1855
        %4632 = vmatprep.subr.bf16.mxu0 %v1860
        %4633 = vmatpush1.bf16.msra.mxu0 %v1859
        %4634 = vmatprep.subr.bf16.mxu0 %v1864
        %4635 = vmatpush1.bf16.msra.mxu0 %v1863
        %4636 = vmatprep.subr.bf16.mxu0 %v1868
        %4637 = vmatpush1.bf16.msra.mxu0 %v1867
        %4638 = vmatprep.subr.bf16.mxu0 0
        %4639 = vmatpush1.bf16.msra.mxu0 0
        %4640 = vmatprep.subr.bf16.mxu0 0
        %4641 = vmatpush1.bf16.msra.mxu0 0
        %4642 = vmatprep.subr.bf16.mxu0 0
        %4643 = vmatpush1.bf16.msra.mxu0 0
        %4644 = vmatprep.subr.bf16.mxu0 0
        %4645 = vmatpush1.bf16.msra.mxu0 0
        %4646 = vmatprep.subr.bf16.mxu0 0
        %4647 = vmatpush1.bf16.msra.mxu0 0
        %4648 = vmatprep.subr.bf16.mxu0 0
        %4649 = vmatpush1.bf16.msra.mxu0 0
        %4650 = vmatprep.subr.bf16.mxu0 0
        %4651 = vmatpush1.bf16.msra.mxu0 0
        %4652 = vmatprep.subr.bf16.mxu0 0
        %4653 = vmatpush1.bf16.msra.mxu0 0
        %4654 = vmatprep.mubr.bf16.mxu0 0
        %4655 = vmatmul.mubr.bf16.gmra.mrb[0].mxu0 %v4612
        %v4656 = vpop.f32.mrb[0].mxu0
        %v4657 = vadd.f32 0.0, %v4656
        %v4658 = vpop.f32.mrb[0].mxu0
        %v4659 = vadd.f32 0.0, %v4658
        %v4660 = vpop.f32.mrb[0].mxu0
        %v4661 = vadd.f32 0.0, %v4660
        %v4662 = vpop.f32.mrb[0].mxu0
        %v4663 = vadd.f32 0.0, %v4662
        %4664 = vdwg.mxu0
        %4665 = vmatprep.subr.bf16.mxu0 %v1842
        %4666 = vmatpush1.bf16.msra.mxu0 %v1841
        %4667 = vmatprep.subr.bf16.mxu0 %v1846
        %4668 = vmatpush1.bf16.msra.mxu0 %v1845
        %4669 = vmatprep.subr.bf16.mxu0 %v1850
        %4670 = vmatpush1.bf16.msra.mxu0 %v1849
        %4671 = vmatprep.subr.bf16.mxu0 %v1854
        %4672 = vmatpush1.bf16.msra.mxu0 %v1853
        %4673 = vmatprep.subr.bf16.mxu0 %v1858
        %4674 = vmatpush1.bf16.msra.mxu0 %v1857
        %4675 = vmatprep.subr.bf16.mxu0 %v1862
        %4676 = vmatpush1.bf16.msra.mxu0 %v1861
        %4677 = vmatprep.subr.bf16.mxu0 %v1866
        %4678 = vmatpush1.bf16.msra.mxu0 %v1865
        %4679 = vmatprep.subr.bf16.mxu0 %v1870
        %4680 = vmatpush1.bf16.msra.mxu0 %v1869
        %4681 = vmatprep.subr.bf16.mxu0 0
        %4682 = vmatpush1.bf16.msra.mxu0 0
        %4683 = vmatprep.subr.bf16.mxu0 0
        %4684 = vmatpush1.bf16.msra.mxu0 0
        %4685 = vmatprep.subr.bf16.mxu0 0
        %4686 = vmatpush1.bf16.msra.mxu0 0
        %4687 = vmatprep.subr.bf16.mxu0 0
        %4688 = vmatpush1.bf16.msra.mxu0 0
        %4689 = vmatprep.subr.bf16.mxu0 0
        %4690 = vmatpush1.bf16.msra.mxu0 0
        %4691 = vmatprep.subr.bf16.mxu0 0
        %4692 = vmatpush1.bf16.msra.mxu0 0
        %4693 = vmatprep.subr.bf16.mxu0 0
        %4694 = vmatpush1.bf16.msra.mxu0 0
        %4695 = vmatprep.subr.bf16.mxu0 0
        %4696 = vmatpush1.bf16.msra.mxu0 0
        %4697 = vmatprep.mubr.bf16.mxu0 0
        %4698 = vmatmul.mubr.bf16.gmra.mrb[0].mxu0 %v4612
        %v4699 = vpop.f32.mrb[0].mxu0
        %v4700 = vadd.f32 0.0, %v4699
        %v4701 = vpop.f32.mrb[0].mxu0
        %v4702 = vadd.f32 0.0, %v4701
        %v4703 = vpop.f32.mrb[0].mxu0
        %v4704 = vadd.f32 0.0, %v4703
        %v4705 = vpop.f32.mrb[0].mxu0
        %v4706 = vadd.f32 0.0, %v4705
        %4707 = vdwg.mxu0
        %v4708 = vunpack.c.l.bf16 %v4618
        %v4709 = vunpack.c.l.bf16 %v4619
        %v4710 = vunpack.c.l.bf16 %v4620
        %v4711 = vunpack.c.l.bf16 %v4621
        %v4712 = vunpack.c.h.bf16 %v4618
        %v4713 = vunpack.c.h.bf16 %v4619
        %v4714 = vunpack.c.h.bf16 %v4620
        %v4715 = vunpack.c.h.bf16 %v4621
        %v4716 = vadd.f32 %v4708, %v4657
        %v4717 = vadd.f32 %v4709, %v4659
        %v4718 = vadd.f32 %v4710, %v4700
        %v4719 = vadd.f32 %v4711, %v4702
        %v4720 = vadd.f32 %v4712, %v4661
        %v4721 = vadd.f32 %v4713, %v4663
        %v4722 = vadd.f32 %v4714, %v4704
        %v4723 = vadd.f32 %v4715, %v4706
        %v4724 = vxor.u32 %v4716, 2147483648
        %v4725 = vxor.u32 %v4720, 2147483648
        %v4726 = vmul.f32 %v4724, 1.442695
        %v4727 = vpow.pop %v4726
        %v4728 = vmul.f32 %v4725, 1.442695
        %v4729 = vpow.pop %v4728
        %v4730 = vadd.f32 %v4727, 1.0
        %v4731 = vadd.f32 %v4729, 1.0
        %v4732 = vrcp.pop %v4730
        %v4733 = vmul.f32 1.0, %v4732
        %v4734 = vrcp.pop %v4731
        %v4735 = vmul.f32 1.0, %v4734
        %v4736 = vxor.u32 %v4717, 2147483648
        %v4737 = vxor.u32 %v4721, 2147483648
        %v4738 = vmul.f32 %v4736, 1.442695
        %v4739 = vpow.pop %v4738
        %v4740 = vmul.f32 %v4737, 1.442695
        %v4741 = vpow.pop %v4740
        %v4742 = vadd.f32 %v4739, 1.0
        %v4743 = vadd.f32 %v4741, 1.0
        %v4744 = vrcp.pop %v4742
        %v4745 = vmul.f32 1.0, %v4744
        %v4746 = vrcp.pop %v4743
        %v4747 = vmul.f32 1.0, %v4746
        %v4748 = vtanh.pop %v4718
        %v4749 = vtanh.pop %v4722
        %v4750 = vxor.u32 %v4719, 2147483648
        %v4751 = vxor.u32 %v4723, 2147483648
        %v4752 = vmul.f32 %v4750, 1.442695
        %v4753 = vpow.pop %v4752
        %v4754 = vmul.f32 %v4751, 1.442695
        %v4755 = vpow.pop %v4754
        %v4756 = vadd.f32 %v4753, 1.0
        %v4757 = vadd.f32 %v4755, 1.0
        %v4758 = vrcp.pop %v4756
        %v4759 = vmul.f32 1.0, %v4758
        %v4760 = vrcp.pop %v4757
        %v4761 = vmul.f32 1.0, %v4760
        %v4762 = vmul.f32 %v4745, %v4606
        %v4763 = vmul.f32 %v4747, %v4607
        %v4764 = vmul.f32 %v4733, %v4748
        %v4765 = vmul.f32 %v4735, %v4749
        %v4766 = vadd.f32 %v4762, %v4764
        %v4767 = vadd.f32 %v4763, %v4765
        %v4768 = vtanh.pop %v4766
        %v4769 = vtanh.pop %v4767
        %v4770 = vmul.f32 %v4759, %v4768
        %v4771 = vmul.f32 %v4761, %v4769
        %v4772 = vpack.c.bf16 %v4771, %v4770
        %s4773 = scalar_lea.vmem [#allocation3], 136
        %4774 = vst [vmem:[%s4773] sm:$0xff] %v4772
        %s4775 = smul.u32 18, 4
        %s4776 = smul.addr %s4775, 8
        %s4777 = scalar_lea.vmem [#allocation2], %s4776
        %v4778 = vld [vmem:[%s4777] sm:$0xff]
        %v4779 = vld [vmem:[%s4777 + $0x8] sm:$0xff]
        %v4780 = vld [vmem:[%s4777 + $0x10] sm:$0xff]
        %v4781 = vld [vmem:[%s4777 + $0x18] sm:$0xff]
        %4782 = vmatprep.subr.bf16.mxu0 %v1840
        %4783 = vmatpush1.bf16.msra.mxu0 %v1839
        %4784 = vmatprep.subr.bf16.mxu0 %v1844
        %4785 = vmatpush1.bf16.msra.mxu0 %v1843
        %4786 = vmatprep.subr.bf16.mxu0 %v1848
        %4787 = vmatpush1.bf16.msra.mxu0 %v1847
        %4788 = vmatprep.subr.bf16.mxu0 %v1852
        %4789 = vmatpush1.bf16.msra.mxu0 %v1851
        %4790 = vmatprep.subr.bf16.mxu0 %v1856
        %4791 = vmatpush1.bf16.msra.mxu0 %v1855
        %4792 = vmatprep.subr.bf16.mxu0 %v1860
        %4793 = vmatpush1.bf16.msra.mxu0 %v1859
        %4794 = vmatprep.subr.bf16.mxu0 %v1864
        %4795 = vmatpush1.bf16.msra.mxu0 %v1863
        %4796 = vmatprep.subr.bf16.mxu0 %v1868
        %4797 = vmatpush1.bf16.msra.mxu0 %v1867
        %4798 = vmatprep.subr.bf16.mxu0 0
        %4799 = vmatpush1.bf16.msra.mxu0 0
        %4800 = vmatprep.subr.bf16.mxu0 0
        %4801 = vmatpush1.bf16.msra.mxu0 0
        %4802 = vmatprep.subr.bf16.mxu0 0
        %4803 = vmatpush1.bf16.msra.mxu0 0
        %4804 = vmatprep.subr.bf16.mxu0 0
        %4805 = vmatpush1.bf16.msra.mxu0 0
        %4806 = vmatprep.subr.bf16.mxu0 0
        %4807 = vmatpush1.bf16.msra.mxu0 0
        %4808 = vmatprep.subr.bf16.mxu0 0
        %4809 = vmatpush1.bf16.msra.mxu0 0
        %4810 = vmatprep.subr.bf16.mxu0 0
        %4811 = vmatpush1.bf16.msra.mxu0 0
        %4812 = vmatprep.subr.bf16.mxu0 0
        %4813 = vmatpush1.bf16.msra.mxu0 0
        %4814 = vmatprep.mubr.bf16.mxu0 0
        %4815 = vmatmul.mubr.bf16.gmra.mrb[0].mxu0 %v4772
        %v4816 = vpop.f32.mrb[0].mxu0
        %v4817 = vadd.f32 0.0, %v4816
        %v4818 = vpop.f32.mrb[0].mxu0
        %v4819 = vadd.f32 0.0, %v4818
        %v4820 = vpop.f32.mrb[0].mxu0
        %v4821 = vadd.f32 0.0, %v4820
        %v4822 = vpop.f32.mrb[0].mxu0
        %v4823 = vadd.f32 0.0, %v4822
        %4824 = vdwg.mxu0
        %4825 = vmatprep.subr.bf16.mxu0 %v1842
        %4826 = vmatpush1.bf16.msra.mxu0 %v1841
        %4827 = vmatprep.subr.bf16.mxu0 %v1846
        %4828 = vmatpush1.bf16.msra.mxu0 %v1845
        %4829 = vmatprep.subr.bf16.mxu0 %v1850
        %4830 = vmatpush1.bf16.msra.mxu0 %v1849
        %4831 = vmatprep.subr.bf16.mxu0 %v1854
        %4832 = vmatpush1.bf16.msra.mxu0 %v1853
        %4833 = vmatprep.subr.bf16.mxu0 %v1858
        %4834 = vmatpush1.bf16.msra.mxu0 %v1857
        %4835 = vmatprep.subr.bf16.mxu0 %v1862
        %4836 = vmatpush1.bf16.msra.mxu0 %v1861
        %4837 = vmatprep.subr.bf16.mxu0 %v1866
        %4838 = vmatpush1.bf16.msra.mxu0 %v1865
        %4839 = vmatprep.subr.bf16.mxu0 %v1870
        %4840 = vmatpush1.bf16.msra.mxu0 %v1869
        %4841 = vmatprep.subr.bf16.mxu0 0
        %4842 = vmatpush1.bf16.msra.mxu0 0
        %4843 = vmatprep.subr.bf16.mxu0 0
        %4844 = vmatpush1.bf16.msra.mxu0 0
        %4845 = vmatprep.subr.bf16.mxu0 0
        %4846 = vmatpush1.bf16.msra.mxu0 0
        %4847 = vmatprep.subr.bf16.mxu0 0
        %4848 = vmatpush1.bf16.msra.mxu0 0
        %4849 = vmatprep.subr.bf16.mxu0 0
        %4850 = vmatpush1.bf16.msra.mxu0 0
        %4851 = vmatprep.subr.bf16.mxu0 0
        %4852 = vmatpush1.bf16.msra.mxu0 0
        %4853 = vmatprep.subr.bf16.mxu0 0
        %4854 = vmatpush1.bf16.msra.mxu0 0
        %4855 = vmatprep.subr.bf16.mxu0 0
        %4856 = vmatpush1.bf16.msra.mxu0 0
        %4857 = vmatprep.mubr.bf16.mxu0 0
        %4858 = vmatmul.mubr.bf16.gmra.mrb[0].mxu0 %v4772
        %v4859 = vpop.f32.mrb[0].mxu0
        %v4860 = vadd.f32 0.0, %v4859
        %v4861 = vpop.f32.mrb[0].mxu0
        %v4862 = vadd.f32 0.0, %v4861
        %v4863 = vpop.f32.mrb[0].mxu0
        %v4864 = vadd.f32 0.0, %v4863
        %v4865 = vpop.f32.mrb[0].mxu0
        %v4866 = vadd.f32 0.0, %v4865
        %4867 = vdwg.mxu0
        %v4868 = vunpack.c.l.bf16 %v4778
        %v4869 = vunpack.c.l.bf16 %v4779
        %v4870 = vunpack.c.l.bf16 %v4780
        %v4871 = vunpack.c.l.bf16 %v4781
        %v4872 = vunpack.c.h.bf16 %v4778
        %v4873 = vunpack.c.h.bf16 %v4779
        %v4874 = vunpack.c.h.bf16 %v4780
        %v4875 = vunpack.c.h.bf16 %v4781
        %v4876 = vadd.f32 %v4868, %v4817
        %v4877 = vadd.f32 %v4869, %v4819
        %v4878 = vadd.f32 %v4870, %v4860
        %v4879 = vadd.f32 %v4871, %v4862
        %v4880 = vadd.f32 %v4872, %v4821
        %v4881 = vadd.f32 %v4873, %v4823
        %v4882 = vadd.f32 %v4874, %v4864
        %v4883 = vadd.f32 %v4875, %v4866
        %v4884 = vxor.u32 %v4876, 2147483648
        %v4885 = vxor.u32 %v4880, 2147483648
        %v4886 = vmul.f32 %v4884, 1.442695
        %v4887 = vpow.pop %v4886
        %v4888 = vmul.f32 %v4885, 1.442695
        %v4889 = vpow.pop %v4888
        %v4890 = vadd.f32 %v4887, 1.0
        %v4891 = vadd.f32 %v4889, 1.0
        %v4892 = vrcp.pop %v4890
        %v4893 = vmul.f32 1.0, %v4892
        %v4894 = vrcp.pop %v4891
        %v4895 = vmul.f32 1.0, %v4894
        %v4896 = vxor.u32 %v4877, 2147483648
        %v4897 = vxor.u32 %v4881, 2147483648
        %v4898 = vmul.f32 %v4896, 1.442695
        %v4899 = vpow.pop %v4898
        %v4900 = vmul.f32 %v4897, 1.442695
        %v4901 = vpow.pop %v4900
        %v4902 = vadd.f32 %v4899, 1.0
        %v4903 = vadd.f32 %v4901, 1.0
        %v4904 = vrcp.pop %v4902
        %v4905 = vmul.f32 1.0, %v4904
        %v4906 = vrcp.pop %v4903
        %v4907 = vmul.f32 1.0, %v4906
        %v4908 = vtanh.pop %v4878
        %v4909 = vtanh.pop %v4882
        %v4910 = vxor.u32 %v4879, 2147483648
        %v4911 = vxor.u32 %v4883, 2147483648
        %v4912 = vmul.f32 %v4910, 1.442695
        %v4913 = vpow.pop %v4912
        %v4914 = vmul.f32 %v4911, 1.442695
        %v4915 = vpow.pop %v4914
        %v4916 = vadd.f32 %v4913, 1.0
        %v4917 = vadd.f32 %v4915, 1.0
        %v4918 = vrcp.pop %v4916
        %v4919 = vmul.f32 1.0, %v4918
        %v4920 = vrcp.pop %v4917
        %v4921 = vmul.f32 1.0, %v4920
        %v4922 = vmul.f32 %v4905, %v4766
        %v4923 = vmul.f32 %v4907, %v4767
        %v4924 = vmul.f32 %v4893, %v4908
        %v4925 = vmul.f32 %v4895, %v4909
        %v4926 = vadd.f32 %v4922, %v4924
        %v4927 = vadd.f32 %v4923, %v4925
        %v4928 = vtanh.pop %v4926
        %v4929 = vtanh.pop %v4927
        %v4930 = vmul.f32 %v4919, %v4928
        %v4931 = vmul.f32 %v4921, %v4929
        %v4932 = vpack.c.bf16 %v4931, %v4930
        %s4933 = scalar_lea.vmem [#allocation3], 144
        %4934 = vst [vmem:[%s4933] sm:$0xff] %v4932
        %s4935 = smul.u32 19, 4
        %s4936 = smul.addr %s4935, 8
        %s4937 = scalar_lea.vmem [#allocation2], %s4936
        %v4938 = vld [vmem:[%s4937] sm:$0xff]
        %v4939 = vld [vmem:[%s4937 + $0x8] sm:$0xff]
        %v4940 = vld [vmem:[%s4937 + $0x10] sm:$0xff]
        %v4941 = vld [vmem:[%s4937 + $0x18] sm:$0xff]
        %4942 = vmatprep.subr.bf16.mxu0 %v1840
        %4943 = vmatpush1.bf16.msra.mxu0 %v1839
        %4944 = vmatprep.subr.bf16.mxu0 %v1844
        %4945 = vmatpush1.bf16.msra.mxu0 %v1843
        %4946 = vmatprep.subr.bf16.mxu0 %v1848
        %4947 = vmatpush1.bf16.msra.mxu0 %v1847
        %4948 = vmatprep.subr.bf16.mxu0 %v1852
        %4949 = vmatpush1.bf16.msra.mxu0 %v1851
        %4950 = vmatprep.subr.bf16.mxu0 %v1856
        %4951 = vmatpush1.bf16.msra.mxu0 %v1855
        %4952 = vmatprep.subr.bf16.mxu0 %v1860
        %4953 = vmatpush1.bf16.msra.mxu0 %v1859
        %4954 = vmatprep.subr.bf16.mxu0 %v1864
        %4955 = vmatpush1.bf16.msra.mxu0 %v1863
        %4956 = vmatprep.subr.bf16.mxu0 %v1868
        %4957 = vmatpush1.bf16.msra.mxu0 %v1867
        %4958 = vmatprep.subr.bf16.mxu0 0
        %4959 = vmatpush1.bf16.msra.mxu0 0
        %4960 = vmatprep.subr.bf16.mxu0 0
        %4961 = vmatpush1.bf16.msra.mxu0 0
        %4962 = vmatprep.subr.bf16.mxu0 0
        %4963 = vmatpush1.bf16.msra.mxu0 0
        %4964 = vmatprep.subr.bf16.mxu0 0
        %4965 = vmatpush1.bf16.msra.mxu0 0
        %4966 = vmatprep.subr.bf16.mxu0 0
        %4967 = vmatpush1.bf16.msra.mxu0 0
        %4968 = vmatprep.subr.bf16.mxu0 0
        %4969 = vmatpush1.bf16.msra.mxu0 0
        %4970 = vmatprep.subr.bf16.mxu0 0
        %4971 = vmatpush1.bf16.msra.mxu0 0
        %4972 = vmatprep.subr.bf16.mxu0 0
        %4973 = vmatpush1.bf16.msra.mxu0 0
        %4974 = vmatprep.mubr.bf16.mxu0 0
        %4975 = vmatmul.mubr.bf16.gmra.mrb[0].mxu0 %v4932
        %v4976 = vpop.f32.mrb[0].mxu0
        %v4977 = vadd.f32 0.0, %v4976
        %v4978 = vpop.f32.mrb[0].mxu0
        %v4979 = vadd.f32 0.0, %v4978
        %v4980 = vpop.f32.mrb[0].mxu0
        %v4981 = vadd.f32 0.0, %v4980
        %v4982 = vpop.f32.mrb[0].mxu0
        %v4983 = vadd.f32 0.0, %v4982
        %4984 = vdwg.mxu0
        %4985 = vmatprep.subr.bf16.mxu0 %v1842
        %4986 = vmatpush1.bf16.msra.mxu0 %v1841
        %4987 = vmatprep.subr.bf16.mxu0 %v1846
        %4988 = vmatpush1.bf16.msra.mxu0 %v1845
        %4989 = vmatprep.subr.bf16.mxu0 %v1850
        %4990 = vmatpush1.bf16.msra.mxu0 %v1849
        %4991 = vmatprep.subr.bf16.mxu0 %v1854
        %4992 = vmatpush1.bf16.msra.mxu0 %v1853
        %4993 = vmatprep.subr.bf16.mxu0 %v1858
        %4994 = vmatpush1.bf16.msra.mxu0 %v1857
        %4995 = vmatprep.subr.bf16.mxu0 %v1862
        %4996 = vmatpush1.bf16.msra.mxu0 %v1861
        %4997 = vmatprep.subr.bf16.mxu0 %v1866
        %4998 = vmatpush1.bf16.msra.mxu0 %v1865
        %4999 = vmatprep.subr.bf16.mxu0 %v1870
        %5000 = vmatpush1.bf16.msra.mxu0 %v1869
        %5001 = vmatprep.subr.bf16.mxu0 0
        %5002 = vmatpush1.bf16.msra.mxu0 0
        %5003 = vmatprep.subr.bf16.mxu0 0
        %5004 = vmatpush1.bf16.msra.mxu0 0
        %5005 = vmatprep.subr.bf16.mxu0 0
        %5006 = vmatpush1.bf16.msra.mxu0 0
        %5007 = vmatprep.subr.bf16.mxu0 0
        %5008 = vmatpush1.bf16.msra.mxu0 0
        %5009 = vmatprep.subr.bf16.mxu0 0
        %5010 = vmatpush1.bf16.msra.mxu0 0
        %5011 = vmatprep.subr.bf16.mxu0 0
        %5012 = vmatpush1.bf16.msra.mxu0 0
        %5013 = vmatprep.subr.bf16.mxu0 0
        %5014 = vmatpush1.bf16.msra.mxu0 0
        %5015 = vmatprep.subr.bf16.mxu0 0
        %5016 = vmatpush1.bf16.msra.mxu0 0
        %5017 = vmatprep.mubr.bf16.mxu0 0
        %5018 = vmatmul.mubr.bf16.gmra.mrb[0].mxu0 %v4932
        %v5019 = vpop.f32.mrb[0].mxu0
        %v5020 = vadd.f32 0.0, %v5019
        %v5021 = vpop.f32.mrb[0].mxu0
        %v5022 = vadd.f32 0.0, %v5021
        %v5023 = vpop.f32.mrb[0].mxu0
        %v5024 = vadd.f32 0.0, %v5023
        %v5025 = vpop.f32.mrb[0].mxu0
        %v5026 = vadd.f32 0.0, %v5025
        %5027 = vdwg.mxu0
        %v5028 = vunpack.c.l.bf16 %v4938
        %v5029 = vunpack.c.l.bf16 %v4939
        %v5030 = vunpack.c.l.bf16 %v4940
        %v5031 = vunpack.c.l.bf16 %v4941
        %v5032 = vunpack.c.h.bf16 %v4938
        %v5033 = vunpack.c.h.bf16 %v4939
        %v5034 = vunpack.c.h.bf16 %v4940
        %v5035 = vunpack.c.h.bf16 %v4941
        %v5036 = vadd.f32 %v5028, %v4977
        %v5037 = vadd.f32 %v5029, %v4979
        %v5038 = vadd.f32 %v5030, %v5020
        %v5039 = vadd.f32 %v5031, %v5022
        %v5040 = vadd.f32 %v5032, %v4981
        %v5041 = vadd.f32 %v5033, %v4983
        %v5042 = vadd.f32 %v5034, %v5024
        %v5043 = vadd.f32 %v5035, %v5026
        %v5044 = vxor.u32 %v5036, 2147483648
        %v5045 = vxor.u32 %v5040, 2147483648
        %v5046 = vmul.f32 %v5044, 1.442695
        %v5047 = vpow.pop %v5046
        %v5048 = vmul.f32 %v5045, 1.442695
        %v5049 = vpow.pop %v5048
        %v5050 = vadd.f32 %v5047, 1.0
        %v5051 = vadd.f32 %v5049, 1.0
        %v5052 = vrcp.pop %v5050
        %v5053 = vmul.f32 1.0, %v5052
        %v5054 = vrcp.pop %v5051
        %v5055 = vmul.f32 1.0, %v5054
        %v5056 = vxor.u32 %v5037, 2147483648
        %v5057 = vxor.u32 %v5041, 2147483648
        %v5058 = vmul.f32 %v5056, 1.442695
        %v5059 = vpow.pop %v5058
        %v5060 = vmul.f32 %v5057, 1.442695
        %v5061 = vpow.pop %v5060
        %v5062 = vadd.f32 %v5059, 1.0
        %v5063 = vadd.f32 %v5061, 1.0
        %v5064 = vrcp.pop %v5062
        %v5065 = vmul.f32 1.0, %v5064
        %v5066 = vrcp.pop %v5063
        %v5067 = vmul.f32 1.0, %v5066
        %v5068 = vtanh.pop %v5038
        %v5069 = vtanh.pop %v5042
        %v5070 = vxor.u32 %v5039, 2147483648
        %v5071 = vxor.u32 %v5043, 2147483648
        %v5072 = vmul.f32 %v5070, 1.442695
        %v5073 = vpow.pop %v5072
        %v5074 = vmul.f32 %v5071, 1.442695
        %v5075 = vpow.pop %v5074
        %v5076 = vadd.f32 %v5073, 1.0
        %v5077 = vadd.f32 %v5075, 1.0
        %v5078 = vrcp.pop %v5076
        %v5079 = vmul.f32 1.0, %v5078
        %v5080 = vrcp.pop %v5077
        %v5081 = vmul.f32 1.0, %v5080
        %v5082 = vmul.f32 %v5065, %v4926
        %v5083 = vmul.f32 %v5067, %v4927
        %v5084 = vmul.f32 %v5053, %v5068
        %v5085 = vmul.f32 %v5055, %v5069
        %v5086 = vadd.f32 %v5082, %v5084
        %v5087 = vadd.f32 %v5083, %v5085
        %v5088 = vtanh.pop %v5086
        %v5089 = vtanh.pop %v5087
        %v5090 = vmul.f32 %v5079, %v5088
        %v5091 = vmul.f32 %v5081, %v5089
        %v5092 = vpack.c.bf16 %v5091, %v5090
        %s5093 = scalar_lea.vmem [#allocation3], 152
        %5094 = vst [vmem:[%s5093] sm:$0xff] %v5092
        %s5095 = smul.u32 20, 4
        %s5096 = smul.addr %s5095, 8
        %s5097 = scalar_lea.vmem [#allocation2], %s5096
        %v5098 = vld [vmem:[%s5097] sm:$0xff]
        %v5099 = vld [vmem:[%s5097 + $0x8] sm:$0xff]
        %v5100 = vld [vmem:[%s5097 + $0x10] sm:$0xff]
        %v5101 = vld [vmem:[%s5097 + $0x18] sm:$0xff]
        %5102 = vmatprep.subr.bf16.mxu0 %v1840
        %5103 = vmatpush1.bf16.msra.mxu0 %v1839
        %5104 = vmatprep.subr.bf16.mxu0 %v1844
        %5105 = vmatpush1.bf16.msra.mxu0 %v1843
        %5106 = vmatprep.subr.bf16.mxu0 %v1848
        %5107 = vmatpush1.bf16.msra.mxu0 %v1847
        %5108 = vmatprep.subr.bf16.mxu0 %v1852
        %5109 = vmatpush1.bf16.msra.mxu0 %v1851
        %5110 = vmatprep.subr.bf16.mxu0 %v1856
        %5111 = vmatpush1.bf16.msra.mxu0 %v1855
        %5112 = vmatprep.subr.bf16.mxu0 %v1860
        %5113 = vmatpush1.bf16.msra.mxu0 %v1859
        %5114 = vmatprep.subr.bf16.mxu0 %v1864
        %5115 = vmatpush1.bf16.msra.mxu0 %v1863
        %5116 = vmatprep.subr.bf16.mxu0 %v1868
        %5117 = vmatpush1.bf16.msra.mxu0 %v1867
        %5118 = vmatprep.subr.bf16.mxu0 0
        %5119 = vmatpush1.bf16.msra.mxu0 0
        %5120 = vmatprep.subr.bf16.mxu0 0
        %5121 = vmatpush1.bf16.msra.mxu0 0
        %5122 = vmatprep.subr.bf16.mxu0 0
        %5123 = vmatpush1.bf16.msra.mxu0 0
        %5124 = vmatprep.subr.bf16.mxu0 0
        %5125 = vmatpush1.bf16.msra.mxu0 0
        %5126 = vmatprep.subr.bf16.mxu0 0
        %5127 = vmatpush1.bf16.msra.mxu0 0
        %5128 = vmatprep.subr.bf16.mxu0 0
        %5129 = vmatpush1.bf16.msra.mxu0 0
        %5130 = vmatprep.subr.bf16.mxu0 0
        %5131 = vmatpush1.bf16.msra.mxu0 0
        %5132 = vmatprep.subr.bf16.mxu0 0
        %5133 = vmatpush1.bf16.msra.mxu0 0
        %5134 = vmatprep.mubr.bf16.mxu0 0
        %5135 = vmatmul.mubr.bf16.gmra.mrb[0].mxu0 %v5092
        %v5136 = vpop.f32.mrb[0].mxu0
        %v5137 = vadd.f32 0.0, %v5136
        %v5138 = vpop.f32.mrb[0].mxu0
        %v5139 = vadd.f32 0.0, %v5138
        %v5140 = vpop.f32.mrb[0].mxu0
        %v5141 = vadd.f32 0.0, %v5140
        %v5142 = vpop.f32.mrb[0].mxu0
        %v5143 = vadd.f32 0.0, %v5142
        %5144 = vdwg.mxu0
        %5145 = vmatprep.subr.bf16.mxu0 %v1842
        %5146 = vmatpush1.bf16.msra.mxu0 %v1841
        %5147 = vmatprep.subr.bf16.mxu0 %v1846
        %5148 = vmatpush1.bf16.msra.mxu0 %v1845
        %5149 = vmatprep.subr.bf16.mxu0 %v1850
        %5150 = vmatpush1.bf16.msra.mxu0 %v1849
        %5151 = vmatprep.subr.bf16.mxu0 %v1854
        %5152 = vmatpush1.bf16.msra.mxu0 %v1853
        %5153 = vmatprep.subr.bf16.mxu0 %v1858
        %5154 = vmatpush1.bf16.msra.mxu0 %v1857
        %5155 = vmatprep.subr.bf16.mxu0 %v1862
        %5156 = vmatpush1.bf16.msra.mxu0 %v1861
        %5157 = vmatprep.subr.bf16.mxu0 %v1866
        %5158 = vmatpush1.bf16.msra.mxu0 %v1865
        %5159 = vmatprep.subr.bf16.mxu0 %v1870
        %5160 = vmatpush1.bf16.msra.mxu0 %v1869
        %5161 = vmatprep.subr.bf16.mxu0 0
        %5162 = vmatpush1.bf16.msra.mxu0 0
        %5163 = vmatprep.subr.bf16.mxu0 0
        %5164 = vmatpush1.bf16.msra.mxu0 0
        %5165 = vmatprep.subr.bf16.mxu0 0
        %5166 = vmatpush1.bf16.msra.mxu0 0
        %5167 = vmatprep.subr.bf16.mxu0 0
        %5168 = vmatpush1.bf16.msra.mxu0 0
        %5169 = vmatprep.subr.bf16.mxu0 0
        %5170 = vmatpush1.bf16.msra.mxu0 0
        %5171 = vmatprep.subr.bf16.mxu0 0
        %5172 = vmatpush1.bf16.msra.mxu0 0
        %5173 = vmatprep.subr.bf16.mxu0 0
        %5174 = vmatpush1.bf16.msra.mxu0 0
        %5175 = vmatprep.subr.bf16.mxu0 0
        %5176 = vmatpush1.bf16.msra.mxu0 0
        %5177 = vmatprep.mubr.bf16.mxu0 0
        %5178 = vmatmul.mubr.bf16.gmra.mrb[0].mxu0 %v5092
        %v5179 = vpop.f32.mrb[0].mxu0
        %v5180 = vadd.f32 0.0, %v5179
        %v5181 = vpop.f32.mrb[0].mxu0
        %v5182 = vadd.f32 0.0, %v5181
        %v5183 = vpop.f32.mrb[0].mxu0
        %v5184 = vadd.f32 0.0, %v5183
        %v5185 = vpop.f32.mrb[0].mxu0
        %v5186 = vadd.f32 0.0, %v5185
        %5187 = vdwg.mxu0
        %v5188 = vunpack.c.l.bf16 %v5098
        %v5189 = vunpack.c.l.bf16 %v5099
        %v5190 = vunpack.c.l.bf16 %v5100
        %v5191 = vunpack.c.l.bf16 %v5101
        %v5192 = vunpack.c.h.bf16 %v5098
        %v5193 = vunpack.c.h.bf16 %v5099
        %v5194 = vunpack.c.h.bf16 %v5100
        %v5195 = vunpack.c.h.bf16 %v5101
        %v5196 = vadd.f32 %v5188, %v5137
        %v5197 = vadd.f32 %v5189, %v5139
        %v5198 = vadd.f32 %v5190, %v5180
        %v5199 = vadd.f32 %v5191, %v5182
        %v5200 = vadd.f32 %v5192, %v5141
        %v5201 = vadd.f32 %v5193, %v5143
        %v5202 = vadd.f32 %v5194, %v5184
        %v5203 = vadd.f32 %v5195, %v5186
        %v5204 = vxor.u32 %v5196, 2147483648
        %v5205 = vxor.u32 %v5200, 2147483648
        %v5206 = vmul.f32 %v5204, 1.442695
        %v5207 = vpow.pop %v5206
        %v5208 = vmul.f32 %v5205, 1.442695
        %v5209 = vpow.pop %v5208
        %v5210 = vadd.f32 %v5207, 1.0
        %v5211 = vadd.f32 %v5209, 1.0
        %v5212 = vrcp.pop %v5210
        %v5213 = vmul.f32 1.0, %v5212
        %v5214 = vrcp.pop %v5211
        %v5215 = vmul.f32 1.0, %v5214
        %v5216 = vxor.u32 %v5197, 2147483648
        %v5217 = vxor.u32 %v5201, 2147483648
        %v5218 = vmul.f32 %v5216, 1.442695
        %v5219 = vpow.pop %v5218
        %v5220 = vmul.f32 %v5217, 1.442695
        %v5221 = vpow.pop %v5220
        %v5222 = vadd.f32 %v5219, 1.0
        %v5223 = vadd.f32 %v5221, 1.0
        %v5224 = vrcp.pop %v5222
        %v5225 = vmul.f32 1.0, %v5224
        %v5226 = vrcp.pop %v5223
        %v5227 = vmul.f32 1.0, %v5226
        %v5228 = vtanh.pop %v5198
        %v5229 = vtanh.pop %v5202
        %v5230 = vxor.u32 %v5199, 2147483648
        %v5231 = vxor.u32 %v5203, 2147483648
        %v5232 = vmul.f32 %v5230, 1.442695
        %v5233 = vpow.pop %v5232
        %v5234 = vmul.f32 %v5231, 1.442695
        %v5235 = vpow.pop %v5234
        %v5236 = vadd.f32 %v5233, 1.0
        %v5237 = vadd.f32 %v5235, 1.0
        %v5238 = vrcp.pop %v5236
        %v5239 = vmul.f32 1.0, %v5238
        %v5240 = vrcp.pop %v5237
        %v5241 = vmul.f32 1.0, %v5240
        %v5242 = vmul.f32 %v5225, %v5086
        %v5243 = vmul.f32 %v5227, %v5087
        %v5244 = vmul.f32 %v5213, %v5228
        %v5245 = vmul.f32 %v5215, %v5229
        %v5246 = vadd.f32 %v5242, %v5244
        %v5247 = vadd.f32 %v5243, %v5245
        %v5248 = vtanh.pop %v5246
        %v5249 = vtanh.pop %v5247
        %v5250 = vmul.f32 %v5239, %v5248
        %v5251 = vmul.f32 %v5241, %v5249
        %v5252 = vpack.c.bf16 %v5251, %v5250
        %s5253 = scalar_lea.vmem [#allocation3], 160
        %5254 = vst [vmem:[%s5253] sm:$0xff] %v5252
        %s5255 = smul.u32 21, 4
        %s5256 = smul.addr %s5255, 8
        %s5257 = scalar_lea.vmem [#allocation2], %s5256
        %v5258 = vld [vmem:[%s5257] sm:$0xff]
        %v5259 = vld [vmem:[%s5257 + $0x8] sm:$0xff]
        %v5260 = vld [vmem:[%s5257 + $0x10] sm:$0xff]
        %v5261 = vld [vmem:[%s5257 + $0x18] sm:$0xff]
        %5262 = vmatprep.subr.bf16.mxu0 %v1840
        %5263 = vmatpush1.bf16.msra.mxu0 %v1839
        %5264 = vmatprep.subr.bf16.mxu0 %v1844
        %5265 = vmatpush1.bf16.msra.mxu0 %v1843
        %5266 = vmatprep.subr.bf16.mxu0 %v1848
        %5267 = vmatpush1.bf16.msra.mxu0 %v1847
        %5268 = vmatprep.subr.bf16.mxu0 %v1852
        %5269 = vmatpush1.bf16.msra.mxu0 %v1851
        %5270 = vmatprep.subr.bf16.mxu0 %v1856
        %5271 = vmatpush1.bf16.msra.mxu0 %v1855
        %5272 = vmatprep.subr.bf16.mxu0 %v1860
        %5273 = vmatpush1.bf16.msra.mxu0 %v1859
        %5274 = vmatprep.subr.bf16.mxu0 %v1864
        %5275 = vmatpush1.bf16.msra.mxu0 %v1863
        %5276 = vmatprep.subr.bf16.mxu0 %v1868
        %5277 = vmatpush1.bf16.msra.mxu0 %v1867
        %5278 = vmatprep.subr.bf16.mxu0 0
        %5279 = vmatpush1.bf16.msra.mxu0 0
        %5280 = vmatprep.subr.bf16.mxu0 0
        %5281 = vmatpush1.bf16.msra.mxu0 0
        %5282 = vmatprep.subr.bf16.mxu0 0
        %5283 = vmatpush1.bf16.msra.mxu0 0
        %5284 = vmatprep.subr.bf16.mxu0 0
        %5285 = vmatpush1.bf16.msra.mxu0 0
        %5286 = vmatprep.subr.bf16.mxu0 0
        %5287 = vmatpush1.bf16.msra.mxu0 0
        %5288 = vmatprep.subr.bf16.mxu0 0
        %5289 = vmatpush1.bf16.msra.mxu0 0
        %5290 = vmatprep.subr.bf16.mxu0 0
        %5291 = vmatpush1.bf16.msra.mxu0 0
        %5292 = vmatprep.subr.bf16.mxu0 0
        %5293 = vmatpush1.bf16.msra.mxu0 0
        %5294 = vmatprep.mubr.bf16.mxu0 0
        %5295 = vmatmul.mubr.bf16.gmra.mrb[0].mxu0 %v5252
        %v5296 = vpop.f32.mrb[0].mxu0
        %v5297 = vadd.f32 0.0, %v5296
        %v5298 = vpop.f32.mrb[0].mxu0
        %v5299 = vadd.f32 0.0, %v5298
        %v5300 = vpop.f32.mrb[0].mxu0
        %v5301 = vadd.f32 0.0, %v5300
        %v5302 = vpop.f32.mrb[0].mxu0
        %v5303 = vadd.f32 0.0, %v5302
        %5304 = vdwg.mxu0
        %5305 = vmatprep.subr.bf16.mxu0 %v1842
        %5306 = vmatpush1.bf16.msra.mxu0 %v1841
        %5307 = vmatprep.subr.bf16.mxu0 %v1846
        %5308 = vmatpush1.bf16.msra.mxu0 %v1845
        %5309 = vmatprep.subr.bf16.mxu0 %v1850
        %5310 = vmatpush1.bf16.msra.mxu0 %v1849
        %5311 = vmatprep.subr.bf16.mxu0 %v1854
        %5312 = vmatpush1.bf16.msra.mxu0 %v1853
        %5313 = vmatprep.subr.bf16.mxu0 %v1858
        %5314 = vmatpush1.bf16.msra.mxu0 %v1857
        %5315 = vmatprep.subr.bf16.mxu0 %v1862
        %5316 = vmatpush1.bf16.msra.mxu0 %v1861
        %5317 = vmatprep.subr.bf16.mxu0 %v1866
        %5318 = vmatpush1.bf16.msra.mxu0 %v1865
        %5319 = vmatprep.subr.bf16.mxu0 %v1870
        %5320 = vmatpush1.bf16.msra.mxu0 %v1869
        %5321 = vmatprep.subr.bf16.mxu0 0
        %5322 = vmatpush1.bf16.msra.mxu0 0
        %5323 = vmatprep.subr.bf16.mxu0 0
        %5324 = vmatpush1.bf16.msra.mxu0 0
        %5325 = vmatprep.subr.bf16.mxu0 0
        %5326 = vmatpush1.bf16.msra.mxu0 0
        %5327 = vmatprep.subr.bf16.mxu0 0
        %5328 = vmatpush1.bf16.msra.mxu0 0
        %5329 = vmatprep.subr.bf16.mxu0 0
        %5330 = vmatpush1.bf16.msra.mxu0 0
        %5331 = vmatprep.subr.bf16.mxu0 0
        %5332 = vmatpush1.bf16.msra.mxu0 0
        %5333 = vmatprep.subr.bf16.mxu0 0
        %5334 = vmatpush1.bf16.msra.mxu0 0
        %5335 = vmatprep.subr.bf16.mxu0 0
        %5336 = vmatpush1.bf16.msra.mxu0 0
        %5337 = vmatprep.mubr.bf16.mxu0 0
        %5338 = vmatmul.mubr.bf16.gmra.mrb[0].mxu0 %v5252
        %v5339 = vpop.f32.mrb[0].mxu0
        %v5340 = vadd.f32 0.0, %v5339
        %v5341 = vpop.f32.mrb[0].mxu0
        %v5342 = vadd.f32 0.0, %v5341
        %v5343 = vpop.f32.mrb[0].mxu0
        %v5344 = vadd.f32 0.0, %v5343
        %v5345 = vpop.f32.mrb[0].mxu0
        %v5346 = vadd.f32 0.0, %v5345
        %5347 = vdwg.mxu0
        %v5348 = vunpack.c.l.bf16 %v5258
        %v5349 = vunpack.c.l.bf16 %v5259
        %v5350 = vunpack.c.l.bf16 %v5260
        %v5351 = vunpack.c.l.bf16 %v5261
        %v5352 = vunpack.c.h.bf16 %v5258
        %v5353 = vunpack.c.h.bf16 %v5259
        %v5354 = vunpack.c.h.bf16 %v5260
        %v5355 = vunpack.c.h.bf16 %v5261
        %v5356 = vadd.f32 %v5348, %v5297
        %v5357 = vadd.f32 %v5349, %v5299
        %v5358 = vadd.f32 %v5350, %v5340
        %v5359 = vadd.f32 %v5351, %v5342
        %v5360 = vadd.f32 %v5352, %v5301
        %v5361 = vadd.f32 %v5353, %v5303
        %v5362 = vadd.f32 %v5354, %v5344
        %v5363 = vadd.f32 %v5355, %v5346
        %v5364 = vxor.u32 %v5356, 2147483648
        %v5365 = vxor.u32 %v5360, 2147483648
        %v5366 = vmul.f32 %v5364, 1.442695
        %v5367 = vpow.pop %v5366
        %v5368 = vmul.f32 %v5365, 1.442695
        %v5369 = vpow.pop %v5368
        %v5370 = vadd.f32 %v5367, 1.0
        %v5371 = vadd.f32 %v5369, 1.0
        %v5372 = vrcp.pop %v5370
        %v5373 = vmul.f32 1.0, %v5372
        %v5374 = vrcp.pop %v5371
        %v5375 = vmul.f32 1.0, %v5374
        %v5376 = vxor.u32 %v5357, 2147483648
        %v5377 = vxor.u32 %v5361, 2147483648
        %v5378 = vmul.f32 %v5376, 1.442695
        %v5379 = vpow.pop %v5378
        %v5380 = vmul.f32 %v5377, 1.442695
        %v5381 = vpow.pop %v5380
        %v5382 = vadd.f32 %v5379, 1.0
        %v5383 = vadd.f32 %v5381, 1.0
        %v5384 = vrcp.pop %v5382
        %v5385 = vmul.f32 1.0, %v5384
        %v5386 = vrcp.pop %v5383
        %v5387 = vmul.f32 1.0, %v5386
        %v5388 = vtanh.pop %v5358
        %v5389 = vtanh.pop %v5362
        %v5390 = vxor.u32 %v5359, 2147483648
        %v5391 = vxor.u32 %v5363, 2147483648
        %v5392 = vmul.f32 %v5390, 1.442695
        %v5393 = vpow.pop %v5392
        %v5394 = vmul.f32 %v5391, 1.442695
        %v5395 = vpow.pop %v5394
        %v5396 = vadd.f32 %v5393, 1.0
        %v5397 = vadd.f32 %v5395, 1.0
        %v5398 = vrcp.pop %v5396
        %v5399 = vmul.f32 1.0, %v5398
        %v5400 = vrcp.pop %v5397
        %v5401 = vmul.f32 1.0, %v5400
        %v5402 = vmul.f32 %v5385, %v5246
        %v5403 = vmul.f32 %v5387, %v5247
        %v5404 = vmul.f32 %v5373, %v5388
        %v5405 = vmul.f32 %v5375, %v5389
        %v5406 = vadd.f32 %v5402, %v5404
        %v5407 = vadd.f32 %v5403, %v5405
        %v5408 = vtanh.pop %v5406
        %v5409 = vtanh.pop %v5407
        %v5410 = vmul.f32 %v5399, %v5408
        %v5411 = vmul.f32 %v5401, %v5409
        %v5412 = vpack.c.bf16 %v5411, %v5410
        %s5413 = scalar_lea.vmem [#allocation3], 168
        %5414 = vst [vmem:[%s5413] sm:$0xff] %v5412
        %s5415 = smul.u32 22, 4
        %s5416 = smul.addr %s5415, 8
        %s5417 = scalar_lea.vmem [#allocation2], %s5416
        %v5418 = vld [vmem:[%s5417] sm:$0xff]
        %v5419 = vld [vmem:[%s5417 + $0x8] sm:$0xff]
        %v5420 = vld [vmem:[%s5417 + $0x10] sm:$0xff]
        %v5421 = vld [vmem:[%s5417 + $0x18] sm:$0xff]
        %5422 = vmatprep.subr.bf16.mxu0 %v1840
        %5423 = vmatpush1.bf16.msra.mxu0 %v1839
        %5424 = vmatprep.subr.bf16.mxu0 %v1844
        %5425 = vmatpush1.bf16.msra.mxu0 %v1843
        %5426 = vmatprep.subr.bf16.mxu0 %v1848
        %5427 = vmatpush1.bf16.msra.mxu0 %v1847
        %5428 = vmatprep.subr.bf16.mxu0 %v1852
        %5429 = vmatpush1.bf16.msra.mxu0 %v1851
        %5430 = vmatprep.subr.bf16.mxu0 %v1856
        %5431 = vmatpush1.bf16.msra.mxu0 %v1855
        %5432 = vmatprep.subr.bf16.mxu0 %v1860
        %5433 = vmatpush1.bf16.msra.mxu0 %v1859
        %5434 = vmatprep.subr.bf16.mxu0 %v1864
        %5435 = vmatpush1.bf16.msra.mxu0 %v1863
        %5436 = vmatprep.subr.bf16.mxu0 %v1868
        %5437 = vmatpush1.bf16.msra.mxu0 %v1867
        %5438 = vmatprep.subr.bf16.mxu0 0
        %5439 = vmatpush1.bf16.msra.mxu0 0
        %5440 = vmatprep.subr.bf16.mxu0 0
        %5441 = vmatpush1.bf16.msra.mxu0 0
        %5442 = vmatprep.subr.bf16.mxu0 0
        %5443 = vmatpush1.bf16.msra.mxu0 0
        %5444 = vmatprep.subr.bf16.mxu0 0
        %5445 = vmatpush1.bf16.msra.mxu0 0
        %5446 = vmatprep.subr.bf16.mxu0 0
        %5447 = vmatpush1.bf16.msra.mxu0 0
        %5448 = vmatprep.subr.bf16.mxu0 0
        %5449 = vmatpush1.bf16.msra.mxu0 0
        %5450 = vmatprep.subr.bf16.mxu0 0
        %5451 = vmatpush1.bf16.msra.mxu0 0
        %5452 = vmatprep.subr.bf16.mxu0 0
        %5453 = vmatpush1.bf16.msra.mxu0 0
        %5454 = vmatprep.mubr.bf16.mxu0 0
        %5455 = vmatmul.mubr.bf16.gmra.mrb[0].mxu0 %v5412
        %v5456 = vpop.f32.mrb[0].mxu0
        %v5457 = vadd.f32 0.0, %v5456
        %v5458 = vpop.f32.mrb[0].mxu0
        %v5459 = vadd.f32 0.0, %v5458
        %v5460 = vpop.f32.mrb[0].mxu0
        %v5461 = vadd.f32 0.0, %v5460
        %v5462 = vpop.f32.mrb[0].mxu0
        %v5463 = vadd.f32 0.0, %v5462
        %5464 = vdwg.mxu0
        %5465 = vmatprep.subr.bf16.mxu0 %v1842
        %5466 = vmatpush1.bf16.msra.mxu0 %v1841
        %5467 = vmatprep.subr.bf16.mxu0 %v1846
        %5468 = vmatpush1.bf16.msra.mxu0 %v1845
        %5469 = vmatprep.subr.bf16.mxu0 %v1850
        %5470 = vmatpush1.bf16.msra.mxu0 %v1849
        %5471 = vmatprep.subr.bf16.mxu0 %v1854
        %5472 = vmatpush1.bf16.msra.mxu0 %v1853
        %5473 = vmatprep.subr.bf16.mxu0 %v1858
        %5474 = vmatpush1.bf16.msra.mxu0 %v1857
        %5475 = vmatprep.subr.bf16.mxu0 %v1862
        %5476 = vmatpush1.bf16.msra.mxu0 %v1861
        %5477 = vmatprep.subr.bf16.mxu0 %v1866
        %5478 = vmatpush1.bf16.msra.mxu0 %v1865
        %5479 = vmatprep.subr.bf16.mxu0 %v1870
        %5480 = vmatpush1.bf16.msra.mxu0 %v1869
        %5481 = vmatprep.subr.bf16.mxu0 0
        %5482 = vmatpush1.bf16.msra.mxu0 0
        %5483 = vmatprep.subr.bf16.mxu0 0
        %5484 = vmatpush1.bf16.msra.mxu0 0
        %5485 = vmatprep.subr.bf16.mxu0 0
        %5486 = vmatpush1.bf16.msra.mxu0 0
        %5487 = vmatprep.subr.bf16.mxu0 0
        %5488 = vmatpush1.bf16.msra.mxu0 0
        %5489 = vmatprep.subr.bf16.mxu0 0
        %5490 = vmatpush1.bf16.msra.mxu0 0
        %5491 = vmatprep.subr.bf16.mxu0 0
        %5492 = vmatpush1.bf16.msra.mxu0 0
        %5493 = vmatprep.subr.bf16.mxu0 0
        %5494 = vmatpush1.bf16.msra.mxu0 0
        %5495 = vmatprep.subr.bf16.mxu0 0
        %5496 = vmatpush1.bf16.msra.mxu0 0
        %5497 = vmatprep.mubr.bf16.mxu0 0
        %5498 = vmatmul.mubr.bf16.gmra.mrb[0].mxu0 %v5412
        %v5499 = vpop.f32.mrb[0].mxu0
        %v5500 = vadd.f32 0.0, %v5499
        %v5501 = vpop.f32.mrb[0].mxu0
        %v5502 = vadd.f32 0.0, %v5501
        %v5503 = vpop.f32.mrb[0].mxu0
        %v5504 = vadd.f32 0.0, %v5503
        %v5505 = vpop.f32.mrb[0].mxu0
        %v5506 = vadd.f32 0.0, %v5505
        %5507 = vdwg.mxu0
        %v5508 = vunpack.c.l.bf16 %v5418
        %v5509 = vunpack.c.l.bf16 %v5419
        %v5510 = vunpack.c.l.bf16 %v5420
        %v5511 = vunpack.c.l.bf16 %v5421
        %v5512 = vunpack.c.h.bf16 %v5418
        %v5513 = vunpack.c.h.bf16 %v5419
        %v5514 = vunpack.c.h.bf16 %v5420
        %v5515 = vunpack.c.h.bf16 %v5421
        %v5516 = vadd.f32 %v5508, %v5457
        %v5517 = vadd.f32 %v5509, %v5459
        %v5518 = vadd.f32 %v5510, %v5500
        %v5519 = vadd.f32 %v5511, %v5502
        %v5520 = vadd.f32 %v5512, %v5461
        %v5521 = vadd.f32 %v5513, %v5463
        %v5522 = vadd.f32 %v5514, %v5504
        %v5523 = vadd.f32 %v5515, %v5506
        %v5524 = vxor.u32 %v5516, 2147483648
        %v5525 = vxor.u32 %v5520, 2147483648
        %v5526 = vmul.f32 %v5524, 1.442695
        %v5527 = vpow.pop %v5526
        %v5528 = vmul.f32 %v5525, 1.442695
        %v5529 = vpow.pop %v5528
        %v5530 = vadd.f32 %v5527, 1.0
        %v5531 = vadd.f32 %v5529, 1.0
        %v5532 = vrcp.pop %v5530
        %v5533 = vmul.f32 1.0, %v5532
        %v5534 = vrcp.pop %v5531
        %v5535 = vmul.f32 1.0, %v5534
        %v5536 = vxor.u32 %v5517, 2147483648
        %v5537 = vxor.u32 %v5521, 2147483648
        %v5538 = vmul.f32 %v5536, 1.442695
        %v5539 = vpow.pop %v5538
        %v5540 = vmul.f32 %v5537, 1.442695
        %v5541 = vpow.pop %v5540
        %v5542 = vadd.f32 %v5539, 1.0
        %v5543 = vadd.f32 %v5541, 1.0
        %v5544 = vrcp.pop %v5542
        %v5545 = vmul.f32 1.0, %v5544
        %v5546 = vrcp.pop %v5543
        %v5547 = vmul.f32 1.0, %v5546
        %v5548 = vtanh.pop %v5518
        %v5549 = vtanh.pop %v5522
        %v5550 = vxor.u32 %v5519, 2147483648
        %v5551 = vxor.u32 %v5523, 2147483648
        %v5552 = vmul.f32 %v5550, 1.442695
        %v5553 = vpow.pop %v5552
        %v5554 = vmul.f32 %v5551, 1.442695
        %v5555 = vpow.pop %v5554
        %v5556 = vadd.f32 %v5553, 1.0
        %v5557 = vadd.f32 %v5555, 1.0
        %v5558 = vrcp.pop %v5556
        %v5559 = vmul.f32 1.0, %v5558
        %v5560 = vrcp.pop %v5557
        %v5561 = vmul.f32 1.0, %v5560
        %v5562 = vmul.f32 %v5545, %v5406
        %v5563 = vmul.f32 %v5547, %v5407
        %v5564 = vmul.f32 %v5533, %v5548
        %v5565 = vmul.f32 %v5535, %v5549
        %v5566 = vadd.f32 %v5562, %v5564
        %v5567 = vadd.f32 %v5563, %v5565
        %v5568 = vtanh.pop %v5566
        %v5569 = vtanh.pop %v5567
        %v5570 = vmul.f32 %v5559, %v5568
        %v5571 = vmul.f32 %v5561, %v5569
        %v5572 = vpack.c.bf16 %v5571, %v5570
        %s5573 = scalar_lea.vmem [#allocation3], 176
        %5574 = vst [vmem:[%s5573] sm:$0xff] %v5572
        %s5575 = smul.u32 23, 4
        %s5576 = smul.addr %s5575, 8
        %s5577 = scalar_lea.vmem [#allocation2], %s5576
        %v5578 = vld [vmem:[%s5577] sm:$0xff]
        %v5579 = vld [vmem:[%s5577 + $0x8] sm:$0xff]
        %v5580 = vld [vmem:[%s5577 + $0x10] sm:$0xff]
        %v5581 = vld [vmem:[%s5577 + $0x18] sm:$0xff]
        %5582 = vmatprep.subr.bf16.mxu0 %v1840
        %5583 = vmatpush1.bf16.msra.mxu0 %v1839
        %5584 = vmatprep.subr.bf16.mxu0 %v1844
        %5585 = vmatpush1.bf16.msra.mxu0 %v1843
        %5586 = vmatprep.subr.bf16.mxu0 %v1848
        %5587 = vmatpush1.bf16.msra.mxu0 %v1847
        %5588 = vmatprep.subr.bf16.mxu0 %v1852
        %5589 = vmatpush1.bf16.msra.mxu0 %v1851
        %5590 = vmatprep.subr.bf16.mxu0 %v1856
        %5591 = vmatpush1.bf16.msra.mxu0 %v1855
        %5592 = vmatprep.subr.bf16.mxu0 %v1860
        %5593 = vmatpush1.bf16.msra.mxu0 %v1859
        %5594 = vmatprep.subr.bf16.mxu0 %v1864
        %5595 = vmatpush1.bf16.msra.mxu0 %v1863
        %5596 = vmatprep.subr.bf16.mxu0 %v1868
        %5597 = vmatpush1.bf16.msra.mxu0 %v1867
        %5598 = vmatprep.subr.bf16.mxu0 0
        %5599 = vmatpush1.bf16.msra.mxu0 0
        %5600 = vmatprep.subr.bf16.mxu0 0
        %5601 = vmatpush1.bf16.msra.mxu0 0
        %5602 = vmatprep.subr.bf16.mxu0 0
        %5603 = vmatpush1.bf16.msra.mxu0 0
        %5604 = vmatprep.subr.bf16.mxu0 0
        %5605 = vmatpush1.bf16.msra.mxu0 0
        %5606 = vmatprep.subr.bf16.mxu0 0
        %5607 = vmatpush1.bf16.msra.mxu0 0
        %5608 = vmatprep.subr.bf16.mxu0 0
        %5609 = vmatpush1.bf16.msra.mxu0 0
        %5610 = vmatprep.subr.bf16.mxu0 0
        %5611 = vmatpush1.bf16.msra.mxu0 0
        %5612 = vmatprep.subr.bf16.mxu0 0
        %5613 = vmatpush1.bf16.msra.mxu0 0
        %5614 = vmatprep.mubr.bf16.mxu0 0
        %5615 = vmatmul.mubr.bf16.gmra.mrb[0].mxu0 %v5572
        %v5616 = vpop.f32.mrb[0].mxu0
        %v5617 = vadd.f32 0.0, %v5616
        %v5618 = vpop.f32.mrb[0].mxu0
        %v5619 = vadd.f32 0.0, %v5618
        %v5620 = vpop.f32.mrb[0].mxu0
        %v5621 = vadd.f32 0.0, %v5620
        %v5622 = vpop.f32.mrb[0].mxu0
        %v5623 = vadd.f32 0.0, %v5622
        %5624 = vdwg.mxu0
        %5625 = vmatprep.subr.bf16.mxu0 %v1842
        %5626 = vmatpush1.bf16.msra.mxu0 %v1841
        %5627 = vmatprep.subr.bf16.mxu0 %v1846
        %5628 = vmatpush1.bf16.msra.mxu0 %v1845
        %5629 = vmatprep.subr.bf16.mxu0 %v1850
        %5630 = vmatpush1.bf16.msra.mxu0 %v1849
        %5631 = vmatprep.subr.bf16.mxu0 %v1854
        %5632 = vmatpush1.bf16.msra.mxu0 %v1853
        %5633 = vmatprep.subr.bf16.mxu0 %v1858
        %5634 = vmatpush1.bf16.msra.mxu0 %v1857
        %5635 = vmatprep.subr.bf16.mxu0 %v1862
        %5636 = vmatpush1.bf16.msra.mxu0 %v1861
        %5637 = vmatprep.subr.bf16.mxu0 %v1866
        %5638 = vmatpush1.bf16.msra.mxu0 %v1865
        %5639 = vmatprep.subr.bf16.mxu0 %v1870
        %5640 = vmatpush1.bf16.msra.mxu0 %v1869
        %5641 = vmatprep.subr.bf16.mxu0 0
        %5642 = vmatpush1.bf16.msra.mxu0 0
        %5643 = vmatprep.subr.bf16.mxu0 0
        %5644 = vmatpush1.bf16.msra.mxu0 0
        %5645 = vmatprep.subr.bf16.mxu0 0
        %5646 = vmatpush1.bf16.msra.mxu0 0
        %5647 = vmatprep.subr.bf16.mxu0 0
        %5648 = vmatpush1.bf16.msra.mxu0 0
        %5649 = vmatprep.subr.bf16.mxu0 0
        %5650 = vmatpush1.bf16.msra.mxu0 0
        %5651 = vmatprep.subr.bf16.mxu0 0
        %5652 = vmatpush1.bf16.msra.mxu0 0
        %5653 = vmatprep.subr.bf16.mxu0 0
        %5654 = vmatpush1.bf16.msra.mxu0 0
        %5655 = vmatprep.subr.bf16.mxu0 0
        %5656 = vmatpush1.bf16.msra.mxu0 0
        %5657 = vmatprep.mubr.bf16.mxu0 0
        %5658 = vmatmul.mubr.bf16.gmra.mrb[0].mxu0 %v5572
        %v5659 = vpop.f32.mrb[0].mxu0
        %v5660 = vadd.f32 0.0, %v5659
        %v5661 = vpop.f32.mrb[0].mxu0
        %v5662 = vadd.f32 0.0, %v5661
        %v5663 = vpop.f32.mrb[0].mxu0
        %v5664 = vadd.f32 0.0, %v5663
        %v5665 = vpop.f32.mrb[0].mxu0
        %v5666 = vadd.f32 0.0, %v5665
        %5667 = vdwg.mxu0
        %v5668 = vunpack.c.l.bf16 %v5578
        %v5669 = vunpack.c.l.bf16 %v5579
        %v5670 = vunpack.c.l.bf16 %v5580
        %v5671 = vunpack.c.l.bf16 %v5581
        %v5672 = vunpack.c.h.bf16 %v5578
        %v5673 = vunpack.c.h.bf16 %v5579
        %v5674 = vunpack.c.h.bf16 %v5580
        %v5675 = vunpack.c.h.bf16 %v5581
        %v5676 = vadd.f32 %v5668, %v5617
        %v5677 = vadd.f32 %v5669, %v5619
        %v5678 = vadd.f32 %v5670, %v5660
        %v5679 = vadd.f32 %v5671, %v5662
        %v5680 = vadd.f32 %v5672, %v5621
        %v5681 = vadd.f32 %v5673, %v5623
        %v5682 = vadd.f32 %v5674, %v5664
        %v5683 = vadd.f32 %v5675, %v5666
        %v5684 = vxor.u32 %v5676, 2147483648
        %v5685 = vxor.u32 %v5680, 2147483648
        %v5686 = vmul.f32 %v5684, 1.442695
        %v5687 = vpow.pop %v5686
        %v5688 = vmul.f32 %v5685, 1.442695
        %v5689 = vpow.pop %v5688
        %v5690 = vadd.f32 %v5687, 1.0
        %v5691 = vadd.f32 %v5689, 1.0
        %v5692 = vrcp.pop %v5690
        %v5693 = vmul.f32 1.0, %v5692
        %v5694 = vrcp.pop %v5691
        %v5695 = vmul.f32 1.0, %v5694
        %v5696 = vxor.u32 %v5677, 2147483648
        %v5697 = vxor.u32 %v5681, 2147483648
        %v5698 = vmul.f32 %v5696, 1.442695
        %v5699 = vpow.pop %v5698
        %v5700 = vmul.f32 %v5697, 1.442695
        %v5701 = vpow.pop %v5700
        %v5702 = vadd.f32 %v5699, 1.0
        %v5703 = vadd.f32 %v5701, 1.0
        %v5704 = vrcp.pop %v5702
        %v5705 = vmul.f32 1.0, %v5704
        %v5706 = vrcp.pop %v5703
        %v5707 = vmul.f32 1.0, %v5706
        %v5708 = vtanh.pop %v5678
        %v5709 = vtanh.pop %v5682
        %v5710 = vxor.u32 %v5679, 2147483648
        %v5711 = vxor.u32 %v5683, 2147483648
        %v5712 = vmul.f32 %v5710, 1.442695
        %v5713 = vpow.pop %v5712
        %v5714 = vmul.f32 %v5711, 1.442695
        %v5715 = vpow.pop %v5714
        %v5716 = vadd.f32 %v5713, 1.0
        %v5717 = vadd.f32 %v5715, 1.0
        %v5718 = vrcp.pop %v5716
        %v5719 = vmul.f32 1.0, %v5718
        %v5720 = vrcp.pop %v5717
        %v5721 = vmul.f32 1.0, %v5720
        %v5722 = vmul.f32 %v5705, %v5566
        %v5723 = vmul.f32 %v5707, %v5567
        %v5724 = vmul.f32 %v5693, %v5708
        %v5725 = vmul.f32 %v5695, %v5709
        %v5726 = vadd.f32 %v5722, %v5724
        %v5727 = vadd.f32 %v5723, %v5725
        %v5728 = vtanh.pop %v5726
        %v5729 = vtanh.pop %v5727
        %v5730 = vmul.f32 %v5719, %v5728
        %v5731 = vmul.f32 %v5721, %v5729
        %v5732 = vpack.c.bf16 %v5731, %v5730
        %s5733 = scalar_lea.vmem [#allocation3], 184
        %5734 = vst [vmem:[%s5733] sm:$0xff] %v5732
        %s5735 = smul.u32 24, 4
        %s5736 = smul.addr %s5735, 8
        %s5737 = scalar_lea.vmem [#allocation2], %s5736
        %v5738 = vld [vmem:[%s5737] sm:$0xff]
        %v5739 = vld [vmem:[%s5737 + $0x8] sm:$0xff]
        %v5740 = vld [vmem:[%s5737 + $0x10] sm:$0xff]
        %v5741 = vld [vmem:[%s5737 + $0x18] sm:$0xff]
        %5742 = vmatprep.subr.bf16.mxu0 %v1840
        %5743 = vmatpush1.bf16.msra.mxu0 %v1839
        %5744 = vmatprep.subr.bf16.mxu0 %v1844
        %5745 = vmatpush1.bf16.msra.mxu0 %v1843
        %5746 = vmatprep.subr.bf16.mxu0 %v1848
        %5747 = vmatpush1.bf16.msra.mxu0 %v1847
        %5748 = vmatprep.subr.bf16.mxu0 %v1852
        %5749 = vmatpush1.bf16.msra.mxu0 %v1851
        %5750 = vmatprep.subr.bf16.mxu0 %v1856
        %5751 = vmatpush1.bf16.msra.mxu0 %v1855
        %5752 = vmatprep.subr.bf16.mxu0 %v1860
        %5753 = vmatpush1.bf16.msra.mxu0 %v1859
        %5754 = vmatprep.subr.bf16.mxu0 %v1864
        %5755 = vmatpush1.bf16.msra.mxu0 %v1863
        %5756 = vmatprep.subr.bf16.mxu0 %v1868
        %5757 = vmatpush1.bf16.msra.mxu0 %v1867
        %5758 = vmatprep.subr.bf16.mxu0 0
        %5759 = vmatpush1.bf16.msra.mxu0 0
        %5760 = vmatprep.subr.bf16.mxu0 0
        %5761 = vmatpush1.bf16.msra.mxu0 0
        %5762 = vmatprep.subr.bf16.mxu0 0
        %5763 = vmatpush1.bf16.msra.mxu0 0
        %5764 = vmatprep.subr.bf16.mxu0 0
        %5765 = vmatpush1.bf16.msra.mxu0 0
        %5766 = vmatprep.subr.bf16.mxu0 0
        %5767 = vmatpush1.bf16.msra.mxu0 0
        %5768 = vmatprep.subr.bf16.mxu0 0
        %5769 = vmatpush1.bf16.msra.mxu0 0
        %5770 = vmatprep.subr.bf16.mxu0 0
        %5771 = vmatpush1.bf16.msra.mxu0 0
        %5772 = vmatprep.subr.bf16.mxu0 0
        %5773 = vmatpush1.bf16.msra.mxu0 0
        %5774 = vmatprep.mubr.bf16.mxu0 0
        %5775 = vmatmul.mubr.bf16.gmra.mrb[0].mxu0 %v5732
        %v5776 = vpop.f32.mrb[0].mxu0
        %v5777 = vadd.f32 0.0, %v5776
        %v5778 = vpop.f32.mrb[0].mxu0
        %v5779 = vadd.f32 0.0, %v5778
        %v5780 = vpop.f32.mrb[0].mxu0
        %v5781 = vadd.f32 0.0, %v5780
        %v5782 = vpop.f32.mrb[0].mxu0
        %v5783 = vadd.f32 0.0, %v5782
        %5784 = vdwg.mxu0
        %5785 = vmatprep.subr.bf16.mxu0 %v1842
        %5786 = vmatpush1.bf16.msra.mxu0 %v1841
        %5787 = vmatprep.subr.bf16.mxu0 %v1846
        %5788 = vmatpush1.bf16.msra.mxu0 %v1845
        %5789 = vmatprep.subr.bf16.mxu0 %v1850
        %5790 = vmatpush1.bf16.msra.mxu0 %v1849
        %5791 = vmatprep.subr.bf16.mxu0 %v1854
        %5792 = vmatpush1.bf16.msra.mxu0 %v1853
        %5793 = vmatprep.subr.bf16.mxu0 %v1858
        %5794 = vmatpush1.bf16.msra.mxu0 %v1857
        %5795 = vmatprep.subr.bf16.mxu0 %v1862
        %5796 = vmatpush1.bf16.msra.mxu0 %v1861
        %5797 = vmatprep.subr.bf16.mxu0 %v1866
        %5798 = vmatpush1.bf16.msra.mxu0 %v1865
        %5799 = vmatprep.subr.bf16.mxu0 %v1870
        %5800 = vmatpush1.bf16.msra.mxu0 %v1869
        %5801 = vmatprep.subr.bf16.mxu0 0
        %5802 = vmatpush1.bf16.msra.mxu0 0
        %5803 = vmatprep.subr.bf16.mxu0 0
        %5804 = vmatpush1.bf16.msra.mxu0 0
        %5805 = vmatprep.subr.bf16.mxu0 0
        %5806 = vmatpush1.bf16.msra.mxu0 0
        %5807 = vmatprep.subr.bf16.mxu0 0
        %5808 = vmatpush1.bf16.msra.mxu0 0
        %5809 = vmatprep.subr.bf16.mxu0 0
        %5810 = vmatpush1.bf16.msra.mxu0 0
        %5811 = vmatprep.subr.bf16.mxu0 0
        %5812 = vmatpush1.bf16.msra.mxu0 0
        %5813 = vmatprep.subr.bf16.mxu0 0
        %5814 = vmatpush1.bf16.msra.mxu0 0
        %5815 = vmatprep.subr.bf16.mxu0 0
        %5816 = vmatpush1.bf16.msra.mxu0 0
        %5817 = vmatprep.mubr.bf16.mxu0 0
        %5818 = vmatmul.mubr.bf16.gmra.mrb[0].mxu0 %v5732
        %v5819 = vpop.f32.mrb[0].mxu0
        %v5820 = vadd.f32 0.0, %v5819
        %v5821 = vpop.f32.mrb[0].mxu0
        %v5822 = vadd.f32 0.0, %v5821
        %v5823 = vpop.f32.mrb[0].mxu0
        %v5824 = vadd.f32 0.0, %v5823
        %v5825 = vpop.f32.mrb[0].mxu0
        %v5826 = vadd.f32 0.0, %v5825
        %5827 = vdwg.mxu0
        %v5828 = vunpack.c.l.bf16 %v5738
        %v5829 = vunpack.c.l.bf16 %v5739
        %v5830 = vunpack.c.l.bf16 %v5740
        %v5831 = vunpack.c.l.bf16 %v5741
        %v5832 = vunpack.c.h.bf16 %v5738
        %v5833 = vunpack.c.h.bf16 %v5739
        %v5834 = vunpack.c.h.bf16 %v5740
        %v5835 = vunpack.c.h.bf16 %v5741
        %v5836 = vadd.f32 %v5828, %v5777
        %v5837 = vadd.f32 %v5829, %v5779
        %v5838 = vadd.f32 %v5830, %v5820
        %v5839 = vadd.f32 %v5831, %v5822
        %v5840 = vadd.f32 %v5832, %v5781
        %v5841 = vadd.f32 %v5833, %v5783
        %v5842 = vadd.f32 %v5834, %v5824
        %v5843 = vadd.f32 %v5835, %v5826
        %v5844 = vxor.u32 %v5836, 2147483648
        %v5845 = vxor.u32 %v5840, 2147483648
        %v5846 = vmul.f32 %v5844, 1.442695
        %v5847 = vpow.pop %v5846
        %v5848 = vmul.f32 %v5845, 1.442695
        %v5849 = vpow.pop %v5848
        %v5850 = vadd.f32 %v5847, 1.0
        %v5851 = vadd.f32 %v5849, 1.0
        %v5852 = vrcp.pop %v5850
        %v5853 = vmul.f32 1.0, %v5852
        %v5854 = vrcp.pop %v5851
        %v5855 = vmul.f32 1.0, %v5854
        %v5856 = vxor.u32 %v5837, 2147483648
        %v5857 = vxor.u32 %v5841, 2147483648
        %v5858 = vmul.f32 %v5856, 1.442695
        %v5859 = vpow.pop %v5858
        %v5860 = vmul.f32 %v5857, 1.442695
        %v5861 = vpow.pop %v5860
        %v5862 = vadd.f32 %v5859, 1.0
        %v5863 = vadd.f32 %v5861, 1.0
        %v5864 = vrcp.pop %v5862
        %v5865 = vmul.f32 1.0, %v5864
        %v5866 = vrcp.pop %v5863
        %v5867 = vmul.f32 1.0, %v5866
        %v5868 = vtanh.pop %v5838
        %v5869 = vtanh.pop %v5842
        %v5870 = vxor.u32 %v5839, 2147483648
        %v5871 = vxor.u32 %v5843, 2147483648
        %v5872 = vmul.f32 %v5870, 1.442695
        %v5873 = vpow.pop %v5872
        %v5874 = vmul.f32 %v5871, 1.442695
        %v5875 = vpow.pop %v5874
        %v5876 = vadd.f32 %v5873, 1.0
        %v5877 = vadd.f32 %v5875, 1.0
        %v5878 = vrcp.pop %v5876
        %v5879 = vmul.f32 1.0, %v5878
        %v5880 = vrcp.pop %v5877
        %v5881 = vmul.f32 1.0, %v5880
        %v5882 = vmul.f32 %v5865, %v5726
        %v5883 = vmul.f32 %v5867, %v5727
        %v5884 = vmul.f32 %v5853, %v5868
        %v5885 = vmul.f32 %v5855, %v5869
        %v5886 = vadd.f32 %v5882, %v5884
        %v5887 = vadd.f32 %v5883, %v5885
        %v5888 = vtanh.pop %v5886
        %v5889 = vtanh.pop %v5887
        %v5890 = vmul.f32 %v5879, %v5888
        %v5891 = vmul.f32 %v5881, %v5889
        %v5892 = vpack.c.bf16 %v5891, %v5890
        %s5893 = scalar_lea.vmem [#allocation3], 192
        %5894 = vst [vmem:[%s5893] sm:$0xff] %v5892
        %s5895 = smul.u32 25, 4
        %s5896 = smul.addr %s5895, 8
        %s5897 = scalar_lea.vmem [#allocation2], %s5896
        %v5898 = vld [vmem:[%s5897] sm:$0xff]
        %v5899 = vld [vmem:[%s5897 + $0x8] sm:$0xff]
        %v5900 = vld [vmem:[%s5897 + $0x10] sm:$0xff]
        %v5901 = vld [vmem:[%s5897 + $0x18] sm:$0xff]
        %5902 = vmatprep.subr.bf16.mxu0 %v1840
        %5903 = vmatpush1.bf16.msra.mxu0 %v1839
        %5904 = vmatprep.subr.bf16.mxu0 %v1844
        %5905 = vmatpush1.bf16.msra.mxu0 %v1843
        %5906 = vmatprep.subr.bf16.mxu0 %v1848
        %5907 = vmatpush1.bf16.msra.mxu0 %v1847
        %5908 = vmatprep.subr.bf16.mxu0 %v1852
        %5909 = vmatpush1.bf16.msra.mxu0 %v1851
        %5910 = vmatprep.subr.bf16.mxu0 %v1856
        %5911 = vmatpush1.bf16.msra.mxu0 %v1855
        %5912 = vmatprep.subr.bf16.mxu0 %v1860
        %5913 = vmatpush1.bf16.msra.mxu0 %v1859
        %5914 = vmatprep.subr.bf16.mxu0 %v1864
        %5915 = vmatpush1.bf16.msra.mxu0 %v1863
        %5916 = vmatprep.subr.bf16.mxu0 %v1868
        %5917 = vmatpush1.bf16.msra.mxu0 %v1867
        %5918 = vmatprep.subr.bf16.mxu0 0
        %5919 = vmatpush1.bf16.msra.mxu0 0
        %5920 = vmatprep.subr.bf16.mxu0 0
        %5921 = vmatpush1.bf16.msra.mxu0 0
        %5922 = vmatprep.subr.bf16.mxu0 0
        %5923 = vmatpush1.bf16.msra.mxu0 0
        %5924 = vmatprep.subr.bf16.mxu0 0
        %5925 = vmatpush1.bf16.msra.mxu0 0
        %5926 = vmatprep.subr.bf16.mxu0 0
        %5927 = vmatpush1.bf16.msra.mxu0 0
        %5928 = vmatprep.subr.bf16.mxu0 0
        %5929 = vmatpush1.bf16.msra.mxu0 0
        %5930 = vmatprep.subr.bf16.mxu0 0
        %5931 = vmatpush1.bf16.msra.mxu0 0
        %5932 = vmatprep.subr.bf16.mxu0 0
        %5933 = vmatpush1.bf16.msra.mxu0 0
        %5934 = vmatprep.mubr.bf16.mxu0 0
        %5935 = vmatmul.mubr.bf16.gmra.mrb[0].mxu0 %v5892
        %v5936 = vpop.f32.mrb[0].mxu0
        %v5937 = vadd.f32 0.0, %v5936
        %v5938 = vpop.f32.mrb[0].mxu0
        %v5939 = vadd.f32 0.0, %v5938
        %v5940 = vpop.f32.mrb[0].mxu0
        %v5941 = vadd.f32 0.0, %v5940
        %v5942 = vpop.f32.mrb[0].mxu0
        %v5943 = vadd.f32 0.0, %v5942
        %5944 = vdwg.mxu0
        %5945 = vmatprep.subr.bf16.mxu0 %v1842
        %5946 = vmatpush1.bf16.msra.mxu0 %v1841
        %5947 = vmatprep.subr.bf16.mxu0 %v1846
        %5948 = vmatpush1.bf16.msra.mxu0 %v1845
        %5949 = vmatprep.subr.bf16.mxu0 %v1850
        %5950 = vmatpush1.bf16.msra.mxu0 %v1849
        %5951 = vmatprep.subr.bf16.mxu0 %v1854
        %5952 = vmatpush1.bf16.msra.mxu0 %v1853
        %5953 = vmatprep.subr.bf16.mxu0 %v1858
        %5954 = vmatpush1.bf16.msra.mxu0 %v1857
        %5955 = vmatprep.subr.bf16.mxu0 %v1862
        %5956 = vmatpush1.bf16.msra.mxu0 %v1861
        %5957 = vmatprep.subr.bf16.mxu0 %v1866
        %5958 = vmatpush1.bf16.msra.mxu0 %v1865
        %5959 = vmatprep.subr.bf16.mxu0 %v1870
        %5960 = vmatpush1.bf16.msra.mxu0 %v1869
        %5961 = vmatprep.subr.bf16.mxu0 0
        %5962 = vmatpush1.bf16.msra.mxu0 0
        %5963 = vmatprep.subr.bf16.mxu0 0
        %5964 = vmatpush1.bf16.msra.mxu0 0
        %5965 = vmatprep.subr.bf16.mxu0 0
        %5966 = vmatpush1.bf16.msra.mxu0 0
        %5967 = vmatprep.subr.bf16.mxu0 0
        %5968 = vmatpush1.bf16.msra.mxu0 0
        %5969 = vmatprep.subr.bf16.mxu0 0
        %5970 = vmatpush1.bf16.msra.mxu0 0
        %5971 = vmatprep.subr.bf16.mxu0 0
        %5972 = vmatpush1.bf16.msra.mxu0 0
        %5973 = vmatprep.subr.bf16.mxu0 0
        %5974 = vmatpush1.bf16.msra.mxu0 0
        %5975 = vmatprep.subr.bf16.mxu0 0
        %5976 = vmatpush1.bf16.msra.mxu0 0
        %5977 = vmatprep.mubr.bf16.mxu0 0
        %5978 = vmatmul.mubr.bf16.gmra.mrb[0].mxu0 %v5892
        %v5979 = vpop.f32.mrb[0].mxu0
        %v5980 = vadd.f32 0.0, %v5979
        %v5981 = vpop.f32.mrb[0].mxu0
        %v5982 = vadd.f32 0.0, %v5981
        %v5983 = vpop.f32.mrb[0].mxu0
        %v5984 = vadd.f32 0.0, %v5983
        %v5985 = vpop.f32.mrb[0].mxu0
        %v5986 = vadd.f32 0.0, %v5985
        %5987 = vdwg.mxu0
        %v5988 = vunpack.c.l.bf16 %v5898
        %v5989 = vunpack.c.l.bf16 %v5899
        %v5990 = vunpack.c.l.bf16 %v5900
        %v5991 = vunpack.c.l.bf16 %v5901
        %v5992 = vunpack.c.h.bf16 %v5898
        %v5993 = vunpack.c.h.bf16 %v5899
        %v5994 = vunpack.c.h.bf16 %v5900
        %v5995 = vunpack.c.h.bf16 %v5901
        %v5996 = vadd.f32 %v5988, %v5937
        %v5997 = vadd.f32 %v5989, %v5939
        %v5998 = vadd.f32 %v5990, %v5980
        %v5999 = vadd.f32 %v5991, %v5982
        %v6000 = vadd.f32 %v5992, %v5941
        %v6001 = vadd.f32 %v5993, %v5943
        %v6002 = vadd.f32 %v5994, %v5984
        %v6003 = vadd.f32 %v5995, %v5986
        %v6004 = vxor.u32 %v5996, 2147483648
        %v6005 = vxor.u32 %v6000, 2147483648
        %v6006 = vmul.f32 %v6004, 1.442695
        %v6007 = vpow.pop %v6006
        %v6008 = vmul.f32 %v6005, 1.442695
        %v6009 = vpow.pop %v6008
        %v6010 = vadd.f32 %v6007, 1.0
        %v6011 = vadd.f32 %v6009, 1.0
        %v6012 = vrcp.pop %v6010
        %v6013 = vmul.f32 1.0, %v6012
        %v6014 = vrcp.pop %v6011
        %v6015 = vmul.f32 1.0, %v6014
        %v6016 = vxor.u32 %v5997, 2147483648
        %v6017 = vxor.u32 %v6001, 2147483648
        %v6018 = vmul.f32 %v6016, 1.442695
        %v6019 = vpow.pop %v6018
        %v6020 = vmul.f32 %v6017, 1.442695
        %v6021 = vpow.pop %v6020
        %v6022 = vadd.f32 %v6019, 1.0
        %v6023 = vadd.f32 %v6021, 1.0
        %v6024 = vrcp.pop %v6022
        %v6025 = vmul.f32 1.0, %v6024
        %v6026 = vrcp.pop %v6023
        %v6027 = vmul.f32 1.0, %v6026
        %v6028 = vtanh.pop %v5998
        %v6029 = vtanh.pop %v6002
        %v6030 = vxor.u32 %v5999, 2147483648
        %v6031 = vxor.u32 %v6003, 2147483648
        %v6032 = vmul.f32 %v6030, 1.442695
        %v6033 = vpow.pop %v6032
        %v6034 = vmul.f32 %v6031, 1.442695
        %v6035 = vpow.pop %v6034
        %v6036 = vadd.f32 %v6033, 1.0
        %v6037 = vadd.f32 %v6035, 1.0
        %v6038 = vrcp.pop %v6036
        %v6039 = vmul.f32 1.0, %v6038
        %v6040 = vrcp.pop %v6037
        %v6041 = vmul.f32 1.0, %v6040
        %v6042 = vmul.f32 %v6025, %v5886
        %v6043 = vmul.f32 %v6027, %v5887
        %v6044 = vmul.f32 %v6013, %v6028
        %v6045 = vmul.f32 %v6015, %v6029
        %v6046 = vadd.f32 %v6042, %v6044
        %v6047 = vadd.f32 %v6043, %v6045
        %v6048 = vtanh.pop %v6046
        %v6049 = vtanh.pop %v6047
        %v6050 = vmul.f32 %v6039, %v6048
        %v6051 = vmul.f32 %v6041, %v6049
        %v6052 = vpack.c.bf16 %v6051, %v6050
        %s6053 = scalar_lea.vmem [#allocation3], 200
        %6054 = vst [vmem:[%s6053] sm:$0xff] %v6052
        %s6055 = smul.u32 26, 4
        %s6056 = smul.addr %s6055, 8
        %s6057 = scalar_lea.vmem [#allocation2], %s6056
        %v6058 = vld [vmem:[%s6057] sm:$0xff]
        %v6059 = vld [vmem:[%s6057 + $0x8] sm:$0xff]
        %v6060 = vld [vmem:[%s6057 + $0x10] sm:$0xff]
        %v6061 = vld [vmem:[%s6057 + $0x18] sm:$0xff]
        %6062 = vmatprep.subr.bf16.mxu0 %v1840
        %6063 = vmatpush1.bf16.msra.mxu0 %v1839
        %6064 = vmatprep.subr.bf16.mxu0 %v1844
        %6065 = vmatpush1.bf16.msra.mxu0 %v1843
        %6066 = vmatprep.subr.bf16.mxu0 %v1848
        %6067 = vmatpush1.bf16.msra.mxu0 %v1847
        %6068 = vmatprep.subr.bf16.mxu0 %v1852
        %6069 = vmatpush1.bf16.msra.mxu0 %v1851
        %6070 = vmatprep.subr.bf16.mxu0 %v1856
        %6071 = vmatpush1.bf16.msra.mxu0 %v1855
        %6072 = vmatprep.subr.bf16.mxu0 %v1860
        %6073 = vmatpush1.bf16.msra.mxu0 %v1859
        %6074 = vmatprep.subr.bf16.mxu0 %v1864
        %6075 = vmatpush1.bf16.msra.mxu0 %v1863
        %6076 = vmatprep.subr.bf16.mxu0 %v1868
        %6077 = vmatpush1.bf16.msra.mxu0 %v1867
        %6078 = vmatprep.subr.bf16.mxu0 0
        %6079 = vmatpush1.bf16.msra.mxu0 0
        %6080 = vmatprep.subr.bf16.mxu0 0
        %6081 = vmatpush1.bf16.msra.mxu0 0
        %6082 = vmatprep.subr.bf16.mxu0 0
        %6083 = vmatpush1.bf16.msra.mxu0 0
        %6084 = vmatprep.subr.bf16.mxu0 0
        %6085 = vmatpush1.bf16.msra.mxu0 0
        %6086 = vmatprep.subr.bf16.mxu0 0
        %6087 = vmatpush1.bf16.msra.mxu0 0
        %6088 = vmatprep.subr.bf16.mxu0 0
        %6089 = vmatpush1.bf16.msra.mxu0 0
        %6090 = vmatprep.subr.bf16.mxu0 0
        %6091 = vmatpush1.bf16.msra.mxu0 0
        %6092 = vmatprep.subr.bf16.mxu0 0
        %6093 = vmatpush1.bf16.msra.mxu0 0
        %6094 = vmatprep.mubr.bf16.mxu0 0
        %6095 = vmatmul.mubr.bf16.gmra.mrb[0].mxu0 %v6052
        %v6096 = vpop.f32.mrb[0].mxu0
        %v6097 = vadd.f32 0.0, %v6096
        %v6098 = vpop.f32.mrb[0].mxu0
        %v6099 = vadd.f32 0.0, %v6098
        %v6100 = vpop.f32.mrb[0].mxu0
        %v6101 = vadd.f32 0.0, %v6100
        %v6102 = vpop.f32.mrb[0].mxu0
        %v6103 = vadd.f32 0.0, %v6102
        %6104 = vdwg.mxu0
        %6105 = vmatprep.subr.bf16.mxu0 %v1842
        %6106 = vmatpush1.bf16.msra.mxu0 %v1841
        %6107 = vmatprep.subr.bf16.mxu0 %v1846
        %6108 = vmatpush1.bf16.msra.mxu0 %v1845
        %6109 = vmatprep.subr.bf16.mxu0 %v1850
        %6110 = vmatpush1.bf16.msra.mxu0 %v1849
        %6111 = vmatprep.subr.bf16.mxu0 %v1854
        %6112 = vmatpush1.bf16.msra.mxu0 %v1853
        %6113 = vmatprep.subr.bf16.mxu0 %v1858
        %6114 = vmatpush1.bf16.msra.mxu0 %v1857
        %6115 = vmatprep.subr.bf16.mxu0 %v1862
        %6116 = vmatpush1.bf16.msra.mxu0 %v1861
        %6117 = vmatprep.subr.bf16.mxu0 %v1866
        %6118 = vmatpush1.bf16.msra.mxu0 %v1865
        %6119 = vmatprep.subr.bf16.mxu0 %v1870
        %6120 = vmatpush1.bf16.msra.mxu0 %v1869
        %6121 = vmatprep.subr.bf16.mxu0 0
        %6122 = vmatpush1.bf16.msra.mxu0 0
        %6123 = vmatprep.subr.bf16.mxu0 0
        %6124 = vmatpush1.bf16.msra.mxu0 0
        %6125 = vmatprep.subr.bf16.mxu0 0
        %6126 = vmatpush1.bf16.msra.mxu0 0
        %6127 = vmatprep.subr.bf16.mxu0 0
        %6128 = vmatpush1.bf16.msra.mxu0 0
        %6129 = vmatprep.subr.bf16.mxu0 0
        %6130 = vmatpush1.bf16.msra.mxu0 0
        %6131 = vmatprep.subr.bf16.mxu0 0
        %6132 = vmatpush1.bf16.msra.mxu0 0
        %6133 = vmatprep.subr.bf16.mxu0 0
        %6134 = vmatpush1.bf16.msra.mxu0 0
        %6135 = vmatprep.subr.bf16.mxu0 0
        %6136 = vmatpush1.bf16.msra.mxu0 0
        %6137 = vmatprep.mubr.bf16.mxu0 0
        %6138 = vmatmul.mubr.bf16.gmra.mrb[0].mxu0 %v6052
        %v6139 = vpop.f32.mrb[0].mxu0
        %v6140 = vadd.f32 0.0, %v6139
        %v6141 = vpop.f32.mrb[0].mxu0
        %v6142 = vadd.f32 0.0, %v6141
        %v6143 = vpop.f32.mrb[0].mxu0
        %v6144 = vadd.f32 0.0, %v6143
        %v6145 = vpop.f32.mrb[0].mxu0
        %v6146 = vadd.f32 0.0, %v6145
        %6147 = vdwg.mxu0
        %v6148 = vunpack.c.l.bf16 %v6058
        %v6149 = vunpack.c.l.bf16 %v6059
        %v6150 = vunpack.c.l.bf16 %v6060
        %v6151 = vunpack.c.l.bf16 %v6061
        %v6152 = vunpack.c.h.bf16 %v6058
        %v6153 = vunpack.c.h.bf16 %v6059
        %v6154 = vunpack.c.h.bf16 %v6060
        %v6155 = vunpack.c.h.bf16 %v6061
        %v6156 = vadd.f32 %v6148, %v6097
        %v6157 = vadd.f32 %v6149, %v6099
        %v6158 = vadd.f32 %v6150, %v6140
        %v6159 = vadd.f32 %v6151, %v6142
        %v6160 = vadd.f32 %v6152, %v6101
        %v6161 = vadd.f32 %v6153, %v6103
        %v6162 = vadd.f32 %v6154, %v6144
        %v6163 = vadd.f32 %v6155, %v6146
        %v6164 = vxor.u32 %v6156, 2147483648
        %v6165 = vxor.u32 %v6160, 2147483648
        %v6166 = vmul.f32 %v6164, 1.442695
        %v6167 = vpow.pop %v6166
        %v6168 = vmul.f32 %v6165, 1.442695
        %v6169 = vpow.pop %v6168
        %v6170 = vadd.f32 %v6167, 1.0
        %v6171 = vadd.f32 %v6169, 1.0
        %v6172 = vrcp.pop %v6170
        %v6173 = vmul.f32 1.0, %v6172
        %v6174 = vrcp.pop %v6171
        %v6175 = vmul.f32 1.0, %v6174
        %v6176 = vxor.u32 %v6157, 2147483648
        %v6177 = vxor.u32 %v6161, 2147483648
        %v6178 = vmul.f32 %v6176, 1.442695
        %v6179 = vpow.pop %v6178
        %v6180 = vmul.f32 %v6177, 1.442695
        %v6181 = vpow.pop %v6180
        %v6182 = vadd.f32 %v6179, 1.0
        %v6183 = vadd.f32 %v6181, 1.0
        %v6184 = vrcp.pop %v6182
        %v6185 = vmul.f32 1.0, %v6184
        %v6186 = vrcp.pop %v6183
        %v6187 = vmul.f32 1.0, %v6186
        %v6188 = vtanh.pop %v6158
        %v6189 = vtanh.pop %v6162
        %v6190 = vxor.u32 %v6159, 2147483648
        %v6191 = vxor.u32 %v6163, 2147483648
        %v6192 = vmul.f32 %v6190, 1.442695
        %v6193 = vpow.pop %v6192
        %v6194 = vmul.f32 %v6191, 1.442695
        %v6195 = vpow.pop %v6194
        %v6196 = vadd.f32 %v6193, 1.0
        %v6197 = vadd.f32 %v6195, 1.0
        %v6198 = vrcp.pop %v6196
        %v6199 = vmul.f32 1.0, %v6198
        %v6200 = vrcp.pop %v6197
        %v6201 = vmul.f32 1.0, %v6200
        %v6202 = vmul.f32 %v6185, %v6046
        %v6203 = vmul.f32 %v6187, %v6047
        %v6204 = vmul.f32 %v6173, %v6188
        %v6205 = vmul.f32 %v6175, %v6189
        %v6206 = vadd.f32 %v6202, %v6204
        %v6207 = vadd.f32 %v6203, %v6205
        %v6208 = vtanh.pop %v6206
        %v6209 = vtanh.pop %v6207
        %v6210 = vmul.f32 %v6199, %v6208
        %v6211 = vmul.f32 %v6201, %v6209
        %v6212 = vpack.c.bf16 %v6211, %v6210
        %s6213 = scalar_lea.vmem [#allocation3], 208
        %6214 = vst [vmem:[%s6213] sm:$0xff] %v6212
        %s6215 = smul.u32 27, 4
        %s6216 = smul.addr %s6215, 8
        %s6217 = scalar_lea.vmem [#allocation2], %s6216
        %v6218 = vld [vmem:[%s6217] sm:$0xff]
        %v6219 = vld [vmem:[%s6217 + $0x8] sm:$0xff]
        %v6220 = vld [vmem:[%s6217 + $0x10] sm:$0xff]
        %v6221 = vld [vmem:[%s6217 + $0x18] sm:$0xff]
        %6222 = vmatprep.subr.bf16.mxu0 %v1840
        %6223 = vmatpush1.bf16.msra.mxu0 %v1839
        %6224 = vmatprep.subr.bf16.mxu0 %v1844
        %6225 = vmatpush1.bf16.msra.mxu0 %v1843
        %6226 = vmatprep.subr.bf16.mxu0 %v1848
        %6227 = vmatpush1.bf16.msra.mxu0 %v1847
        %6228 = vmatprep.subr.bf16.mxu0 %v1852
        %6229 = vmatpush1.bf16.msra.mxu0 %v1851
        %6230 = vmatprep.subr.bf16.mxu0 %v1856
        %6231 = vmatpush1.bf16.msra.mxu0 %v1855
        %6232 = vmatprep.subr.bf16.mxu0 %v1860
        %6233 = vmatpush1.bf16.msra.mxu0 %v1859
        %6234 = vmatprep.subr.bf16.mxu0 %v1864
        %6235 = vmatpush1.bf16.msra.mxu0 %v1863
        %6236 = vmatprep.subr.bf16.mxu0 %v1868
        %6237 = vmatpush1.bf16.msra.mxu0 %v1867
        %6238 = vmatprep.subr.bf16.mxu0 0
        %6239 = vmatpush1.bf16.msra.mxu0 0
        %6240 = vmatprep.subr.bf16.mxu0 0
        %6241 = vmatpush1.bf16.msra.mxu0 0
        %6242 = vmatprep.subr.bf16.mxu0 0
        %6243 = vmatpush1.bf16.msra.mxu0 0
        %6244 = vmatprep.subr.bf16.mxu0 0
        %6245 = vmatpush1.bf16.msra.mxu0 0
        %6246 = vmatprep.subr.bf16.mxu0 0
        %6247 = vmatpush1.bf16.msra.mxu0 0
        %6248 = vmatprep.subr.bf16.mxu0 0
        %6249 = vmatpush1.bf16.msra.mxu0 0
        %6250 = vmatprep.subr.bf16.mxu0 0
        %6251 = vmatpush1.bf16.msra.mxu0 0
        %6252 = vmatprep.subr.bf16.mxu0 0
        %6253 = vmatpush1.bf16.msra.mxu0 0
        %6254 = vmatprep.mubr.bf16.mxu0 0
        %6255 = vmatmul.mubr.bf16.gmra.mrb[0].mxu0 %v6212
        %v6256 = vpop.f32.mrb[0].mxu0
        %v6257 = vadd.f32 0.0, %v6256
        %v6258 = vpop.f32.mrb[0].mxu0
        %v6259 = vadd.f32 0.0, %v6258
        %v6260 = vpop.f32.mrb[0].mxu0
        %v6261 = vadd.f32 0.0, %v6260
        %v6262 = vpop.f32.mrb[0].mxu0
        %v6263 = vadd.f32 0.0, %v6262
        %6264 = vdwg.mxu0
        %6265 = vmatprep.subr.bf16.mxu0 %v1842
        %6266 = vmatpush1.bf16.msra.mxu0 %v1841
        %6267 = vmatprep.subr.bf16.mxu0 %v1846
        %6268 = vmatpush1.bf16.msra.mxu0 %v1845
        %6269 = vmatprep.subr.bf16.mxu0 %v1850
        %6270 = vmatpush1.bf16.msra.mxu0 %v1849
        %6271 = vmatprep.subr.bf16.mxu0 %v1854
        %6272 = vmatpush1.bf16.msra.mxu0 %v1853
        %6273 = vmatprep.subr.bf16.mxu0 %v1858
        %6274 = vmatpush1.bf16.msra.mxu0 %v1857
        %6275 = vmatprep.subr.bf16.mxu0 %v1862
        %6276 = vmatpush1.bf16.msra.mxu0 %v1861
        %6277 = vmatprep.subr.bf16.mxu0 %v1866
        %6278 = vmatpush1.bf16.msra.mxu0 %v1865
        %6279 = vmatprep.subr.bf16.mxu0 %v1870
        %6280 = vmatpush1.bf16.msra.mxu0 %v1869
        %6281 = vmatprep.subr.bf16.mxu0 0
        %6282 = vmatpush1.bf16.msra.mxu0 0
        %6283 = vmatprep.subr.bf16.mxu0 0
        %6284 = vmatpush1.bf16.msra.mxu0 0
        %6285 = vmatprep.subr.bf16.mxu0 0
        %6286 = vmatpush1.bf16.msra.mxu0 0
        %6287 = vmatprep.subr.bf16.mxu0 0
        %6288 = vmatpush1.bf16.msra.mxu0 0
        %6289 = vmatprep.subr.bf16.mxu0 0
        %6290 = vmatpush1.bf16.msra.mxu0 0
        %6291 = vmatprep.subr.bf16.mxu0 0
        %6292 = vmatpush1.bf16.msra.mxu0 0
        %6293 = vmatprep.subr.bf16.mxu0 0
        %6294 = vmatpush1.bf16.msra.mxu0 0
        %6295 = vmatprep.subr.bf16.mxu0 0
        %6296 = vmatpush1.bf16.msra.mxu0 0
        %6297 = vmatprep.mubr.bf16.mxu0 0
        %6298 = vmatmul.mubr.bf16.gmra.mrb[0].mxu0 %v6212
        %v6299 = vpop.f32.mrb[0].mxu0
        %v6300 = vadd.f32 0.0, %v6299
        %v6301 = vpop.f32.mrb[0].mxu0
        %v6302 = vadd.f32 0.0, %v6301
        %v6303 = vpop.f32.mrb[0].mxu0
        %v6304 = vadd.f32 0.0, %v6303
        %v6305 = vpop.f32.mrb[0].mxu0
        %v6306 = vadd.f32 0.0, %v6305
        %6307 = vdwg.mxu0
        %v6308 = vunpack.c.l.bf16 %v6218
        %v6309 = vunpack.c.l.bf16 %v6219
        %v6310 = vunpack.c.l.bf16 %v6220
        %v6311 = vunpack.c.l.bf16 %v6221
        %v6312 = vunpack.c.h.bf16 %v6218
        %v6313 = vunpack.c.h.bf16 %v6219
        %v6314 = vunpack.c.h.bf16 %v6220
        %v6315 = vunpack.c.h.bf16 %v6221
        %v6316 = vadd.f32 %v6308, %v6257
        %v6317 = vadd.f32 %v6309, %v6259
        %v6318 = vadd.f32 %v6310, %v6300
        %v6319 = vadd.f32 %v6311, %v6302
        %v6320 = vadd.f32 %v6312, %v6261
        %v6321 = vadd.f32 %v6313, %v6263
        %v6322 = vadd.f32 %v6314, %v6304
        %v6323 = vadd.f32 %v6315, %v6306
        %v6324 = vxor.u32 %v6316, 2147483648
        %v6325 = vxor.u32 %v6320, 2147483648
        %v6326 = vmul.f32 %v6324, 1.442695
        %v6327 = vpow.pop %v6326
        %v6328 = vmul.f32 %v6325, 1.442695
        %v6329 = vpow.pop %v6328
        %v6330 = vadd.f32 %v6327, 1.0
        %v6331 = vadd.f32 %v6329, 1.0
        %v6332 = vrcp.pop %v6330
        %v6333 = vmul.f32 1.0, %v6332
        %v6334 = vrcp.pop %v6331
        %v6335 = vmul.f32 1.0, %v6334
        %v6336 = vxor.u32 %v6317, 2147483648
        %v6337 = vxor.u32 %v6321, 2147483648
        %v6338 = vmul.f32 %v6336, 1.442695
        %v6339 = vpow.pop %v6338
        %v6340 = vmul.f32 %v6337, 1.442695
        %v6341 = vpow.pop %v6340
        %v6342 = vadd.f32 %v6339, 1.0
        %v6343 = vadd.f32 %v6341, 1.0
        %v6344 = vrcp.pop %v6342
        %v6345 = vmul.f32 1.0, %v6344
        %v6346 = vrcp.pop %v6343
        %v6347 = vmul.f32 1.0, %v6346
        %v6348 = vtanh.pop %v6318
        %v6349 = vtanh.pop %v6322
        %v6350 = vxor.u32 %v6319, 2147483648
        %v6351 = vxor.u32 %v6323, 2147483648
        %v6352 = vmul.f32 %v6350, 1.442695
        %v6353 = vpow.pop %v6352
        %v6354 = vmul.f32 %v6351, 1.442695
        %v6355 = vpow.pop %v6354
        %v6356 = vadd.f32 %v6353, 1.0
        %v6357 = vadd.f32 %v6355, 1.0
        %v6358 = vrcp.pop %v6356
        %v6359 = vmul.f32 1.0, %v6358
        %v6360 = vrcp.pop %v6357
        %v6361 = vmul.f32 1.0, %v6360
        %v6362 = vmul.f32 %v6345, %v6206
        %v6363 = vmul.f32 %v6347, %v6207
        %v6364 = vmul.f32 %v6333, %v6348
        %v6365 = vmul.f32 %v6335, %v6349
        %v6366 = vadd.f32 %v6362, %v6364
        %v6367 = vadd.f32 %v6363, %v6365
        %v6368 = vtanh.pop %v6366
        %v6369 = vtanh.pop %v6367
        %v6370 = vmul.f32 %v6359, %v6368
        %v6371 = vmul.f32 %v6361, %v6369
        %v6372 = vpack.c.bf16 %v6371, %v6370
        %s6373 = scalar_lea.vmem [#allocation3], 216
        %6374 = vst [vmem:[%s6373] sm:$0xff] %v6372
        %s6375 = smul.u32 28, 4
        %s6376 = smul.addr %s6375, 8
        %s6377 = scalar_lea.vmem [#allocation2], %s6376
        %v6378 = vld [vmem:[%s6377] sm:$0xff]
        %v6379 = vld [vmem:[%s6377 + $0x8] sm:$0xff]
        %v6380 = vld [vmem:[%s6377 + $0x10] sm:$0xff]
        %v6381 = vld [vmem:[%s6377 + $0x18] sm:$0xff]
        %6382 = vmatprep.subr.bf16.mxu0 %v1840
        %6383 = vmatpush1.bf16.msra.mxu0 %v1839
        %6384 = vmatprep.subr.bf16.mxu0 %v1844
        %6385 = vmatpush1.bf16.msra.mxu0 %v1843
        %6386 = vmatprep.subr.bf16.mxu0 %v1848
        %6387 = vmatpush1.bf16.msra.mxu0 %v1847
        %6388 = vmatprep.subr.bf16.mxu0 %v1852
        %6389 = vmatpush1.bf16.msra.mxu0 %v1851
        %6390 = vmatprep.subr.bf16.mxu0 %v1856
        %6391 = vmatpush1.bf16.msra.mxu0 %v1855
        %6392 = vmatprep.subr.bf16.mxu0 %v1860
        %6393 = vmatpush1.bf16.msra.mxu0 %v1859
        %6394 = vmatprep.subr.bf16.mxu0 %v1864
        %6395 = vmatpush1.bf16.msra.mxu0 %v1863
        %6396 = vmatprep.subr.bf16.mxu0 %v1868
        %6397 = vmatpush1.bf16.msra.mxu0 %v1867
        %6398 = vmatprep.subr.bf16.mxu0 0
        %6399 = vmatpush1.bf16.msra.mxu0 0
        %6400 = vmatprep.subr.bf16.mxu0 0
        %6401 = vmatpush1.bf16.msra.mxu0 0
        %6402 = vmatprep.subr.bf16.mxu0 0
        %6403 = vmatpush1.bf16.msra.mxu0 0
        %6404 = vmatprep.subr.bf16.mxu0 0
        %6405 = vmatpush1.bf16.msra.mxu0 0
        %6406 = vmatprep.subr.bf16.mxu0 0
        %6407 = vmatpush1.bf16.msra.mxu0 0
        %6408 = vmatprep.subr.bf16.mxu0 0
        %6409 = vmatpush1.bf16.msra.mxu0 0
        %6410 = vmatprep.subr.bf16.mxu0 0
        %6411 = vmatpush1.bf16.msra.mxu0 0
        %6412 = vmatprep.subr.bf16.mxu0 0
        %6413 = vmatpush1.bf16.msra.mxu0 0
        %6414 = vmatprep.mubr.bf16.mxu0 0
        %6415 = vmatmul.mubr.bf16.gmra.mrb[0].mxu0 %v6372
        %v6416 = vpop.f32.mrb[0].mxu0
        %v6417 = vadd.f32 0.0, %v6416
        %v6418 = vpop.f32.mrb[0].mxu0
        %v6419 = vadd.f32 0.0, %v6418
        %v6420 = vpop.f32.mrb[0].mxu0
        %v6421 = vadd.f32 0.0, %v6420
        %v6422 = vpop.f32.mrb[0].mxu0
        %v6423 = vadd.f32 0.0, %v6422
        %6424 = vdwg.mxu0
        %6425 = vmatprep.subr.bf16.mxu0 %v1842
        %6426 = vmatpush1.bf16.msra.mxu0 %v1841
        %6427 = vmatprep.subr.bf16.mxu0 %v1846
        %6428 = vmatpush1.bf16.msra.mxu0 %v1845
        %6429 = vmatprep.subr.bf16.mxu0 %v1850
        %6430 = vmatpush1.bf16.msra.mxu0 %v1849
        %6431 = vmatprep.subr.bf16.mxu0 %v1854
        %6432 = vmatpush1.bf16.msra.mxu0 %v1853
        %6433 = vmatprep.subr.bf16.mxu0 %v1858
        %6434 = vmatpush1.bf16.msra.mxu0 %v1857
        %6435 = vmatprep.subr.bf16.mxu0 %v1862
        %6436 = vmatpush1.bf16.msra.mxu0 %v1861
        %6437 = vmatprep.subr.bf16.mxu0 %v1866
        %6438 = vmatpush1.bf16.msra.mxu0 %v1865
        %6439 = vmatprep.subr.bf16.mxu0 %v1870
        %6440 = vmatpush1.bf16.msra.mxu0 %v1869
        %6441 = vmatprep.subr.bf16.mxu0 0
        %6442 = vmatpush1.bf16.msra.mxu0 0
        %6443 = vmatprep.subr.bf16.mxu0 0
        %6444 = vmatpush1.bf16.msra.mxu0 0
        %6445 = vmatprep.subr.bf16.mxu0 0
        %6446 = vmatpush1.bf16.msra.mxu0 0
        %6447 = vmatprep.subr.bf16.mxu0 0
        %6448 = vmatpush1.bf16.msra.mxu0 0
        %6449 = vmatprep.subr.bf16.mxu0 0
        %6450 = vmatpush1.bf16.msra.mxu0 0
        %6451 = vmatprep.subr.bf16.mxu0 0
        %6452 = vmatpush1.bf16.msra.mxu0 0
        %6453 = vmatprep.subr.bf16.mxu0 0
        %6454 = vmatpush1.bf16.msra.mxu0 0
        %6455 = vmatprep.subr.bf16.mxu0 0
        %6456 = vmatpush1.bf16.msra.mxu0 0
        %6457 = vmatprep.mubr.bf16.mxu0 0
        %6458 = vmatmul.mubr.bf16.gmra.mrb[0].mxu0 %v6372
        %v6459 = vpop.f32.mrb[0].mxu0
        %v6460 = vadd.f32 0.0, %v6459
        %v6461 = vpop.f32.mrb[0].mxu0
        %v6462 = vadd.f32 0.0, %v6461
        %v6463 = vpop.f32.mrb[0].mxu0
        %v6464 = vadd.f32 0.0, %v6463
        %v6465 = vpop.f32.mrb[0].mxu0
        %v6466 = vadd.f32 0.0, %v6465
        %6467 = vdwg.mxu0
        %v6468 = vunpack.c.l.bf16 %v6378
        %v6469 = vunpack.c.l.bf16 %v6379
        %v6470 = vunpack.c.l.bf16 %v6380
        %v6471 = vunpack.c.l.bf16 %v6381
        %v6472 = vunpack.c.h.bf16 %v6378
        %v6473 = vunpack.c.h.bf16 %v6379
        %v6474 = vunpack.c.h.bf16 %v6380
        %v6475 = vunpack.c.h.bf16 %v6381
        %v6476 = vadd.f32 %v6468, %v6417
        %v6477 = vadd.f32 %v6469, %v6419
        %v6478 = vadd.f32 %v6470, %v6460
        %v6479 = vadd.f32 %v6471, %v6462
        %v6480 = vadd.f32 %v6472, %v6421
        %v6481 = vadd.f32 %v6473, %v6423
        %v6482 = vadd.f32 %v6474, %v6464
        %v6483 = vadd.f32 %v6475, %v6466
        %v6484 = vxor.u32 %v6476, 2147483648
        %v6485 = vxor.u32 %v6480, 2147483648
        %v6486 = vmul.f32 %v6484, 1.442695
        %v6487 = vpow.pop %v6486
        %v6488 = vmul.f32 %v6485, 1.442695
        %v6489 = vpow.pop %v6488
        %v6490 = vadd.f32 %v6487, 1.0
        %v6491 = vadd.f32 %v6489, 1.0
        %v6492 = vrcp.pop %v6490
        %v6493 = vmul.f32 1.0, %v6492
        %v6494 = vrcp.pop %v6491
        %v6495 = vmul.f32 1.0, %v6494
        %v6496 = vxor.u32 %v6477, 2147483648
        %v6497 = vxor.u32 %v6481, 2147483648
        %v6498 = vmul.f32 %v6496, 1.442695
        %v6499 = vpow.pop %v6498
        %v6500 = vmul.f32 %v6497, 1.442695
        %v6501 = vpow.pop %v6500
        %v6502 = vadd.f32 %v6499, 1.0
        %v6503 = vadd.f32 %v6501, 1.0
        %v6504 = vrcp.pop %v6502
        %v6505 = vmul.f32 1.0, %v6504
        %v6506 = vrcp.pop %v6503
        %v6507 = vmul.f32 1.0, %v6506
        %v6508 = vtanh.pop %v6478
        %v6509 = vtanh.pop %v6482
        %v6510 = vxor.u32 %v6479, 2147483648
        %v6511 = vxor.u32 %v6483, 2147483648
        %v6512 = vmul.f32 %v6510, 1.442695
        %v6513 = vpow.pop %v6512
        %v6514 = vmul.f32 %v6511, 1.442695
        %v6515 = vpow.pop %v6514
        %v6516 = vadd.f32 %v6513, 1.0
        %v6517 = vadd.f32 %v6515, 1.0
        %v6518 = vrcp.pop %v6516
        %v6519 = vmul.f32 1.0, %v6518
        %v6520 = vrcp.pop %v6517
        %v6521 = vmul.f32 1.0, %v6520
        %v6522 = vmul.f32 %v6505, %v6366
        %v6523 = vmul.f32 %v6507, %v6367
        %v6524 = vmul.f32 %v6493, %v6508
        %v6525 = vmul.f32 %v6495, %v6509
        %v6526 = vadd.f32 %v6522, %v6524
        %v6527 = vadd.f32 %v6523, %v6525
        %v6528 = vtanh.pop %v6526
        %v6529 = vtanh.pop %v6527
        %v6530 = vmul.f32 %v6519, %v6528
        %v6531 = vmul.f32 %v6521, %v6529
        %v6532 = vpack.c.bf16 %v6531, %v6530
        %s6533 = scalar_lea.vmem [#allocation3], 224
        %6534 = vst [vmem:[%s6533] sm:$0xff] %v6532
        %s6535 = smul.u32 29, 4
        %s6536 = smul.addr %s6535, 8
        %s6537 = scalar_lea.vmem [#allocation2], %s6536
        %v6538 = vld [vmem:[%s6537] sm:$0xff]
        %v6539 = vld [vmem:[%s6537 + $0x8] sm:$0xff]
        %v6540 = vld [vmem:[%s6537 + $0x10] sm:$0xff]
        %v6541 = vld [vmem:[%s6537 + $0x18] sm:$0xff]
        %6542 = vmatprep.subr.bf16.mxu0 %v1840
        %6543 = vmatpush1.bf16.msra.mxu0 %v1839
        %6544 = vmatprep.subr.bf16.mxu0 %v1844
        %6545 = vmatpush1.bf16.msra.mxu0 %v1843
        %6546 = vmatprep.subr.bf16.mxu0 %v1848
        %6547 = vmatpush1.bf16.msra.mxu0 %v1847
        %6548 = vmatprep.subr.bf16.mxu0 %v1852
        %6549 = vmatpush1.bf16.msra.mxu0 %v1851
        %6550 = vmatprep.subr.bf16.mxu0 %v1856
        %6551 = vmatpush1.bf16.msra.mxu0 %v1855
        %6552 = vmatprep.subr.bf16.mxu0 %v1860
        %6553 = vmatpush1.bf16.msra.mxu0 %v1859
        %6554 = vmatprep.subr.bf16.mxu0 %v1864
        %6555 = vmatpush1.bf16.msra.mxu0 %v1863
        %6556 = vmatprep.subr.bf16.mxu0 %v1868
        %6557 = vmatpush1.bf16.msra.mxu0 %v1867
        %6558 = vmatprep.subr.bf16.mxu0 0
        %6559 = vmatpush1.bf16.msra.mxu0 0
        %6560 = vmatprep.subr.bf16.mxu0 0
        %6561 = vmatpush1.bf16.msra.mxu0 0
        %6562 = vmatprep.subr.bf16.mxu0 0
        %6563 = vmatpush1.bf16.msra.mxu0 0
        %6564 = vmatprep.subr.bf16.mxu0 0
        %6565 = vmatpush1.bf16.msra.mxu0 0
        %6566 = vmatprep.subr.bf16.mxu0 0
        %6567 = vmatpush1.bf16.msra.mxu0 0
        %6568 = vmatprep.subr.bf16.mxu0 0
        %6569 = vmatpush1.bf16.msra.mxu0 0
        %6570 = vmatprep.subr.bf16.mxu0 0
        %6571 = vmatpush1.bf16.msra.mxu0 0
        %6572 = vmatprep.subr.bf16.mxu0 0
        %6573 = vmatpush1.bf16.msra.mxu0 0
        %6574 = vmatprep.mubr.bf16.mxu0 0
        %6575 = vmatmul.mubr.bf16.gmra.mrb[0].mxu0 %v6532
        %v6576 = vpop.f32.mrb[0].mxu0
        %v6577 = vadd.f32 0.0, %v6576
        %v6578 = vpop.f32.mrb[0].mxu0
        %v6579 = vadd.f32 0.0, %v6578
        %v6580 = vpop.f32.mrb[0].mxu0
        %v6581 = vadd.f32 0.0, %v6580
        %v6582 = vpop.f32.mrb[0].mxu0
        %v6583 = vadd.f32 0.0, %v6582
        %6584 = vdwg.mxu0
        %6585 = vmatprep.subr.bf16.mxu0 %v1842
        %6586 = vmatpush1.bf16.msra.mxu0 %v1841
        %6587 = vmatprep.subr.bf16.mxu0 %v1846
        %6588 = vmatpush1.bf16.msra.mxu0 %v1845
        %6589 = vmatprep.subr.bf16.mxu0 %v1850
        %6590 = vmatpush1.bf16.msra.mxu0 %v1849
        %6591 = vmatprep.subr.bf16.mxu0 %v1854
        %6592 = vmatpush1.bf16.msra.mxu0 %v1853
        %6593 = vmatprep.subr.bf16.mxu0 %v1858
        %6594 = vmatpush1.bf16.msra.mxu0 %v1857
        %6595 = vmatprep.subr.bf16.mxu0 %v1862
        %6596 = vmatpush1.bf16.msra.mxu0 %v1861
        %6597 = vmatprep.subr.bf16.mxu0 %v1866
        %6598 = vmatpush1.bf16.msra.mxu0 %v1865
        %6599 = vmatprep.subr.bf16.mxu0 %v1870
        %6600 = vmatpush1.bf16.msra.mxu0 %v1869
        %6601 = vmatprep.subr.bf16.mxu0 0
        %6602 = vmatpush1.bf16.msra.mxu0 0
        %6603 = vmatprep.subr.bf16.mxu0 0
        %6604 = vmatpush1.bf16.msra.mxu0 0
        %6605 = vmatprep.subr.bf16.mxu0 0
        %6606 = vmatpush1.bf16.msra.mxu0 0
        %6607 = vmatprep.subr.bf16.mxu0 0
        %6608 = vmatpush1.bf16.msra.mxu0 0
        %6609 = vmatprep.subr.bf16.mxu0 0
        %6610 = vmatpush1.bf16.msra.mxu0 0
        %6611 = vmatprep.subr.bf16.mxu0 0
        %6612 = vmatpush1.bf16.msra.mxu0 0
        %6613 = vmatprep.subr.bf16.mxu0 0
        %6614 = vmatpush1.bf16.msra.mxu0 0
        %6615 = vmatprep.subr.bf16.mxu0 0
        %6616 = vmatpush1.bf16.msra.mxu0 0
        %6617 = vmatprep.mubr.bf16.mxu0 0
        %6618 = vmatmul.mubr.bf16.gmra.mrb[0].mxu0 %v6532
        %v6619 = vpop.f32.mrb[0].mxu0
        %v6620 = vadd.f32 0.0, %v6619
        %v6621 = vpop.f32.mrb[0].mxu0
        %v6622 = vadd.f32 0.0, %v6621
        %v6623 = vpop.f32.mrb[0].mxu0
        %v6624 = vadd.f32 0.0, %v6623
        %v6625 = vpop.f32.mrb[0].mxu0
        %v6626 = vadd.f32 0.0, %v6625
        %6627 = vdwg.mxu0
        %v6628 = vunpack.c.l.bf16 %v6538
        %v6629 = vunpack.c.l.bf16 %v6539
        %v6630 = vunpack.c.l.bf16 %v6540
        %v6631 = vunpack.c.l.bf16 %v6541
        %v6632 = vunpack.c.h.bf16 %v6538
        %v6633 = vunpack.c.h.bf16 %v6539
        %v6634 = vunpack.c.h.bf16 %v6540
        %v6635 = vunpack.c.h.bf16 %v6541
        %v6636 = vadd.f32 %v6628, %v6577
        %v6637 = vadd.f32 %v6629, %v6579
        %v6638 = vadd.f32 %v6630, %v6620
        %v6639 = vadd.f32 %v6631, %v6622
        %v6640 = vadd.f32 %v6632, %v6581
        %v6641 = vadd.f32 %v6633, %v6583
        %v6642 = vadd.f32 %v6634, %v6624
        %v6643 = vadd.f32 %v6635, %v6626
        %v6644 = vxor.u32 %v6636, 2147483648
        %v6645 = vxor.u32 %v6640, 2147483648
        %v6646 = vmul.f32 %v6644, 1.442695
        %v6647 = vpow.pop %v6646
        %v6648 = vmul.f32 %v6645, 1.442695
        %v6649 = vpow.pop %v6648
        %v6650 = vadd.f32 %v6647, 1.0
        %v6651 = vadd.f32 %v6649, 1.0
        %v6652 = vrcp.pop %v6650
        %v6653 = vmul.f32 1.0, %v6652
        %v6654 = vrcp.pop %v6651
        %v6655 = vmul.f32 1.0, %v6654
        %v6656 = vxor.u32 %v6637, 2147483648
        %v6657 = vxor.u32 %v6641, 2147483648
        %v6658 = vmul.f32 %v6656, 1.442695
        %v6659 = vpow.pop %v6658
        %v6660 = vmul.f32 %v6657, 1.442695
        %v6661 = vpow.pop %v6660
        %v6662 = vadd.f32 %v6659, 1.0
        %v6663 = vadd.f32 %v6661, 1.0
        %v6664 = vrcp.pop %v6662
        %v6665 = vmul.f32 1.0, %v6664
        %v6666 = vrcp.pop %v6663
        %v6667 = vmul.f32 1.0, %v6666
        %v6668 = vtanh.pop %v6638
        %v6669 = vtanh.pop %v6642
        %v6670 = vxor.u32 %v6639, 2147483648
        %v6671 = vxor.u32 %v6643, 2147483648
        %v6672 = vmul.f32 %v6670, 1.442695
        %v6673 = vpow.pop %v6672
        %v6674 = vmul.f32 %v6671, 1.442695
        %v6675 = vpow.pop %v6674
        %v6676 = vadd.f32 %v6673, 1.0
        %v6677 = vadd.f32 %v6675, 1.0
        %v6678 = vrcp.pop %v6676
        %v6679 = vmul.f32 1.0, %v6678
        %v6680 = vrcp.pop %v6677
        %v6681 = vmul.f32 1.0, %v6680
        %v6682 = vmul.f32 %v6665, %v6526
        %v6683 = vmul.f32 %v6667, %v6527
        %v6684 = vmul.f32 %v6653, %v6668
        %v6685 = vmul.f32 %v6655, %v6669
        %v6686 = vadd.f32 %v6682, %v6684
        %v6687 = vadd.f32 %v6683, %v6685
        %v6688 = vtanh.pop %v6686
        %v6689 = vtanh.pop %v6687
        %v6690 = vmul.f32 %v6679, %v6688
        %v6691 = vmul.f32 %v6681, %v6689
        %v6692 = vpack.c.bf16 %v6691, %v6690
        %s6693 = scalar_lea.vmem [#allocation3], 232
        %6694 = vst [vmem:[%s6693] sm:$0xff] %v6692
        %s6695 = smul.u32 30, 4
        %s6696 = smul.addr %s6695, 8
        %s6697 = scalar_lea.vmem [#allocation2], %s6696
        %v6698 = vld [vmem:[%s6697] sm:$0xff]
        %v6699 = vld [vmem:[%s6697 + $0x8] sm:$0xff]
        %v6700 = vld [vmem:[%s6697 + $0x10] sm:$0xff]
        %v6701 = vld [vmem:[%s6697 + $0x18] sm:$0xff]
        %6702 = vmatprep.subr.bf16.mxu0 %v1840
        %6703 = vmatpush1.bf16.msra.mxu0 %v1839
        %6704 = vmatprep.subr.bf16.mxu0 %v1844
        %6705 = vmatpush1.bf16.msra.mxu0 %v1843
        %6706 = vmatprep.subr.bf16.mxu0 %v1848
        %6707 = vmatpush1.bf16.msra.mxu0 %v1847
        %6708 = vmatprep.subr.bf16.mxu0 %v1852
        %6709 = vmatpush1.bf16.msra.mxu0 %v1851
        %6710 = vmatprep.subr.bf16.mxu0 %v1856
        %6711 = vmatpush1.bf16.msra.mxu0 %v1855
        %6712 = vmatprep.subr.bf16.mxu0 %v1860
        %6713 = vmatpush1.bf16.msra.mxu0 %v1859
        %6714 = vmatprep.subr.bf16.mxu0 %v1864
        %6715 = vmatpush1.bf16.msra.mxu0 %v1863
        %6716 = vmatprep.subr.bf16.mxu0 %v1868
        %6717 = vmatpush1.bf16.msra.mxu0 %v1867
        %6718 = vmatprep.subr.bf16.mxu0 0
        %6719 = vmatpush1.bf16.msra.mxu0 0
        %6720 = vmatprep.subr.bf16.mxu0 0
        %6721 = vmatpush1.bf16.msra.mxu0 0
        %6722 = vmatprep.subr.bf16.mxu0 0
        %6723 = vmatpush1.bf16.msra.mxu0 0
        %6724 = vmatprep.subr.bf16.mxu0 0
        %6725 = vmatpush1.bf16.msra.mxu0 0
        %6726 = vmatprep.subr.bf16.mxu0 0
        %6727 = vmatpush1.bf16.msra.mxu0 0
        %6728 = vmatprep.subr.bf16.mxu0 0
        %6729 = vmatpush1.bf16.msra.mxu0 0
        %6730 = vmatprep.subr.bf16.mxu0 0
        %6731 = vmatpush1.bf16.msra.mxu0 0
        %6732 = vmatprep.subr.bf16.mxu0 0
        %6733 = vmatpush1.bf16.msra.mxu0 0
        %6734 = vmatprep.mubr.bf16.mxu0 0
        %6735 = vmatmul.mubr.bf16.gmra.mrb[0].mxu0 %v6692
        %v6736 = vpop.f32.mrb[0].mxu0
        %v6737 = vadd.f32 0.0, %v6736
        %v6738 = vpop.f32.mrb[0].mxu0
        %v6739 = vadd.f32 0.0, %v6738
        %v6740 = vpop.f32.mrb[0].mxu0
        %v6741 = vadd.f32 0.0, %v6740
        %v6742 = vpop.f32.mrb[0].mxu0
        %v6743 = vadd.f32 0.0, %v6742
        %6744 = vdwg.mxu0
        %6745 = vmatprep.subr.bf16.mxu0 %v1842
        %6746 = vmatpush1.bf16.msra.mxu0 %v1841
        %6747 = vmatprep.subr.bf16.mxu0 %v1846
        %6748 = vmatpush1.bf16.msra.mxu0 %v1845
        %6749 = vmatprep.subr.bf16.mxu0 %v1850
        %6750 = vmatpush1.bf16.msra.mxu0 %v1849
        %6751 = vmatprep.subr.bf16.mxu0 %v1854
        %6752 = vmatpush1.bf16.msra.mxu0 %v1853
        %6753 = vmatprep.subr.bf16.mxu0 %v1858
        %6754 = vmatpush1.bf16.msra.mxu0 %v1857
        %6755 = vmatprep.subr.bf16.mxu0 %v1862
        %6756 = vmatpush1.bf16.msra.mxu0 %v1861
        %6757 = vmatprep.subr.bf16.mxu0 %v1866
        %6758 = vmatpush1.bf16.msra.mxu0 %v1865
        %6759 = vmatprep.subr.bf16.mxu0 %v1870
        %6760 = vmatpush1.bf16.msra.mxu0 %v1869
        %6761 = vmatprep.subr.bf16.mxu0 0
        %6762 = vmatpush1.bf16.msra.mxu0 0
        %6763 = vmatprep.subr.bf16.mxu0 0
        %6764 = vmatpush1.bf16.msra.mxu0 0
        %6765 = vmatprep.subr.bf16.mxu0 0
        %6766 = vmatpush1.bf16.msra.mxu0 0
        %6767 = vmatprep.subr.bf16.mxu0 0
        %6768 = vmatpush1.bf16.msra.mxu0 0
        %6769 = vmatprep.subr.bf16.mxu0 0
        %6770 = vmatpush1.bf16.msra.mxu0 0
        %6771 = vmatprep.subr.bf16.mxu0 0
        %6772 = vmatpush1.bf16.msra.mxu0 0
        %6773 = vmatprep.subr.bf16.mxu0 0
        %6774 = vmatpush1.bf16.msra.mxu0 0
        %6775 = vmatprep.subr.bf16.mxu0 0
        %6776 = vmatpush1.bf16.msra.mxu0 0
        %6777 = vmatprep.mubr.bf16.mxu0 0
        %6778 = vmatmul.mubr.bf16.gmra.mrb[0].mxu0 %v6692
        %v6779 = vpop.f32.mrb[0].mxu0
        %v6780 = vadd.f32 0.0, %v6779
        %v6781 = vpop.f32.mrb[0].mxu0
        %v6782 = vadd.f32 0.0, %v6781
        %v6783 = vpop.f32.mrb[0].mxu0
        %v6784 = vadd.f32 0.0, %v6783
        %v6785 = vpop.f32.mrb[0].mxu0
        %v6786 = vadd.f32 0.0, %v6785
        %6787 = vdwg.mxu0
        %v6788 = vunpack.c.l.bf16 %v6698
        %v6789 = vunpack.c.l.bf16 %v6699
        %v6790 = vunpack.c.l.bf16 %v6700
        %v6791 = vunpack.c.l.bf16 %v6701
        %v6792 = vunpack.c.h.bf16 %v6698
        %v6793 = vunpack.c.h.bf16 %v6699
        %v6794 = vunpack.c.h.bf16 %v6700
        %v6795 = vunpack.c.h.bf16 %v6701
        %v6796 = vadd.f32 %v6788, %v6737
        %v6797 = vadd.f32 %v6789, %v6739
        %v6798 = vadd.f32 %v6790, %v6780
        %v6799 = vadd.f32 %v6791, %v6782
        %v6800 = vadd.f32 %v6792, %v6741
        %v6801 = vadd.f32 %v6793, %v6743
        %v6802 = vadd.f32 %v6794, %v6784
        %v6803 = vadd.f32 %v6795, %v6786
        %v6804 = vxor.u32 %v6796, 2147483648
        %v6805 = vxor.u32 %v6800, 2147483648
        %v6806 = vmul.f32 %v6804, 1.442695
        %v6807 = vpow.pop %v6806
        %v6808 = vmul.f32 %v6805, 1.442695
        %v6809 = vpow.pop %v6808
        %v6810 = vadd.f32 %v6807, 1.0
        %v6811 = vadd.f32 %v6809, 1.0
        %v6812 = vrcp.pop %v6810
        %v6813 = vmul.f32 1.0, %v6812
        %v6814 = vrcp.pop %v6811
        %v6815 = vmul.f32 1.0, %v6814
        %v6816 = vxor.u32 %v6797, 2147483648
        %v6817 = vxor.u32 %v6801, 2147483648
        %v6818 = vmul.f32 %v6816, 1.442695
        %v6819 = vpow.pop %v6818
        %v6820 = vmul.f32 %v6817, 1.442695
        %v6821 = vpow.pop %v6820
        %v6822 = vadd.f32 %v6819, 1.0
        %v6823 = vadd.f32 %v6821, 1.0
        %v6824 = vrcp.pop %v6822
        %v6825 = vmul.f32 1.0, %v6824
        %v6826 = vrcp.pop %v6823
        %v6827 = vmul.f32 1.0, %v6826
        %v6828 = vtanh.pop %v6798
        %v6829 = vtanh.pop %v6802
        %v6830 = vxor.u32 %v6799, 2147483648
        %v6831 = vxor.u32 %v6803, 2147483648
        %v6832 = vmul.f32 %v6830, 1.442695
        %v6833 = vpow.pop %v6832
        %v6834 = vmul.f32 %v6831, 1.442695
        %v6835 = vpow.pop %v6834
        %v6836 = vadd.f32 %v6833, 1.0
        %v6837 = vadd.f32 %v6835, 1.0
        %v6838 = vrcp.pop %v6836
        %v6839 = vmul.f32 1.0, %v6838
        %v6840 = vrcp.pop %v6837
        %v6841 = vmul.f32 1.0, %v6840
        %v6842 = vmul.f32 %v6825, %v6686
        %v6843 = vmul.f32 %v6827, %v6687
        %v6844 = vmul.f32 %v6813, %v6828
        %v6845 = vmul.f32 %v6815, %v6829
        %v6846 = vadd.f32 %v6842, %v6844
        %v6847 = vadd.f32 %v6843, %v6845
        %v6848 = vtanh.pop %v6846
        %v6849 = vtanh.pop %v6847
        %v6850 = vmul.f32 %v6839, %v6848
        %v6851 = vmul.f32 %v6841, %v6849
        %v6852 = vpack.c.bf16 %v6851, %v6850
        %s6853 = scalar_lea.vmem [#allocation3], 240
        %6854 = vst [vmem:[%s6853] sm:$0xff] %v6852
        %s6855 = smul.u32 31, 4
        %s6856 = smul.addr %s6855, 8
        %s6857 = scalar_lea.vmem [#allocation2], %s6856
        %v6858 = vld [vmem:[%s6857] sm:$0xff]
        %v6859 = vld [vmem:[%s6857 + $0x8] sm:$0xff]
        %v6860 = vld [vmem:[%s6857 + $0x10] sm:$0xff]
        %v6861 = vld [vmem:[%s6857 + $0x18] sm:$0xff]
        %6862 = vmatprep.subr.bf16.mxu0 %v1840
        %6863 = vmatpush1.bf16.msra.mxu0 %v1839
        %6864 = vmatprep.subr.bf16.mxu0 %v1844
        %6865 = vmatpush1.bf16.msra.mxu0 %v1843
        %6866 = vmatprep.subr.bf16.mxu0 %v1848
        %6867 = vmatpush1.bf16.msra.mxu0 %v1847
        %6868 = vmatprep.subr.bf16.mxu0 %v1852
        %6869 = vmatpush1.bf16.msra.mxu0 %v1851
        %6870 = vmatprep.subr.bf16.mxu0 %v1856
        %6871 = vmatpush1.bf16.msra.mxu0 %v1855
        %6872 = vmatprep.subr.bf16.mxu0 %v1860
        %6873 = vmatpush1.bf16.msra.mxu0 %v1859
        %6874 = vmatprep.subr.bf16.mxu0 %v1864
        %6875 = vmatpush1.bf16.msra.mxu0 %v1863
        %6876 = vmatprep.subr.bf16.mxu0 %v1868
        %6877 = vmatpush1.bf16.msra.mxu0 %v1867
        %6878 = vmatprep.subr.bf16.mxu0 0
        %6879 = vmatpush1.bf16.msra.mxu0 0
        %6880 = vmatprep.subr.bf16.mxu0 0
        %6881 = vmatpush1.bf16.msra.mxu0 0
        %6882 = vmatprep.subr.bf16.mxu0 0
        %6883 = vmatpush1.bf16.msra.mxu0 0
        %6884 = vmatprep.subr.bf16.mxu0 0
        %6885 = vmatpush1.bf16.msra.mxu0 0
        %6886 = vmatprep.subr.bf16.mxu0 0
        %6887 = vmatpush1.bf16.msra.mxu0 0
        %6888 = vmatprep.subr.bf16.mxu0 0
        %6889 = vmatpush1.bf16.msra.mxu0 0
        %6890 = vmatprep.subr.bf16.mxu0 0
        %6891 = vmatpush1.bf16.msra.mxu0 0
        %6892 = vmatprep.subr.bf16.mxu0 0
        %6893 = vmatpush1.bf16.msra.mxu0 0
        %6894 = vmatprep.mubr.bf16.mxu0 0
        %6895 = vmatmul.mubr.bf16.gmra.mrb[0].mxu0 %v6852
        %v6896 = vpop.f32.mrb[0].mxu0
        %v6897 = vadd.f32 0.0, %v6896
        %v6898 = vpop.f32.mrb[0].mxu0
        %v6899 = vadd.f32 0.0, %v6898
        %v6900 = vpop.f32.mrb[0].mxu0
        %v6901 = vadd.f32 0.0, %v6900
        %v6902 = vpop.f32.mrb[0].mxu0
        %v6903 = vadd.f32 0.0, %v6902
        %6904 = vdwg.mxu0
        %6905 = vmatprep.subr.bf16.mxu0 %v1842
        %6906 = vmatpush1.bf16.msra.mxu0 %v1841
        %6907 = vmatprep.subr.bf16.mxu0 %v1846
        %6908 = vmatpush1.bf16.msra.mxu0 %v1845
        %6909 = vmatprep.subr.bf16.mxu0 %v1850
        %6910 = vmatpush1.bf16.msra.mxu0 %v1849
        %6911 = vmatprep.subr.bf16.mxu0 %v1854
        %6912 = vmatpush1.bf16.msra.mxu0 %v1853
        %6913 = vmatprep.subr.bf16.mxu0 %v1858
        %6914 = vmatpush1.bf16.msra.mxu0 %v1857
        %6915 = vmatprep.subr.bf16.mxu0 %v1862
        %6916 = vmatpush1.bf16.msra.mxu0 %v1861
        %6917 = vmatprep.subr.bf16.mxu0 %v1866
        %6918 = vmatpush1.bf16.msra.mxu0 %v1865
        %6919 = vmatprep.subr.bf16.mxu0 %v1870
        %6920 = vmatpush1.bf16.msra.mxu0 %v1869
        %6921 = vmatprep.subr.bf16.mxu0 0
        %6922 = vmatpush1.bf16.msra.mxu0 0
        %6923 = vmatprep.subr.bf16.mxu0 0
        %6924 = vmatpush1.bf16.msra.mxu0 0
        %6925 = vmatprep.subr.bf16.mxu0 0
        %6926 = vmatpush1.bf16.msra.mxu0 0
        %6927 = vmatprep.subr.bf16.mxu0 0
        %6928 = vmatpush1.bf16.msra.mxu0 0
        %6929 = vmatprep.subr.bf16.mxu0 0
        %6930 = vmatpush1.bf16.msra.mxu0 0
        %6931 = vmatprep.subr.bf16.mxu0 0
        %6932 = vmatpush1.bf16.msra.mxu0 0
        %6933 = vmatprep.subr.bf16.mxu0 0
        %6934 = vmatpush1.bf16.msra.mxu0 0
        %6935 = vmatprep.subr.bf16.mxu0 0
        %6936 = vmatpush1.bf16.msra.mxu0 0
        %6937 = vmatprep.mubr.bf16.mxu0 0
        %6938 = vmatmul.mubr.bf16.gmra.mrb[0].mxu0 %v6852
        %v6939 = vpop.f32.mrb[0].mxu0
        %v6940 = vadd.f32 0.0, %v6939
        %v6941 = vpop.f32.mrb[0].mxu0
        %v6942 = vadd.f32 0.0, %v6941
        %v6943 = vpop.f32.mrb[0].mxu0
        %v6944 = vadd.f32 0.0, %v6943
        %v6945 = vpop.f32.mrb[0].mxu0
        %v6946 = vadd.f32 0.0, %v6945
        %6947 = vdwg.mxu0
        %v6948 = vunpack.c.l.bf16 %v6858
        %v6949 = vunpack.c.l.bf16 %v6859
        %v6950 = vunpack.c.l.bf16 %v6860
        %v6951 = vunpack.c.l.bf16 %v6861
        %v6952 = vunpack.c.h.bf16 %v6858
        %v6953 = vunpack.c.h.bf16 %v6859
        %v6954 = vunpack.c.h.bf16 %v6860
        %v6955 = vunpack.c.h.bf16 %v6861
        %v6956 = vadd.f32 %v6948, %v6897
        %v6957 = vadd.f32 %v6949, %v6899
        %v6958 = vadd.f32 %v6950, %v6940
        %v6959 = vadd.f32 %v6951, %v6942
        %v6960 = vadd.f32 %v6952, %v6901
        %v6961 = vadd.f32 %v6953, %v6903
        %v6962 = vadd.f32 %v6954, %v6944
        %v6963 = vadd.f32 %v6955, %v6946
        %v6964 = vxor.u32 %v6956, 2147483648
        %v6965 = vxor.u32 %v6960, 2147483648
        %v6966 = vmul.f32 %v6964, 1.442695
        %v6967 = vpow.pop %v6966
        %v6968 = vmul.f32 %v6965, 1.442695
        %v6969 = vpow.pop %v6968
        %v6970 = vadd.f32 %v6967, 1.0
        %v6971 = vadd.f32 %v6969, 1.0
        %v6972 = vrcp.pop %v6970
        %v6973 = vmul.f32 1.0, %v6972
        %v6974 = vrcp.pop %v6971
        %v6975 = vmul.f32 1.0, %v6974
        %v6976 = vxor.u32 %v6957, 2147483648
        %v6977 = vxor.u32 %v6961, 2147483648
        %v6978 = vmul.f32 %v6976, 1.442695
        %v6979 = vpow.pop %v6978
        %v6980 = vmul.f32 %v6977, 1.442695
        %v6981 = vpow.pop %v6980
        %v6982 = vadd.f32 %v6979, 1.0
        %v6983 = vadd.f32 %v6981, 1.0
        %v6984 = vrcp.pop %v6982
        %v6985 = vmul.f32 1.0, %v6984
        %v6986 = vrcp.pop %v6983
        %v6987 = vmul.f32 1.0, %v6986
        %v6988 = vtanh.pop %v6958
        %v6989 = vtanh.pop %v6962
        %v6990 = vxor.u32 %v6959, 2147483648
        %v6991 = vxor.u32 %v6963, 2147483648
        %v6992 = vmul.f32 %v6990, 1.442695
        %v6993 = vpow.pop %v6992
        %v6994 = vmul.f32 %v6991, 1.442695
        %v6995 = vpow.pop %v6994
        %v6996 = vadd.f32 %v6993, 1.0
        %v6997 = vadd.f32 %v6995, 1.0
        %v6998 = vrcp.pop %v6996
        %v6999 = vmul.f32 1.0, %v6998
        %v7000 = vrcp.pop %v6997
        %v7001 = vmul.f32 1.0, %v7000
        %v7002 = vmul.f32 %v6985, %v6846
        %v7003 = vmul.f32 %v6987, %v6847
        %v7004 = vmul.f32 %v6973, %v6988
        %v7005 = vmul.f32 %v6975, %v6989
        %v7006 = vadd.f32 %v7002, %v7004
        %v7007 = vadd.f32 %v7003, %v7005
        %v7008 = vtanh.pop %v7006
        %v7009 = vtanh.pop %v7007
        %v7010 = vmul.f32 %v6999, %v7008
        %v7011 = vmul.f32 %v7001, %v7009
        %v7012 = vpack.c.bf16 %v7011, %v7010
        %s7013 = scalar_lea.vmem [#allocation3], 248
        %7014 = vst [vmem:[%s7013] sm:$0xff] %v7012
        %7015 = vst [vmem:[#allocation5] sm:$0xff] %v7012
        %7016 = vst [vmem:[#allocation6] sm:$0xff] %v7006
        %7017 = vst [vmem:[#allocation6 + $0x8] sm:$0xff] %v7007
        %v7018 = vld [vmem:[#allocation3] sm:$0xff]
        %v7019 = vld [vmem:[#allocation3 + $0x8] sm:$0xff]
        %v7020 = vld [vmem:[#allocation3 + $0x10] sm:$0xff]
        %v7021 = vld [vmem:[#allocation3 + $0x18] sm:$0xff]
        %v7022 = vld [vmem:[#allocation3 + $0x20] sm:$0xff]
        %v7023 = vld [vmem:[#allocation3 + $0x28] sm:$0xff]
        %v7024 = vld [vmem:[#allocation3 + $0x30] sm:$0xff]
        %v7025 = vld [vmem:[#allocation3 + $0x38] sm:$0xff]
        %v7026 = vld [vmem:[#allocation3 + $0x40] sm:$0xff]
        %v7027 = vld [vmem:[#allocation3 + $0x48] sm:$0xff]
        %v7028 = vld [vmem:[#allocation3 + $0x50] sm:$0xff]
        %v7029 = vld [vmem:[#allocation3 + $0x58] sm:$0xff]
        %v7030 = vld [vmem:[#allocation3 + $0x60] sm:$0xff]
        %v7031 = vld [vmem:[#allocation3 + $0x68] sm:$0xff]
        %v7032 = vld [vmem:[#allocation3 + $0x70] sm:$0xff]
        %v7033 = vld [vmem:[#allocation3 + $0x78] sm:$0xff]
        %v7034 = vld [vmem:[#allocation3 + $0x80] sm:$0xff]
        %v7035 = vld [vmem:[#allocation3 + $0x88] sm:$0xff]
        %v7036 = vld [vmem:[#allocation3 + $0x90] sm:$0xff]
        %v7037 = vld [vmem:[#allocation3 + $0x98] sm:$0xff]
        %v7038 = vld [vmem:[#allocation3 + $0xa0] sm:$0xff]
        %v7039 = vld [vmem:[#allocation3 + $0xa8] sm:$0xff]
        %v7040 = vld [vmem:[#allocation3 + $0xb0] sm:$0xff]
        %v7041 = vld [vmem:[#allocation3 + $0xb8] sm:$0xff]
        %v7042 = vld [vmem:[#allocation3 + $0xc0] sm:$0xff]
        %v7043 = vld [vmem:[#allocation3 + $0xc8] sm:$0xff]
        %v7044 = vld [vmem:[#allocation3 + $0xd0] sm:$0xff]
        %v7045 = vld [vmem:[#allocation3 + $0xd8] sm:$0xff]
        %v7046 = vld [vmem:[#allocation3 + $0xe0] sm:$0xff]
        %v7047 = vld [vmem:[#allocation3 + $0xe8] sm:$0xff]
        %v7048 = vld [vmem:[#allocation3 + $0xf0] sm:$0xff]
        %v7049 = vld [vmem:[#allocation3 + $0xf8] sm:$0xff]
        %v7050 = vld [vmem:[%s5] sm:$0xff]
        %v7051 = vld [vmem:[%s5 + $0x8] sm:$0xff]
        %v7052 = vld [vmem:[%s5 + $0x10] sm:$0xff]
        %v7053 = vld [vmem:[%s5 + $0x18] sm:$0xff]
        %v7054 = vld [vmem:[%s5 + $0x20] sm:$0xff]
        %v7055 = vld [vmem:[%s5 + $0x28] sm:$0xff]
        %v7056 = vld [vmem:[%s5 + $0x30] sm:$0xff]
        %v7057 = vld [vmem:[%s5 + $0x38] sm:$0xff]
        %v7058 = vld [vmem:[%s5 + $0x40] sm:$0xff]
        %v7059 = vld [vmem:[%s5 + $0x48] sm:$0xff]
        %v7060 = vld [vmem:[%s5 + $0x50] sm:$0xff]
        %v7061 = vld [vmem:[%s5 + $0x58] sm:$0xff]
        %v7062 = vld [vmem:[%s5 + $0x60] sm:$0xff]
        %v7063 = vld [vmem:[%s5 + $0x68] sm:$0xff]
        %v7064 = vld [vmem:[%s5 + $0x70] sm:$0xff]
        %v7065 = vld [vmem:[%s5 + $0x78] sm:$0xff]
        %v7082 = vunpack.c.l.b16 %v7050
        %v7083 = vunpack.c.h.b16 %v7050
        %v7084 = vunpack.c.l.b16 %v7051
        %v7085 = vunpack.c.h.b16 %v7051
        %v7086 = vunpack.c.l.b16 %v7052
        %v7087 = vunpack.c.h.b16 %v7052
        %v7088 = vunpack.c.l.b16 %v7053
        %v7089 = vunpack.c.h.b16 %v7053
        %v7090 = vunpack.c.l.b16 %v7054
        %v7091 = vunpack.c.h.b16 %v7054
        %v7092 = vunpack.c.l.b16 %v7055
        %v7093 = vunpack.c.h.b16 %v7055
        %v7094 = vunpack.c.l.b16 %v7056
        %v7095 = vunpack.c.h.b16 %v7056
        %v7096 = vunpack.c.l.b16 %v7057
        %v7097 = vunpack.c.h.b16 %v7057
        %v7098 = vunpack.c.l.b16 %v7058
        %v7099 = vunpack.c.h.b16 %v7058
        %v7100 = vunpack.c.l.b16 %v7059
        %v7101 = vunpack.c.h.b16 %v7059
        %v7102 = vunpack.c.l.b16 %v7060
        %v7103 = vunpack.c.h.b16 %v7060
        %v7104 = vunpack.c.l.b16 %v7061
        %v7105 = vunpack.c.h.b16 %v7061
        %v7106 = vunpack.c.l.b16 %v7062
        %v7107 = vunpack.c.h.b16 %v7062
        %v7108 = vunpack.c.l.b16 %v7063
        %v7109 = vunpack.c.h.b16 %v7063
        %v7110 = vunpack.c.l.b16 %v7064
        %v7111 = vunpack.c.h.b16 %v7064
        %v7112 = vunpack.c.l.b16 %v7065
        %v7113 = vunpack.c.h.b16 %v7065
        %v7114 = vpack.c.b16 %v7084, %v7082
        %v7115 = vpack.c.b16 %v7085, %v7083
        %v7116 = vpack.c.b16 %v7088, %v7086
        %v7117 = vpack.c.b16 %v7089, %v7087
        %v7118 = vpack.c.b16 %v7092, %v7090
        %v7119 = vpack.c.b16 %v7093, %v7091
        %v7120 = vpack.c.b16 %v7096, %v7094
        %v7121 = vpack.c.b16 %v7097, %v7095
        %v7122 = vpack.c.b16 %v7100, %v7098
        %v7123 = vpack.c.b16 %v7101, %v7099
        %v7124 = vpack.c.b16 %v7104, %v7102
        %v7125 = vpack.c.b16 %v7105, %v7103
        %v7126 = vpack.c.b16 %v7108, %v7106
        %v7127 = vpack.c.b16 %v7109, %v7107
        %v7128 = vpack.c.b16 %v7112, %v7110
        %v7129 = vpack.c.b16 %v7113, %v7111
        %7146 = vmatprep.subr.bf16.mxu0 %v7115
        %7147 = vmatpush1.bf16.msra.mxu0 %v7114
        %7148 = vmatprep.subr.bf16.mxu0 %v7117
        %7149 = vmatpush1.bf16.msra.mxu0 %v7116
        %7150 = vmatprep.subr.bf16.mxu0 %v7119
        %7151 = vmatpush1.bf16.msra.mxu0 %v7118
        %7152 = vmatprep.subr.bf16.mxu0 %v7121
        %7153 = vmatpush1.bf16.msra.mxu0 %v7120
        %7154 = vmatprep.subr.bf16.mxu0 %v7123
        %7155 = vmatpush1.bf16.msra.mxu0 %v7122
        %7156 = vmatprep.subr.bf16.mxu0 %v7125
        %7157 = vmatpush1.bf16.msra.mxu0 %v7124
        %7158 = vmatprep.subr.bf16.mxu0 %v7127
        %7159 = vmatpush1.bf16.msra.mxu0 %v7126
        %7160 = vmatprep.subr.bf16.mxu0 %v7129
        %7161 = vmatpush1.bf16.msra.mxu0 %v7128
        %7162 = vmatprep.subr.bf16.mxu0 0
        %7163 = vmatpush1.bf16.msra.mxu0 0
        %7164 = vmatprep.subr.bf16.mxu0 0
        %7165 = vmatpush1.bf16.msra.mxu0 0
        %7166 = vmatprep.subr.bf16.mxu0 0
        %7167 = vmatpush1.bf16.msra.mxu0 0
        %7168 = vmatprep.subr.bf16.mxu0 0
        %7169 = vmatpush1.bf16.msra.mxu0 0
        %7170 = vmatprep.subr.bf16.mxu0 0
        %7171 = vmatpush1.bf16.msra.mxu0 0
        %7172 = vmatprep.subr.bf16.mxu0 0
        %7173 = vmatpush1.bf16.msra.mxu0 0
        %7174 = vmatprep.subr.bf16.mxu0 0
        %7175 = vmatpush1.bf16.msra.mxu0 0
        %7176 = vmatprep.subr.bf16.mxu0 0
        %7177 = vmatpush1.bf16.msra.mxu0 0
        %7178 = vmatprep.mubr.bf16.mxu0 0
        %7179 = vmatmul.mubr.bf16.gmra.mrb[0].mxu0 %v7018
        %v7180 = vpop.f32.mrb[0].mxu0
        %v7181 = vadd.f32 0.0, %v7180
        %v7182 = vpop.f32.mrb[0].mxu0
        %v7183 = vadd.f32 0.0, %v7182
        %v7184 = vpop.f32.mrb[0].mxu0
        %v7185 = vadd.f32 0.0, %v7184
        %v7186 = vpop.f32.mrb[0].mxu0
        %v7187 = vadd.f32 0.0, %v7186
        %7188 = vmatprep.mubr.bf16.mxu0 0
        %7189 = vmatmul.mubr.bf16.gmra.mrb[0].mxu0 %v7019
        %v7190 = vpop.f32.mrb[0].mxu0
        %v7191 = vadd.f32 0.0, %v7190
        %v7192 = vpop.f32.mrb[0].mxu0
        %v7193 = vadd.f32 0.0, %v7192
        %v7194 = vpop.f32.mrb[0].mxu0
        %v7195 = vadd.f32 0.0, %v7194
        %v7196 = vpop.f32.mrb[0].mxu0
        %v7197 = vadd.f32 0.0, %v7196
        %7198 = vmatprep.mubr.bf16.mxu0 0
        %7199 = vmatmul.mubr.bf16.gmra.mrb[0].mxu0 %v7020
        %v7200 = vpop.f32.mrb[0].mxu0
        %v7201 = vadd.f32 0.0, %v7200
        %v7202 = vpop.f32.mrb[0].mxu0
        %v7203 = vadd.f32 0.0, %v7202
        %v7204 = vpop.f32.mrb[0].mxu0
        %v7205 = vadd.f32 0.0, %v7204
        %v7206 = vpop.f32.mrb[0].mxu0
        %v7207 = vadd.f32 0.0, %v7206
        %7208 = vmatprep.mubr.bf16.mxu0 0
        %7209 = vmatmul.mubr.bf16.gmra.mrb[0].mxu0 %v7021
        %v7210 = vpop.f32.mrb[0].mxu0
        %v7211 = vadd.f32 0.0, %v7210
        %v7212 = vpop.f32.mrb[0].mxu0
        %v7213 = vadd.f32 0.0, %v7212
        %v7214 = vpop.f32.mrb[0].mxu0
        %v7215 = vadd.f32 0.0, %v7214
        %v7216 = vpop.f32.mrb[0].mxu0
        %v7217 = vadd.f32 0.0, %v7216
        %7218 = vmatprep.mubr.bf16.mxu0 0
        %7219 = vmatmul.mubr.bf16.gmra.mrb[0].mxu0 %v7022
        %v7220 = vpop.f32.mrb[0].mxu0
        %v7221 = vadd.f32 0.0, %v7220
        %v7222 = vpop.f32.mrb[0].mxu0
        %v7223 = vadd.f32 0.0, %v7222
        %v7224 = vpop.f32.mrb[0].mxu0
        %v7225 = vadd.f32 0.0, %v7224
        %v7226 = vpop.f32.mrb[0].mxu0
        %v7227 = vadd.f32 0.0, %v7226
        %7228 = vmatprep.mubr.bf16.mxu0 0
        %7229 = vmatmul.mubr.bf16.gmra.mrb[0].mxu0 %v7023
        %v7230 = vpop.f32.mrb[0].mxu0
        %v7231 = vadd.f32 0.0, %v7230
        %v7232 = vpop.f32.mrb[0].mxu0
        %v7233 = vadd.f32 0.0, %v7232
        %v7234 = vpop.f32.mrb[0].mxu0
        %v7235 = vadd.f32 0.0, %v7234
        %v7236 = vpop.f32.mrb[0].mxu0
        %v7237 = vadd.f32 0.0, %v7236
        %7238 = vmatprep.mubr.bf16.mxu0 0
        %7239 = vmatmul.mubr.bf16.gmra.mrb[0].mxu0 %v7024
        %v7240 = vpop.f32.mrb[0].mxu0
        %v7241 = vadd.f32 0.0, %v7240
        %v7242 = vpop.f32.mrb[0].mxu0
        %v7243 = vadd.f32 0.0, %v7242
        %v7244 = vpop.f32.mrb[0].mxu0
        %v7245 = vadd.f32 0.0, %v7244
        %v7246 = vpop.f32.mrb[0].mxu0
        %v7247 = vadd.f32 0.0, %v7246
        %7248 = vmatprep.mubr.bf16.mxu0 0
        %7249 = vmatmul.mubr.bf16.gmra.mrb[0].mxu0 %v7025
        %v7250 = vpop.f32.mrb[0].mxu0
        %v7251 = vadd.f32 0.0, %v7250
        %v7252 = vpop.f32.mrb[0].mxu0
        %v7253 = vadd.f32 0.0, %v7252
        %v7254 = vpop.f32.mrb[0].mxu0
        %v7255 = vadd.f32 0.0, %v7254
        %v7256 = vpop.f32.mrb[0].mxu0
        %v7257 = vadd.f32 0.0, %v7256
        %7258 = vmatprep.mubr.bf16.mxu0 0
        %7259 = vmatmul.mubr.bf16.gmra.mrb[0].mxu0 %v7026
        %v7260 = vpop.f32.mrb[0].mxu0
        %v7261 = vadd.f32 0.0, %v7260
        %v7262 = vpop.f32.mrb[0].mxu0
        %v7263 = vadd.f32 0.0, %v7262
        %v7264 = vpop.f32.mrb[0].mxu0
        %v7265 = vadd.f32 0.0, %v7264
        %v7266 = vpop.f32.mrb[0].mxu0
        %v7267 = vadd.f32 0.0, %v7266
        %7268 = vmatprep.mubr.bf16.mxu0 0
        %7269 = vmatmul.mubr.bf16.gmra.mrb[0].mxu0 %v7027
        %v7270 = vpop.f32.mrb[0].mxu0
        %v7271 = vadd.f32 0.0, %v7270
        %v7272 = vpop.f32.mrb[0].mxu0
        %v7273 = vadd.f32 0.0, %v7272
        %v7274 = vpop.f32.mrb[0].mxu0
        %v7275 = vadd.f32 0.0, %v7274
        %v7276 = vpop.f32.mrb[0].mxu0
        %v7277 = vadd.f32 0.0, %v7276
        %7278 = vmatprep.mubr.bf16.mxu0 0
        %7279 = vmatmul.mubr.bf16.gmra.mrb[0].mxu0 %v7028
        %v7280 = vpop.f32.mrb[0].mxu0
        %v7281 = vadd.f32 0.0, %v7280
        %v7282 = vpop.f32.mrb[0].mxu0
        %v7283 = vadd.f32 0.0, %v7282
        %v7284 = vpop.f32.mrb[0].mxu0
        %v7285 = vadd.f32 0.0, %v7284
        %v7286 = vpop.f32.mrb[0].mxu0
        %v7287 = vadd.f32 0.0, %v7286
        %7288 = vmatprep.mubr.bf16.mxu0 0
        %7289 = vmatmul.mubr.bf16.gmra.mrb[0].mxu0 %v7029
        %v7290 = vpop.f32.mrb[0].mxu0
        %v7291 = vadd.f32 0.0, %v7290
        %v7292 = vpop.f32.mrb[0].mxu0
        %v7293 = vadd.f32 0.0, %v7292
        %v7294 = vpop.f32.mrb[0].mxu0
        %v7295 = vadd.f32 0.0, %v7294
        %v7296 = vpop.f32.mrb[0].mxu0
        %v7297 = vadd.f32 0.0, %v7296
        %7298 = vmatprep.mubr.bf16.mxu0 0
        %7299 = vmatmul.mubr.bf16.gmra.mrb[0].mxu0 %v7030
        %v7300 = vpop.f32.mrb[0].mxu0
        %v7301 = vadd.f32 0.0, %v7300
        %v7302 = vpop.f32.mrb[0].mxu0
        %v7303 = vadd.f32 0.0, %v7302
        %v7304 = vpop.f32.mrb[0].mxu0
        %v7305 = vadd.f32 0.0, %v7304
        %v7306 = vpop.f32.mrb[0].mxu0
        %v7307 = vadd.f32 0.0, %v7306
        %7308 = vmatprep.mubr.bf16.mxu0 0
        %7309 = vmatmul.mubr.bf16.gmra.mrb[0].mxu0 %v7031
        %v7310 = vpop.f32.mrb[0].mxu0
        %v7311 = vadd.f32 0.0, %v7310
        %v7312 = vpop.f32.mrb[0].mxu0
        %v7313 = vadd.f32 0.0, %v7312
        %v7314 = vpop.f32.mrb[0].mxu0
        %v7315 = vadd.f32 0.0, %v7314
        %v7316 = vpop.f32.mrb[0].mxu0
        %v7317 = vadd.f32 0.0, %v7316
        %7318 = vmatprep.mubr.bf16.mxu0 0
        %7319 = vmatmul.mubr.bf16.gmra.mrb[0].mxu0 %v7032
        %v7320 = vpop.f32.mrb[0].mxu0
        %v7321 = vadd.f32 0.0, %v7320
        %v7322 = vpop.f32.mrb[0].mxu0
        %v7323 = vadd.f32 0.0, %v7322
        %v7324 = vpop.f32.mrb[0].mxu0
        %v7325 = vadd.f32 0.0, %v7324
        %v7326 = vpop.f32.mrb[0].mxu0
        %v7327 = vadd.f32 0.0, %v7326
        %7328 = vmatprep.mubr.bf16.mxu0 0
        %7329 = vmatmul.mubr.bf16.gmra.mrb[0].mxu0 %v7033
        %v7330 = vpop.f32.mrb[0].mxu0
        %v7331 = vadd.f32 0.0, %v7330
        %v7332 = vpop.f32.mrb[0].mxu0
        %v7333 = vadd.f32 0.0, %v7332
        %v7334 = vpop.f32.mrb[0].mxu0
        %v7335 = vadd.f32 0.0, %v7334
        %v7336 = vpop.f32.mrb[0].mxu0
        %v7337 = vadd.f32 0.0, %v7336
        %7338 = vmatprep.mubr.bf16.mxu0 0
        %7339 = vmatmul.mubr.bf16.gmra.mrb[0].mxu0 %v7034
        %v7340 = vpop.f32.mrb[0].mxu0
        %v7341 = vadd.f32 0.0, %v7340
        %v7342 = vpop.f32.mrb[0].mxu0
        %v7343 = vadd.f32 0.0, %v7342
        %v7344 = vpop.f32.mrb[0].mxu0
        %v7345 = vadd.f32 0.0, %v7344
        %v7346 = vpop.f32.mrb[0].mxu0
        %v7347 = vadd.f32 0.0, %v7346
        %7348 = vmatprep.mubr.bf16.mxu0 0
        %7349 = vmatmul.mubr.bf16.gmra.mrb[0].mxu0 %v7035
        %v7350 = vpop.f32.mrb[0].mxu0
        %v7351 = vadd.f32 0.0, %v7350
        %v7352 = vpop.f32.mrb[0].mxu0
        %v7353 = vadd.f32 0.0, %v7352
        %v7354 = vpop.f32.mrb[0].mxu0
        %v7355 = vadd.f32 0.0, %v7354
        %v7356 = vpop.f32.mrb[0].mxu0
        %v7357 = vadd.f32 0.0, %v7356
        %7358 = vmatprep.mubr.bf16.mxu0 0
        %7359 = vmatmul.mubr.bf16.gmra.mrb[0].mxu0 %v7036
        %v7360 = vpop.f32.mrb[0].mxu0
        %v7361 = vadd.f32 0.0, %v7360
        %v7362 = vpop.f32.mrb[0].mxu0
        %v7363 = vadd.f32 0.0, %v7362
        %v7364 = vpop.f32.mrb[0].mxu0
        %v7365 = vadd.f32 0.0, %v7364
        %v7366 = vpop.f32.mrb[0].mxu0
        %v7367 = vadd.f32 0.0, %v7366
        %7368 = vmatprep.mubr.bf16.mxu0 0
        %7369 = vmatmul.mubr.bf16.gmra.mrb[0].mxu0 %v7037
        %v7370 = vpop.f32.mrb[0].mxu0
        %v7371 = vadd.f32 0.0, %v7370
        %v7372 = vpop.f32.mrb[0].mxu0
        %v7373 = vadd.f32 0.0, %v7372
        %v7374 = vpop.f32.mrb[0].mxu0
        %v7375 = vadd.f32 0.0, %v7374
        %v7376 = vpop.f32.mrb[0].mxu0
        %v7377 = vadd.f32 0.0, %v7376
        %7378 = vmatprep.mubr.bf16.mxu0 0
        %7379 = vmatmul.mubr.bf16.gmra.mrb[0].mxu0 %v7038
        %v7380 = vpop.f32.mrb[0].mxu0
        %v7381 = vadd.f32 0.0, %v7380
        %v7382 = vpop.f32.mrb[0].mxu0
        %v7383 = vadd.f32 0.0, %v7382
        %v7384 = vpop.f32.mrb[0].mxu0
        %v7385 = vadd.f32 0.0, %v7384
        %v7386 = vpop.f32.mrb[0].mxu0
        %v7387 = vadd.f32 0.0, %v7386
        %7388 = vmatprep.mubr.bf16.mxu0 0
        %7389 = vmatmul.mubr.bf16.gmra.mrb[0].mxu0 %v7039
        %v7390 = vpop.f32.mrb[0].mxu0
        %v7391 = vadd.f32 0.0, %v7390
        %v7392 = vpop.f32.mrb[0].mxu0
        %v7393 = vadd.f32 0.0, %v7392
        %v7394 = vpop.f32.mrb[0].mxu0
        %v7395 = vadd.f32 0.0, %v7394
        %v7396 = vpop.f32.mrb[0].mxu0
        %v7397 = vadd.f32 0.0, %v7396
        %7398 = vmatprep.mubr.bf16.mxu0 0
        %7399 = vmatmul.mubr.bf16.gmra.mrb[0].mxu0 %v7040
        %v7400 = vpop.f32.mrb[0].mxu0
        %v7401 = vadd.f32 0.0, %v7400
        %v7402 = vpop.f32.mrb[0].mxu0
        %v7403 = vadd.f32 0.0, %v7402
        %v7404 = vpop.f32.mrb[0].mxu0
        %v7405 = vadd.f32 0.0, %v7404
        %v7406 = vpop.f32.mrb[0].mxu0
        %v7407 = vadd.f32 0.0, %v7406
        %7408 = vmatprep.mubr.bf16.mxu0 0
        %7409 = vmatmul.mubr.bf16.gmra.mrb[0].mxu0 %v7041
        %v7410 = vpop.f32.mrb[0].mxu0
        %v7411 = vadd.f32 0.0, %v7410
        %v7412 = vpop.f32.mrb[0].mxu0
        %v7413 = vadd.f32 0.0, %v7412
        %v7414 = vpop.f32.mrb[0].mxu0
        %v7415 = vadd.f32 0.0, %v7414
        %v7416 = vpop.f32.mrb[0].mxu0
        %v7417 = vadd.f32 0.0, %v7416
        %7418 = vmatprep.mubr.bf16.mxu0 0
        %7419 = vmatmul.mubr.bf16.gmra.mrb[0].mxu0 %v7042
        %v7420 = vpop.f32.mrb[0].mxu0
        %v7421 = vadd.f32 0.0, %v7420
        %v7422 = vpop.f32.mrb[0].mxu0
        %v7423 = vadd.f32 0.0, %v7422
        %v7424 = vpop.f32.mrb[0].mxu0
        %v7425 = vadd.f32 0.0, %v7424
        %v7426 = vpop.f32.mrb[0].mxu0
        %v7427 = vadd.f32 0.0, %v7426
        %7428 = vmatprep.mubr.bf16.mxu0 0
        %7429 = vmatmul.mubr.bf16.gmra.mrb[0].mxu0 %v7043
        %v7430 = vpop.f32.mrb[0].mxu0
        %v7431 = vadd.f32 0.0, %v7430
        %v7432 = vpop.f32.mrb[0].mxu0
        %v7433 = vadd.f32 0.0, %v7432
        %v7434 = vpop.f32.mrb[0].mxu0
        %v7435 = vadd.f32 0.0, %v7434
        %v7436 = vpop.f32.mrb[0].mxu0
        %v7437 = vadd.f32 0.0, %v7436
        %7438 = vmatprep.mubr.bf16.mxu0 0
        %7439 = vmatmul.mubr.bf16.gmra.mrb[0].mxu0 %v7044
        %v7440 = vpop.f32.mrb[0].mxu0
        %v7441 = vadd.f32 0.0, %v7440
        %v7442 = vpop.f32.mrb[0].mxu0
        %v7443 = vadd.f32 0.0, %v7442
        %v7444 = vpop.f32.mrb[0].mxu0
        %v7445 = vadd.f32 0.0, %v7444
        %v7446 = vpop.f32.mrb[0].mxu0
        %v7447 = vadd.f32 0.0, %v7446
        %7448 = vmatprep.mubr.bf16.mxu0 0
        %7449 = vmatmul.mubr.bf16.gmra.mrb[0].mxu0 %v7045
        %v7450 = vpop.f32.mrb[0].mxu0
        %v7451 = vadd.f32 0.0, %v7450
        %v7452 = vpop.f32.mrb[0].mxu0
        %v7453 = vadd.f32 0.0, %v7452
        %v7454 = vpop.f32.mrb[0].mxu0
        %v7455 = vadd.f32 0.0, %v7454
        %v7456 = vpop.f32.mrb[0].mxu0
        %v7457 = vadd.f32 0.0, %v7456
        %7458 = vmatprep.mubr.bf16.mxu0 0
        %7459 = vmatmul.mubr.bf16.gmra.mrb[0].mxu0 %v7046
        %v7460 = vpop.f32.mrb[0].mxu0
        %v7461 = vadd.f32 0.0, %v7460
        %v7462 = vpop.f32.mrb[0].mxu0
        %v7463 = vadd.f32 0.0, %v7462
        %v7464 = vpop.f32.mrb[0].mxu0
        %v7465 = vadd.f32 0.0, %v7464
        %v7466 = vpop.f32.mrb[0].mxu0
        %v7467 = vadd.f32 0.0, %v7466
        %7468 = vmatprep.mubr.bf16.mxu0 0
        %7469 = vmatmul.mubr.bf16.gmra.mrb[0].mxu0 %v7047
        %v7470 = vpop.f32.mrb[0].mxu0
        %v7471 = vadd.f32 0.0, %v7470
        %v7472 = vpop.f32.mrb[0].mxu0
        %v7473 = vadd.f32 0.0, %v7472
        %v7474 = vpop.f32.mrb[0].mxu0
        %v7475 = vadd.f32 0.0, %v7474
        %v7476 = vpop.f32.mrb[0].mxu0
        %v7477 = vadd.f32 0.0, %v7476
        %7478 = vmatprep.mubr.bf16.mxu0 0
        %7479 = vmatmul.mubr.bf16.gmra.mrb[0].mxu0 %v7048
        %v7480 = vpop.f32.mrb[0].mxu0
        %v7481 = vadd.f32 0.0, %v7480
        %v7482 = vpop.f32.mrb[0].mxu0
        %v7483 = vadd.f32 0.0, %v7482
        %v7484 = vpop.f32.mrb[0].mxu0
        %v7485 = vadd.f32 0.0, %v7484
        %v7486 = vpop.f32.mrb[0].mxu0
        %v7487 = vadd.f32 0.0, %v7486
        %7488 = vmatprep.mubr.bf16.mxu0 0
        %7489 = vmatmul.mubr.bf16.gmra.mrb[0].mxu0 %v7049
        %v7490 = vpop.f32.mrb[0].mxu0
        %v7491 = vadd.f32 0.0, %v7490
        %v7492 = vpop.f32.mrb[0].mxu0
        %v7493 = vadd.f32 0.0, %v7492
        %v7494 = vpop.f32.mrb[0].mxu0
        %v7495 = vadd.f32 0.0, %v7494
        %v7496 = vpop.f32.mrb[0].mxu0
        %v7497 = vadd.f32 0.0, %v7496
        %7498 = vdwg.mxu0
        %7499 = vst [vmem:[#allocation4] sm:$0xff] %v7181
        %7500 = vst [vmem:[#allocation4 + $0x8] sm:$0xff] %v7183
        %7501 = vst [vmem:[#allocation4 + $0x10] sm:$0xff] %v7185
        %7502 = vst [vmem:[#allocation4 + $0x18] sm:$0xff] %v7187
        %7503 = vst [vmem:[#allocation4 + $0x20] sm:$0xff] %v7191
        %7504 = vst [vmem:[#allocation4 + $0x28] sm:$0xff] %v7193
        %7505 = vst [vmem:[#allocation4 + $0x30] sm:$0xff] %v7195
        %7506 = vst [vmem:[#allocation4 + $0x38] sm:$0xff] %v7197
        %7507 = vst [vmem:[#allocation4 + $0x40] sm:$0xff] %v7201
        %7508 = vst [vmem:[#allocation4 + $0x48] sm:$0xff] %v7203
        %7509 = vst [vmem:[#allocation4 + $0x50] sm:$0xff] %v7205
        %7510 = vst [vmem:[#allocation4 + $0x58] sm:$0xff] %v7207
        %7511 = vst [vmem:[#allocation4 + $0x60] sm:$0xff] %v7211
        %7512 = vst [vmem:[#allocation4 + $0x68] sm:$0xff] %v7213
        %7513 = vst [vmem:[#allocation4 + $0x70] sm:$0xff] %v7215
        %7514 = vst [vmem:[#allocation4 + $0x78] sm:$0xff] %v7217
        %7515 = vst [vmem:[#allocation4 + $0x80] sm:$0xff] %v7221
        %7516 = vst [vmem:[#allocation4 + $0x88] sm:$0xff] %v7223
        %7517 = vst [vmem:[#allocation4 + $0x90] sm:$0xff] %v7225
        %7518 = vst [vmem:[#allocation4 + $0x98] sm:$0xff] %v7227
        %7519 = vst [vmem:[#allocation4 + $0xa0] sm:$0xff] %v7231
        %7520 = vst [vmem:[#allocation4 + $0xa8] sm:$0xff] %v7233
        %7521 = vst [vmem:[#allocation4 + $0xb0] sm:$0xff] %v7235
        %7522 = vst [vmem:[#allocation4 + $0xb8] sm:$0xff] %v7237
        %7523 = vst [vmem:[#allocation4 + $0xc0] sm:$0xff] %v7241
        %7524 = vst [vmem:[#allocation4 + $0xc8] sm:$0xff] %v7243
        %7525 = vst [vmem:[#allocation4 + $0xd0] sm:$0xff] %v7245
        %7526 = vst [vmem:[#allocation4 + $0xd8] sm:$0xff] %v7247
        %7527 = vst [vmem:[#allocation4 + $0xe0] sm:$0xff] %v7251
        %7528 = vst [vmem:[#allocation4 + $0xe8] sm:$0xff] %v7253
        %7529 = vst [vmem:[#allocation4 + $0xf0] sm:$0xff] %v7255
        %7530 = vst [vmem:[#allocation4 + $0xf8] sm:$0xff] %v7257
        %7531 = vst [vmem:[#allocation4 + $0x100] sm:$0xff] %v7261
        %7532 = vst [vmem:[#allocation4 + $0x108] sm:$0xff] %v7263
        %7533 = vst [vmem:[#allocation4 + $0x110] sm:$0xff] %v7265
        %7534 = vst [vmem:[#allocation4 + $0x118] sm:$0xff] %v7267
        %7535 = vst [vmem:[#allocation4 + $0x120] sm:$0xff] %v7271
        %7536 = vst [vmem:[#allocation4 + $0x128] sm:$0xff] %v7273
        %7537 = vst [vmem:[#allocation4 + $0x130] sm:$0xff] %v7275
        %7538 = vst [vmem:[#allocation4 + $0x138] sm:$0xff] %v7277
        %7539 = vst [vmem:[#allocation4 + $0x140] sm:$0xff] %v7281
        %7540 = vst [vmem:[#allocation4 + $0x148] sm:$0xff] %v7283
        %7541 = vst [vmem:[#allocation4 + $0x150] sm:$0xff] %v7285
        %7542 = vst [vmem:[#allocation4 + $0x158] sm:$0xff] %v7287
        %7543 = vst [vmem:[#allocation4 + $0x160] sm:$0xff] %v7291
        %7544 = vst [vmem:[#allocation4 + $0x168] sm:$0xff] %v7293
        %7545 = vst [vmem:[#allocation4 + $0x170] sm:$0xff] %v7295
        %7546 = vst [vmem:[#allocation4 + $0x178] sm:$0xff] %v7297
        %7547 = vst [vmem:[#allocation4 + $0x180] sm:$0xff] %v7301
        %7548 = vst [vmem:[#allocation4 + $0x188] sm:$0xff] %v7303
        %7549 = vst [vmem:[#allocation4 + $0x190] sm:$0xff] %v7305
        %7550 = vst [vmem:[#allocation4 + $0x198] sm:$0xff] %v7307
        %7551 = vst [vmem:[#allocation4 + $0x1a0] sm:$0xff] %v7311
        %7552 = vst [vmem:[#allocation4 + $0x1a8] sm:$0xff] %v7313
        %7553 = vst [vmem:[#allocation4 + $0x1b0] sm:$0xff] %v7315
        %7554 = vst [vmem:[#allocation4 + $0x1b8] sm:$0xff] %v7317
        %7555 = vst [vmem:[#allocation4 + $0x1c0] sm:$0xff] %v7321
        %7556 = vst [vmem:[#allocation4 + $0x1c8] sm:$0xff] %v7323
        %7557 = vst [vmem:[#allocation4 + $0x1d0] sm:$0xff] %v7325
        %7558 = vst [vmem:[#allocation4 + $0x1d8] sm:$0xff] %v7327
        %7559 = vst [vmem:[#allocation4 + $0x1e0] sm:$0xff] %v7331
        %7560 = vst [vmem:[#allocation4 + $0x1e8] sm:$0xff] %v7333
        %7561 = vst [vmem:[#allocation4 + $0x1f0] sm:$0xff] %v7335
        %7562 = vst [vmem:[#allocation4 + $0x1f8] sm:$0xff] %v7337
        %7563 = vst [vmem:[#allocation4 + $0x200] sm:$0xff] %v7341
        %7564 = vst [vmem:[#allocation4 + $0x208] sm:$0xff] %v7343
        %7565 = vst [vmem:[#allocation4 + $0x210] sm:$0xff] %v7345
        %7566 = vst [vmem:[#allocation4 + $0x218] sm:$0xff] %v7347
        %7567 = vst [vmem:[#allocation4 + $0x220] sm:$0xff] %v7351
        %7568 = vst [vmem:[#allocation4 + $0x228] sm:$0xff] %v7353
        %7569 = vst [vmem:[#allocation4 + $0x230] sm:$0xff] %v7355
        %7570 = vst [vmem:[#allocation4 + $0x238] sm:$0xff] %v7357
        %7571 = vst [vmem:[#allocation4 + $0x240] sm:$0xff] %v7361
        %7572 = vst [vmem:[#allocation4 + $0x248] sm:$0xff] %v7363
        %7573 = vst [vmem:[#allocation4 + $0x250] sm:$0xff] %v7365
        %7574 = vst [vmem:[#allocation4 + $0x258] sm:$0xff] %v7367
        %7575 = vst [vmem:[#allocation4 + $0x260] sm:$0xff] %v7371
        %7576 = vst [vmem:[#allocation4 + $0x268] sm:$0xff] %v7373
        %7577 = vst [vmem:[#allocation4 + $0x270] sm:$0xff] %v7375
        %7578 = vst [vmem:[#allocation4 + $0x278] sm:$0xff] %v7377
        %7579 = vst [vmem:[#allocation4 + $0x280] sm:$0xff] %v7381
        %7580 = vst [vmem:[#allocation4 + $0x288] sm:$0xff] %v7383
        %7581 = vst [vmem:[#allocation4 + $0x290] sm:$0xff] %v7385
        %7582 = vst [vmem:[#allocation4 + $0x298] sm:$0xff] %v7387
        %7583 = vst [vmem:[#allocation4 + $0x2a0] sm:$0xff] %v7391
        %7584 = vst [vmem:[#allocation4 + $0x2a8] sm:$0xff] %v7393
        %7585 = vst [vmem:[#allocation4 + $0x2b0] sm:$0xff] %v7395
        %7586 = vst [vmem:[#allocation4 + $0x2b8] sm:$0xff] %v7397
        %7587 = vst [vmem:[#allocation4 + $0x2c0] sm:$0xff] %v7401
        %7588 = vst [vmem:[#allocation4 + $0x2c8] sm:$0xff] %v7403
        %7589 = vst [vmem:[#allocation4 + $0x2d0] sm:$0xff] %v7405
        %7590 = vst [vmem:[#allocation4 + $0x2d8] sm:$0xff] %v7407
        %7591 = vst [vmem:[#allocation4 + $0x2e0] sm:$0xff] %v7411
        %7592 = vst [vmem:[#allocation4 + $0x2e8] sm:$0xff] %v7413
        %7593 = vst [vmem:[#allocation4 + $0x2f0] sm:$0xff] %v7415
        %7594 = vst [vmem:[#allocation4 + $0x2f8] sm:$0xff] %v7417
        %7595 = vst [vmem:[#allocation4 + $0x300] sm:$0xff] %v7421
        %7596 = vst [vmem:[#allocation4 + $0x308] sm:$0xff] %v7423
        %7597 = vst [vmem:[#allocation4 + $0x310] sm:$0xff] %v7425
        %7598 = vst [vmem:[#allocation4 + $0x318] sm:$0xff] %v7427
        %7599 = vst [vmem:[#allocation4 + $0x320] sm:$0xff] %v7431
        %7600 = vst [vmem:[#allocation4 + $0x328] sm:$0xff] %v7433
        %7601 = vst [vmem:[#allocation4 + $0x330] sm:$0xff] %v7435
        %7602 = vst [vmem:[#allocation4 + $0x338] sm:$0xff] %v7437
        %7603 = vst [vmem:[#allocation4 + $0x340] sm:$0xff] %v7441
        %7604 = vst [vmem:[#allocation4 + $0x348] sm:$0xff] %v7443
        %7605 = vst [vmem:[#allocation4 + $0x350] sm:$0xff] %v7445
        %7606 = vst [vmem:[#allocation4 + $0x358] sm:$0xff] %v7447
        %7607 = vst [vmem:[#allocation4 + $0x360] sm:$0xff] %v7451
        %7608 = vst [vmem:[#allocation4 + $0x368] sm:$0xff] %v7453
        %7609 = vst [vmem:[#allocation4 + $0x370] sm:$0xff] %v7455
        %7610 = vst [vmem:[#allocation4 + $0x378] sm:$0xff] %v7457
        %7611 = vst [vmem:[#allocation4 + $0x380] sm:$0xff] %v7461
        %7612 = vst [vmem:[#allocation4 + $0x388] sm:$0xff] %v7463
        %7613 = vst [vmem:[#allocation4 + $0x390] sm:$0xff] %v7465
        %7614 = vst [vmem:[#allocation4 + $0x398] sm:$0xff] %v7467
        %7615 = vst [vmem:[#allocation4 + $0x3a0] sm:$0xff] %v7471
        %7616 = vst [vmem:[#allocation4 + $0x3a8] sm:$0xff] %v7473
        %7617 = vst [vmem:[#allocation4 + $0x3b0] sm:$0xff] %v7475
        %7618 = vst [vmem:[#allocation4 + $0x3b8] sm:$0xff] %v7477
        %7619 = vst [vmem:[#allocation4 + $0x3c0] sm:$0xff] %v7481
        %7620 = vst [vmem:[#allocation4 + $0x3c8] sm:$0xff] %v7483
        %7621 = vst [vmem:[#allocation4 + $0x3d0] sm:$0xff] %v7485
        %7622 = vst [vmem:[#allocation4 + $0x3d8] sm:$0xff] %v7487
        %7623 = vst [vmem:[#allocation4 + $0x3e0] sm:$0xff] %v7491
        %7624 = vst [vmem:[#allocation4 + $0x3e8] sm:$0xff] %v7493
        %7625 = vst [vmem:[#allocation4 + $0x3f0] sm:$0xff] %v7495
        %7626 = vst [vmem:[#allocation4 + $0x3f8] sm:$0xff] %v7497
        %v7627 = vld [vmem:[%s6] sm:$0x3]
        loop: start=0, step=1, limit=16
        $region53: #{language_model_loss.1} parent=47 // loop_pre_header
          _
        $region54: #{language_model_loss.1} parent=47 // loop_header
          %s7629 = sphi 0, %s7633
          %p7630 = scmp.ge.s32.totalorder %s7629, 16
          %v7634 = vphi 0.0, %v7811
          %v7635 = vphi 0.0, %v7825
        $region55: #{language_model_loss.1} parent=47 // loop_header_branch
          %7632 = sbr.rel (%p7630) target = $region59
        $region56: #{language_model_loss.1} parent=47 // loop_body
          %s7636 = smul.u32 %s7629, 32
          %s7637 = sshra.s32 %s7636, 3
          %s7638 = sand.u32 %s7636, 7
          %s7639 = smul.u32 %s7637, 2
          %s7640 = smul.addr %s7639, 8
          %s7641 = scalar_lea.vmem [#allocation4], %s7640
          %v7642 = vld [vmem:[%s7641] sm:$0xff]
          %v7643 = vld [vmem:[%s7641 + $0x8] sm:$0xff]
          %v7644 = vld [vmem:[%s7641 + $0x10] sm:$0xff]
          %v7645 = vld [vmem:[%s7641 + $0x18] sm:$0xff]
          %v7646 = vld [vmem:[%s7641 + $0x20] sm:$0xff]
          %v7647 = vld [vmem:[%s7641 + $0x28] sm:$0xff]
          %v7648 = vld [vmem:[%s7641 + $0x30] sm:$0xff]
          %v7649 = vld [vmem:[%s7641 + $0x38] sm:$0xff]
          %v7651 = vlaneseq
          %v7652 = vshrl.u32 %v7651, 7
          %v7653 = vsub.s32 0, %v7652
          %v7654 = vrot.slane %v7627, %v7653
          %v7655 = vlaneseq
          %v7656 = vshrl.u32 %v7655, 7
          %v7657 = vsub.s32 1, %v7656
          %v7658 = vrot.slane %v7627, %v7657
          %v7661 = vadd.f32 %v7642, %v7654
          %v7662 = vadd.f32 %v7643, %v7658
          %v7663 = vadd.f32 %v7644, %v7654
          %v7664 = vadd.f32 %v7645, %v7658
          %v7665 = vadd.f32 %v7646, %v7654
          %v7666 = vadd.f32 %v7647, %v7658
          %v7667 = vadd.f32 %v7648, %v7654
          %v7668 = vadd.f32 %v7649, %v7658
          %s7669 = scalar_lea.vmem %s287, %s7636
          %v7670 = vld [vmem:[%s7669] sm:$0xff]
          %v7671 = vld [vmem:[%s7669 + $0x8] sm:$0xff]
          %v7672 = vld [vmem:[%s7669 + $0x10] sm:$0xff]
          %v7673 = vld [vmem:[%s7669 + $0x18] sm:$0xff]
          %v7674 = vmax.f32 %v7661, %v7662
          %7675 = vmax.xlane.f32.xlu0 %v7674
          %v7676 = vpop.xlane.xlu0 %7675
          %v7677 = vmax.f32 %v7663, %v7664
          %7678 = vmax.xlane.f32.xlu0 %v7677
          %v7679 = vpop.xlane.xlu0 %7678
          %v7680 = vmax.f32 %v7665, %v7666
          %7681 = vmax.xlane.f32.xlu0 %v7680
          %v7682 = vpop.xlane.xlu0 %7681
          %v7683 = vmax.f32 %v7667, %v7668
          %7684 = vmax.xlane.f32.xlu0 %v7683
          %v7685 = vpop.xlane.xlu0 %7684
          %v7686 = vsub.f32 %v7661, %v7676
          %v7687 = vsub.f32 %v7662, %v7676
          %v7688 = vsub.f32 %v7663, %v7679
          %v7689 = vsub.f32 %v7664, %v7679
          %v7690 = vsub.f32 %v7665, %v7682
          %v7691 = vsub.f32 %v7666, %v7682
          %v7692 = vsub.f32 %v7667, %v7685
          %v7693 = vsub.f32 %v7668, %v7685
          %v7694 = vmul.f32 %v7686, 1.442695
          %v7695 = vpow.pop %v7694
          %v7696 = vmul.f32 %v7687, 1.442695
          %v7697 = vpow.pop %v7696
          %v7698 = vmul.f32 %v7688, 1.442695
          %v7699 = vpow.pop %v7698
          %v7700 = vmul.f32 %v7689, 1.442695
          %v7701 = vpow.pop %v7700
          %v7702 = vmul.f32 %v7690, 1.442695
          %v7703 = vpow.pop %v7702
          %v7704 = vmul.f32 %v7691, 1.442695
          %v7705 = vpow.pop %v7704
          %v7706 = vmul.f32 %v7692, 1.442695
          %v7707 = vpow.pop %v7706
          %v7708 = vmul.f32 %v7693, 1.442695
          %v7709 = vpow.pop %v7708
          %v7710 = vadd.f32 %v7695, %v7697
          %7711 = vadd.xlane.f32.xlu0 %v7710
          %v7712 = vpop.xlane.xlu0 %7711
          %v7713 = vadd.f32 %v7699, %v7701
          %7714 = vadd.xlane.f32.xlu0 %v7713
          %v7715 = vpop.xlane.xlu0 %7714
          %v7716 = vadd.f32 %v7703, %v7705
          %7717 = vadd.xlane.f32.xlu0 %v7716
          %v7718 = vpop.xlane.xlu0 %7717
          %v7719 = vadd.f32 %v7707, %v7709
          %7720 = vadd.xlane.f32.xlu0 %v7719
          %v7721 = vpop.xlane.xlu0 %7720
          %v7722 = vlog2.pop %v7712
          %v7723 = vmul.f32 %v7722, 0.6931472
          %v7724 = vlog2.pop %v7715
          %v7725 = vmul.f32 %v7724, 0.6931472
          %v7726 = vlog2.pop %v7718
          %v7727 = vmul.f32 %v7726, 0.6931472
          %v7728 = vlog2.pop %v7721
          %v7729 = vmul.f32 %v7728, 0.6931472
          %v7730 = vadd.f32 %v7723, %v7676
          %v7731 = vadd.f32 %v7725, %v7679
          %v7732 = vadd.f32 %v7727, %v7682
          %v7733 = vadd.f32 %v7729, %v7685
          %v7734 = vlaneseq
          %v7735 = vand.u32 %v7734, 127
          %v7736 = vadd.s32 %v7735, 128
          %7737 = vset.pattern.permute.xlu0 0
          %7738 = vperm.xlu0 %7737, %v7670
          %v7739 = vpop.permute.xlu0 %7738
          %7740 = vset.pattern.permute.xlu0 0
          %7741 = vperm.xlu0 %7740, %v7671
          %v7742 = vpop.permute.xlu0 %7741
          %7743 = vset.pattern.permute.xlu0 0
          %7744 = vperm.xlu0 %7743, %v7672
          %v7745 = vpop.permute.xlu0 %7744
          %7746 = vset.pattern.permute.xlu0 0
          %7747 = vperm.xlu0 %7746, %v7673
          %v7748 = vpop.permute.xlu0 %7747
          %vm7749 = vcmp.eq.s32.totalorder %v7735, %v7739
          %vm7750 = vcmp.eq.s32.totalorder %v7736, %v7739
          %vm7751 = vcmp.eq.s32.totalorder %v7735, %v7742
          %vm7752 = vcmp.eq.s32.totalorder %v7736, %v7742
          %vm7753 = vcmp.eq.s32.totalorder %v7735, %v7745
          %vm7754 = vcmp.eq.s32.totalorder %v7736, %v7745
          %vm7755 = vcmp.eq.s32.totalorder %v7735, %v7748
          %vm7756 = vcmp.eq.s32.totalorder %v7736, %v7748
          %v7757 = vsel %vm7749, %v7661, 0.0
          %v7758 = vsel %vm7750, %v7662, 0.0
          %v7759 = vsel %vm7751, %v7663, 0.0
          %v7760 = vsel %vm7752, %v7664, 0.0
          %v7761 = vsel %vm7753, %v7665, 0.0
          %v7762 = vsel %vm7754, %v7666, 0.0
          %v7763 = vsel %vm7755, %v7667, 0.0
          %v7764 = vsel %vm7756, %v7668, 0.0
          %v7765 = vadd.f32 %v7757, %v7758
          %7766 = vadd.xlane.f32.xlu0 %v7765
          %v7767 = vpop.xlane.xlu0 %7766
          %v7768 = vadd.f32 %v7759, %v7760
          %7769 = vadd.xlane.f32.xlu0 %v7768
          %v7770 = vpop.xlane.xlu0 %7769
          %v7771 = vadd.f32 %v7761, %v7762
          %7772 = vadd.xlane.f32.xlu0 %v7771
          %v7773 = vpop.xlane.xlu0 %7772
          %v7774 = vadd.f32 %v7763, %v7764
          %7775 = vadd.xlane.f32.xlu0 %v7774
          %v7776 = vpop.xlane.xlu0 %7775
          %vm7777 = vcmp.ne.s32.totalorder %v7670, 0
          %vm7778 = vcmp.ne.s32.totalorder %v7671, 0
          %vm7779 = vcmp.ne.s32.totalorder %v7672, 0
          %vm7780 = vcmp.ne.s32.totalorder %v7673, 0
          %v7781 = vsel %vm7777, 1, 0
          %v7782 = vsel %vm7778, 1, 0
          %v7783 = vsel %vm7779, 1, 0
          %v7784 = vsel %vm7780, 1, 0
          %v7785 = vcvt.s32.f32 %v7781
          %v7786 = vcvt.s32.f32 %v7782
          %v7787 = vcvt.s32.f32 %v7783
          %v7788 = vcvt.s32.f32 %v7784
          %v7789 = vsub.f32 %v7730, %v7767
          %v7790 = vsub.f32 %v7731, %v7770
          %v7791 = vsub.f32 %v7732, %v7773
          %v7792 = vsub.f32 %v7733, %v7776
          %v7793 = vmul.f32 %v7789, %v7785
          %v7794 = vmul.f32 %v7790, %v7786
          %v7795 = vmul.f32 %v7791, %v7787
          %v7796 = vmul.f32 %v7792, %v7788
          %vm7797 = vcmask 7168
          %v7798 = vsel %vm7797, %v7793, 0.0
          %v7799 = vsel %vm7797, %v7794, 0.0
          %v7800 = vadd.f32 %v7798, %v7799
          %v7801 = vsel %vm7797, %v7795, 0.0
          %v7802 = vadd.f32 %v7800, %v7801
          %v7803 = vsel %vm7797, %v7796, 0.0
          %v7804 = vadd.f32 %v7802, %v7803
          %v7805 = vrot.slane %v7804, 4
          %v7806 = vadd.f32 %v7804, %v7805
          %v7807 = vrot.slane %v7806, 2
          %v7808 = vadd.f32 %v7806, %v7807
          %v7809 = vrot.slane %v7808, 1
          %v7810 = vadd.f32 %v7808, %v7809
          %v7811 = vadd.f32 %v7634, %v7810
          %v7812 = vsel %vm7797, %v7785, 0.0
          %v7813 = vsel %vm7797, %v7786, 0.0
          %v7814 = vadd.f32 %v7812, %v7813
          %v7815 = vsel %vm7797, %v7787, 0.0
          %v7816 = vadd.f32 %v7814, %v7815
          %v7817 = vsel %vm7797, %v7788, 0.0
          %v7818 = vadd.f32 %v7816, %v7817
          %v7819 = vrot.slane %v7818, 4
          %v7820 = vadd.f32 %v7818, %v7819
          %v7821 = vrot.slane %v7820, 2
          %v7822 = vadd.f32 %v7820, %v7821
          %v7823 = vrot.slane %v7822, 1
          %v7824 = vadd.f32 %v7822, %v7823
          %v7825 = vadd.f32 %v7635, %v7824
        $region57: #{language_model_loss.1} parent=47 // loop_footer
          %s7633 = sadd.s32 1, %s7629
        $region58: #{language_model_loss.1} parent=47 // loop_footer_branch
          %7628 = sbr.rel target = $region54
        $region59: #{language_model_loss.1} parent=47 // loop_exit
          _
        %v7826 = vld [vmem:[#allocation7] sm:$0x1]
        %v7827 = vadd.f32 %v7826, %v7634
        %vm7828 = vcmask 0
        %7829 = vst.msk [vmem:[#allocation7] sm:$0x1] %vm7828, %v7827
        %v7830 = vld [vmem:[#allocation8] sm:$0x1]
        %v7831 = vadd.f32 %v7830, %v7635
        %7832 = vst.msk [vmem:[#allocation8] sm:$0x1] %vm7828, %v7831
        %p7833 = scmp.eq.s32.totalorder %s19, 1
        // Predicated region
        $region60: #{language_model_loss.1} parent=47 // pred_check
          %p7834 = pneg %p7833
        $region61: #{language_model_loss.1} parent=47 // pred_check_branch
          %7836 = sbr.rel (%p7834) target = $region63
        $region62: #{language_model_loss.1} parent=47 // pred_region
          %v7837 = vld [vmem:[#allocation7] sm:$0x1]
          %v7838 = vld [vmem:[#allocation8] sm:$0x1]
          %v7839 = vrcp.pop %v7838
          %v7840 = vmul.f32 %v7837, %v7839
          %7841 = vst.msk [vmem:[#allocation9] sm:$0x1] %vm7828, %v7840
        $region63: #{language_model_loss.1} parent=47 // pred_fallthru
          _
        // Predicated region
        $region64: #{language_model_loss.1} parent=47 // pred_check
          %p7842 = pneg %p189
        $region65: #{language_model_loss.1} parent=47 // pred_check_branch
          %7844 = sbr.rel (%p7842) target = $region67
        $region66: #{language_model_loss.1} parent=47 // pred_region
          %s7846 = ssub.s32 16, 16
          %7847 = vsyncadd [#allocation10], %s7846
          %s7849 = sshll.u32 [#allocation9], 4
          %s7850 = int_to_ptr.vmem [resolvable:$true] %s7849
          %7852 = dma.vmem_to_hbm [thread:$0]  %s7850, 16, %s7, [#allocation10]
        $region67: #{language_model_loss.1} parent=47 // pred_fallthru
          _
        // Predicated region
        $region68: #{language_model_loss.1} parent=47 // pred_check
          %p7853 = pneg %p189
        $region69: #{language_model_loss.1} parent=47 // pred_check_branch
          %7855 = sbr.rel (%p7853) target = $region71
        $region70: #{language_model_loss.1} parent=47 // pred_region
          %7856 = dma.done [#allocation10], 16
        $region71: #{language_model_loss.1} parent=47 // pred_fallthru
          _
      $region48: #{language_model_loss.1} parent=5 // pred_fallthru
        _
      %p7857 = scmp.le.s32.totalorder 2, %s14
      // Predicated region
      $region72: #{language_model_loss.1} parent=5 // pred_check
        %p7858 = pneg %p7857
      $region73: #{language_model_loss.1} parent=5 // pred_check_branch
        %7860 = sbr.rel (%p7858) target = $region75
      $region74: #{language_model_loss.1} parent=5 // pred_region
        %s7861 = ssub.s32 %s14, 2
      $region75: #{language_model_loss.1} parent=5 // pred_fallthru
        _
    $region6: #{language_model_loss.1} parent=1 // loop_footer
      %s18 = sadd.s32 1, %s14
    $region7: #{language_model_loss.1} parent=1 // loop_footer_branch
      %13 = sbr.rel target = $region3
    $region8: #{language_model_loss.1} parent=1 // loop_exit
      _
    %7862 = vsyncpa [#allocation10], 1
    %s7863 = scalar_lea.sflag [#allocation10], 1
    %7864 = vsyncpa %s7863, 1

</llo_original>
